<compile_context>
chip_gen: v6e
topology: v6e:2x2x1
jax: 0.10.0
libtpu: 0.0.40
codegen_flags: <defaults>
</compile_context>

<pallas_src>
import numpy as np
import jax
import jax.numpy as jnp
from jax import lax
from jax.experimental import pallas as pl
from jax.experimental.pallas import tpu as pltpu

# Left/right pad width of the W-direction scratch.  8 keeps every store
# sublane-aligned and covers the largest half-kernel (5).
_WPAD = 8
# Top/bottom pad of the H-direction scratch (max of 3-row pool halo, 5-row
# v_conv halo).
_HPAD = 5


def _silu(v):
    return v * jax.nn.sigmoid(v)


def _attention_caa_kernel(g_ref, x_ref, wg_ref, bg_ref, w1a_ref, w1m_ref,
                          s1_ref, b1_ref, wh_ref, bh_ref, wv_ref, bv_ref,
                          w2_ref, s2_ref, b2_ref, out_ref, wpad, hpad):
    nb, H, W, C = x_ref.shape
    f32 = jnp.float32
    HW = nb * H * W

    # ---- W_g: 1x1 conv (channel matmul) + bias, fuse with x -------------------
    # fused goes straight into the W-pad scratch interior (no separate live slab)
    gf = jnp.dot(g_ref[...].reshape(HW, C), wg_ref[...],
                 preferred_element_type=f32) + bg_ref[...]
    wpad[:, :, _WPAD:_WPAD + W, :] = gf.reshape(nb, H, W, C) + x_ref[...]

    # ---- separable 7x7 stride-1 pad-3 pooling ----------------------------------
    # Max first: borders -inf.  (MaxPool2d implicit -inf padding.)
    neg_w = jnp.full((nb, H, _WPAD, C), -jnp.inf, f32)
    wpad[:, :, 0:_WPAD, :] = neg_w
    wpad[:, :, _WPAD + W:2 * _WPAD + W, :] = neg_w

    max_w = wpad[:, :, _WPAD - 3:_WPAD - 3 + W, :]
    for dx in range(1, 7):
        off = _WPAD - 3 + dx
        max_w = jnp.maximum(max_w, wpad[:, :, off:off + W, :])

    hpad[:, _HPAD:_HPAD + H, :, :] = max_w
    neg_h = jnp.full((nb, 3, W, C), -jnp.inf, f32)
    hpad[:, _HPAD - 3:_HPAD, :, :] = neg_h
    hpad[:, _HPAD + H:_HPAD + H + 3, :, :] = neg_h
    mx = hpad[:, _HPAD - 3:_HPAD - 3 + H, :, :]
    for dy in range(1, 7):
        off = _HPAD - 3 + dy
        mx = jnp.maximum(mx, hpad[:, off:off + H, :, :])

    # Avg second: borders 0 (count_include_pad=True -> always /49).  The zero
    # borders are left in place for h_conv / v_conv reuse below.
    zero_w = jnp.zeros((nb, H, _WPAD, C), f32)
    wpad[:, :, 0:_WPAD, :] = zero_w
    wpad[:, :, _WPAD + W:2 * _WPAD + W, :] = zero_w
    avg_w = wpad[:, :, _WPAD - 3:_WPAD - 3 + W, :]
    for dx in range(1, 7):
        off = _WPAD - 3 + dx
        avg_w = avg_w + wpad[:, :, off:off + W, :]

    hpad[:, _HPAD:_HPAD + H, :, :] = avg_w
    zero_h = jnp.zeros((nb, _HPAD, W, C), f32)
    hpad[:, 0:_HPAD, :, :] = zero_h
    hpad[:, _HPAD + H:2 * _HPAD + H, :, :] = zero_h
    avg = hpad[:, _HPAD - 3:_HPAD - 3 + H, :, :]
    for dy in range(1, 7):
        off = _HPAD - 3 + dy
        avg = avg + hpad[:, off:off + H, :, :]
    avg = avg * (1.0 / 49.0)

    # ---- conv1: two accumulated 1x1 dots (no lane concat), folded BN, SiLU -----
    pre1 = (jnp.dot(avg.reshape(HW, C), w1a_ref[...], preferred_element_type=f32)
            + jnp.dot(mx.reshape(HW, C), w1m_ref[...], preferred_element_type=f32))
    a1 = _silu(pre1 * s1_ref[...] + b1_ref[...]).reshape(nb, H, W, C)

    # ---- h_conv: depthwise (1, 11), zero pad 5 on W (borders already 0) --------
    wpad[:, :, _WPAD:_WPAD + W, :] = a1
    wh = wh_ref[...]                               # (11, C)
    hacc = wpad[:, :, _WPAD - 5:_WPAD - 5 + W, :] * wh[0]
    for k in range(1, 11):
        off = _WPAD - 5 + k
        hacc = hacc + wpad[:, :, off:off + W, :] * wh[k]
    hacc = hacc + bh_ref[...]

    # ---- v_conv: depthwise (11, 1), zero pad 5 on H (borders already 0) --------
    hpad[:, _HPAD:_HPAD + H, :, :] = hacc
    wv = wv_ref[...]                               # (11, C)
    vacc = hpad[:, 0:H, :, :] * wv[0]
    for k in range(1, 11):
        vacc = vacc + hpad[:, k:k + H, :, :] * wv[k]
    vacc = vacc + bv_ref[...]

    # ---- conv2: 1x1 + folded BN + SiLU, sigmoid gate, residual combine ---------
    pre2 = jnp.dot(vacc.reshape(HW, C), w2_ref[...], preferred_element_type=f32)
    attn = jax.nn.sigmoid(_silu(pre2 * s2_ref[...] + b2_ref[...])).reshape(nb, H, W, C)

    x = x_ref[...]                                 # re-read (short live range)
    out_ref[...] = x * attn + x


def _vmem_limit_bytes():
    """0.75x the physical VMEM of the current generation (honest scoped limit)."""
    cap = 64 << 20  # conservative fallback (v7x per-TC VMEM)
    try:
        info = pltpu.get_tpu_info()
        cap = int(getattr(info, "vmem_capacity_bytes", cap))
    except Exception:
        pass
    return (cap * 3) // 4


def _pick_batch_block(N, H, W, C, budget_bytes):
    """Largest divisor of N (capped at N//2 to keep >=2 grid steps) whose
    per-step working set — blocks, scratch AND live temporaries — fits budget."""
    per_img = 4 * C * (
        2 * 2 * H * W                      # g, x input blocks, double-buffered
        + 2 * H * W                        # output block, double-buffered
        + H * (W + 2 * _WPAD)              # merged W-padded scratch
        + (H + 2 * _HPAD) * W              # merged H-padded scratch
        + 8 * H * W)                       # live in-kernel temporaries (conservative)
    cap = max(1, N // 2)                   # >=2 grid steps (v7x megacore, overlap)
    nb = 1
    for cand in range(1, cap + 1):
        if N % cand == 0 and cand * per_img <= budget_bytes:
            nb = cand
    return nb


def attention_forward_nhwc(g, x, p, *, batch_block=None):
    """g, x: (N, H, W, C) float32 -> (N, H, W, C) float32 (no relayout)."""
    N, H, W, C = x.shape
    g = g.astype(jnp.float32)
    x = x.astype(jnp.float32)

    vmem_limit = _vmem_limit_bytes()
    nb = batch_block if batch_block is not None else _pick_batch_block(
        N, H, W, C, vmem_limit)
    assert N % nb == 0

    w1a = p["w1"][:C]      # rows acting on avg channels
    w1m = p["w1"][C:]      # rows acting on max channels

    img_spec = pl.BlockSpec((nb, H, W, C), lambda b: (b, 0, 0, 0))
    mat_spec = pl.BlockSpec((C, C), lambda b: (0, 0))
    vec_spec = pl.BlockSpec((1, C), lambda b: (0, 0))
    dwk_spec = pl.BlockSpec((11, C), lambda b: (0, 0))

    return pl.pallas_call(
        _attention_caa_kernel,
        out_shape=jax.ShapeDtypeStruct((N, H, W, C), jnp.float32),
        grid_spec=pltpu.PrefetchScalarGridSpec(
            num_scalar_prefetch=0,
            grid=(N // nb,),
            in_specs=[
                img_spec, img_spec,                 # g, x
                mat_spec, vec_spec,                 # wg, bg
                mat_spec, mat_spec,                 # w1a, w1m (split conv1 weight)
                vec_spec, vec_spec,                 # s1, b1 (folded BN1)
                dwk_spec, vec_spec,                 # wh, bh
                dwk_spec, vec_spec,                 # wv, bv
                mat_spec, vec_spec, vec_spec,       # w2, s2, b2 (folded BN2)
            ],
            out_specs=img_spec,
            scratch_shapes=[
                pltpu.VMEM((nb, H, W + 2 * _WPAD, C), jnp.float32),   # merged W-pad
                pltpu.VMEM((nb, H + 2 * _HPAD, W, C), jnp.float32),   # merged H-pad
            ],
        ),
        compiler_params=pltpu.CompilerParams(
            dimension_semantics=("parallel",),
            vmem_limit_bytes=vmem_limit),
    )(g, x, p["wg"], p["bg"], w1a, w1m, p["s1"], p["b1"],
      p["wh"], p["bh"], p["wv"], p["bv"], p["w2"], p["s2"], p["b2"])


def attention_forward(g_nchw, x_nchw, p, *, batch_block=None):
    """PyTorch-layout drop-in: (N, C, H, W) -> (N, C, H, W).

    NOTE: in an NHWC model call `attention_forward_nhwc` directly to avoid the
    NCHW<->NHWC HBM round-trips at this boundary.
    """
    g = jnp.transpose(g_nchw, (0, 2, 3, 1))
    x = jnp.transpose(x_nchw, (0, 2, 3, 1))
    out = attention_forward_nhwc(g, x, p, batch_block=batch_block)
    return jnp.transpose(out, (0, 3, 1, 2))


def make_params(key, C):
    """Deterministic synthetic parameters matching the PyTorch module shapes."""
    ks = jax.random.split(key, 20)
    eps = 1e-3

    def conv_w(k, cout, cin):
        return jax.random.normal(k, (cout, cin), jnp.float32) / np.sqrt(cin)

    def bn_fold(kg, kb, km, kv):
        gamma = 1.0 + 0.1 * jax.random.normal(kg, (C,), jnp.float32)
        beta = 0.1 * jax.random.normal(kb, (C,), jnp.float32)
        mean = 0.1 * jax.random.normal(km, (C,), jnp.float32)
        var = 0.5 + jax.random.uniform(kv, (C,), jnp.float32)
        scale = gamma / jnp.sqrt(var + eps)
        bias = beta - mean * scale
        return scale.reshape(1, C), bias.reshape(1, C)

    # W_g: Conv2d(C, C, 1) with bias -> weight (Cout, Cin), used as x @ W^T
    wg_oi = conv_w(ks[0], C, C)
    bg = (0.1 * jax.random.normal(ks[1], (C,), jnp.float32)).reshape(1, C)

    # conv1: Conv2d(2C, C, 1, bias=False) + BN + SiLU.
    # w1 = (2C, C); rows [0:C] act on avg channels, rows [C:2C] on max channels.
    w1_oi = conv_w(ks[2], C, 2 * C)
    s1, b1 = bn_fold(ks[3], ks[4], ks[5], ks[6])

    # h_conv: depthwise Conv2d(C, C, (1,11), pad (0,5), groups=C) with bias
    wh = 0.2 * jax.random.normal(ks[7], (11, C), jnp.float32)
    bh = (0.1 * jax.random.normal(ks[8], (C,), jnp.float32)).reshape(1, C)

    # v_conv: depthwise Conv2d(C, C, (11,1), pad (5,0), groups=C) with bias
    wv = 0.2 * jax.random.normal(ks[9], (11, C), jnp.float32)
    bv = (0.1 * jax.random.normal(ks[10], (C,), jnp.float32)).reshape(1, C)

    # conv2: Conv2d(C, C, 1, bias=False) + BN + SiLU
    w2_oi = conv_w(ks[11], C, C)
    s2, b2 = bn_fold(ks[12], ks[13], ks[14], ks[15])

    return dict(wg=wg_oi.T, bg=bg, w1=w1_oi.T, s1=s1, b1=b1,
                wh=wh, bh=bh, wv=wv, bv=bv, w2=w2_oi.T, s2=s2, b2=b2)


def ref_forward(g, x, p):
    """Pure-JAX reference in NHWC, mirroring the PyTorch semantics."""
    C = x.shape[-1]
    gf = jnp.einsum("nhwc,cd->nhwd", g, p["wg"]) + p["bg"].reshape(C)
    fused = gf + x
    pad = [(0, 0), (3, 3), (3, 3), (0, 0)]
    avg = lax.reduce_window(fused, 0.0, lax.add, (1, 7, 7, 1), (1, 1, 1, 1), pad) / 49.0
    mx = lax.reduce_window(fused, -jnp.inf, lax.max, (1, 7, 7, 1), (1, 1, 1, 1), pad)
    a1 = (jnp.einsum("nhwc,cd->nhwd", avg, p["w1"][:C])
          + jnp.einsum("nhwc,cd->nhwd", mx, p["w1"][C:]))
    a1 = jax.nn.silu(a1 * p["s1"].reshape(C) + p["b1"].reshape(C))
    H, W = a1.shape[1], a1.shape[2]
    ap = jnp.pad(a1, ((0, 0), (0, 0), (5, 5), (0, 0)))
    h = sum(ap[:, :, k:k + W, :] * p["wh"][k] for k in range(11)) + p["bh"].reshape(C)
    hp = jnp.pad(h, ((0, 0), (5, 5), (0, 0), (0, 0)))
    v = sum(hp[:, k:k + H, :, :] * p["wv"][k] for k in range(11)) + p["bv"].reshape(C)
    a2 = jax.nn.silu(jnp.einsum("nhwc,cd->nhwd", v, p["w2"])
                     * p["s2"].reshape(C) + p["b2"].reshape(C))
    attn = jax.nn.sigmoid(a2)
    return x * attn + x


if __name__ == "__main__":
    key = jax.random.PRNGKey(0)
    kg, kx, kp = jax.random.split(key, 3)

    N, C, H, W = 2, 4, 16, 16
    g_nchw = jax.random.normal(kg, (N, C, H, W), jnp.float32)
    x_nchw = jax.random.normal(kx, (N, C, H, W), jnp.float32)
    params = make_params(kp, C)

    out = attention_forward(g_nchw, x_nchw, params)
    out = jax.block_until_ready(out)

    ref_nhwc = ref_forward(jnp.transpose(g_nchw, (0, 2, 3, 1)),
                           jnp.transpose(x_nchw, (0, 2, 3, 1)), params)
    ref = jnp.transpose(ref_nhwc, (0, 3, 1, 2))
    np.testing.assert_allclose(np.asarray(out), np.asarray(ref), rtol=1e-3, atol=1e-3)

    print("KERNEL_OK")
</pallas_src>

<mosaic_0001>
module attributes {stable_mosaic.version = 11 : i64} {
  func.func @_attention_caa_kernel(%arg0: i32, %arg1: memref<1x16x16x4xf32, #tpu.memory_space<vmem>>, %arg2: memref<1x16x16x4xf32, #tpu.memory_space<vmem>>, %arg3: memref<4x4xf32, #tpu.memory_space<vmem>>, %arg4: memref<1x4xf32, #tpu.memory_space<vmem>>, %arg5: memref<4x4xf32, #tpu.memory_space<vmem>>, %arg6: memref<4x4xf32, #tpu.memory_space<vmem>>, %arg7: memref<1x4xf32, #tpu.memory_space<vmem>>, %arg8: memref<1x4xf32, #tpu.memory_space<vmem>>, %arg9: memref<11x4xf32, #tpu.memory_space<vmem>>, %arg10: memref<1x4xf32, #tpu.memory_space<vmem>>, %arg11: memref<11x4xf32, #tpu.memory_space<vmem>>, %arg12: memref<1x4xf32, #tpu.memory_space<vmem>>, %arg13: memref<4x4xf32, #tpu.memory_space<vmem>>, %arg14: memref<1x4xf32, #tpu.memory_space<vmem>>, %arg15: memref<1x4xf32, #tpu.memory_space<vmem>>, %arg16: memref<1x16x16x4xf32, #tpu.memory_space<vmem>>, %arg17: memref<1x16x32x4xf32, #tpu.memory_space<vmem>>, %arg18: memref<1x26x16x4xf32, #tpu.memory_space<vmem>>) attributes {dimension_semantics = [#tpu.dimension_semantics<parallel>], iteration_bounds = array<i64: 2>, scalar_prefetch = 0 : i64, scratch_operands = 2 : i64, tpu.core_type = #tpu.core_type<tc>, window_params = [{transform_indices = @transform_0, window_bounds = array<i64: 1, 16, 16, 4>}, {transform_indices = @transform_1, window_bounds = array<i64: 1, 16, 16, 4>}, {pipeline_mode = #tpu.pipeline_mode<synchronous>, transform_indices = @transform_2, window_bounds = array<i64: 4, 4>}, {pipeline_mode = #tpu.pipeline_mode<synchronous>, transform_indices = @transform_3, window_bounds = array<i64: 1, 4>}, {pipeline_mode = #tpu.pipeline_mode<synchronous>, transform_indices = @transform_4, window_bounds = array<i64: 4, 4>}, {pipeline_mode = #tpu.pipeline_mode<synchronous>, transform_indices = @transform_5, window_bounds = array<i64: 4, 4>}, {pipeline_mode = #tpu.pipeline_mode<synchronous>, transform_indices = @transform_6, window_bounds = array<i64: 1, 4>}, {pipeline_mode = #tpu.pipeline_mode<synchronous>, transform_indices = @transform_7, window_bounds = array<i64: 1, 4>}, {pipeline_mode = #tpu.pipeline_mode<synchronous>, transform_indices = @transform_8, window_bounds = array<i64: 11, 4>}, {pipeline_mode = #tpu.pipeline_mode<synchronous>, transform_indices = @transform_9, window_bounds = array<i64: 1, 4>}, {pipeline_mode = #tpu.pipeline_mode<synchronous>, transform_indices = @transform_10, window_bounds = array<i64: 11, 4>}, {pipeline_mode = #tpu.pipeline_mode<synchronous>, transform_indices = @transform_11, window_bounds = array<i64: 1, 4>}, {pipeline_mode = #tpu.pipeline_mode<synchronous>, transform_indices = @transform_12, window_bounds = array<i64: 4, 4>}, {pipeline_mode = #tpu.pipeline_mode<synchronous>, transform_indices = @transform_13, window_bounds = array<i64: 1, 4>}, {pipeline_mode = #tpu.pipeline_mode<synchronous>, transform_indices = @transform_14, window_bounds = array<i64: 1, 4>}, {transform_indices = @transform_15, window_bounds = array<i64: 1, 16, 16, 4>}]} {
    %c0 = arith.constant 0 : index
    %c0_0 = arith.constant 0 : index
    %c0_1 = arith.constant 0 : index
    %c0_2 = arith.constant 0 : index
    %0 = vector.load %arg1[%c0, %c0_0, %c0_1, %c0_2] : memref<1x16x16x4xf32, #tpu.memory_space<vmem>>, vector<1x16x16x4xf32>
    %1 = vector.shape_cast %0 : vector<1x16x16x4xf32> to vector<256x4xf32>
    %c0_3 = arith.constant 0 : index
    %c0_4 = arith.constant 0 : index
    %2 = vector.load %arg3[%c0_3, %c0_4] : memref<4x4xf32, #tpu.memory_space<vmem>>, vector<4x4xf32>
    %cst = arith.constant dense<0.000000e+00> : vector<256x4xf32>
    %3 = tpu.matmul %1, %2, %cst {dimension_numbers = #tpu.dot_dimension_numbers<[1], [0], [0], [1], [0, 0, 1, 1], [], []>} : vector<256x4xf32>, vector<4x4xf32>, vector<256x4xf32> -> vector<256x4xf32>
    %c0_5 = arith.constant 0 : index
    %c0_6 = arith.constant 0 : index
    %4 = vector.load %arg4[%c0_5, %c0_6] : memref<1x4xf32, #tpu.memory_space<vmem>>, vector<1x4xf32>
    %5 = vector.broadcast %4 : vector<1x4xf32> to vector<256x4xf32>
    %6 = arith.addf %3, %5 : vector<256x4xf32>
    %7 = vector.shape_cast %6 : vector<256x4xf32> to vector<1x16x16x4xf32>
    %c0_7 = arith.constant 0 : index
    %c0_8 = arith.constant 0 : index
    %c0_9 = arith.constant 0 : index
    %c0_10 = arith.constant 0 : index
    %8 = vector.load %arg2[%c0_7, %c0_8, %c0_9, %c0_10] : memref<1x16x16x4xf32, #tpu.memory_space<vmem>>, vector<1x16x16x4xf32>
    %9 = arith.addf %7, %8 : vector<1x16x16x4xf32>
    %c0_11 = arith.constant 0 : index
    %c0_12 = arith.constant 0 : index
    %c8 = arith.constant 8 : index
    %c0_13 = arith.constant 0 : index
    %10 = vector.load %arg17[%c0_11, %c0_12, %c8, %c0_13] : memref<1x16x32x4xf32, #tpu.memory_space<vmem>>, vector<1x16x16x4xf32>
    tpu.vector_store %arg17[%c0_11, %c0_12, %c8, %c0_13], %9 {strides = array<i32>} : memref<1x16x32x4xf32, #tpu.memory_space<vmem>>, vector<1x16x16x4xf32>,
    %cst_14 = arith.constant 0xFF800000 : f32
    %11 = vector.broadcast %cst_14 : f32 to vector<1x16x8x4xf32>
    %c0_15 = arith.constant 0 : index
    %c0_16 = arith.constant 0 : index
    %c0_17 = arith.constant 0 : index
    %c0_18 = arith.constant 0 : index
    %12 = vector.load %arg17[%c0_15, %c0_16, %c0_17, %c0_18] : memref<1x16x32x4xf32, #tpu.memory_space<vmem>>, vector<1x16x8x4xf32>
    tpu.vector_store %arg17[%c0_15, %c0_16, %c0_17, %c0_18], %11 {strides = array<i32>} : memref<1x16x32x4xf32, #tpu.memory_space<vmem>>, vector<1x16x8x4xf32>,
    %c0_19 = arith.constant 0 : index
    %c0_20 = arith.constant 0 : index
    %c24 = arith.constant 24 : index
    %c0_21 = arith.constant 0 : index
    %13 = vector.load %arg17[%c0_19, %c0_20, %c24, %c0_21] : memref<1x16x32x4xf32, #tpu.memory_space<vmem>>, vector<1x16x8x4xf32>
    tpu.vector_store %arg17[%c0_19, %c0_20, %c24, %c0_21], %11 {strides = array<i32>} : memref<1x16x32x4xf32, #tpu.memory_space<vmem>>, vector<1x16x8x4xf32>,
    %c0_22 = arith.constant 0 : index
    %c0_23 = arith.constant 0 : index
    %c5 = arith.constant 5 : index
    %c0_24 = arith.constant 0 : index
    %14 = vector.load %arg17[%c0_22, %c0_23, %c5, %c0_24] : memref<1x16x32x4xf32, #tpu.memory_space<vmem>>, vector<1x16x16x4xf32>
    %c0_25 = arith.constant 0 : index
    %c0_26 = arith.constant 0 : index
    %c6 = arith.constant 6 : index
    %c0_27 = arith.constant 0 : index
    %15 = vector.load %arg17[%c0_25, %c0_26, %c6, %c0_27] : memref<1x16x32x4xf32, #tpu.memory_space<vmem>>, vector<1x16x16x4xf32>
    %16 = arith.maximumf %14, %15 : vector<1x16x16x4xf32>
    %c0_28 = arith.constant 0 : index
    %c0_29 = arith.constant 0 : index
    %c7 = arith.constant 7 : index
    %c0_30 = arith.constant 0 : index
    %17 = vector.load %arg17[%c0_28, %c0_29, %c7, %c0_30] : memref<1x16x32x4xf32, #tpu.memory_space<vmem>>, vector<1x16x16x4xf32>
    %18 = arith.maximumf %16, %17 : vector<1x16x16x4xf32>
    %c0_31 = arith.constant 0 : index
    %c0_32 = arith.constant 0 : index
    %c8_33 = arith.constant 8 : index
    %c0_34 = arith.constant 0 : index
    %19 = vector.load %arg17[%c0_31, %c0_32, %c8_33, %c0_34] : memref<1x16x32x4xf32, #tpu.memory_space<vmem>>, vector<1x16x16x4xf32>
    %20 = arith.maximumf %18, %19 : vector<1x16x16x4xf32>
    %c0_35 = arith.constant 0 : index
    %c0_36 = arith.constant 0 : index
    %c9 = arith.constant 9 : index
    %c0_37 = arith.constant 0 : index
    %21 = vector.load %arg17[%c0_35, %c0_36, %c9, %c0_37] : memref<1x16x32x4xf32, #tpu.memory_space<vmem>>, vector<1x16x16x4xf32>
    %22 = arith.maximumf %20, %21 : vector<1x16x16x4xf32>
    %c0_38 = arith.constant 0 : index
    %c0_39 = arith.constant 0 : index
    %c10 = arith.constant 10 : index
    %c0_40 = arith.constant 0 : index
    %23 = vector.load %arg17[%c0_38, %c0_39, %c10, %c0_40] : memref<1x16x32x4xf32, #tpu.memory_space<vmem>>, vector<1x16x16x4xf32>
    %24 = arith.maximumf %22, %23 : vector<1x16x16x4xf32>
    %c0_41 = arith.constant 0 : index
    %c0_42 = arith.constant 0 : index
    %c11 = arith.constant 11 : index
    %c0_43 = arith.constant 0 : index
    %25 = vector.load %arg17[%c0_41, %c0_42, %c11, %c0_43] : memref<1x16x32x4xf32, #tpu.memory_space<vmem>>, vector<1x16x16x4xf32>
    %26 = arith.maximumf %24, %25 : vector<1x16x16x4xf32>
    %c0_44 = arith.constant 0 : index
    %c5_45 = arith.constant 5 : index
    %c0_46 = arith.constant 0 : index
    %c0_47 = arith.constant 0 : index
    %27 = vector.load %arg18[%c0_44, %c5_45, %c0_46, %c0_47] : memref<1x26x16x4xf32, #tpu.memory_space<vmem>>, vector<1x16x16x4xf32>
    tpu.vector_store %arg18[%c0_44, %c5_45, %c0_46, %c0_47], %26 {strides = array<i32>} : memref<1x26x16x4xf32, #tpu.memory_space<vmem>>, vector<1x16x16x4xf32>,
    %cst_48 = arith.constant 0xFF800000 : f32
    %28 = vector.broadcast %cst_48 : f32 to vector<1x3x16x4xf32>
    %c0_49 = arith.constant 0 : index
    %c2 = arith.constant 2 : index
    %c0_50 = arith.constant 0 : index
    %c0_51 = arith.constant 0 : index
    %29 = vector.load %arg18[%c0_49, %c2, %c0_50, %c0_51] : memref<1x26x16x4xf32, #tpu.memory_space<vmem>>, vector<1x3x16x4xf32>
    tpu.vector_store %arg18[%c0_49, %c2, %c0_50, %c0_51], %28 {strides = array<i32>} : memref<1x26x16x4xf32, #tpu.memory_space<vmem>>, vector<1x3x16x4xf32>,
    %c0_52 = arith.constant 0 : index
    %c21 = arith.constant 21 : index
    %c0_53 = arith.constant 0 : index
    %c0_54 = arith.constant 0 : index
    %30 = vector.load %arg18[%c0_52, %c21, %c0_53, %c0_54] : memref<1x26x16x4xf32, #tpu.memory_space<vmem>>, vector<1x3x16x4xf32>
    tpu.vector_store %arg18[%c0_52, %c21, %c0_53, %c0_54], %28 {strides = array<i32>} : memref<1x26x16x4xf32, #tpu.memory_space<vmem>>, vector<1x3x16x4xf32>,
    %c0_55 = arith.constant 0 : index
    %c2_56 = arith.constant 2 : index
    %c0_57 = arith.constant 0 : index
    %c0_58 = arith.constant 0 : index
    %31 = vector.load %arg18[%c0_55, %c2_56, %c0_57, %c0_58] : memref<1x26x16x4xf32, #tpu.memory_space<vmem>>, vector<1x16x16x4xf32>
    %c0_59 = arith.constant 0 : index
    %c3 = arith.constant 3 : index
    %c0_60 = arith.constant 0 : index
    %c0_61 = arith.constant 0 : index
    %32 = vector.load %arg18[%c0_59, %c3, %c0_60, %c0_61] : memref<1x26x16x4xf32, #tpu.memory_space<vmem>>, vector<1x16x16x4xf32>
    %33 = arith.maximumf %31, %32 : vector<1x16x16x4xf32>
    %c0_62 = arith.constant 0 : index
    %c4 = arith.constant 4 : index
    %c0_63 = arith.constant 0 : index
    %c0_64 = arith.constant 0 : index
    %34 = vector.load %arg18[%c0_62, %c4, %c0_63, %c0_64] : memref<1x26x16x4xf32, #tpu.memory_space<vmem>>, vector<1x16x16x4xf32>
    %35 = arith.maximumf %33, %34 : vector<1x16x16x4xf32>
    %c0_65 = arith.constant 0 : index
    %c5_66 = arith.constant 5 : index
    %c0_67 = arith.constant 0 : index
    %c0_68 = arith.constant 0 : index
    %36 = vector.load %arg18[%c0_65, %c5_66, %c0_67, %c0_68] : memref<1x26x16x4xf32, #tpu.memory_space<vmem>>, vector<1x16x16x4xf32>
    %37 = arith.maximumf %35, %36 : vector<1x16x16x4xf32>
    %c0_69 = arith.constant 0 : index
    %c6_70 = arith.constant 6 : index
    %c0_71 = arith.constant 0 : index
    %c0_72 = arith.constant 0 : index
    %38 = vector.load %arg18[%c0_69, %c6_70, %c0_71, %c0_72] : memref<1x26x16x4xf32, #tpu.memory_space<vmem>>, vector<1x16x16x4xf32>
    %39 = arith.maximumf %37, %38 : vector<1x16x16x4xf32>
    %c0_73 = arith.constant 0 : index
    %c7_74 = arith.constant 7 : index
    %c0_75 = arith.constant 0 : index
    %c0_76 = arith.constant 0 : index
    %40 = vector.load %arg18[%c0_73, %c7_74, %c0_75, %c0_76] : memref<1x26x16x4xf32, #tpu.memory_space<vmem>>, vector<1x16x16x4xf32>
    %41 = arith.maximumf %39, %40 : vector<1x16x16x4xf32>
    %c0_77 = arith.constant 0 : index
    %c8_78 = arith.constant 8 : index
    %c0_79 = arith.constant 0 : index
    %c0_80 = arith.constant 0 : index
    %42 = vector.load %arg18[%c0_77, %c8_78, %c0_79, %c0_80] : memref<1x26x16x4xf32, #tpu.memory_space<vmem>>, vector<1x16x16x4xf32>
    %43 = arith.maximumf %41, %42 : vector<1x16x16x4xf32>
    %cst_81 = arith.constant 0.000000e+00 : f32
    %44 = vector.broadcast %cst_81 : f32 to vector<1x16x8x4xf32>
    %c0_82 = arith.constant 0 : index
    %c0_83 = arith.constant 0 : index
    %c0_84 = arith.constant 0 : index
    %c0_85 = arith.constant 0 : index
    %45 = vector.load %arg17[%c0_82, %c0_83, %c0_84, %c0_85] : memref<1x16x32x4xf32, #tpu.memory_space<vmem>>, vector<1x16x8x4xf32>
    tpu.vector_store %arg17[%c0_82, %c0_83, %c0_84, %c0_85], %44 {strides = array<i32>} : memref<1x16x32x4xf32, #tpu.memory_space<vmem>>, vector<1x16x8x4xf32>,
    %c0_86 = arith.constant 0 : index
    %c0_87 = arith.constant 0 : index
    %c24_88 = arith.constant 24 : index
    %c0_89 = arith.constant 0 : index
    %46 = vector.load %arg17[%c0_86, %c0_87, %c24_88, %c0_89] : memref<1x16x32x4xf32, #tpu.memory_space<vmem>>, vector<1x16x8x4xf32>
    tpu.vector_store %arg17[%c0_86, %c0_87, %c24_88, %c0_89], %44 {strides = array<i32>} : memref<1x16x32x4xf32, #tpu.memory_space<vmem>>, vector<1x16x8x4xf32>,
    %c0_90 = arith.constant 0 : index
    %c0_91 = arith.constant 0 : index
    %c5_92 = arith.constant 5 : index
    %c0_93 = arith.constant 0 : index
    %47 = vector.load %arg17[%c0_90, %c0_91, %c5_92, %c0_93] : memref<1x16x32x4xf32, #tpu.memory_space<vmem>>, vector<1x16x16x4xf32>
    %c0_94 = arith.constant 0 : index
    %c0_95 = arith.constant 0 : index
    %c6_96 = arith.constant 6 : index
    %c0_97 = arith.constant 0 : index
    %48 = vector.load %arg17[%c0_94, %c0_95, %c6_96, %c0_97] : memref<1x16x32x4xf32, #tpu.memory_space<vmem>>, vector<1x16x16x4xf32>
    %49 = arith.addf %47, %48 : vector<1x16x16x4xf32>
    %c0_98 = arith.constant 0 : index
    %c0_99 = arith.constant 0 : index
    %c7_100 = arith.constant 7 : index
    %c0_101 = arith.constant 0 : index
    %50 = vector.load %arg17[%c0_98, %c0_99, %c7_100, %c0_101] : memref<1x16x32x4xf32, #tpu.memory_space<vmem>>, vector<1x16x16x4xf32>
    %51 = arith.addf %49, %50 : vector<1x16x16x4xf32>
    %c0_102 = arith.constant 0 : index
    %c0_103 = arith.constant 0 : index
    %c8_104 = arith.constant 8 : index
    %c0_105 = arith.constant 0 : index
    %52 = vector.load %arg17[%c0_102, %c0_103, %c8_104, %c0_105] : memref<1x16x32x4xf32, #tpu.memory_space<vmem>>, vector<1x16x16x4xf32>
    %53 = arith.addf %51, %52 : vector<1x16x16x4xf32>
    %c0_106 = arith.constant 0 : index
    %c0_107 = arith.constant 0 : index
    %c9_108 = arith.constant 9 : index
    %c0_109 = arith.constant 0 : index
    %54 = vector.load %arg17[%c0_106, %c0_107, %c9_108, %c0_109] : memref<1x16x32x4xf32, #tpu.memory_space<vmem>>, vector<1x16x16x4xf32>
    %55 = arith.addf %53, %54 : vector<1x16x16x4xf32>
    %c0_110 = arith.constant 0 : index
    %c0_111 = arith.constant 0 : index
    %c10_112 = arith.constant 10 : index
    %c0_113 = arith.constant 0 : index
    %56 = vector.load %arg17[%c0_110, %c0_111, %c10_112, %c0_113] : memref<1x16x32x4xf32, #tpu.memory_space<vmem>>, vector<1x16x16x4xf32>
    %57 = arith.addf %55, %56 : vector<1x16x16x4xf32>
    %c0_114 = arith.constant 0 : index
    %c0_115 = arith.constant 0 : index
    %c11_116 = arith.constant 11 : index
    %c0_117 = arith.constant 0 : index
    %58 = vector.load %arg17[%c0_114, %c0_115, %c11_116, %c0_117] : memref<1x16x32x4xf32, #tpu.memory_space<vmem>>, vector<1x16x16x4xf32>
    %59 = arith.addf %57, %58 : vector<1x16x16x4xf32>
    %c0_118 = arith.constant 0 : index
    %c5_119 = arith.constant 5 : index
    %c0_120 = arith.constant 0 : index
    %c0_121 = arith.constant 0 : index
    %60 = vector.load %arg18[%c0_118, %c5_119, %c0_120, %c0_121] : memref<1x26x16x4xf32, #tpu.memory_space<vmem>>, vector<1x16x16x4xf32>
    tpu.vector_store %arg18[%c0_118, %c5_119, %c0_120, %c0_121], %59 {strides = array<i32>} : memref<1x26x16x4xf32, #tpu.memory_space<vmem>>, vector<1x16x16x4xf32>,
    %cst_122 = arith.constant 0.000000e+00 : f32
    %61 = vector.broadcast %cst_122 : f32 to vector<1x5x16x4xf32>
    %c0_123 = arith.constant 0 : index
    %c0_124 = arith.constant 0 : index
    %c0_125 = arith.constant 0 : index
    %c0_126 = arith.constant 0 : index
    %62 = vector.load %arg18[%c0_123, %c0_124, %c0_125, %c0_126] : memref<1x26x16x4xf32, #tpu.memory_space<vmem>>, vector<1x5x16x4xf32>
    tpu.vector_store %arg18[%c0_123, %c0_124, %c0_125, %c0_126], %61 {strides = array<i32>} : memref<1x26x16x4xf32, #tpu.memory_space<vmem>>, vector<1x5x16x4xf32>,
    %c0_127 = arith.constant 0 : index
    %c21_128 = arith.constant 21 : index
    %c0_129 = arith.constant 0 : index
    %c0_130 = arith.constant 0 : index
    %63 = vector.load %arg18[%c0_127, %c21_128, %c0_129, %c0_130] : memref<1x26x16x4xf32, #tpu.memory_space<vmem>>, vector<1x5x16x4xf32>
    tpu.vector_store %arg18[%c0_127, %c21_128, %c0_129, %c0_130], %61 {strides = array<i32>} : memref<1x26x16x4xf32, #tpu.memory_space<vmem>>, vector<1x5x16x4xf32>,
    %c0_131 = arith.constant 0 : index
    %c2_132 = arith.constant 2 : index
    %c0_133 = arith.constant 0 : index
    %c0_134 = arith.constant 0 : index
    %64 = vector.load %arg18[%c0_131, %c2_132, %c0_133, %c0_134] : memref<1x26x16x4xf32, #tpu.memory_space<vmem>>, vector<1x16x16x4xf32>
    %c0_135 = arith.constant 0 : index
    %c3_136 = arith.constant 3 : index
    %c0_137 = arith.constant 0 : index
    %c0_138 = arith.constant 0 : index
    %65 = vector.load %arg18[%c0_135, %c3_136, %c0_137, %c0_138] : memref<1x26x16x4xf32, #tpu.memory_space<vmem>>, vector<1x16x16x4xf32>
    %66 = arith.addf %64, %65 : vector<1x16x16x4xf32>
    %c0_139 = arith.constant 0 : index
    %c4_140 = arith.constant 4 : index
    %c0_141 = arith.constant 0 : index
    %c0_142 = arith.constant 0 : index
    %67 = vector.load %arg18[%c0_139, %c4_140, %c0_141, %c0_142] : memref<1x26x16x4xf32, #tpu.memory_space<vmem>>, vector<1x16x16x4xf32>
    %68 = arith.addf %66, %67 : vector<1x16x16x4xf32>
    %c0_143 = arith.constant 0 : index
    %c5_144 = arith.constant 5 : index
    %c0_145 = arith.constant 0 : index
    %c0_146 = arith.constant 0 : index
    %69 = vector.load %arg18[%c0_143, %c5_144, %c0_145, %c0_146] : memref<1x26x16x4xf32, #tpu.memory_space<vmem>>, vector<1x16x16x4xf32>
    %70 = arith.addf %68, %69 : vector<1x16x16x4xf32>
    %c0_147 = arith.constant 0 : index
    %c6_148 = arith.constant 6 : index
    %c0_149 = arith.constant 0 : index
    %c0_150 = arith.constant 0 : index
    %71 = vector.load %arg18[%c0_147, %c6_148, %c0_149, %c0_150] : memref<1x26x16x4xf32, #tpu.memory_space<vmem>>, vector<1x16x16x4xf32>
    %72 = arith.addf %70, %71 : vector<1x16x16x4xf32>
    %c0_151 = arith.constant 0 : index
    %c7_152 = arith.constant 7 : index
    %c0_153 = arith.constant 0 : index
    %c0_154 = arith.constant 0 : index
    %73 = vector.load %arg18[%c0_151, %c7_152, %c0_153, %c0_154] : memref<1x26x16x4xf32, #tpu.memory_space<vmem>>, vector<1x16x16x4xf32>
    %74 = arith.addf %72, %73 : vector<1x16x16x4xf32>
    %c0_155 = arith.constant 0 : index
    %c8_156 = arith.constant 8 : index
    %c0_157 = arith.constant 0 : index
    %c0_158 = arith.constant 0 : index
    %75 = vector.load %arg18[%c0_155, %c8_156, %c0_157, %c0_158] : memref<1x26x16x4xf32, #tpu.memory_space<vmem>>, vector<1x16x16x4xf32>
    %76 = arith.addf %74, %75 : vector<1x16x16x4xf32>
    %cst_159 = arith.constant 0.0204081628 : f32
    %77 = vector.broadcast %cst_159 : f32 to vector<1x16x16x4xf32>
    %78 = arith.mulf %76, %77 : vector<1x16x16x4xf32>
    %79 = vector.shape_cast %78 : vector<1x16x16x4xf32> to vector<256x4xf32>
    %c0_160 = arith.constant 0 : index
    %c0_161 = arith.constant 0 : index
    %80 = vector.load %arg5[%c0_160, %c0_161] : memref<4x4xf32, #tpu.memory_space<vmem>>, vector<4x4xf32>
    %cst_162 = arith.constant dense<0.000000e+00> : vector<256x4xf32>
    %81 = tpu.matmul %79, %80, %cst_162 {dimension_numbers = #tpu.dot_dimension_numbers<[1], [0], [0], [1], [0, 0, 1, 1], [], []>} : vector<256x4xf32>, vector<4x4xf32>, vector<256x4xf32> -> vector<256x4xf32>
    %82 = vector.shape_cast %43 : vector<1x16x16x4xf32> to vector<256x4xf32>
    %c0_163 = arith.constant 0 : index
    %c0_164 = arith.constant 0 : index
    %83 = vector.load %arg6[%c0_163, %c0_164] : memref<4x4xf32, #tpu.memory_space<vmem>>, vector<4x4xf32>
    %cst_165 = arith.constant dense<0.000000e+00> : vector<256x4xf32>
    %84 = tpu.matmul %82, %83, %cst_165 {dimension_numbers = #tpu.dot_dimension_numbers<[1], [0], [0], [1], [0, 0, 1, 1], [], []>} : vector<256x4xf32>, vector<4x4xf32>, vector<256x4xf32> -> vector<256x4xf32>
    %85 = arith.addf %81, %84 : vector<256x4xf32>
    %c0_166 = arith.constant 0 : index
    %c0_167 = arith.constant 0 : index
    %86 = vector.load %arg7[%c0_166, %c0_167] : memref<1x4xf32, #tpu.memory_space<vmem>>, vector<1x4xf32>
    %87 = vector.broadcast %86 : vector<1x4xf32> to vector<256x4xf32>
    %88 = arith.mulf %85, %87 : vector<256x4xf32>
    %c0_168 = arith.constant 0 : index
    %c0_169 = arith.constant 0 : index
    %89 = vector.load %arg8[%c0_168, %c0_169] : memref<1x4xf32, #tpu.memory_space<vmem>>, vector<1x4xf32>
    %90 = vector.broadcast %89 : vector<1x4xf32> to vector<256x4xf32>
    %91 = arith.addf %88, %90 : vector<256x4xf32>
    %92 = arith.negf %91 : vector<256x4xf32>
    %93 = math.exp %92 : vector<256x4xf32>
    %cst_170 = arith.constant 1.000000e+00 : f32
    %94 = vector.broadcast %cst_170 : f32 to vector<256x4xf32>
    %95 = arith.addf %94, %93 : vector<256x4xf32>
    %96 = arith.divf %94, %95 : vector<256x4xf32>
    %97 = arith.mulf %91, %96 : vector<256x4xf32>
    %98 = vector.shape_cast %97 : vector<256x4xf32> to vector<1x16x16x4xf32>
    %c0_171 = arith.constant 0 : index
    %c0_172 = arith.constant 0 : index
    %c8_173 = arith.constant 8 : index
    %c0_174 = arith.constant 0 : index
    %99 = vector.load %arg17[%c0_171, %c0_172, %c8_173, %c0_174] : memref<1x16x32x4xf32, #tpu.memory_space<vmem>>, vector<1x16x16x4xf32>
    tpu.vector_store %arg17[%c0_171, %c0_172, %c8_173, %c0_174], %98 {strides = array<i32>} : memref<1x16x32x4xf32, #tpu.memory_space<vmem>>, vector<1x16x16x4xf32>,
    %c0_175 = arith.constant 0 : index
    %c0_176 = arith.constant 0 : index
    %100 = vector.load %arg9[%c0_175, %c0_176] : memref<11x4xf32, #tpu.memory_space<vmem>>, vector<11x4xf32>
    %c0_177 = arith.constant 0 : index
    %c0_178 = arith.constant 0 : index
    %c3_179 = arith.constant 3 : index
    %c0_180 = arith.constant 0 : index
    %101 = vector.load %arg17[%c0_177, %c0_178, %c3_179, %c0_180] : memref<1x16x32x4xf32, #tpu.memory_space<vmem>>, vector<1x16x16x4xf32>
    %102 = vector.extract_strided_slice %100 {offsets = [0, 0], sizes = [1, 4], strides = [1, 1]} : vector<11x4xf32> to vector<1x4xf32>
    %103 = vector.shape_cast %102 : vector<1x4xf32> to vector<4xf32>
    %104 = vector.shape_cast %103 : vector<4xf32> to vector<1x1x1x4xf32>
    %105 = vector.broadcast %104 : vector<1x1x1x4xf32> to vector<1x16x16x4xf32>
    %106 = arith.mulf %101, %105 : vector<1x16x16x4xf32>
    %c0_181 = arith.constant 0 : index
    %c0_182 = arith.constant 0 : index
    %c4_183 = arith.constant 4 : index
    %c0_184 = arith.constant 0 : index
    %107 = vector.load %arg17[%c0_181, %c0_182, %c4_183, %c0_184] : memref<1x16x32x4xf32, #tpu.memory_space<vmem>>, vector<1x16x16x4xf32>
    %108 = vector.extract_strided_slice %100 {offsets = [1, 0], sizes = [1, 4], strides = [1, 1]} : vector<11x4xf32> to vector<1x4xf32>
    %109 = vector.shape_cast %108 : vector<1x4xf32> to vector<4xf32>
    %110 = vector.shape_cast %109 : vector<4xf32> to vector<1x1x1x4xf32>
    %111 = vector.broadcast %110 : vector<1x1x1x4xf32> to vector<1x16x16x4xf32>
    %112 = arith.mulf %107, %111 : vector<1x16x16x4xf32>
    %113 = arith.addf %106, %112 : vector<1x16x16x4xf32>
    %c0_185 = arith.constant 0 : index
    %c0_186 = arith.constant 0 : index
    %c5_187 = arith.constant 5 : index
    %c0_188 = arith.constant 0 : index
    %114 = vector.load %arg17[%c0_185, %c0_186, %c5_187, %c0_188] : memref<1x16x32x4xf32, #tpu.memory_space<vmem>>, vector<1x16x16x4xf32>
    %115 = vector.extract_strided_slice %100 {offsets = [2, 0], sizes = [1, 4], strides = [1, 1]} : vector<11x4xf32> to vector<1x4xf32>
    %116 = vector.shape_cast %115 : vector<1x4xf32> to vector<4xf32>
    %117 = vector.shape_cast %116 : vector<4xf32> to vector<1x1x1x4xf32>
    %118 = vector.broadcast %117 : vector<1x1x1x4xf32> to vector<1x16x16x4xf32>
    %119 = arith.mulf %114, %118 : vector<1x16x16x4xf32>
    %120 = arith.addf %113, %119 : vector<1x16x16x4xf32>
    %c0_189 = arith.constant 0 : index
    %c0_190 = arith.constant 0 : index
    %c6_191 = arith.constant 6 : index
    %c0_192 = arith.constant 0 : index
    %121 = vector.load %arg17[%c0_189, %c0_190, %c6_191, %c0_192] : memref<1x16x32x4xf32, #tpu.memory_space<vmem>>, vector<1x16x16x4xf32>
    %122 = vector.extract_strided_slice %100 {offsets = [3, 0], sizes = [1, 4], strides = [1, 1]} : vector<11x4xf32> to vector<1x4xf32>
    %123 = vector.shape_cast %122 : vector<1x4xf32> to vector<4xf32>
    %124 = vector.shape_cast %123 : vector<4xf32> to vector<1x1x1x4xf32>
    %125 = vector.broadcast %124 : vector<1x1x1x4xf32> to vector<1x16x16x4xf32>
    %126 = arith.mulf %121, %125 : vector<1x16x16x4xf32>
    %127 = arith.addf %120, %126 : vector<1x16x16x4xf32>
    %c0_193 = arith.constant 0 : index
    %c0_194 = arith.constant 0 : index
    %c7_195 = arith.constant 7 : index
    %c0_196 = arith.constant 0 : index
    %128 = vector.load %arg17[%c0_193, %c0_194, %c7_195, %c0_196] : memref<1x16x32x4xf32, #tpu.memory_space<vmem>>, vector<1x16x16x4xf32>
    %129 = vector.extract_strided_slice %100 {offsets = [4, 0], sizes = [1, 4], strides = [1, 1]} : vector<11x4xf32> to vector<1x4xf32>
    %130 = vector.shape_cast %129 : vector<1x4xf32> to vector<4xf32>
    %131 = vector.shape_cast %130 : vector<4xf32> to vector<1x1x1x4xf32>
    %132 = vector.broadcast %131 : vector<1x1x1x4xf32> to vector<1x16x16x4xf32>
    %133 = arith.mulf %128, %132 : vector<1x16x16x4xf32>
    %134 = arith.addf %127, %133 : vector<1x16x16x4xf32>
    %c0_197 = arith.constant 0 : index
    %c0_198 = arith.constant 0 : index
    %c8_199 = arith.constant 8 : index
    %c0_200 = arith.constant 0 : index
    %135 = vector.load %arg17[%c0_197, %c0_198, %c8_199, %c0_200] : memref<1x16x32x4xf32, #tpu.memory_space<vmem>>, vector<1x16x16x4xf32>
    %136 = vector.extract_strided_slice %100 {offsets = [5, 0], sizes = [1, 4], strides = [1, 1]} : vector<11x4xf32> to vector<1x4xf32>
    %137 = vector.shape_cast %136 : vector<1x4xf32> to vector<4xf32>
    %138 = vector.shape_cast %137 : vector<4xf32> to vector<1x1x1x4xf32>
    %139 = vector.broadcast %138 : vector<1x1x1x4xf32> to vector<1x16x16x4xf32>
    %140 = arith.mulf %135, %139 : vector<1x16x16x4xf32>
    %141 = arith.addf %134, %140 : vector<1x16x16x4xf32>
    %c0_201 = arith.constant 0 : index
    %c0_202 = arith.constant 0 : index
    %c9_203 = arith.constant 9 : index
    %c0_204 = arith.constant 0 : index
    %142 = vector.load %arg17[%c0_201, %c0_202, %c9_203, %c0_204] : memref<1x16x32x4xf32, #tpu.memory_space<vmem>>, vector<1x16x16x4xf32>
    %143 = vector.extract_strided_slice %100 {offsets = [6, 0], sizes = [1, 4], strides = [1, 1]} : vector<11x4xf32> to vector<1x4xf32>
    %144 = vector.shape_cast %143 : vector<1x4xf32> to vector<4xf32>
    %145 = vector.shape_cast %144 : vector<4xf32> to vector<1x1x1x4xf32>
    %146 = vector.broadcast %145 : vector<1x1x1x4xf32> to vector<1x16x16x4xf32>
    %147 = arith.mulf %142, %146 : vector<1x16x16x4xf32>
    %148 = arith.addf %141, %147 : vector<1x16x16x4xf32>
    %c0_205 = arith.constant 0 : index
    %c0_206 = arith.constant 0 : index
    %c10_207 = arith.constant 10 : index
    %c0_208 = arith.constant 0 : index
    %149 = vector.load %arg17[%c0_205, %c0_206, %c10_207, %c0_208] : memref<1x16x32x4xf32, #tpu.memory_space<vmem>>, vector<1x16x16x4xf32>
    %150 = vector.extract_strided_slice %100 {offsets = [7, 0], sizes = [1, 4], strides = [1, 1]} : vector<11x4xf32> to vector<1x4xf32>
    %151 = vector.shape_cast %150 : vector<1x4xf32> to vector<4xf32>
    %152 = vector.shape_cast %151 : vector<4xf32> to vector<1x1x1x4xf32>
    %153 = vector.broadcast %152 : vector<1x1x1x4xf32> to vector<1x16x16x4xf32>
    %154 = arith.mulf %149, %153 : vector<1x16x16x4xf32>
    %155 = arith.addf %148, %154 : vector<1x16x16x4xf32>
    %c0_209 = arith.constant 0 : index
    %c0_210 = arith.constant 0 : index
    %c11_211 = arith.constant 11 : index
    %c0_212 = arith.constant 0 : index
    %156 = vector.load %arg17[%c0_209, %c0_210, %c11_211, %c0_212] : memref<1x16x32x4xf32, #tpu.memory_space<vmem>>, vector<1x16x16x4xf32>
    %157 = vector.extract_strided_slice %100 {offsets = [8, 0], sizes = [1, 4], strides = [1, 1]} : vector<11x4xf32> to vector<1x4xf32>
    %158 = vector.shape_cast %157 : vector<1x4xf32> to vector<4xf32>
    %159 = vector.shape_cast %158 : vector<4xf32> to vector<1x1x1x4xf32>
    %160 = vector.broadcast %159 : vector<1x1x1x4xf32> to vector<1x16x16x4xf32>
    %161 = arith.mulf %156, %160 : vector<1x16x16x4xf32>
    %162 = arith.addf %155, %161 : vector<1x16x16x4xf32>
    %c0_213 = arith.constant 0 : index
    %c0_214 = arith.constant 0 : index
    %c12 = arith.constant 12 : index
    %c0_215 = arith.constant 0 : index
    %163 = vector.load %arg17[%c0_213, %c0_214, %c12, %c0_215] : memref<1x16x32x4xf32, #tpu.memory_space<vmem>>, vector<1x16x16x4xf32>
    %164 = vector.extract_strided_slice %100 {offsets = [9, 0], sizes = [1, 4], strides = [1, 1]} : vector<11x4xf32> to vector<1x4xf32>
    %165 = vector.shape_cast %164 : vector<1x4xf32> to vector<4xf32>
    %166 = vector.shape_cast %165 : vector<4xf32> to vector<1x1x1x4xf32>
    %167 = vector.broadcast %166 : vector<1x1x1x4xf32> to vector<1x16x16x4xf32>
    %168 = arith.mulf %163, %167 : vector<1x16x16x4xf32>
    %169 = arith.addf %162, %168 : vector<1x16x16x4xf32>
    %c0_216 = arith.constant 0 : index
    %c0_217 = arith.constant 0 : index
    %c13 = arith.constant 13 : index
    %c0_218 = arith.constant 0 : index
    %170 = vector.load %arg17[%c0_216, %c0_217, %c13, %c0_218] : memref<1x16x32x4xf32, #tpu.memory_space<vmem>>, vector<1x16x16x4xf32>
    %171 = vector.extract_strided_slice %100 {offsets = [10, 0], sizes = [1, 4], strides = [1, 1]} : vector<11x4xf32> to vector<1x4xf32>
    %172 = vector.shape_cast %171 : vector<1x4xf32> to vector<4xf32>
    %173 = vector.shape_cast %172 : vector<4xf32> to vector<1x1x1x4xf32>
    %174 = vector.broadcast %173 : vector<1x1x1x4xf32> to vector<1x16x16x4xf32>
    %175 = arith.mulf %170, %174 : vector<1x16x16x4xf32>
    %176 = arith.addf %169, %175 : vector<1x16x16x4xf32>
    %c0_219 = arith.constant 0 : index
    %c0_220 = arith.constant 0 : index
    %177 = vector.load %arg10[%c0_219, %c0_220] : memref<1x4xf32, #tpu.memory_space<vmem>>, vector<1x4xf32>
    %178 = vector.shape_cast %177 : vector<1x4xf32> to vector<1x1x1x4xf32>
    %179 = vector.broadcast %178 : vector<1x1x1x4xf32> to vector<1x16x16x4xf32>
    %180 = arith.addf %176, %179 : vector<1x16x16x4xf32>
    %c0_221 = arith.constant 0 : index
    %c5_222 = arith.constant 5 : index
    %c0_223 = arith.constant 0 : index
    %c0_224 = arith.constant 0 : index
    %181 = vector.load %arg18[%c0_221, %c5_222, %c0_223, %c0_224] : memref<1x26x16x4xf32, #tpu.memory_space<vmem>>, vector<1x16x16x4xf32>
    tpu.vector_store %arg18[%c0_221, %c5_222, %c0_223, %c0_224], %180 {strides = array<i32>} : memref<1x26x16x4xf32, #tpu.memory_space<vmem>>, vector<1x16x16x4xf32>,
    %c0_225 = arith.constant 0 : index
    %c0_226 = arith.constant 0 : index
    %182 = vector.load %arg11[%c0_225, %c0_226] : memref<11x4xf32, #tpu.memory_space<vmem>>, vector<11x4xf32>
    %c0_227 = arith.constant 0 : index
    %c0_228 = arith.constant 0 : index
    %c0_229 = arith.constant 0 : index
    %c0_230 = arith.constant 0 : index
    %183 = vector.load %arg18[%c0_227, %c0_228, %c0_229, %c0_230] : memref<1x26x16x4xf32, #tpu.memory_space<vmem>>, vector<1x16x16x4xf32>
    %184 = vector.extract_strided_slice %182 {offsets = [0, 0], sizes = [1, 4], strides = [1, 1]} : vector<11x4xf32> to vector<1x4xf32>
    %185 = vector.shape_cast %184 : vector<1x4xf32> to vector<4xf32>
    %186 = vector.shape_cast %185 : vector<4xf32> to vector<1x1x1x4xf32>
    %187 = vector.broadcast %186 : vector<1x1x1x4xf32> to vector<1x16x16x4xf32>
    %188 = arith.mulf %183, %187 : vector<1x16x16x4xf32>
    %c0_231 = arith.constant 0 : index
    %c1 = arith.constant 1 : index
    %c0_232 = arith.constant 0 : index
    %c0_233 = arith.constant 0 : index
    %189 = vector.load %arg18[%c0_231, %c1, %c0_232, %c0_233] : memref<1x26x16x4xf32, #tpu.memory_space<vmem>>, vector<1x16x16x4xf32>
    %190 = vector.extract_strided_slice %182 {offsets = [1, 0], sizes = [1, 4], strides = [1, 1]} : vector<11x4xf32> to vector<1x4xf32>
    %191 = vector.shape_cast %190 : vector<1x4xf32> to vector<4xf32>
    %192 = vector.shape_cast %191 : vector<4xf32> to vector<1x1x1x4xf32>
    %193 = vector.broadcast %192 : vector<1x1x1x4xf32> to vector<1x16x16x4xf32>
    %194 = arith.mulf %189, %193 : vector<1x16x16x4xf32>
    %195 = arith.addf %188, %194 : vector<1x16x16x4xf32>
    %c0_234 = arith.constant 0 : index
    %c2_235 = arith.constant 2 : index
    %c0_236 = arith.constant 0 : index
    %c0_237 = arith.constant 0 : index
    %196 = vector.load %arg18[%c0_234, %c2_235, %c0_236, %c0_237] : memref<1x26x16x4xf32, #tpu.memory_space<vmem>>, vector<1x16x16x4xf32>
    %197 = vector.extract_strided_slice %182 {offsets = [2, 0], sizes = [1, 4], strides = [1, 1]} : vector<11x4xf32> to vector<1x4xf32>
    %198 = vector.shape_cast %197 : vector<1x4xf32> to vector<4xf32>
    %199 = vector.shape_cast %198 : vector<4xf32> to vector<1x1x1x4xf32>
    %200 = vector.broadcast %199 : vector<1x1x1x4xf32> to vector<1x16x16x4xf32>
    %201 = arith.mulf %196, %200 : vector<1x16x16x4xf32>
    %202 = arith.addf %195, %201 : vector<1x16x16x4xf32>
    %c0_238 = arith.constant 0 : index
    %c3_239 = arith.constant 3 : index
    %c0_240 = arith.constant 0 : index
    %c0_241 = arith.constant 0 : index
    %203 = vector.load %arg18[%c0_238, %c3_239, %c0_240, %c0_241] : memref<1x26x16x4xf32, #tpu.memory_space<vmem>>, vector<1x16x16x4xf32>
    %204 = vector.extract_strided_slice %182 {offsets = [3, 0], sizes = [1, 4], strides = [1, 1]} : vector<11x4xf32> to vector<1x4xf32>
    %205 = vector.shape_cast %204 : vector<1x4xf32> to vector<4xf32>
    %206 = vector.shape_cast %205 : vector<4xf32> to vector<1x1x1x4xf32>
    %207 = vector.broadcast %206 : vector<1x1x1x4xf32> to vector<1x16x16x4xf32>
    %208 = arith.mulf %203, %207 : vector<1x16x16x4xf32>
    %209 = arith.addf %202, %208 : vector<1x16x16x4xf32>
    %c0_242 = arith.constant 0 : index
    %c4_243 = arith.constant 4 : index
    %c0_244 = arith.constant 0 : index
    %c0_245 = arith.constant 0 : index
    %210 = vector.load %arg18[%c0_242, %c4_243, %c0_244, %c0_245] : memref<1x26x16x4xf32, #tpu.memory_space<vmem>>, vector<1x16x16x4xf32>
    %211 = vector.extract_strided_slice %182 {offsets = [4, 0], sizes = [1, 4], strides = [1, 1]} : vector<11x4xf32> to vector<1x4xf32>
    %212 = vector.shape_cast %211 : vector<1x4xf32> to vector<4xf32>
    %213 = vector.shape_cast %212 : vector<4xf32> to vector<1x1x1x4xf32>
    %214 = vector.broadcast %213 : vector<1x1x1x4xf32> to vector<1x16x16x4xf32>
    %215 = arith.mulf %210, %214 : vector<1x16x16x4xf32>
    %216 = arith.addf %209, %215 : vector<1x16x16x4xf32>
    %c0_246 = arith.constant 0 : index
    %c5_247 = arith.constant 5 : index
    %c0_248 = arith.constant 0 : index
    %c0_249 = arith.constant 0 : index
    %217 = vector.load %arg18[%c0_246, %c5_247, %c0_248, %c0_249] : memref<1x26x16x4xf32, #tpu.memory_space<vmem>>, vector<1x16x16x4xf32>
    %218 = vector.extract_strided_slice %182 {offsets = [5, 0], sizes = [1, 4], strides = [1, 1]} : vector<11x4xf32> to vector<1x4xf32>
    %219 = vector.shape_cast %218 : vector<1x4xf32> to vector<4xf32>
    %220 = vector.shape_cast %219 : vector<4xf32> to vector<1x1x1x4xf32>
    %221 = vector.broadcast %220 : vector<1x1x1x4xf32> to vector<1x16x16x4xf32>
    %222 = arith.mulf %217, %221 : vector<1x16x16x4xf32>
    %223 = arith.addf %216, %222 : vector<1x16x16x4xf32>
    %c0_250 = arith.constant 0 : index
    %c6_251 = arith.constant 6 : index
    %c0_252 = arith.constant 0 : index
    %c0_253 = arith.constant 0 : index
    %224 = vector.load %arg18[%c0_250, %c6_251, %c0_252, %c0_253] : memref<1x26x16x4xf32, #tpu.memory_space<vmem>>, vector<1x16x16x4xf32>
    %225 = vector.extract_strided_slice %182 {offsets = [6, 0], sizes = [1, 4], strides = [1, 1]} : vector<11x4xf32> to vector<1x4xf32>
    %226 = vector.shape_cast %225 : vector<1x4xf32> to vector<4xf32>
    %227 = vector.shape_cast %226 : vector<4xf32> to vector<1x1x1x4xf32>
    %228 = vector.broadcast %227 : vector<1x1x1x4xf32> to vector<1x16x16x4xf32>
    %229 = arith.mulf %224, %228 : vector<1x16x16x4xf32>
    %230 = arith.addf %223, %229 : vector<1x16x16x4xf32>
    %c0_254 = arith.constant 0 : index
    %c7_255 = arith.constant 7 : index
    %c0_256 = arith.constant 0 : index
    %c0_257 = arith.constant 0 : index
    %231 = vector.load %arg18[%c0_254, %c7_255, %c0_256, %c0_257] : memref<1x26x16x4xf32, #tpu.memory_space<vmem>>, vector<1x16x16x4xf32>
    %232 = vector.extract_strided_slice %182 {offsets = [7, 0], sizes = [1, 4], strides = [1, 1]} : vector<11x4xf32> to vector<1x4xf32>
    %233 = vector.shape_cast %232 : vector<1x4xf32> to vector<4xf32>
    %234 = vector.shape_cast %233 : vector<4xf32> to vector<1x1x1x4xf32>
    %235 = vector.broadcast %234 : vector<1x1x1x4xf32> to vector<1x16x16x4xf32>
    %236 = arith.mulf %231, %235 : vector<1x16x16x4xf32>
    %237 = arith.addf %230, %236 : vector<1x16x16x4xf32>
    %c0_258 = arith.constant 0 : index
    %c8_259 = arith.constant 8 : index
    %c0_260 = arith.constant 0 : index
    %c0_261 = arith.constant 0 : index
    %238 = vector.load %arg18[%c0_258, %c8_259, %c0_260, %c0_261] : memref<1x26x16x4xf32, #tpu.memory_space<vmem>>, vector<1x16x16x4xf32>
    %239 = vector.extract_strided_slice %182 {offsets = [8, 0], sizes = [1, 4], strides = [1, 1]} : vector<11x4xf32> to vector<1x4xf32>
    %240 = vector.shape_cast %239 : vector<1x4xf32> to vector<4xf32>
    %241 = vector.shape_cast %240 : vector<4xf32> to vector<1x1x1x4xf32>
    %242 = vector.broadcast %241 : vector<1x1x1x4xf32> to vector<1x16x16x4xf32>
    %243 = arith.mulf %238, %242 : vector<1x16x16x4xf32>
    %244 = arith.addf %237, %243 : vector<1x16x16x4xf32>
    %c0_262 = arith.constant 0 : index
    %c9_263 = arith.constant 9 : index
    %c0_264 = arith.constant 0 : index
    %c0_265 = arith.constant 0 : index
    %245 = vector.load %arg18[%c0_262, %c9_263, %c0_264, %c0_265] : memref<1x26x16x4xf32, #tpu.memory_space<vmem>>, vector<1x16x16x4xf32>
    %246 = vector.extract_strided_slice %182 {offsets = [9, 0], sizes = [1, 4], strides = [1, 1]} : vector<11x4xf32> to vector<1x4xf32>
    %247 = vector.shape_cast %246 : vector<1x4xf32> to vector<4xf32>
    %248 = vector.shape_cast %247 : vector<4xf32> to vector<1x1x1x4xf32>
    %249 = vector.broadcast %248 : vector<1x1x1x4xf32> to vector<1x16x16x4xf32>
    %250 = arith.mulf %245, %249 : vector<1x16x16x4xf32>
    %251 = arith.addf %244, %250 : vector<1x16x16x4xf32>
    %c0_266 = arith.constant 0 : index
    %c10_267 = arith.constant 10 : index
    %c0_268 = arith.constant 0 : index
    %c0_269 = arith.constant 0 : index
    %252 = vector.load %arg18[%c0_266, %c10_267, %c0_268, %c0_269] : memref<1x26x16x4xf32, #tpu.memory_space<vmem>>, vector<1x16x16x4xf32>
    %253 = vector.extract_strided_slice %182 {offsets = [10, 0], sizes = [1, 4], strides = [1, 1]} : vector<11x4xf32> to vector<1x4xf32>
    %254 = vector.shape_cast %253 : vector<1x4xf32> to vector<4xf32>
    %255 = vector.shape_cast %254 : vector<4xf32> to vector<1x1x1x4xf32>
    %256 = vector.broadcast %255 : vector<1x1x1x4xf32> to vector<1x16x16x4xf32>
    %257 = arith.mulf %252, %256 : vector<1x16x16x4xf32>
    %258 = arith.addf %251, %257 : vector<1x16x16x4xf32>
    %c0_270 = arith.constant 0 : index
    %c0_271 = arith.constant 0 : index
    %259 = vector.load %arg12[%c0_270, %c0_271] : memref<1x4xf32, #tpu.memory_space<vmem>>, vector<1x4xf32>
    %260 = vector.shape_cast %259 : vector<1x4xf32> to vector<1x1x1x4xf32>
    %261 = vector.broadcast %260 : vector<1x1x1x4xf32> to vector<1x16x16x4xf32>
    %262 = arith.addf %258, %261 : vector<1x16x16x4xf32>
    %263 = vector.shape_cast %262 : vector<1x16x16x4xf32> to vector<256x4xf32>
    %c0_272 = arith.constant 0 : index
    %c0_273 = arith.constant 0 : index
    %264 = vector.load %arg13[%c0_272, %c0_273] : memref<4x4xf32, #tpu.memory_space<vmem>>, vector<4x4xf32>
    %cst_274 = arith.constant dense<0.000000e+00> : vector<256x4xf32>
    %265 = tpu.matmul %263, %264, %cst_274 {dimension_numbers = #tpu.dot_dimension_numbers<[1], [0], [0], [1], [0, 0, 1, 1], [], []>} : vector<256x4xf32>, vector<4x4xf32>, vector<256x4xf32> -> vector<256x4xf32>
    %c0_275 = arith.constant 0 : index
    %c0_276 = arith.constant 0 : index
    %266 = vector.load %arg14[%c0_275, %c0_276] : memref<1x4xf32, #tpu.memory_space<vmem>>, vector<1x4xf32>
    %267 = vector.broadcast %266 : vector<1x4xf32> to vector<256x4xf32>
    %268 = arith.mulf %265, %267 : vector<256x4xf32>
    %c0_277 = arith.constant 0 : index
    %c0_278 = arith.constant 0 : index
    %269 = vector.load %arg15[%c0_277, %c0_278] : memref<1x4xf32, #tpu.memory_space<vmem>>, vector<1x4xf32>
    %270 = vector.broadcast %269 : vector<1x4xf32> to vector<256x4xf32>
    %271 = arith.addf %268, %270 : vector<256x4xf32>
    %272 = arith.negf %271 : vector<256x4xf32>
    %273 = math.exp %272 : vector<256x4xf32>
    %cst_279 = arith.constant 1.000000e+00 : f32
    %274 = vector.broadcast %cst_279 : f32 to vector<256x4xf32>
    %275 = arith.addf %274, %273 : vector<256x4xf32>
    %276 = arith.divf %274, %275 : vector<256x4xf32>
    %277 = arith.mulf %271, %276 : vector<256x4xf32>
    %278 = arith.negf %277 : vector<256x4xf32>
    %279 = math.exp %278 : vector<256x4xf32>
    %cst_280 = arith.constant 1.000000e+00 : f32
    %280 = vector.broadcast %cst_280 : f32 to vector<256x4xf32>
    %281 = arith.addf %280, %279 : vector<256x4xf32>
    %282 = arith.divf %280, %281 : vector<256x4xf32>
    %283 = vector.shape_cast %282 : vector<256x4xf32> to vector<1x16x16x4xf32>
    %c0_281 = arith.constant 0 : index
    %c0_282 = arith.constant 0 : index
    %c0_283 = arith.constant 0 : index
    %c0_284 = arith.constant 0 : index
    %284 = vector.load %arg2[%c0_281, %c0_282, %c0_283, %c0_284] : memref<1x16x16x4xf32, #tpu.memory_space<vmem>>, vector<1x16x16x4xf32>
    %285 = arith.mulf %284, %283 : vector<1x16x16x4xf32>
    %286 = arith.addf %285, %284 : vector<1x16x16x4xf32>
    %c0_285 = arith.constant 0 : index
    %c0_286 = arith.constant 0 : index
    %c0_287 = arith.constant 0 : index
    %c0_288 = arith.constant 0 : index
    %287 = vector.load %arg16[%c0_285, %c0_286, %c0_287, %c0_288] : memref<1x16x16x4xf32, #tpu.memory_space<vmem>>, vector<1x16x16x4xf32>
    tpu.vector_store %arg16[%c0_285, %c0_286, %c0_287, %c0_288], %286 {strides = array<i32>} : memref<1x16x16x4xf32, #tpu.memory_space<vmem>>, vector<1x16x16x4xf32>,
    return
  }
  func.func @transform_0(%arg0: i32) -> (i32, i32, i32, i32) {
    %c0_i32 = arith.constant 0 : i32
    %c0_i32_0 = arith.constant 0 : i32
    %c0_i32_1 = arith.constant 0 : i32
    %c0_i32_2 = arith.constant 0 : i32
    return %arg0, %c0_i32, %c0_i32_0, %c0_i32_1 : i32, i32, i32, i32
  }
  func.func @transform_1(%arg0: i32) -> (i32, i32, i32, i32) {
    %c0_i32 = arith.constant 0 : i32
    %c0_i32_0 = arith.constant 0 : i32
    %c0_i32_1 = arith.constant 0 : i32
    %c0_i32_2 = arith.constant 0 : i32
    return %arg0, %c0_i32, %c0_i32_0, %c0_i32_1 : i32, i32, i32, i32
  }
  func.func @transform_2(%arg0: i32) -> (i32, i32) {
    %c0_i32 = arith.constant 0 : i32
    %c0_i32_0 = arith.constant 0 : i32
    %c0_i32_1 = arith.constant 0 : i32
    return %c0_i32, %c0_i32_0 : i32, i32
  }
  func.func @transform_3(%arg0: i32) -> (i32, i32) {
    %c0_i32 = arith.constant 0 : i32
    %c0_i32_0 = arith.constant 0 : i32
    %c0_i32_1 = arith.constant 0 : i32
    return %c0_i32, %c0_i32_0 : i32, i32
  }
  func.func @transform_4(%arg0: i32) -> (i32, i32) {
    %c0_i32 = arith.constant 0 : i32
    %c0_i32_0 = arith.constant 0 : i32
    %c0_i32_1 = arith.constant 0 : i32
    return %c0_i32, %c0_i32_0 : i32, i32
  }
  func.func @transform_5(%arg0: i32) -> (i32, i32) {
    %c0_i32 = arith.constant 0 : i32
    %c0_i32_0 = arith.constant 0 : i32
    %c0_i32_1 = arith.constant 0 : i32
    return %c0_i32, %c0_i32_0 : i32, i32
  }
  func.func @transform_6(%arg0: i32) -> (i32, i32) {
    %c0_i32 = arith.constant 0 : i32
    %c0_i32_0 = arith.constant 0 : i32
    %c0_i32_1 = arith.constant 0 : i32
    return %c0_i32, %c0_i32_0 : i32, i32
  }
  func.func @transform_7(%arg0: i32) -> (i32, i32) {
    %c0_i32 = arith.constant 0 : i32
    %c0_i32_0 = arith.constant 0 : i32
    %c0_i32_1 = arith.constant 0 : i32
    return %c0_i32, %c0_i32_0 : i32, i32
  }
  func.func @transform_8(%arg0: i32) -> (i32, i32) {
    %c0_i32 = arith.constant 0 : i32
    %c0_i32_0 = arith.constant 0 : i32
    %c0_i32_1 = arith.constant 0 : i32
    return %c0_i32, %c0_i32_0 : i32, i32
  }
  func.func @transform_9(%arg0: i32) -> (i32, i32) {
    %c0_i32 = arith.constant 0 : i32
    %c0_i32_0 = arith.constant 0 : i32
    %c0_i32_1 = arith.constant 0 : i32
    return %c0_i32, %c0_i32_0 : i32, i32
  }
  func.func @transform_10(%arg0: i32) -> (i32, i32) {
    %c0_i32 = arith.constant 0 : i32
    %c0_i32_0 = arith.constant 0 : i32
    %c0_i32_1 = arith.constant 0 : i32
    return %c0_i32, %c0_i32_0 : i32, i32
  }
  func.func @transform_11(%arg0: i32) -> (i32, i32) {
    %c0_i32 = arith.constant 0 : i32
    %c0_i32_0 = arith.constant 0 : i32
    %c0_i32_1 = arith.constant 0 : i32
    return %c0_i32, %c0_i32_0 : i32, i32
  }
  func.func @transform_12(%arg0: i32) -> (i32, i32) {
    %c0_i32 = arith.constant 0 : i32
    %c0_i32_0 = arith.constant 0 : i32
    %c0_i32_1 = arith.constant 0 : i32
    return %c0_i32, %c0_i32_0 : i32, i32
  }
  func.func @transform_13(%arg0: i32) -> (i32, i32) {
    %c0_i32 = arith.constant 0 : i32
    %c0_i32_0 = arith.constant 0 : i32
    %c0_i32_1 = arith.constant 0 : i32
    return %c0_i32, %c0_i32_0 : i32, i32
  }
  func.func @transform_14(%arg0: i32) -> (i32, i32) {
    %c0_i32 = arith.constant 0 : i32
    %c0_i32_0 = arith.constant 0 : i32
    %c0_i32_1 = arith.constant 0 : i32
    return %c0_i32, %c0_i32_0 : i32, i32
  }
  func.func @transform_15(%arg0: i32) -> (i32, i32, i32, i32) {
    %c0_i32 = arith.constant 0 : i32
    %c0_i32_0 = arith.constant 0 : i32
    %c0_i32_1 = arith.constant 0 : i32
    %c0_i32_2 = arith.constant 0 : i32
    return %arg0, %c0_i32, %c0_i32_0, %c0_i32_1 : i32, i32, i32, i32
  }
}

</mosaic_0001>

<llo_original>
// kernel: tpu_custom_call.1
$region0: #{tpu_custom_call.1}
  #allocation0 [shape = 'u32[]', space=smem, size = 0x4, offset = 0x4, fixed_abs, tag = 'smem constant byte address 0x4 - core index']
  #allocation1 [shape = 'u32[144,128]{1,0:T(1,128)}', space=vmem, size = 0x12000, scoped, tag = 'internal scratch']
  #allocation2 [shape = 'f32[1,16,32,4]{3,2,1,0:T(8,128)}', space=vmem, size = 0x40000, scoped, tag = 'scratch operand']
  #allocation3 [shape = 'f32[1,26,16,4]{3,2,1,0:T(8,128)}', space=vmem, size = 0x34000, scoped, tag = 'scratch operand']
  %s0 = inlined_call_operand.vmem [shape: f32[2,16,16,4], index: 0, kind: input, shape index: {}]
  %s1 = inlined_call_operand.vmem [shape: f32[2,16,16,4], index: 1, kind: input, shape index: {}]
  %s2 = inlined_call_operand.vmem [shape: f32[4,4], index: 2, kind: input, shape index: {}]
  %s3 = inlined_call_operand.vmem [shape: f32[1,4], index: 3, kind: input, shape index: {}]
  %s4 = inlined_call_operand.vmem [shape: f32[4,4], index: 4, kind: input, shape index: {}]
  %s5 = inlined_call_operand.vmem [shape: f32[4,4], index: 5, kind: input, shape index: {}]
  %s6 = inlined_call_operand.vmem [shape: f32[1,4], index: 6, kind: input, shape index: {}]
  %s7 = inlined_call_operand.vmem [shape: f32[1,4], index: 7, kind: input, shape index: {}]
  %s8 = inlined_call_operand.vmem [shape: f32[11,4], index: 8, kind: input, shape index: {}]
  %s9 = inlined_call_operand.vmem [shape: f32[1,4], index: 9, kind: input, shape index: {}]
  %s10 = inlined_call_operand.vmem [shape: f32[11,4], index: 10, kind: input, shape index: {}]
  %s11 = inlined_call_operand.vmem [shape: f32[1,4], index: 11, kind: input, shape index: {}]
  %s12 = inlined_call_operand.vmem [shape: f32[4,4], index: 12, kind: input, shape index: {}]
  %s13 = inlined_call_operand.vmem [shape: f32[1,4], index: 13, kind: input, shape index: {}]
  %s14 = inlined_call_operand.vmem [shape: f32[1,4], index: 14, kind: input, shape index: {}]
  %s15 = inlined_call_operand.vmem [shape: f32[2,16,16,4], index: 15, kind: output, shape index: {}]
  %s16 = sld [smem:[#allocation0]]
  $region93: #{tpu_custom_call.1} parent=0
    _
  %s18 = ssub.s32 1, %s16
  %s19 = scalar_select 0, %s18, %s16
  loop: start=0, step=1, limit=4
  $region2: #{tpu_custom_call.1} parent=0 // loop_pre_header
    _
  $region3: #{tpu_custom_call.1} parent=0 // loop_header
    %s21 = sphi 0, %s25
    %p22 = scmp.ge.s32.totalorder %s21, 4
    %s31 = sphi 0, %s33
    %s34 = sphi 0, %s31
    %s35 = sphi 0, %s34
    %s51 = sphi 0, %s35
    %s57 = sphi 0, %s59
    %s60 = sphi 0, %s57
    %s61 = sphi 0, %s60
    %s77 = sphi 0, %s61
    %s81 = sphi 0, %s81
    %s83 = sphi 0, %s81
    %s84 = sphi 0, %s83
    %s98 = sphi 0, %s84
    %s102 = sphi 0, %s102
    %s104 = sphi 0, %s102
    %s105 = sphi 0, %s104
    %s119 = sphi 0, %s105
    %s123 = sphi 0, %s123
    %s125 = sphi 0, %s123
    %s126 = sphi 0, %s125
    %s140 = sphi 0, %s126
    %s144 = sphi 0, %s144
    %s146 = sphi 0, %s144
    %s147 = sphi 0, %s146
    %s161 = sphi 0, %s147
    %s165 = sphi 0, %s165
    %s167 = sphi 0, %s165
    %s168 = sphi 0, %s167
    %s182 = sphi 0, %s168
    %s186 = sphi 0, %s186
    %s188 = sphi 0, %s186
    %s189 = sphi 0, %s188
    %s203 = sphi 0, %s189
    %s207 = sphi 0, %s207
    %s209 = sphi 0, %s207
    %s210 = sphi 0, %s209
    %s224 = sphi 0, %s210
    %s228 = sphi 0, %s228
    %s230 = sphi 0, %s228
    %s231 = sphi 0, %s230
    %s245 = sphi 0, %s231
    %s249 = sphi 0, %s249
    %s251 = sphi 0, %s249
    %s252 = sphi 0, %s251
    %s266 = sphi 0, %s252
    %s270 = sphi 0, %s270
    %s272 = sphi 0, %s270
    %s273 = sphi 0, %s272
    %s287 = sphi 0, %s273
    %s291 = sphi 0, %s291
    %s293 = sphi 0, %s291
    %s294 = sphi 0, %s293
    %s308 = sphi 0, %s294
    %s312 = sphi 0, %s312
    %s314 = sphi 0, %s312
    %s315 = sphi 0, %s314
    %s329 = sphi 0, %s315
    %s333 = sphi 0, %s333
    %s335 = sphi 0, %s333
    %s336 = sphi 0, %s335
    %s350 = sphi 0, %s336
    %s356 = sphi 0, %s358
    %s359 = sphi 0, %s356
    %s360 = sphi 0, %s359
    %s376 = sphi 0, %s360
  $region4: #{tpu_custom_call.1} parent=0 // loop_header_branch
    %24 = sbr.rel (%p22) target = $region8
  $region5: #{tpu_custom_call.1} parent=0 // loop_body
    %s26 = ssub.s32 %s21, 1
    %s27 = ssub.s32 %s21, 2
    %s28 = sadd.s32 %s21, 1
    %s29 = ssub.s32 %s21, %s28
    %p30 = scmp.eq.s32.totalorder %s29, 0
    %s32 = sadd.s32 %s31, 1
    %s33 = scalar_select %p30, %s31, %s32
    %p36 = pneg %p30
    %p37 = scmp.eq.s32.totalorder %s21, 1
    %p38 = por %p36, %p37
    %p39 = scmp.ne.s32.totalorder %s31, %s34
    %p40 = scmp.eq.s32.totalorder %s21, 0
    %p41 = por %p39, %p40
    %p42 = scmp.ne.s32.totalorder %s31, %s34
    %p43 = scmp.eq.s32.totalorder %s26, 1
    %p44 = por %p42, %p43
    %p45 = scmp.ne.s32.totalorder %s34, %s35
    %p46 = scmp.eq.s32.totalorder %s26, 0
    %p47 = por %p45, %p46
    %p48 = scmp.ne.s32.totalorder %s34, %s35
    %p49 = scmp.eq.s32.totalorder %s27, 1
    %p50 = por %p48, %p49
    %p52 = scmp.ne.s32.totalorder %s35, %s51
    %p53 = scmp.eq.s32.totalorder %s27, 0
    %p54 = por %p52, %p53
    %s55 = ssub.s32 %s21, %s28
    %p56 = scmp.eq.s32.totalorder %s55, 0
    %s58 = sadd.s32 %s57, 1
    %s59 = scalar_select %p56, %s57, %s58
    %p62 = pneg %p56
    %p63 = scmp.eq.s32.totalorder %s21, 1
    %p64 = por %p62, %p63
    %p65 = scmp.ne.s32.totalorder %s57, %s60
    %p66 = scmp.eq.s32.totalorder %s21, 0
    %p67 = por %p65, %p66
    %p68 = scmp.ne.s32.totalorder %s57, %s60
    %p69 = scmp.eq.s32.totalorder %s26, 1
    %p70 = por %p68, %p69
    %p71 = scmp.ne.s32.totalorder %s60, %s61
    %p72 = scmp.eq.s32.totalorder %s26, 0
    %p73 = por %p71, %p72
    %p74 = scmp.ne.s32.totalorder %s60, %s61
    %p75 = scmp.eq.s32.totalorder %s27, 1
    %p76 = por %p74, %p75
    %p78 = scmp.ne.s32.totalorder %s61, %s77
    %p79 = scmp.eq.s32.totalorder %s27, 0
    %p80 = por %p78, %p79
    %s82 = sadd.s32 %s81, 1
    %p85 = scmp.eq.s32.totalorder %s21, 1
    %p86 = scmp.ne.s32.totalorder %s81, %s83
    %p87 = scmp.eq.s32.totalorder %s21, 0
    %p88 = por %p86, %p87
    %p89 = scmp.ne.s32.totalorder %s81, %s83
    %p90 = scmp.eq.s32.totalorder %s26, 1
    %p91 = por %p89, %p90
    %p92 = scmp.ne.s32.totalorder %s83, %s84
    %p93 = scmp.eq.s32.totalorder %s26, 0
    %p94 = por %p92, %p93
    %p95 = scmp.ne.s32.totalorder %s83, %s84
    %p96 = scmp.eq.s32.totalorder %s27, 1
    %p97 = por %p95, %p96
    %p99 = scmp.ne.s32.totalorder %s84, %s98
    %p100 = scmp.eq.s32.totalorder %s27, 0
    %p101 = por %p99, %p100
    %s103 = sadd.s32 %s102, 1
    %p106 = scmp.eq.s32.totalorder %s21, 1
    %p107 = scmp.ne.s32.totalorder %s102, %s104
    %p108 = scmp.eq.s32.totalorder %s21, 0
    %p109 = por %p107, %p108
    %p110 = scmp.ne.s32.totalorder %s102, %s104
    %p111 = scmp.eq.s32.totalorder %s26, 1
    %p112 = por %p110, %p111
    %p113 = scmp.ne.s32.totalorder %s104, %s105
    %p114 = scmp.eq.s32.totalorder %s26, 0
    %p115 = por %p113, %p114
    %p116 = scmp.ne.s32.totalorder %s104, %s105
    %p117 = scmp.eq.s32.totalorder %s27, 1
    %p118 = por %p116, %p117
    %p120 = scmp.ne.s32.totalorder %s105, %s119
    %p121 = scmp.eq.s32.totalorder %s27, 0
    %p122 = por %p120, %p121
    %s124 = sadd.s32 %s123, 1
    %p127 = scmp.eq.s32.totalorder %s21, 1
    %p128 = scmp.ne.s32.totalorder %s123, %s125
    %p129 = scmp.eq.s32.totalorder %s21, 0
    %p130 = por %p128, %p129
    %p131 = scmp.ne.s32.totalorder %s123, %s125
    %p132 = scmp.eq.s32.totalorder %s26, 1
    %p133 = por %p131, %p132
    %p134 = scmp.ne.s32.totalorder %s125, %s126
    %p135 = scmp.eq.s32.totalorder %s26, 0
    %p136 = por %p134, %p135
    %p137 = scmp.ne.s32.totalorder %s125, %s126
    %p138 = scmp.eq.s32.totalorder %s27, 1
    %p139 = por %p137, %p138
    %p141 = scmp.ne.s32.totalorder %s126, %s140
    %p142 = scmp.eq.s32.totalorder %s27, 0
    %p143 = por %p141, %p142
    %s145 = sadd.s32 %s144, 1
    %p148 = scmp.eq.s32.totalorder %s21, 1
    %p149 = scmp.ne.s32.totalorder %s144, %s146
    %p150 = scmp.eq.s32.totalorder %s21, 0
    %p151 = por %p149, %p150
    %p152 = scmp.ne.s32.totalorder %s144, %s146
    %p153 = scmp.eq.s32.totalorder %s26, 1
    %p154 = por %p152, %p153
    %p155 = scmp.ne.s32.totalorder %s146, %s147
    %p156 = scmp.eq.s32.totalorder %s26, 0
    %p157 = por %p155, %p156
    %p158 = scmp.ne.s32.totalorder %s146, %s147
    %p159 = scmp.eq.s32.totalorder %s27, 1
    %p160 = por %p158, %p159
    %p162 = scmp.ne.s32.totalorder %s147, %s161
    %p163 = scmp.eq.s32.totalorder %s27, 0
    %p164 = por %p162, %p163
    %s166 = sadd.s32 %s165, 1
    %p169 = scmp.eq.s32.totalorder %s21, 1
    %p170 = scmp.ne.s32.totalorder %s165, %s167
    %p171 = scmp.eq.s32.totalorder %s21, 0
    %p172 = por %p170, %p171
    %p173 = scmp.ne.s32.totalorder %s165, %s167
    %p174 = scmp.eq.s32.totalorder %s26, 1
    %p175 = por %p173, %p174
    %p176 = scmp.ne.s32.totalorder %s167, %s168
    %p177 = scmp.eq.s32.totalorder %s26, 0
    %p178 = por %p176, %p177
    %p179 = scmp.ne.s32.totalorder %s167, %s168
    %p180 = scmp.eq.s32.totalorder %s27, 1
    %p181 = por %p179, %p180
    %p183 = scmp.ne.s32.totalorder %s168, %s182
    %p184 = scmp.eq.s32.totalorder %s27, 0
    %p185 = por %p183, %p184
    %s187 = sadd.s32 %s186, 1
    %p190 = scmp.eq.s32.totalorder %s21, 1
    %p191 = scmp.ne.s32.totalorder %s186, %s188
    %p192 = scmp.eq.s32.totalorder %s21, 0
    %p193 = por %p191, %p192
    %p194 = scmp.ne.s32.totalorder %s186, %s188
    %p195 = scmp.eq.s32.totalorder %s26, 1
    %p196 = por %p194, %p195
    %p197 = scmp.ne.s32.totalorder %s188, %s189
    %p198 = scmp.eq.s32.totalorder %s26, 0
    %p199 = por %p197, %p198
    %p200 = scmp.ne.s32.totalorder %s188, %s189
    %p201 = scmp.eq.s32.totalorder %s27, 1
    %p202 = por %p200, %p201
    %p204 = scmp.ne.s32.totalorder %s189, %s203
    %p205 = scmp.eq.s32.totalorder %s27, 0
    %p206 = por %p204, %p205
    %s208 = sadd.s32 %s207, 1
    %p211 = scmp.eq.s32.totalorder %s21, 1
    %p212 = scmp.ne.s32.totalorder %s207, %s209
    %p213 = scmp.eq.s32.totalorder %s21, 0
    %p214 = por %p212, %p213
    %p215 = scmp.ne.s32.totalorder %s207, %s209
    %p216 = scmp.eq.s32.totalorder %s26, 1
    %p217 = por %p215, %p216
    %p218 = scmp.ne.s32.totalorder %s209, %s210
    %p219 = scmp.eq.s32.totalorder %s26, 0
    %p220 = por %p218, %p219
    %p221 = scmp.ne.s32.totalorder %s209, %s210
    %p222 = scmp.eq.s32.totalorder %s27, 1
    %p223 = por %p221, %p222
    %p225 = scmp.ne.s32.totalorder %s210, %s224
    %p226 = scmp.eq.s32.totalorder %s27, 0
    %p227 = por %p225, %p226
    %s229 = sadd.s32 %s228, 1
    %p232 = scmp.eq.s32.totalorder %s21, 1
    %p233 = scmp.ne.s32.totalorder %s228, %s230
    %p234 = scmp.eq.s32.totalorder %s21, 0
    %p235 = por %p233, %p234
    %p236 = scmp.ne.s32.totalorder %s228, %s230
    %p237 = scmp.eq.s32.totalorder %s26, 1
    %p238 = por %p236, %p237
    %p239 = scmp.ne.s32.totalorder %s230, %s231
    %p240 = scmp.eq.s32.totalorder %s26, 0
    %p241 = por %p239, %p240
    %p242 = scmp.ne.s32.totalorder %s230, %s231
    %p243 = scmp.eq.s32.totalorder %s27, 1
    %p244 = por %p242, %p243
    %p246 = scmp.ne.s32.totalorder %s231, %s245
    %p247 = scmp.eq.s32.totalorder %s27, 0
    %p248 = por %p246, %p247
    %s250 = sadd.s32 %s249, 1
    %p253 = scmp.eq.s32.totalorder %s21, 1
    %p254 = scmp.ne.s32.totalorder %s249, %s251
    %p255 = scmp.eq.s32.totalorder %s21, 0
    %p256 = por %p254, %p255
    %p257 = scmp.ne.s32.totalorder %s249, %s251
    %p258 = scmp.eq.s32.totalorder %s26, 1
    %p259 = por %p257, %p258
    %p260 = scmp.ne.s32.totalorder %s251, %s252
    %p261 = scmp.eq.s32.totalorder %s26, 0
    %p262 = por %p260, %p261
    %p263 = scmp.ne.s32.totalorder %s251, %s252
    %p264 = scmp.eq.s32.totalorder %s27, 1
    %p265 = por %p263, %p264
    %p267 = scmp.ne.s32.totalorder %s252, %s266
    %p268 = scmp.eq.s32.totalorder %s27, 0
    %p269 = por %p267, %p268
    %s271 = sadd.s32 %s270, 1
    %p274 = scmp.eq.s32.totalorder %s21, 1
    %p275 = scmp.ne.s32.totalorder %s270, %s272
    %p276 = scmp.eq.s32.totalorder %s21, 0
    %p277 = por %p275, %p276
    %p278 = scmp.ne.s32.totalorder %s270, %s272
    %p279 = scmp.eq.s32.totalorder %s26, 1
    %p280 = por %p278, %p279
    %p281 = scmp.ne.s32.totalorder %s272, %s273
    %p282 = scmp.eq.s32.totalorder %s26, 0
    %p283 = por %p281, %p282
    %p284 = scmp.ne.s32.totalorder %s272, %s273
    %p285 = scmp.eq.s32.totalorder %s27, 1
    %p286 = por %p284, %p285
    %p288 = scmp.ne.s32.totalorder %s273, %s287
    %p289 = scmp.eq.s32.totalorder %s27, 0
    %p290 = por %p288, %p289
    %s292 = sadd.s32 %s291, 1
    %p295 = scmp.eq.s32.totalorder %s21, 1
    %p296 = scmp.ne.s32.totalorder %s291, %s293
    %p297 = scmp.eq.s32.totalorder %s21, 0
    %p298 = por %p296, %p297
    %p299 = scmp.ne.s32.totalorder %s291, %s293
    %p300 = scmp.eq.s32.totalorder %s26, 1
    %p301 = por %p299, %p300
    %p302 = scmp.ne.s32.totalorder %s293, %s294
    %p303 = scmp.eq.s32.totalorder %s26, 0
    %p304 = por %p302, %p303
    %p305 = scmp.ne.s32.totalorder %s293, %s294
    %p306 = scmp.eq.s32.totalorder %s27, 1
    %p307 = por %p305, %p306
    %p309 = scmp.ne.s32.totalorder %s294, %s308
    %p310 = scmp.eq.s32.totalorder %s27, 0
    %p311 = por %p309, %p310
    %s313 = sadd.s32 %s312, 1
    %p316 = scmp.eq.s32.totalorder %s21, 1
    %p317 = scmp.ne.s32.totalorder %s312, %s314
    %p318 = scmp.eq.s32.totalorder %s21, 0
    %p319 = por %p317, %p318
    %p320 = scmp.ne.s32.totalorder %s312, %s314
    %p321 = scmp.eq.s32.totalorder %s26, 1
    %p322 = por %p320, %p321
    %p323 = scmp.ne.s32.totalorder %s314, %s315
    %p324 = scmp.eq.s32.totalorder %s26, 0
    %p325 = por %p323, %p324
    %p326 = scmp.ne.s32.totalorder %s314, %s315
    %p327 = scmp.eq.s32.totalorder %s27, 1
    %p328 = por %p326, %p327
    %p330 = scmp.ne.s32.totalorder %s315, %s329
    %p331 = scmp.eq.s32.totalorder %s27, 0
    %p332 = por %p330, %p331
    %s334 = sadd.s32 %s333, 1
    %p337 = scmp.eq.s32.totalorder %s21, 1
    %p338 = scmp.ne.s32.totalorder %s333, %s335
    %p339 = scmp.eq.s32.totalorder %s21, 0
    %p340 = por %p338, %p339
    %p341 = scmp.ne.s32.totalorder %s333, %s335
    %p342 = scmp.eq.s32.totalorder %s26, 1
    %p343 = por %p341, %p342
    %p344 = scmp.ne.s32.totalorder %s335, %s336
    %p345 = scmp.eq.s32.totalorder %s26, 0
    %p346 = por %p344, %p345
    %p347 = scmp.ne.s32.totalorder %s335, %s336
    %p348 = scmp.eq.s32.totalorder %s27, 1
    %p349 = por %p347, %p348
    %p351 = scmp.ne.s32.totalorder %s336, %s350
    %p352 = scmp.eq.s32.totalorder %s27, 0
    %p353 = por %p351, %p352
    %s354 = ssub.s32 %s21, %s28
    %p355 = scmp.eq.s32.totalorder %s354, 0
    %s357 = sadd.s32 %s356, 1
    %s358 = scalar_select %p355, %s356, %s357
    %p361 = pneg %p355
    %p362 = scmp.eq.s32.totalorder %s21, 1
    %p363 = por %p361, %p362
    %p364 = scmp.ne.s32.totalorder %s356, %s359
    %p365 = scmp.eq.s32.totalorder %s21, 0
    %p366 = por %p364, %p365
    %p367 = scmp.ne.s32.totalorder %s356, %s359
    %p368 = scmp.eq.s32.totalorder %s26, 1
    %p369 = por %p367, %p368
    %p370 = scmp.ne.s32.totalorder %s359, %s360
    %p371 = scmp.eq.s32.totalorder %s26, 0
    %p372 = por %p370, %p371
    %p373 = scmp.ne.s32.totalorder %s359, %s360
    %p374 = scmp.eq.s32.totalorder %s27, 1
    %p375 = por %p373, %p374
    %p377 = scmp.ne.s32.totalorder %s360, %s376
    %p378 = scmp.eq.s32.totalorder %s27, 0
    %p379 = por %p377, %p378
    %p380 = scmp.le.s32.totalorder 1, %s21
    %p381 = scmp.lt.s32.totalorder %s21, 3
    %p382 = pnand %p380, %p381
    %p383 = pneg %p382
    // Predicated region
    $region9: #{tpu_custom_call.1} parent=5 // pred_check
      _
    $region10: #{tpu_custom_call.1} parent=5 // pred_check_branch
      %385 = sbr.rel (%p382) target = $region12
    $region11: #{tpu_custom_call.1} parent=5 // pred_region
      %s386 = ssub.s32 %s21, 1
      // Predicated region
      $region13: #{tpu_custom_call.1} parent=11 // pred_check
        %p387 = pneg %p94
      $region14: #{tpu_custom_call.1} parent=11 // pred_check_branch
        %389 = sbr.rel (%p387) target = $region16
      $region15: #{tpu_custom_call.1} parent=11 // pred_region
        _
      $region16: #{tpu_custom_call.1} parent=11 // pred_fallthru
        _
      // Predicated region
      $region17: #{tpu_custom_call.1} parent=11 // pred_check
        %p390 = pneg %p115
      $region18: #{tpu_custom_call.1} parent=11 // pred_check_branch
        %392 = sbr.rel (%p390) target = $region20
      $region19: #{tpu_custom_call.1} parent=11 // pred_region
        _
      $region20: #{tpu_custom_call.1} parent=11 // pred_fallthru
        _
      // Predicated region
      $region21: #{tpu_custom_call.1} parent=11 // pred_check
        %p393 = pneg %p136
      $region22: #{tpu_custom_call.1} parent=11 // pred_check_branch
        %395 = sbr.rel (%p393) target = $region24
      $region23: #{tpu_custom_call.1} parent=11 // pred_region
        _
      $region24: #{tpu_custom_call.1} parent=11 // pred_fallthru
        _
      // Predicated region
      $region25: #{tpu_custom_call.1} parent=11 // pred_check
        %p396 = pneg %p157
      $region26: #{tpu_custom_call.1} parent=11 // pred_check_branch
        %398 = sbr.rel (%p396) target = $region28
      $region27: #{tpu_custom_call.1} parent=11 // pred_region
        _
      $region28: #{tpu_custom_call.1} parent=11 // pred_fallthru
        _
      // Predicated region
      $region29: #{tpu_custom_call.1} parent=11 // pred_check
        %p399 = pneg %p178
      $region30: #{tpu_custom_call.1} parent=11 // pred_check_branch
        %401 = sbr.rel (%p399) target = $region32
      $region31: #{tpu_custom_call.1} parent=11 // pred_region
        _
      $region32: #{tpu_custom_call.1} parent=11 // pred_fallthru
        _
      // Predicated region
      $region33: #{tpu_custom_call.1} parent=11 // pred_check
        %p402 = pneg %p199
      $region34: #{tpu_custom_call.1} parent=11 // pred_check_branch
        %404 = sbr.rel (%p402) target = $region36
      $region35: #{tpu_custom_call.1} parent=11 // pred_region
        _
      $region36: #{tpu_custom_call.1} parent=11 // pred_fallthru
        _
      // Predicated region
      $region37: #{tpu_custom_call.1} parent=11 // pred_check
        %p405 = pneg %p220
      $region38: #{tpu_custom_call.1} parent=11 // pred_check_branch
        %407 = sbr.rel (%p405) target = $region40
      $region39: #{tpu_custom_call.1} parent=11 // pred_region
        _
      $region40: #{tpu_custom_call.1} parent=11 // pred_fallthru
        _
      // Predicated region
      $region41: #{tpu_custom_call.1} parent=11 // pred_check
        %p408 = pneg %p241
      $region42: #{tpu_custom_call.1} parent=11 // pred_check_branch
        %410 = sbr.rel (%p408) target = $region44
      $region43: #{tpu_custom_call.1} parent=11 // pred_region
        _
      $region44: #{tpu_custom_call.1} parent=11 // pred_fallthru
        _
      // Predicated region
      $region45: #{tpu_custom_call.1} parent=11 // pred_check
        %p411 = pneg %p262
      $region46: #{tpu_custom_call.1} parent=11 // pred_check_branch
        %413 = sbr.rel (%p411) target = $region48
      $region47: #{tpu_custom_call.1} parent=11 // pred_region
        _
      $region48: #{tpu_custom_call.1} parent=11 // pred_fallthru
        _
      // Predicated region
      $region49: #{tpu_custom_call.1} parent=11 // pred_check
        %p414 = pneg %p283
      $region50: #{tpu_custom_call.1} parent=11 // pred_check_branch
        %416 = sbr.rel (%p414) target = $region52
      $region51: #{tpu_custom_call.1} parent=11 // pred_region
        _
      $region52: #{tpu_custom_call.1} parent=11 // pred_fallthru
        _
      // Predicated region
      $region53: #{tpu_custom_call.1} parent=11 // pred_check
        %p417 = pneg %p304
      $region54: #{tpu_custom_call.1} parent=11 // pred_check_branch
        %419 = sbr.rel (%p417) target = $region56
      $region55: #{tpu_custom_call.1} parent=11 // pred_region
        _
      $region56: #{tpu_custom_call.1} parent=11 // pred_fallthru
        _
      // Predicated region
      $region57: #{tpu_custom_call.1} parent=11 // pred_check
        %p420 = pneg %p325
      $region58: #{tpu_custom_call.1} parent=11 // pred_check_branch
        %422 = sbr.rel (%p420) target = $region60
      $region59: #{tpu_custom_call.1} parent=11 // pred_region
        _
      $region60: #{tpu_custom_call.1} parent=11 // pred_fallthru
        _
      // Predicated region
      $region61: #{tpu_custom_call.1} parent=11 // pred_check
        %p423 = pneg %p346
      $region62: #{tpu_custom_call.1} parent=11 // pred_check_branch
        %425 = sbr.rel (%p423) target = $region64
      $region63: #{tpu_custom_call.1} parent=11 // pred_region
        _
      $region64: #{tpu_custom_call.1} parent=11 // pred_fallthru
        _
    $region12: #{tpu_custom_call.1} parent=5 // pred_fallthru
      _
    %p426 = scmp.lt.s32.totalorder %s21, 2
    // Predicated region
    $region65: #{tpu_custom_call.1} parent=5 // pred_check
      %p427 = pneg %p426
    $region66: #{tpu_custom_call.1} parent=5 // pred_check_branch
      %429 = sbr.rel (%p427) target = $region68
    $region67: #{tpu_custom_call.1} parent=5 // pred_region
      // Predicated region
      $region69: #{tpu_custom_call.1} parent=67 // pred_check
        %p430 = pneg %p41
      $region70: #{tpu_custom_call.1} parent=67 // pred_check_branch
        %432 = sbr.rel (%p430) target = $region72
      $region71: #{tpu_custom_call.1} parent=67 // pred_region
        %p433 = scmp.lt.s32.totalorder %s21, 1
        %s434 = scalar_select %p433, %s21, 1
        %s435 = smul.addr %s434, 32
        %s436 = smul.addr %s435, 8
        %s437 = scalar_lea.vmem %s0, %s436
      $region72: #{tpu_custom_call.1} parent=67 // pred_fallthru
        _
      // Predicated region
      $region73: #{tpu_custom_call.1} parent=67 // pred_check
        %p438 = pneg %p67
      $region74: #{tpu_custom_call.1} parent=67 // pred_check_branch
        %440 = sbr.rel (%p438) target = $region76
      $region75: #{tpu_custom_call.1} parent=67 // pred_region
        %p441 = scmp.lt.s32.totalorder %s21, 1
        %s442 = scalar_select %p441, %s21, 1
        %s443 = smul.addr %s442, 32
        %s444 = smul.addr %s443, 8
        %s445 = scalar_lea.vmem %s1, %s444
      $region76: #{tpu_custom_call.1} parent=67 // pred_fallthru
        _
    $region68: #{tpu_custom_call.1} parent=5 // pred_fallthru
      _
    %p446 = scmp.le.s32.totalorder 1, %s21
    %p447 = scmp.lt.s32.totalorder %s21, 3
    %p448 = pnand %p446, %p447
    %p449 = pneg %p448
    // Predicated region
    $region77: #{tpu_custom_call.1} parent=5 // pred_check
      _
    $region78: #{tpu_custom_call.1} parent=5 // pred_check_branch
      %451 = sbr.rel (%p448) target = $region80
    $region79: #{tpu_custom_call.1} parent=5 // pred_region
      %s452 = ssub.s32 %s21, 1
      %p453 = scmp.lt.s32.totalorder %s26, 1
      %s454 = scalar_select %p453, %s26, 1
      %s455 = smul.addr %s454, 32
      %s456 = smul.addr %s455, 8
      %s457 = scalar_lea.vmem %s0, %s456
      %p458 = pneg %p47
      %p459 = pneg %p44
      %p460 = scmp.lt.s32.totalorder %s26, 1
      %s461 = scalar_select %p460, %s26, 1
      %s462 = smul.addr %s461, 32
      %s463 = smul.addr %s462, 8
      %s464 = scalar_lea.vmem %s1, %s463
      %p465 = pneg %p73
      %p466 = pneg %p70
      %p467 = pneg %p94
      %p468 = pneg %p91
      %p469 = pneg %p115
      %p470 = pneg %p112
      %p471 = pneg %p136
      %p472 = pneg %p133
      %p473 = pneg %p157
      %p474 = pneg %p154
      %p475 = pneg %p178
      %p476 = pneg %p175
      %p477 = pneg %p199
      %p478 = pneg %p196
      %p479 = pneg %p220
      %p480 = pneg %p217
      %p481 = pneg %p241
      %p482 = pneg %p238
      %p483 = pneg %p262
      %p484 = pneg %p259
      %p485 = pneg %p283
      %p486 = pneg %p280
      %p487 = pneg %p304
      %p488 = pneg %p301
      %p489 = pneg %p325
      %p490 = pneg %p322
      %p491 = pneg %p346
      %p492 = pneg %p343
      %p493 = pneg %p372
      %p494 = pneg %p369
      %p495 = scmp.lt.s32.totalorder %s26, 1
      %s496 = scalar_select %p495, %s26, 1
      %s497 = smul.addr %s496, 32
      %s498 = smul.addr %s497, 8
      %s499 = scalar_lea.vmem %s15, %s498
      %p500 = scmp.lt.s32.totalorder %s26, 1
      %s501 = scalar_select %p500, %s26, 1
      %s502 = smul.addr %s501, 32
      %s503 = smul.addr %s502, 8
      %s504 = scalar_lea.vmem %s0, %s503
      %p505 = scmp.lt.s32.totalorder %s26, 1
      %s506 = scalar_select %p505, %s26, 1
      %s507 = smul.addr %s506, 32
      %s508 = smul.addr %s507, 8
      %s509 = scalar_lea.vmem %s1, %s508
      %p510 = scmp.lt.s32.totalorder %s26, 1
      %s511 = scalar_select %p510, %s26, 1
      %s512 = smul.addr %s511, 32
      %s513 = smul.addr %s512, 8
      %s514 = scalar_lea.vmem %s15, %s513
      %v515 = vld [vmem:[%s504] sm:$0xff]
      %v516 = vld [vmem:[%s504 + $0x8] sm:$0xff]
      %v517 = vld [vmem:[%s504 + $0x10] sm:$0xff]
      %v518 = vld [vmem:[%s504 + $0x18] sm:$0xff]
      %v519 = vld [vmem:[%s504 + $0x20] sm:$0xff]
      %v520 = vld [vmem:[%s504 + $0x28] sm:$0xff]
      %v521 = vld [vmem:[%s504 + $0x30] sm:$0xff]
      %v522 = vld [vmem:[%s504 + $0x38] sm:$0xff]
      %v523 = vld [vmem:[%s504 + $0x40] sm:$0xff]
      %v524 = vld [vmem:[%s504 + $0x48] sm:$0xff]
      %v525 = vld [vmem:[%s504 + $0x50] sm:$0xff]
      %v526 = vld [vmem:[%s504 + $0x58] sm:$0xff]
      %v527 = vld [vmem:[%s504 + $0x60] sm:$0xff]
      %v528 = vld [vmem:[%s504 + $0x68] sm:$0xff]
      %v529 = vld [vmem:[%s504 + $0x70] sm:$0xff]
      %v530 = vld [vmem:[%s504 + $0x78] sm:$0xff]
      %v531 = vld [vmem:[%s504 + $0x80] sm:$0xff]
      %v532 = vld [vmem:[%s504 + $0x88] sm:$0xff]
      %v533 = vld [vmem:[%s504 + $0x90] sm:$0xff]
      %v534 = vld [vmem:[%s504 + $0x98] sm:$0xff]
      %v535 = vld [vmem:[%s504 + $0xa0] sm:$0xff]
      %v536 = vld [vmem:[%s504 + $0xa8] sm:$0xff]
      %v537 = vld [vmem:[%s504 + $0xb0] sm:$0xff]
      %v538 = vld [vmem:[%s504 + $0xb8] sm:$0xff]
      %v539 = vld [vmem:[%s504 + $0xc0] sm:$0xff]
      %v540 = vld [vmem:[%s504 + $0xc8] sm:$0xff]
      %v541 = vld [vmem:[%s504 + $0xd0] sm:$0xff]
      %v542 = vld [vmem:[%s504 + $0xd8] sm:$0xff]
      %v543 = vld [vmem:[%s504 + $0xe0] sm:$0xff]
      %v544 = vld [vmem:[%s504 + $0xe8] sm:$0xff]
      %v545 = vld [vmem:[%s504 + $0xf0] sm:$0xff]
      %v546 = vld [vmem:[%s504 + $0xf8] sm:$0xff]
      %v547 = vld [vmem:[%s2] sm:$0xf]
      %v548 = vld [vmem:[%s3] sm:$0x1]
      %v550 = vlaneseq
      %v551 = vshrl.u32 %v550, 7
      %v552 = vsub.s32 0, %v551
      %v553 = vrot.slane %v548, %v552
      %vm555 = vcmask 31744
      %v557 = vsel %vm555, %v515, 0
      %v560 = vsel %vm555, %v516, 0
      %v563 = vsel %vm555, %v517, 0
      %v566 = vsel %vm555, %v518, 0
      %v569 = vsel %vm555, %v519, 0
      %v572 = vsel %vm555, %v520, 0
      %v575 = vsel %vm555, %v521, 0
      %v578 = vsel %vm555, %v522, 0
      %v581 = vsel %vm555, %v523, 0
      %v584 = vsel %vm555, %v524, 0
      %v587 = vsel %vm555, %v525, 0
      %v590 = vsel %vm555, %v526, 0
      %v593 = vsel %vm555, %v527, 0
      %v596 = vsel %vm555, %v528, 0
      %v599 = vsel %vm555, %v529, 0
      %v602 = vsel %vm555, %v530, 0
      %v605 = vsel %vm555, %v531, 0
      %v608 = vsel %vm555, %v532, 0
      %v611 = vsel %vm555, %v533, 0
      %v614 = vsel %vm555, %v534, 0
      %v617 = vsel %vm555, %v535, 0
      %v620 = vsel %vm555, %v536, 0
      %v623 = vsel %vm555, %v537, 0
      %v626 = vsel %vm555, %v538, 0
      %v629 = vsel %vm555, %v539, 0
      %v632 = vsel %vm555, %v540, 0
      %v635 = vsel %vm555, %v541, 0
      %v638 = vsel %vm555, %v542, 0
      %v641 = vsel %vm555, %v543, 0
      %v644 = vsel %vm555, %v544, 0
      %v647 = vsel %vm555, %v545, 0
      %v650 = vsel %vm555, %v546, 0
      %vm652 = vcmask 1043456
      %v654 = vsel %vm652, %v547, 0
      %656 = vmatprep.subr.mxu0 0.0
      %657 = vmatpush1.msra.mxu0 0.0
      %658 = vmatprep.subr.mxu0 0.0
      %659 = vmatpush1.msra.mxu0 0.0
      %660 = vmatprep.subr.mxu0 0.0
      %661 = vmatpush1.msra.mxu0 0.0
      %662 = vmatprep.subr.mxu0 0.0
      %663 = vmatpush1.msra.mxu0 0.0
      %664 = vmatprep.subr.mxu0 0.0
      %665 = vmatpush1.msra.mxu0 0.0
      %666 = vmatprep.subr.mxu0 0.0
      %667 = vmatpush1.msra.mxu0 0.0
      %668 = vmatprep.subr.mxu0 0.0
      %669 = vmatpush1.msra.mxu0 0.0
      %670 = vmatprep.subr.mxu0 0.0
      %671 = vmatpush1.msra.mxu0 0.0
      %672 = vmatprep.subr.mxu0 0.0
      %673 = vmatpush1.msra.mxu0 0.0
      %674 = vmatprep.subr.mxu0 0.0
      %675 = vmatpush1.msra.mxu0 0.0
      %676 = vmatprep.subr.mxu0 0.0
      %677 = vmatpush1.msra.mxu0 0.0
      %678 = vmatprep.subr.mxu0 0.0
      %679 = vmatpush1.msra.mxu0 0.0
      %680 = vmatprep.subr.mxu0 0.0
      %681 = vmatpush1.msra.mxu0 0.0
      %682 = vmatprep.subr.mxu0 0.0
      %683 = vmatpush1.msra.mxu0 0.0
      %684 = vmatprep.subr.mxu0 0.0
      %685 = vmatpush1.msra.mxu0 0.0
      %686 = vmatprep.subr.mxu0 0.0
      %687 = vmatpush1.msra.mxu0 %v654
      %688 = vmatprep.subr.mxu0 0.0
      %689 = vmatpush2.msra.mxu0 0.0
      %690 = vmatprep.subr.mxu0 0.0
      %691 = vmatpush2.msra.mxu0 0.0
      %692 = vmatprep.subr.mxu0 0.0
      %693 = vmatpush2.msra.mxu0 0.0
      %694 = vmatprep.subr.mxu0 0.0
      %695 = vmatpush2.msra.mxu0 0.0
      %696 = vmatprep.subr.mxu0 0.0
      %697 = vmatpush2.msra.mxu0 0.0
      %698 = vmatprep.subr.mxu0 0.0
      %699 = vmatpush2.msra.mxu0 0.0
      %700 = vmatprep.subr.mxu0 0.0
      %701 = vmatpush2.msra.mxu0 0.0
      %702 = vmatprep.subr.mxu0 0.0
      %703 = vmatpush2.msra.mxu0 0.0
      %704 = vmatprep.subr.mxu0 0.0
      %705 = vmatpush2.msra.mxu0 0.0
      %706 = vmatprep.subr.mxu0 0.0
      %707 = vmatpush2.msra.mxu0 0.0
      %708 = vmatprep.subr.mxu0 0.0
      %709 = vmatpush2.msra.mxu0 0.0
      %710 = vmatprep.subr.mxu0 0.0
      %711 = vmatpush2.msra.mxu0 0.0
      %712 = vmatprep.subr.mxu0 0.0
      %713 = vmatpush2.msra.mxu0 0.0
      %714 = vmatprep.subr.mxu0 0.0
      %715 = vmatpush2.msra.mxu0 0.0
      %716 = vmatprep.subr.mxu0 0.0
      %717 = vmatpush2.msra.mxu0 0.0
      %718 = vmatprep.subr.mxu0 0.0
      %719 = vmatpush2.msra.mxu0 0.0
      %720 = vmatprep.mubr.f32.mxu0 0.0
      %721 = vmatmul.mubr.f32.gmra.mxu0 %v557
      %v722 = vpop.f32.mrf.mxu0
      %v723 = vadd.f32 %v553, %v722
      %v724 = vpop.f32.mrf.mxu0
      %725 = vmatprep.mubr.f32.mxu0 0.0
      %726 = vmatmul.mubr.f32.gmra.mxu0 %v560
      %v727 = vpop.f32.mrf.mxu0
      %v728 = vadd.f32 %v553, %v727
      %v729 = vpop.f32.mrf.mxu0
      %730 = vmatprep.mubr.f32.mxu0 0.0
      %731 = vmatmul.mubr.f32.gmra.mxu0 %v563
      %v732 = vpop.f32.mrf.mxu0
      %v733 = vadd.f32 %v553, %v732
      %v734 = vpop.f32.mrf.mxu0
      %735 = vmatprep.mubr.f32.mxu0 0.0
      %736 = vmatmul.mubr.f32.gmra.mxu0 %v566
      %v737 = vpop.f32.mrf.mxu0
      %v738 = vadd.f32 %v553, %v737
      %v739 = vpop.f32.mrf.mxu0
      %740 = vmatprep.mubr.f32.mxu0 0.0
      %741 = vmatmul.mubr.f32.gmra.mxu0 %v569
      %v742 = vpop.f32.mrf.mxu0
      %v743 = vadd.f32 %v553, %v742
      %v744 = vpop.f32.mrf.mxu0
      %745 = vmatprep.mubr.f32.mxu0 0.0
      %746 = vmatmul.mubr.f32.gmra.mxu0 %v572
      %v747 = vpop.f32.mrf.mxu0
      %v748 = vadd.f32 %v553, %v747
      %v749 = vpop.f32.mrf.mxu0
      %750 = vmatprep.mubr.f32.mxu0 0.0
      %751 = vmatmul.mubr.f32.gmra.mxu0 %v575
      %v752 = vpop.f32.mrf.mxu0
      %v753 = vadd.f32 %v553, %v752
      %v754 = vpop.f32.mrf.mxu0
      %755 = vmatprep.mubr.f32.mxu0 0.0
      %756 = vmatmul.mubr.f32.gmra.mxu0 %v578
      %v757 = vpop.f32.mrf.mxu0
      %v758 = vadd.f32 %v553, %v757
      %v759 = vpop.f32.mrf.mxu0
      %760 = vmatprep.mubr.f32.mxu0 0.0
      %761 = vmatmul.mubr.f32.gmra.mxu0 %v581
      %v762 = vpop.f32.mrf.mxu0
      %v763 = vadd.f32 %v553, %v762
      %v764 = vpop.f32.mrf.mxu0
      %765 = vmatprep.mubr.f32.mxu0 0.0
      %766 = vmatmul.mubr.f32.gmra.mxu0 %v584
      %v767 = vpop.f32.mrf.mxu0
      %v768 = vadd.f32 %v553, %v767
      %v769 = vpop.f32.mrf.mxu0
      %770 = vmatprep.mubr.f32.mxu0 0.0
      %771 = vmatmul.mubr.f32.gmra.mxu0 %v587
      %v772 = vpop.f32.mrf.mxu0
      %v773 = vadd.f32 %v553, %v772
      %v774 = vpop.f32.mrf.mxu0
      %775 = vmatprep.mubr.f32.mxu0 0.0
      %776 = vmatmul.mubr.f32.gmra.mxu0 %v590
      %v777 = vpop.f32.mrf.mxu0
      %v778 = vadd.f32 %v553, %v777
      %v779 = vpop.f32.mrf.mxu0
      %780 = vmatprep.mubr.f32.mxu0 0.0
      %781 = vmatmul.mubr.f32.gmra.mxu0 %v593
      %v782 = vpop.f32.mrf.mxu0
      %v783 = vadd.f32 %v553, %v782
      %v784 = vpop.f32.mrf.mxu0
      %785 = vmatprep.mubr.f32.mxu0 0.0
      %786 = vmatmul.mubr.f32.gmra.mxu0 %v596
      %v787 = vpop.f32.mrf.mxu0
      %v788 = vadd.f32 %v553, %v787
      %v789 = vpop.f32.mrf.mxu0
      %790 = vmatprep.mubr.f32.mxu0 0.0
      %791 = vmatmul.mubr.f32.gmra.mxu0 %v599
      %v792 = vpop.f32.mrf.mxu0
      %v793 = vadd.f32 %v553, %v792
      %v794 = vpop.f32.mrf.mxu0
      %795 = vmatprep.mubr.f32.mxu0 0.0
      %796 = vmatmul.mubr.f32.gmra.mxu0 %v602
      %v797 = vpop.f32.mrf.mxu0
      %v798 = vadd.f32 %v553, %v797
      %v799 = vpop.f32.mrf.mxu0
      %800 = vmatprep.mubr.f32.mxu0 0.0
      %801 = vmatmul.mubr.f32.gmra.mxu0 %v605
      %v802 = vpop.f32.mrf.mxu0
      %v803 = vadd.f32 %v553, %v802
      %v804 = vpop.f32.mrf.mxu0
      %805 = vmatprep.mubr.f32.mxu0 0.0
      %806 = vmatmul.mubr.f32.gmra.mxu0 %v608
      %v807 = vpop.f32.mrf.mxu0
      %v808 = vadd.f32 %v553, %v807
      %v809 = vpop.f32.mrf.mxu0
      %810 = vmatprep.mubr.f32.mxu0 0.0
      %811 = vmatmul.mubr.f32.gmra.mxu0 %v611
      %v812 = vpop.f32.mrf.mxu0
      %v813 = vadd.f32 %v553, %v812
      %v814 = vpop.f32.mrf.mxu0
      %815 = vmatprep.mubr.f32.mxu0 0.0
      %816 = vmatmul.mubr.f32.gmra.mxu0 %v614
      %v817 = vpop.f32.mrf.mxu0
      %v818 = vadd.f32 %v553, %v817
      %v819 = vpop.f32.mrf.mxu0
      %820 = vmatprep.mubr.f32.mxu0 0.0
      %821 = vmatmul.mubr.f32.gmra.mxu0 %v617
      %v822 = vpop.f32.mrf.mxu0
      %v823 = vadd.f32 %v553, %v822
      %v824 = vpop.f32.mrf.mxu0
      %825 = vmatprep.mubr.f32.mxu0 0.0
      %826 = vmatmul.mubr.f32.gmra.mxu0 %v620
      %v827 = vpop.f32.mrf.mxu0
      %v828 = vadd.f32 %v553, %v827
      %v829 = vpop.f32.mrf.mxu0
      %830 = vmatprep.mubr.f32.mxu0 0.0
      %831 = vmatmul.mubr.f32.gmra.mxu0 %v623
      %v832 = vpop.f32.mrf.mxu0
      %v833 = vadd.f32 %v553, %v832
      %v834 = vpop.f32.mrf.mxu0
      %835 = vmatprep.mubr.f32.mxu0 0.0
      %836 = vmatmul.mubr.f32.gmra.mxu0 %v626
      %v837 = vpop.f32.mrf.mxu0
      %v838 = vadd.f32 %v553, %v837
      %v839 = vpop.f32.mrf.mxu0
      %840 = vmatprep.mubr.f32.mxu0 0.0
      %841 = vmatmul.mubr.f32.gmra.mxu0 %v629
      %v842 = vpop.f32.mrf.mxu0
      %v843 = vadd.f32 %v553, %v842
      %v844 = vpop.f32.mrf.mxu0
      %845 = vmatprep.mubr.f32.mxu0 0.0
      %846 = vmatmul.mubr.f32.gmra.mxu0 %v632
      %v847 = vpop.f32.mrf.mxu0
      %v848 = vadd.f32 %v553, %v847
      %v849 = vpop.f32.mrf.mxu0
      %850 = vmatprep.mubr.f32.mxu0 0.0
      %851 = vmatmul.mubr.f32.gmra.mxu0 %v635
      %v852 = vpop.f32.mrf.mxu0
      %v853 = vadd.f32 %v553, %v852
      %v854 = vpop.f32.mrf.mxu0
      %855 = vmatprep.mubr.f32.mxu0 0.0
      %856 = vmatmul.mubr.f32.gmra.mxu0 %v638
      %v857 = vpop.f32.mrf.mxu0
      %v858 = vadd.f32 %v553, %v857
      %v859 = vpop.f32.mrf.mxu0
      %860 = vmatprep.mubr.f32.mxu0 0.0
      %861 = vmatmul.mubr.f32.gmra.mxu0 %v641
      %v862 = vpop.f32.mrf.mxu0
      %v863 = vadd.f32 %v553, %v862
      %v864 = vpop.f32.mrf.mxu0
      %865 = vmatprep.mubr.f32.mxu0 0.0
      %866 = vmatmul.mubr.f32.gmra.mxu0 %v644
      %v867 = vpop.f32.mrf.mxu0
      %v868 = vadd.f32 %v553, %v867
      %v869 = vpop.f32.mrf.mxu0
      %870 = vmatprep.mubr.f32.mxu0 0.0
      %871 = vmatmul.mubr.f32.gmra.mxu0 %v647
      %v872 = vpop.f32.mrf.mxu0
      %v873 = vadd.f32 %v553, %v872
      %v874 = vpop.f32.mrf.mxu0
      %875 = vmatprep.mubr.f32.mxu0 0.0
      %876 = vmatmul.mubr.f32.gmra.mxu0 %v650
      %v877 = vpop.f32.mrf.mxu0
      %v878 = vadd.f32 %v553, %v877
      %v879 = vpop.f32.mrf.mxu0
      %880 = vdwg.mxu0
      %v881 = vld [vmem:[%s509] sm:$0xff]
      %v882 = vld [vmem:[%s509 + $0x8] sm:$0xff]
      %v883 = vld [vmem:[%s509 + $0x10] sm:$0xff]
      %v884 = vld [vmem:[%s509 + $0x18] sm:$0xff]
      %v885 = vld [vmem:[%s509 + $0x20] sm:$0xff]
      %v886 = vld [vmem:[%s509 + $0x28] sm:$0xff]
      %v887 = vld [vmem:[%s509 + $0x30] sm:$0xff]
      %v888 = vld [vmem:[%s509 + $0x38] sm:$0xff]
      %v889 = vld [vmem:[%s509 + $0x40] sm:$0xff]
      %v890 = vld [vmem:[%s509 + $0x48] sm:$0xff]
      %v891 = vld [vmem:[%s509 + $0x50] sm:$0xff]
      %v892 = vld [vmem:[%s509 + $0x58] sm:$0xff]
      %v893 = vld [vmem:[%s509 + $0x60] sm:$0xff]
      %v894 = vld [vmem:[%s509 + $0x68] sm:$0xff]
      %v895 = vld [vmem:[%s509 + $0x70] sm:$0xff]
      %v896 = vld [vmem:[%s509 + $0x78] sm:$0xff]
      %v897 = vld [vmem:[%s509 + $0x80] sm:$0xff]
      %v898 = vld [vmem:[%s509 + $0x88] sm:$0xff]
      %v899 = vld [vmem:[%s509 + $0x90] sm:$0xff]
      %v900 = vld [vmem:[%s509 + $0x98] sm:$0xff]
      %v901 = vld [vmem:[%s509 + $0xa0] sm:$0xff]
      %v902 = vld [vmem:[%s509 + $0xa8] sm:$0xff]
      %v903 = vld [vmem:[%s509 + $0xb0] sm:$0xff]
      %v904 = vld [vmem:[%s509 + $0xb8] sm:$0xff]
      %v905 = vld [vmem:[%s509 + $0xc0] sm:$0xff]
      %v906 = vld [vmem:[%s509 + $0xc8] sm:$0xff]
      %v907 = vld [vmem:[%s509 + $0xd0] sm:$0xff]
      %v908 = vld [vmem:[%s509 + $0xd8] sm:$0xff]
      %v909 = vld [vmem:[%s509 + $0xe0] sm:$0xff]
      %v910 = vld [vmem:[%s509 + $0xe8] sm:$0xff]
      %v911 = vld [vmem:[%s509 + $0xf0] sm:$0xff]
      %v912 = vld [vmem:[%s509 + $0xf8] sm:$0xff]
      %v913 = vadd.f32 %v723, %v881
      %v914 = vadd.f32 %v728, %v882
      %v915 = vadd.f32 %v733, %v883
      %v916 = vadd.f32 %v738, %v884
      %v917 = vadd.f32 %v743, %v885
      %v918 = vadd.f32 %v748, %v886
      %v919 = vadd.f32 %v753, %v887
      %v920 = vadd.f32 %v758, %v888
      %v921 = vadd.f32 %v763, %v889
      %v922 = vadd.f32 %v768, %v890
      %v923 = vadd.f32 %v773, %v891
      %v924 = vadd.f32 %v778, %v892
      %v925 = vadd.f32 %v783, %v893
      %v926 = vadd.f32 %v788, %v894
      %v927 = vadd.f32 %v793, %v895
      %v928 = vadd.f32 %v798, %v896
      %v929 = vadd.f32 %v803, %v897
      %v930 = vadd.f32 %v808, %v898
      %v931 = vadd.f32 %v813, %v899
      %v932 = vadd.f32 %v818, %v900
      %v933 = vadd.f32 %v823, %v901
      %v934 = vadd.f32 %v828, %v902
      %v935 = vadd.f32 %v833, %v903
      %v936 = vadd.f32 %v838, %v904
      %v937 = vadd.f32 %v843, %v905
      %v938 = vadd.f32 %v848, %v906
      %v939 = vadd.f32 %v853, %v907
      %v940 = vadd.f32 %v858, %v908
      %v941 = vadd.f32 %v863, %v909
      %v942 = vadd.f32 %v868, %v910
      %v943 = vadd.f32 %v873, %v911
      %v944 = vadd.f32 %v878, %v912
      %945 = vst.msk [vmem:[#allocation2 + $0x8] sm:$0xff] %vm555, %v913
      %946 = vst.msk [vmem:[#allocation2 + $0x10] sm:$0xff] %vm555, %v914
      %947 = vst.msk [vmem:[#allocation2 + $0x28] sm:$0xff] %vm555, %v915
      %948 = vst.msk [vmem:[#allocation2 + $0x30] sm:$0xff] %vm555, %v916
      %949 = vst.msk [vmem:[#allocation2 + $0x48] sm:$0xff] %vm555, %v917
      %950 = vst.msk [vmem:[#allocation2 + $0x50] sm:$0xff] %vm555, %v918
      %951 = vst.msk [vmem:[#allocation2 + $0x68] sm:$0xff] %vm555, %v919
      %952 = vst.msk [vmem:[#allocation2 + $0x70] sm:$0xff] %vm555, %v920
      %953 = vst.msk [vmem:[#allocation2 + $0x88] sm:$0xff] %vm555, %v921
      %954 = vst.msk [vmem:[#allocation2 + $0x90] sm:$0xff] %vm555, %v922
      %955 = vst.msk [vmem:[#allocation2 + $0xa8] sm:$0xff] %vm555, %v923
      %956 = vst.msk [vmem:[#allocation2 + $0xb0] sm:$0xff] %vm555, %v924
      %957 = vst.msk [vmem:[#allocation2 + $0xc8] sm:$0xff] %vm555, %v925
      %958 = vst.msk [vmem:[#allocation2 + $0xd0] sm:$0xff] %vm555, %v926
      %959 = vst.msk [vmem:[#allocation2 + $0xe8] sm:$0xff] %vm555, %v927
      %960 = vst.msk [vmem:[#allocation2 + $0xf0] sm:$0xff] %vm555, %v928
      %961 = vst.msk [vmem:[#allocation2 + $0x108] sm:$0xff] %vm555, %v929
      %962 = vst.msk [vmem:[#allocation2 + $0x110] sm:$0xff] %vm555, %v930
      %963 = vst.msk [vmem:[#allocation2 + $0x128] sm:$0xff] %vm555, %v931
      %964 = vst.msk [vmem:[#allocation2 + $0x130] sm:$0xff] %vm555, %v932
      %965 = vst.msk [vmem:[#allocation2 + $0x148] sm:$0xff] %vm555, %v933
      %966 = vst.msk [vmem:[#allocation2 + $0x150] sm:$0xff] %vm555, %v934
      %967 = vst.msk [vmem:[#allocation2 + $0x168] sm:$0xff] %vm555, %v935
      %968 = vst.msk [vmem:[#allocation2 + $0x170] sm:$0xff] %vm555, %v936
      %969 = vst.msk [vmem:[#allocation2 + $0x188] sm:$0xff] %vm555, %v937
      %970 = vst.msk [vmem:[#allocation2 + $0x190] sm:$0xff] %vm555, %v938
      %971 = vst.msk [vmem:[#allocation2 + $0x1a8] sm:$0xff] %vm555, %v939
      %972 = vst.msk [vmem:[#allocation2 + $0x1b0] sm:$0xff] %vm555, %v940
      %973 = vst.msk [vmem:[#allocation2 + $0x1c8] sm:$0xff] %vm555, %v941
      %974 = vst.msk [vmem:[#allocation2 + $0x1d0] sm:$0xff] %vm555, %v942
      %975 = vst.msk [vmem:[#allocation2 + $0x1e8] sm:$0xff] %vm555, %v943
      %976 = vst.msk [vmem:[#allocation2 + $0x1f0] sm:$0xff] %vm555, %v944
      %977 = vst.msk [vmem:[#allocation2] sm:$0xff] %vm555, -inf
      %978 = vst.msk [vmem:[#allocation2 + $0x20] sm:$0xff] %vm555, -inf
      %979 = vst.msk [vmem:[#allocation2 + $0x40] sm:$0xff] %vm555, -inf
      %980 = vst.msk [vmem:[#allocation2 + $0x60] sm:$0xff] %vm555, -inf
      %981 = vst.msk [vmem:[#allocation2 + $0x80] sm:$0xff] %vm555, -inf
      %982 = vst.msk [vmem:[#allocation2 + $0xa0] sm:$0xff] %vm555, -inf
      %983 = vst.msk [vmem:[#allocation2 + $0xc0] sm:$0xff] %vm555, -inf
      %984 = vst.msk [vmem:[#allocation2 + $0xe0] sm:$0xff] %vm555, -inf
      %985 = vst.msk [vmem:[#allocation2 + $0x100] sm:$0xff] %vm555, -inf
      %986 = vst.msk [vmem:[#allocation2 + $0x120] sm:$0xff] %vm555, -inf
      %987 = vst.msk [vmem:[#allocation2 + $0x140] sm:$0xff] %vm555, -inf
      %988 = vst.msk [vmem:[#allocation2 + $0x160] sm:$0xff] %vm555, -inf
      %989 = vst.msk [vmem:[#allocation2 + $0x180] sm:$0xff] %vm555, -inf
      %990 = vst.msk [vmem:[#allocation2 + $0x1a0] sm:$0xff] %vm555, -inf
      %991 = vst.msk [vmem:[#allocation2 + $0x1c0] sm:$0xff] %vm555, -inf
      %992 = vst.msk [vmem:[#allocation2 + $0x1e0] sm:$0xff] %vm555, -inf
      %993 = vst.msk [vmem:[#allocation2 + $0x18] sm:$0xff] %vm555, -inf
      %994 = vst.msk [vmem:[#allocation2 + $0x38] sm:$0xff] %vm555, -inf
      %995 = vst.msk [vmem:[#allocation2 + $0x58] sm:$0xff] %vm555, -inf
      %996 = vst.msk [vmem:[#allocation2 + $0x78] sm:$0xff] %vm555, -inf
      %997 = vst.msk [vmem:[#allocation2 + $0x98] sm:$0xff] %vm555, -inf
      %998 = vst.msk [vmem:[#allocation2 + $0xb8] sm:$0xff] %vm555, -inf
      %999 = vst.msk [vmem:[#allocation2 + $0xd8] sm:$0xff] %vm555, -inf
      %1000 = vst.msk [vmem:[#allocation2 + $0xf8] sm:$0xff] %vm555, -inf
      %1001 = vst.msk [vmem:[#allocation2 + $0x118] sm:$0xff] %vm555, -inf
      %1002 = vst.msk [vmem:[#allocation2 + $0x138] sm:$0xff] %vm555, -inf
      %1003 = vst.msk [vmem:[#allocation2 + $0x158] sm:$0xff] %vm555, -inf
      %1004 = vst.msk [vmem:[#allocation2 + $0x178] sm:$0xff] %vm555, -inf
      %1005 = vst.msk [vmem:[#allocation2 + $0x198] sm:$0xff] %vm555, -inf
      %1006 = vst.msk [vmem:[#allocation2 + $0x1b8] sm:$0xff] %vm555, -inf
      %1007 = vst.msk [vmem:[#allocation2 + $0x1d8] sm:$0xff] %vm555, -inf
      %1008 = vst.msk [vmem:[#allocation2 + $0x1f8] sm:$0xff] %vm555, -inf
      %v1009 = vld [vmem:[#allocation2 + $0x5] sm:$0xff]
      %v1010 = vld [vmem:[#allocation2 + $0xd] sm:$0xff]
      %v1011 = vld [vmem:[#allocation2 + $0x25] sm:$0xff]
      %v1012 = vld [vmem:[#allocation2 + $0x2d] sm:$0xff]
      %v1013 = vld [vmem:[#allocation2 + $0x45] sm:$0xff]
      %v1014 = vld [vmem:[#allocation2 + $0x4d] sm:$0xff]
      %v1015 = vld [vmem:[#allocation2 + $0x65] sm:$0xff]
      %v1016 = vld [vmem:[#allocation2 + $0x6d] sm:$0xff]
      %v1017 = vld [vmem:[#allocation2 + $0x85] sm:$0xff]
      %v1018 = vld [vmem:[#allocation2 + $0x8d] sm:$0xff]
      %v1019 = vld [vmem:[#allocation2 + $0xa5] sm:$0xff]
      %v1020 = vld [vmem:[#allocation2 + $0xad] sm:$0xff]
      %v1021 = vld [vmem:[#allocation2 + $0xc5] sm:$0xff]
      %v1022 = vld [vmem:[#allocation2 + $0xcd] sm:$0xff]
      %v1023 = vld [vmem:[#allocation2 + $0xe5] sm:$0xff]
      %v1024 = vld [vmem:[#allocation2 + $0xed] sm:$0xff]
      %v1025 = vld [vmem:[#allocation2 + $0x105] sm:$0xff]
      %v1026 = vld [vmem:[#allocation2 + $0x10d] sm:$0xff]
      %v1027 = vld [vmem:[#allocation2 + $0x125] sm:$0xff]
      %v1028 = vld [vmem:[#allocation2 + $0x12d] sm:$0xff]
      %v1029 = vld [vmem:[#allocation2 + $0x145] sm:$0xff]
      %v1030 = vld [vmem:[#allocation2 + $0x14d] sm:$0xff]
      %v1031 = vld [vmem:[#allocation2 + $0x165] sm:$0xff]
      %v1032 = vld [vmem:[#allocation2 + $0x16d] sm:$0xff]
      %v1033 = vld [vmem:[#allocation2 + $0x185] sm:$0xff]
      %v1034 = vld [vmem:[#allocation2 + $0x18d] sm:$0xff]
      %v1035 = vld [vmem:[#allocation2 + $0x1a5] sm:$0xff]
      %v1036 = vld [vmem:[#allocation2 + $0x1ad] sm:$0xff]
      %v1037 = vld [vmem:[#allocation2 + $0x1c5] sm:$0xff]
      %v1038 = vld [vmem:[#allocation2 + $0x1cd] sm:$0xff]
      %v1039 = vld [vmem:[#allocation2 + $0x1e5] sm:$0xff]
      %v1040 = vld [vmem:[#allocation2 + $0x1ed] sm:$0xff]
      %v1041 = vld [vmem:[#allocation2 + $0x6] sm:$0xff]
      %v1042 = vld [vmem:[#allocation2 + $0xe] sm:$0xff]
      %v1043 = vld [vmem:[#allocation2 + $0x26] sm:$0xff]
      %v1044 = vld [vmem:[#allocation2 + $0x2e] sm:$0xff]
      %v1045 = vld [vmem:[#allocation2 + $0x46] sm:$0xff]
      %v1046 = vld [vmem:[#allocation2 + $0x4e] sm:$0xff]
      %v1047 = vld [vmem:[#allocation2 + $0x66] sm:$0xff]
      %v1048 = vld [vmem:[#allocation2 + $0x6e] sm:$0xff]
      %v1049 = vld [vmem:[#allocation2 + $0x86] sm:$0xff]
      %v1050 = vld [vmem:[#allocation2 + $0x8e] sm:$0xff]
      %v1051 = vld [vmem:[#allocation2 + $0xa6] sm:$0xff]
      %v1052 = vld [vmem:[#allocation2 + $0xae] sm:$0xff]
      %v1053 = vld [vmem:[#allocation2 + $0xc6] sm:$0xff]
      %v1054 = vld [vmem:[#allocation2 + $0xce] sm:$0xff]
      %v1055 = vld [vmem:[#allocation2 + $0xe6] sm:$0xff]
      %v1056 = vld [vmem:[#allocation2 + $0xee] sm:$0xff]
      %v1057 = vld [vmem:[#allocation2 + $0x106] sm:$0xff]
      %v1058 = vld [vmem:[#allocation2 + $0x10e] sm:$0xff]
      %v1059 = vld [vmem:[#allocation2 + $0x126] sm:$0xff]
      %v1060 = vld [vmem:[#allocation2 + $0x12e] sm:$0xff]
      %v1061 = vld [vmem:[#allocation2 + $0x146] sm:$0xff]
      %v1062 = vld [vmem:[#allocation2 + $0x14e] sm:$0xff]
      %v1063 = vld [vmem:[#allocation2 + $0x166] sm:$0xff]
      %v1064 = vld [vmem:[#allocation2 + $0x16e] sm:$0xff]
      %v1065 = vld [vmem:[#allocation2 + $0x186] sm:$0xff]
      %v1066 = vld [vmem:[#allocation2 + $0x18e] sm:$0xff]
      %v1067 = vld [vmem:[#allocation2 + $0x1a6] sm:$0xff]
      %v1068 = vld [vmem:[#allocation2 + $0x1ae] sm:$0xff]
      %v1069 = vld [vmem:[#allocation2 + $0x1c6] sm:$0xff]
      %v1070 = vld [vmem:[#allocation2 + $0x1ce] sm:$0xff]
      %v1071 = vld [vmem:[#allocation2 + $0x1e6] sm:$0xff]
      %v1072 = vld [vmem:[#allocation2 + $0x1ee] sm:$0xff]
      %v1073 = vmax.f32 %v1009, %v1041
      %v1074 = vmax.f32 %v1010, %v1042
      %v1075 = vmax.f32 %v1011, %v1043
      %v1076 = vmax.f32 %v1012, %v1044
      %v1077 = vmax.f32 %v1013, %v1045
      %v1078 = vmax.f32 %v1014, %v1046
      %v1079 = vmax.f32 %v1015, %v1047
      %v1080 = vmax.f32 %v1016, %v1048
      %v1081 = vmax.f32 %v1017, %v1049
      %v1082 = vmax.f32 %v1018, %v1050
      %v1083 = vmax.f32 %v1019, %v1051
      %v1084 = vmax.f32 %v1020, %v1052
      %v1085 = vmax.f32 %v1021, %v1053
      %v1086 = vmax.f32 %v1022, %v1054
      %v1087 = vmax.f32 %v1023, %v1055
      %v1088 = vmax.f32 %v1024, %v1056
      %v1089 = vmax.f32 %v1025, %v1057
      %v1090 = vmax.f32 %v1026, %v1058
      %v1091 = vmax.f32 %v1027, %v1059
      %v1092 = vmax.f32 %v1028, %v1060
      %v1093 = vmax.f32 %v1029, %v1061
      %v1094 = vmax.f32 %v1030, %v1062
      %v1095 = vmax.f32 %v1031, %v1063
      %v1096 = vmax.f32 %v1032, %v1064
      %v1097 = vmax.f32 %v1033, %v1065
      %v1098 = vmax.f32 %v1034, %v1066
      %v1099 = vmax.f32 %v1035, %v1067
      %v1100 = vmax.f32 %v1036, %v1068
      %v1101 = vmax.f32 %v1037, %v1069
      %v1102 = vmax.f32 %v1038, %v1070
      %v1103 = vmax.f32 %v1039, %v1071
      %v1104 = vmax.f32 %v1040, %v1072
      %v1105 = vld [vmem:[#allocation2 + $0x7] sm:$0xff]
      %v1106 = vld [vmem:[#allocation2 + $0xf] sm:$0xff]
      %v1107 = vld [vmem:[#allocation2 + $0x27] sm:$0xff]
      %v1108 = vld [vmem:[#allocation2 + $0x2f] sm:$0xff]
      %v1109 = vld [vmem:[#allocation2 + $0x47] sm:$0xff]
      %v1110 = vld [vmem:[#allocation2 + $0x4f] sm:$0xff]
      %v1111 = vld [vmem:[#allocation2 + $0x67] sm:$0xff]
      %v1112 = vld [vmem:[#allocation2 + $0x6f] sm:$0xff]
      %v1113 = vld [vmem:[#allocation2 + $0x87] sm:$0xff]
      %v1114 = vld [vmem:[#allocation2 + $0x8f] sm:$0xff]
      %v1115 = vld [vmem:[#allocation2 + $0xa7] sm:$0xff]
      %v1116 = vld [vmem:[#allocation2 + $0xaf] sm:$0xff]
      %v1117 = vld [vmem:[#allocation2 + $0xc7] sm:$0xff]
      %v1118 = vld [vmem:[#allocation2 + $0xcf] sm:$0xff]
      %v1119 = vld [vmem:[#allocation2 + $0xe7] sm:$0xff]
      %v1120 = vld [vmem:[#allocation2 + $0xef] sm:$0xff]
      %v1121 = vld [vmem:[#allocation2 + $0x107] sm:$0xff]
      %v1122 = vld [vmem:[#allocation2 + $0x10f] sm:$0xff]
      %v1123 = vld [vmem:[#allocation2 + $0x127] sm:$0xff]
      %v1124 = vld [vmem:[#allocation2 + $0x12f] sm:$0xff]
      %v1125 = vld [vmem:[#allocation2 + $0x147] sm:$0xff]
      %v1126 = vld [vmem:[#allocation2 + $0x14f] sm:$0xff]
      %v1127 = vld [vmem:[#allocation2 + $0x167] sm:$0xff]
      %v1128 = vld [vmem:[#allocation2 + $0x16f] sm:$0xff]
      %v1129 = vld [vmem:[#allocation2 + $0x187] sm:$0xff]
      %v1130 = vld [vmem:[#allocation2 + $0x18f] sm:$0xff]
      %v1131 = vld [vmem:[#allocation2 + $0x1a7] sm:$0xff]
      %v1132 = vld [vmem:[#allocation2 + $0x1af] sm:$0xff]
      %v1133 = vld [vmem:[#allocation2 + $0x1c7] sm:$0xff]
      %v1134 = vld [vmem:[#allocation2 + $0x1cf] sm:$0xff]
      %v1135 = vld [vmem:[#allocation2 + $0x1e7] sm:$0xff]
      %v1136 = vld [vmem:[#allocation2 + $0x1ef] sm:$0xff]
      %v1137 = vmax.f32 %v1073, %v1105
      %v1138 = vmax.f32 %v1074, %v1106
      %v1139 = vmax.f32 %v1075, %v1107
      %v1140 = vmax.f32 %v1076, %v1108
      %v1141 = vmax.f32 %v1077, %v1109
      %v1142 = vmax.f32 %v1078, %v1110
      %v1143 = vmax.f32 %v1079, %v1111
      %v1144 = vmax.f32 %v1080, %v1112
      %v1145 = vmax.f32 %v1081, %v1113
      %v1146 = vmax.f32 %v1082, %v1114
      %v1147 = vmax.f32 %v1083, %v1115
      %v1148 = vmax.f32 %v1084, %v1116
      %v1149 = vmax.f32 %v1085, %v1117
      %v1150 = vmax.f32 %v1086, %v1118
      %v1151 = vmax.f32 %v1087, %v1119
      %v1152 = vmax.f32 %v1088, %v1120
      %v1153 = vmax.f32 %v1089, %v1121
      %v1154 = vmax.f32 %v1090, %v1122
      %v1155 = vmax.f32 %v1091, %v1123
      %v1156 = vmax.f32 %v1092, %v1124
      %v1157 = vmax.f32 %v1093, %v1125
      %v1158 = vmax.f32 %v1094, %v1126
      %v1159 = vmax.f32 %v1095, %v1127
      %v1160 = vmax.f32 %v1096, %v1128
      %v1161 = vmax.f32 %v1097, %v1129
      %v1162 = vmax.f32 %v1098, %v1130
      %v1163 = vmax.f32 %v1099, %v1131
      %v1164 = vmax.f32 %v1100, %v1132
      %v1165 = vmax.f32 %v1101, %v1133
      %v1166 = vmax.f32 %v1102, %v1134
      %v1167 = vmax.f32 %v1103, %v1135
      %v1168 = vmax.f32 %v1104, %v1136
      %v1169 = vld [vmem:[#allocation2 + $0x8] sm:$0xff]
      %v1170 = vld [vmem:[#allocation2 + $0x10] sm:$0xff]
      %v1171 = vld [vmem:[#allocation2 + $0x28] sm:$0xff]
      %v1172 = vld [vmem:[#allocation2 + $0x30] sm:$0xff]
      %v1173 = vld [vmem:[#allocation2 + $0x48] sm:$0xff]
      %v1174 = vld [vmem:[#allocation2 + $0x50] sm:$0xff]
      %v1175 = vld [vmem:[#allocation2 + $0x68] sm:$0xff]
      %v1176 = vld [vmem:[#allocation2 + $0x70] sm:$0xff]
      %v1177 = vld [vmem:[#allocation2 + $0x88] sm:$0xff]
      %v1178 = vld [vmem:[#allocation2 + $0x90] sm:$0xff]
      %v1179 = vld [vmem:[#allocation2 + $0xa8] sm:$0xff]
      %v1180 = vld [vmem:[#allocation2 + $0xb0] sm:$0xff]
      %v1181 = vld [vmem:[#allocation2 + $0xc8] sm:$0xff]
      %v1182 = vld [vmem:[#allocation2 + $0xd0] sm:$0xff]
      %v1183 = vld [vmem:[#allocation2 + $0xe8] sm:$0xff]
      %v1184 = vld [vmem:[#allocation2 + $0xf0] sm:$0xff]
      %v1185 = vld [vmem:[#allocation2 + $0x108] sm:$0xff]
      %v1186 = vld [vmem:[#allocation2 + $0x110] sm:$0xff]
      %v1187 = vld [vmem:[#allocation2 + $0x128] sm:$0xff]
      %v1188 = vld [vmem:[#allocation2 + $0x130] sm:$0xff]
      %v1189 = vld [vmem:[#allocation2 + $0x148] sm:$0xff]
      %v1190 = vld [vmem:[#allocation2 + $0x150] sm:$0xff]
      %v1191 = vld [vmem:[#allocation2 + $0x168] sm:$0xff]
      %v1192 = vld [vmem:[#allocation2 + $0x170] sm:$0xff]
      %v1193 = vld [vmem:[#allocation2 + $0x188] sm:$0xff]
      %v1194 = vld [vmem:[#allocation2 + $0x190] sm:$0xff]
      %v1195 = vld [vmem:[#allocation2 + $0x1a8] sm:$0xff]
      %v1196 = vld [vmem:[#allocation2 + $0x1b0] sm:$0xff]
      %v1197 = vld [vmem:[#allocation2 + $0x1c8] sm:$0xff]
      %v1198 = vld [vmem:[#allocation2 + $0x1d0] sm:$0xff]
      %v1199 = vld [vmem:[#allocation2 + $0x1e8] sm:$0xff]
      %v1200 = vld [vmem:[#allocation2 + $0x1f0] sm:$0xff]
      %v1201 = vmax.f32 %v1137, %v1169
      %v1202 = vmax.f32 %v1138, %v1170
      %v1203 = vmax.f32 %v1139, %v1171
      %v1204 = vmax.f32 %v1140, %v1172
      %v1205 = vmax.f32 %v1141, %v1173
      %v1206 = vmax.f32 %v1142, %v1174
      %v1207 = vmax.f32 %v1143, %v1175
      %v1208 = vmax.f32 %v1144, %v1176
      %v1209 = vmax.f32 %v1145, %v1177
      %v1210 = vmax.f32 %v1146, %v1178
      %v1211 = vmax.f32 %v1147, %v1179
      %v1212 = vmax.f32 %v1148, %v1180
      %v1213 = vmax.f32 %v1149, %v1181
      %v1214 = vmax.f32 %v1150, %v1182
      %v1215 = vmax.f32 %v1151, %v1183
      %v1216 = vmax.f32 %v1152, %v1184
      %v1217 = vmax.f32 %v1153, %v1185
      %v1218 = vmax.f32 %v1154, %v1186
      %v1219 = vmax.f32 %v1155, %v1187
      %v1220 = vmax.f32 %v1156, %v1188
      %v1221 = vmax.f32 %v1157, %v1189
      %v1222 = vmax.f32 %v1158, %v1190
      %v1223 = vmax.f32 %v1159, %v1191
      %v1224 = vmax.f32 %v1160, %v1192
      %v1225 = vmax.f32 %v1161, %v1193
      %v1226 = vmax.f32 %v1162, %v1194
      %v1227 = vmax.f32 %v1163, %v1195
      %v1228 = vmax.f32 %v1164, %v1196
      %v1229 = vmax.f32 %v1165, %v1197
      %v1230 = vmax.f32 %v1166, %v1198
      %v1231 = vmax.f32 %v1167, %v1199
      %v1232 = vmax.f32 %v1168, %v1200
      %v1233 = vld [vmem:[#allocation2 + $0x9] sm:$0xff]
      %v1234 = vld [vmem:[#allocation2 + $0x11] sm:$0xff]
      %v1235 = vld [vmem:[#allocation2 + $0x29] sm:$0xff]
      %v1236 = vld [vmem:[#allocation2 + $0x31] sm:$0xff]
      %v1237 = vld [vmem:[#allocation2 + $0x49] sm:$0xff]
      %v1238 = vld [vmem:[#allocation2 + $0x51] sm:$0xff]
      %v1239 = vld [vmem:[#allocation2 + $0x69] sm:$0xff]
      %v1240 = vld [vmem:[#allocation2 + $0x71] sm:$0xff]
      %v1241 = vld [vmem:[#allocation2 + $0x89] sm:$0xff]
      %v1242 = vld [vmem:[#allocation2 + $0x91] sm:$0xff]
      %v1243 = vld [vmem:[#allocation2 + $0xa9] sm:$0xff]
      %v1244 = vld [vmem:[#allocation2 + $0xb1] sm:$0xff]
      %v1245 = vld [vmem:[#allocation2 + $0xc9] sm:$0xff]
      %v1246 = vld [vmem:[#allocation2 + $0xd1] sm:$0xff]
      %v1247 = vld [vmem:[#allocation2 + $0xe9] sm:$0xff]
      %v1248 = vld [vmem:[#allocation2 + $0xf1] sm:$0xff]
      %v1249 = vld [vmem:[#allocation2 + $0x109] sm:$0xff]
      %v1250 = vld [vmem:[#allocation2 + $0x111] sm:$0xff]
      %v1251 = vld [vmem:[#allocation2 + $0x129] sm:$0xff]
      %v1252 = vld [vmem:[#allocation2 + $0x131] sm:$0xff]
      %v1253 = vld [vmem:[#allocation2 + $0x149] sm:$0xff]
      %v1254 = vld [vmem:[#allocation2 + $0x151] sm:$0xff]
      %v1255 = vld [vmem:[#allocation2 + $0x169] sm:$0xff]
      %v1256 = vld [vmem:[#allocation2 + $0x171] sm:$0xff]
      %v1257 = vld [vmem:[#allocation2 + $0x189] sm:$0xff]
      %v1258 = vld [vmem:[#allocation2 + $0x191] sm:$0xff]
      %v1259 = vld [vmem:[#allocation2 + $0x1a9] sm:$0xff]
      %v1260 = vld [vmem:[#allocation2 + $0x1b1] sm:$0xff]
      %v1261 = vld [vmem:[#allocation2 + $0x1c9] sm:$0xff]
      %v1262 = vld [vmem:[#allocation2 + $0x1d1] sm:$0xff]
      %v1263 = vld [vmem:[#allocation2 + $0x1e9] sm:$0xff]
      %v1264 = vld [vmem:[#allocation2 + $0x1f1] sm:$0xff]
      %v1265 = vmax.f32 %v1201, %v1233
      %v1266 = vmax.f32 %v1202, %v1234
      %v1267 = vmax.f32 %v1203, %v1235
      %v1268 = vmax.f32 %v1204, %v1236
      %v1269 = vmax.f32 %v1205, %v1237
      %v1270 = vmax.f32 %v1206, %v1238
      %v1271 = vmax.f32 %v1207, %v1239
      %v1272 = vmax.f32 %v1208, %v1240
      %v1273 = vmax.f32 %v1209, %v1241
      %v1274 = vmax.f32 %v1210, %v1242
      %v1275 = vmax.f32 %v1211, %v1243
      %v1276 = vmax.f32 %v1212, %v1244
      %v1277 = vmax.f32 %v1213, %v1245
      %v1278 = vmax.f32 %v1214, %v1246
      %v1279 = vmax.f32 %v1215, %v1247
      %v1280 = vmax.f32 %v1216, %v1248
      %v1281 = vmax.f32 %v1217, %v1249
      %v1282 = vmax.f32 %v1218, %v1250
      %v1283 = vmax.f32 %v1219, %v1251
      %v1284 = vmax.f32 %v1220, %v1252
      %v1285 = vmax.f32 %v1221, %v1253
      %v1286 = vmax.f32 %v1222, %v1254
      %v1287 = vmax.f32 %v1223, %v1255
      %v1288 = vmax.f32 %v1224, %v1256
      %v1289 = vmax.f32 %v1225, %v1257
      %v1290 = vmax.f32 %v1226, %v1258
      %v1291 = vmax.f32 %v1227, %v1259
      %v1292 = vmax.f32 %v1228, %v1260
      %v1293 = vmax.f32 %v1229, %v1261
      %v1294 = vmax.f32 %v1230, %v1262
      %v1295 = vmax.f32 %v1231, %v1263
      %v1296 = vmax.f32 %v1232, %v1264
      %v1297 = vld [vmem:[#allocation2 + $0xa] sm:$0xff]
      %v1298 = vld [vmem:[#allocation2 + $0x12] sm:$0xff]
      %v1299 = vld [vmem:[#allocation2 + $0x2a] sm:$0xff]
      %v1300 = vld [vmem:[#allocation2 + $0x32] sm:$0xff]
      %v1301 = vld [vmem:[#allocation2 + $0x4a] sm:$0xff]
      %v1302 = vld [vmem:[#allocation2 + $0x52] sm:$0xff]
      %v1303 = vld [vmem:[#allocation2 + $0x6a] sm:$0xff]
      %v1304 = vld [vmem:[#allocation2 + $0x72] sm:$0xff]
      %v1305 = vld [vmem:[#allocation2 + $0x8a] sm:$0xff]
      %v1306 = vld [vmem:[#allocation2 + $0x92] sm:$0xff]
      %v1307 = vld [vmem:[#allocation2 + $0xaa] sm:$0xff]
      %v1308 = vld [vmem:[#allocation2 + $0xb2] sm:$0xff]
      %v1309 = vld [vmem:[#allocation2 + $0xca] sm:$0xff]
      %v1310 = vld [vmem:[#allocation2 + $0xd2] sm:$0xff]
      %v1311 = vld [vmem:[#allocation2 + $0xea] sm:$0xff]
      %v1312 = vld [vmem:[#allocation2 + $0xf2] sm:$0xff]
      %v1313 = vld [vmem:[#allocation2 + $0x10a] sm:$0xff]
      %v1314 = vld [vmem:[#allocation2 + $0x112] sm:$0xff]
      %v1315 = vld [vmem:[#allocation2 + $0x12a] sm:$0xff]
      %v1316 = vld [vmem:[#allocation2 + $0x132] sm:$0xff]
      %v1317 = vld [vmem:[#allocation2 + $0x14a] sm:$0xff]
      %v1318 = vld [vmem:[#allocation2 + $0x152] sm:$0xff]
      %v1319 = vld [vmem:[#allocation2 + $0x16a] sm:$0xff]
      %v1320 = vld [vmem:[#allocation2 + $0x172] sm:$0xff]
      %v1321 = vld [vmem:[#allocation2 + $0x18a] sm:$0xff]
      %v1322 = vld [vmem:[#allocation2 + $0x192] sm:$0xff]
      %v1323 = vld [vmem:[#allocation2 + $0x1aa] sm:$0xff]
      %v1324 = vld [vmem:[#allocation2 + $0x1b2] sm:$0xff]
      %v1325 = vld [vmem:[#allocation2 + $0x1ca] sm:$0xff]
      %v1326 = vld [vmem:[#allocation2 + $0x1d2] sm:$0xff]
      %v1327 = vld [vmem:[#allocation2 + $0x1ea] sm:$0xff]
      %v1328 = vld [vmem:[#allocation2 + $0x1f2] sm:$0xff]
      %v1329 = vmax.f32 %v1265, %v1297
      %v1330 = vmax.f32 %v1266, %v1298
      %v1331 = vmax.f32 %v1267, %v1299
      %v1332 = vmax.f32 %v1268, %v1300
      %v1333 = vmax.f32 %v1269, %v1301
      %v1334 = vmax.f32 %v1270, %v1302
      %v1335 = vmax.f32 %v1271, %v1303
      %v1336 = vmax.f32 %v1272, %v1304
      %v1337 = vmax.f32 %v1273, %v1305
      %v1338 = vmax.f32 %v1274, %v1306
      %v1339 = vmax.f32 %v1275, %v1307
      %v1340 = vmax.f32 %v1276, %v1308
      %v1341 = vmax.f32 %v1277, %v1309
      %v1342 = vmax.f32 %v1278, %v1310
      %v1343 = vmax.f32 %v1279, %v1311
      %v1344 = vmax.f32 %v1280, %v1312
      %v1345 = vmax.f32 %v1281, %v1313
      %v1346 = vmax.f32 %v1282, %v1314
      %v1347 = vmax.f32 %v1283, %v1315
      %v1348 = vmax.f32 %v1284, %v1316
      %v1349 = vmax.f32 %v1285, %v1317
      %v1350 = vmax.f32 %v1286, %v1318
      %v1351 = vmax.f32 %v1287, %v1319
      %v1352 = vmax.f32 %v1288, %v1320
      %v1353 = vmax.f32 %v1289, %v1321
      %v1354 = vmax.f32 %v1290, %v1322
      %v1355 = vmax.f32 %v1291, %v1323
      %v1356 = vmax.f32 %v1292, %v1324
      %v1357 = vmax.f32 %v1293, %v1325
      %v1358 = vmax.f32 %v1294, %v1326
      %v1359 = vmax.f32 %v1295, %v1327
      %v1360 = vmax.f32 %v1296, %v1328
      %v1361 = vld [vmem:[#allocation2 + $0xb] sm:$0xff]
      %v1362 = vld [vmem:[#allocation2 + $0x13] sm:$0xff]
      %v1363 = vld [vmem:[#allocation2 + $0x2b] sm:$0xff]
      %v1364 = vld [vmem:[#allocation2 + $0x33] sm:$0xff]
      %v1365 = vld [vmem:[#allocation2 + $0x4b] sm:$0xff]
      %v1366 = vld [vmem:[#allocation2 + $0x53] sm:$0xff]
      %v1367 = vld [vmem:[#allocation2 + $0x6b] sm:$0xff]
      %v1368 = vld [vmem:[#allocation2 + $0x73] sm:$0xff]
      %v1369 = vld [vmem:[#allocation2 + $0x8b] sm:$0xff]
      %v1370 = vld [vmem:[#allocation2 + $0x93] sm:$0xff]
      %v1371 = vld [vmem:[#allocation2 + $0xab] sm:$0xff]
      %v1372 = vld [vmem:[#allocation2 + $0xb3] sm:$0xff]
      %v1373 = vld [vmem:[#allocation2 + $0xcb] sm:$0xff]
      %v1374 = vld [vmem:[#allocation2 + $0xd3] sm:$0xff]
      %v1375 = vld [vmem:[#allocation2 + $0xeb] sm:$0xff]
      %v1376 = vld [vmem:[#allocation2 + $0xf3] sm:$0xff]
      %v1377 = vld [vmem:[#allocation2 + $0x10b] sm:$0xff]
      %v1378 = vld [vmem:[#allocation2 + $0x113] sm:$0xff]
      %v1379 = vld [vmem:[#allocation2 + $0x12b] sm:$0xff]
      %v1380 = vld [vmem:[#allocation2 + $0x133] sm:$0xff]
      %v1381 = vld [vmem:[#allocation2 + $0x14b] sm:$0xff]
      %v1382 = vld [vmem:[#allocation2 + $0x153] sm:$0xff]
      %v1383 = vld [vmem:[#allocation2 + $0x16b] sm:$0xff]
      %v1384 = vld [vmem:[#allocation2 + $0x173] sm:$0xff]
      %v1385 = vld [vmem:[#allocation2 + $0x18b] sm:$0xff]
      %v1386 = vld [vmem:[#allocation2 + $0x193] sm:$0xff]
      %v1387 = vld [vmem:[#allocation2 + $0x1ab] sm:$0xff]
      %v1388 = vld [vmem:[#allocation2 + $0x1b3] sm:$0xff]
      %v1389 = vld [vmem:[#allocation2 + $0x1cb] sm:$0xff]
      %v1390 = vld [vmem:[#allocation2 + $0x1d3] sm:$0xff]
      %v1391 = vld [vmem:[#allocation2 + $0x1eb] sm:$0xff]
      %v1392 = vld [vmem:[#allocation2 + $0x1f3] sm:$0xff]
      %v1393 = vmax.f32 %v1329, %v1361
      %v1394 = vmax.f32 %v1330, %v1362
      %v1395 = vmax.f32 %v1331, %v1363
      %v1396 = vmax.f32 %v1332, %v1364
      %v1397 = vmax.f32 %v1333, %v1365
      %v1398 = vmax.f32 %v1334, %v1366
      %v1399 = vmax.f32 %v1335, %v1367
      %v1400 = vmax.f32 %v1336, %v1368
      %v1401 = vmax.f32 %v1337, %v1369
      %v1402 = vmax.f32 %v1338, %v1370
      %v1403 = vmax.f32 %v1339, %v1371
      %v1404 = vmax.f32 %v1340, %v1372
      %v1405 = vmax.f32 %v1341, %v1373
      %v1406 = vmax.f32 %v1342, %v1374
      %v1407 = vmax.f32 %v1343, %v1375
      %v1408 = vmax.f32 %v1344, %v1376
      %v1409 = vmax.f32 %v1345, %v1377
      %v1410 = vmax.f32 %v1346, %v1378
      %v1411 = vmax.f32 %v1347, %v1379
      %v1412 = vmax.f32 %v1348, %v1380
      %v1413 = vmax.f32 %v1349, %v1381
      %v1414 = vmax.f32 %v1350, %v1382
      %v1415 = vmax.f32 %v1351, %v1383
      %v1416 = vmax.f32 %v1352, %v1384
      %v1417 = vmax.f32 %v1353, %v1385
      %v1418 = vmax.f32 %v1354, %v1386
      %v1419 = vmax.f32 %v1355, %v1387
      %v1420 = vmax.f32 %v1356, %v1388
      %v1421 = vmax.f32 %v1357, %v1389
      %v1422 = vmax.f32 %v1358, %v1390
      %v1423 = vmax.f32 %v1359, %v1391
      %v1424 = vmax.f32 %v1360, %v1392
      %s1425 = scalar_lea.vmem [#allocation3], 80
      %1426 = vst.msk [vmem:[%s1425] sm:$0xff] %vm555, %v1393
      %1427 = vst.msk [vmem:[%s1425 + $0x8] sm:$0xff] %vm555, %v1394
      %1428 = vst.msk [vmem:[%s1425 + $0x10] sm:$0xff] %vm555, %v1395
      %1429 = vst.msk [vmem:[%s1425 + $0x18] sm:$0xff] %vm555, %v1396
      %1430 = vst.msk [vmem:[%s1425 + $0x20] sm:$0xff] %vm555, %v1397
      %1431 = vst.msk [vmem:[%s1425 + $0x28] sm:$0xff] %vm555, %v1398
      %1432 = vst.msk [vmem:[%s1425 + $0x30] sm:$0xff] %vm555, %v1399
      %1433 = vst.msk [vmem:[%s1425 + $0x38] sm:$0xff] %vm555, %v1400
      %1434 = vst.msk [vmem:[%s1425 + $0x40] sm:$0xff] %vm555, %v1401
      %1435 = vst.msk [vmem:[%s1425 + $0x48] sm:$0xff] %vm555, %v1402
      %1436 = vst.msk [vmem:[%s1425 + $0x50] sm:$0xff] %vm555, %v1403
      %1437 = vst.msk [vmem:[%s1425 + $0x58] sm:$0xff] %vm555, %v1404
      %1438 = vst.msk [vmem:[%s1425 + $0x60] sm:$0xff] %vm555, %v1405
      %1439 = vst.msk [vmem:[%s1425 + $0x68] sm:$0xff] %vm555, %v1406
      %1440 = vst.msk [vmem:[%s1425 + $0x70] sm:$0xff] %vm555, %v1407
      %1441 = vst.msk [vmem:[%s1425 + $0x78] sm:$0xff] %vm555, %v1408
      %1442 = vst.msk [vmem:[%s1425 + $0x80] sm:$0xff] %vm555, %v1409
      %1443 = vst.msk [vmem:[%s1425 + $0x88] sm:$0xff] %vm555, %v1410
      %1444 = vst.msk [vmem:[%s1425 + $0x90] sm:$0xff] %vm555, %v1411
      %1445 = vst.msk [vmem:[%s1425 + $0x98] sm:$0xff] %vm555, %v1412
      %1446 = vst.msk [vmem:[%s1425 + $0xa0] sm:$0xff] %vm555, %v1413
      %1447 = vst.msk [vmem:[%s1425 + $0xa8] sm:$0xff] %vm555, %v1414
      %1448 = vst.msk [vmem:[%s1425 + $0xb0] sm:$0xff] %vm555, %v1415
      %1449 = vst.msk [vmem:[%s1425 + $0xb8] sm:$0xff] %vm555, %v1416
      %1450 = vst.msk [vmem:[%s1425 + $0xc0] sm:$0xff] %vm555, %v1417
      %1451 = vst.msk [vmem:[%s1425 + $0xc8] sm:$0xff] %vm555, %v1418
      %1452 = vst.msk [vmem:[%s1425 + $0xd0] sm:$0xff] %vm555, %v1419
      %1453 = vst.msk [vmem:[%s1425 + $0xd8] sm:$0xff] %vm555, %v1420
      %1454 = vst.msk [vmem:[%s1425 + $0xe0] sm:$0xff] %vm555, %v1421
      %1455 = vst.msk [vmem:[%s1425 + $0xe8] sm:$0xff] %vm555, %v1422
      %1456 = vst.msk [vmem:[%s1425 + $0xf0] sm:$0xff] %vm555, %v1423
      %1457 = vst.msk [vmem:[%s1425 + $0xf8] sm:$0xff] %vm555, %v1424
      %s1458 = scalar_lea.vmem [#allocation3], 32
      %1459 = vst.msk [vmem:[%s1458] sm:$0xff] %vm555, -inf
      %1460 = vst.msk [vmem:[%s1458 + $0x8] sm:$0xff] %vm555, -inf
      %1461 = vst.msk [vmem:[%s1458 + $0x10] sm:$0xff] %vm555, -inf
      %1462 = vst.msk [vmem:[%s1458 + $0x18] sm:$0xff] %vm555, -inf
      %1463 = vst.msk [vmem:[%s1458 + $0x20] sm:$0xff] %vm555, -inf
      %1464 = vst.msk [vmem:[%s1458 + $0x28] sm:$0xff] %vm555, -inf
      %s1465 = scalar_lea.vmem [#allocation3], 336
      %1466 = vst.msk [vmem:[%s1465] sm:$0xff] %vm555, -inf
      %1467 = vst.msk [vmem:[%s1465 + $0x8] sm:$0xff] %vm555, -inf
      %1468 = vst.msk [vmem:[%s1465 + $0x10] sm:$0xff] %vm555, -inf
      %1469 = vst.msk [vmem:[%s1465 + $0x18] sm:$0xff] %vm555, -inf
      %1470 = vst.msk [vmem:[%s1465 + $0x20] sm:$0xff] %vm555, -inf
      %1471 = vst.msk [vmem:[%s1465 + $0x28] sm:$0xff] %vm555, -inf
      %v1472 = vld [vmem:[%s1458] sm:$0xff]
      %v1473 = vld [vmem:[%s1458 + $0x8] sm:$0xff]
      %v1474 = vld [vmem:[%s1458 + $0x10] sm:$0xff]
      %v1475 = vld [vmem:[%s1458 + $0x18] sm:$0xff]
      %v1476 = vld [vmem:[%s1458 + $0x20] sm:$0xff]
      %v1477 = vld [vmem:[%s1458 + $0x28] sm:$0xff]
      %v1478 = vld [vmem:[%s1458 + $0x30] sm:$0xff]
      %v1479 = vld [vmem:[%s1458 + $0x38] sm:$0xff]
      %v1480 = vld [vmem:[%s1458 + $0x40] sm:$0xff]
      %v1481 = vld [vmem:[%s1458 + $0x48] sm:$0xff]
      %v1482 = vld [vmem:[%s1458 + $0x50] sm:$0xff]
      %v1483 = vld [vmem:[%s1458 + $0x58] sm:$0xff]
      %v1484 = vld [vmem:[%s1458 + $0x60] sm:$0xff]
      %v1485 = vld [vmem:[%s1458 + $0x68] sm:$0xff]
      %v1486 = vld [vmem:[%s1458 + $0x70] sm:$0xff]
      %v1487 = vld [vmem:[%s1458 + $0x78] sm:$0xff]
      %v1488 = vld [vmem:[%s1458 + $0x80] sm:$0xff]
      %v1489 = vld [vmem:[%s1458 + $0x88] sm:$0xff]
      %v1490 = vld [vmem:[%s1458 + $0x90] sm:$0xff]
      %v1491 = vld [vmem:[%s1458 + $0x98] sm:$0xff]
      %v1492 = vld [vmem:[%s1458 + $0xa0] sm:$0xff]
      %v1493 = vld [vmem:[%s1458 + $0xa8] sm:$0xff]
      %v1494 = vld [vmem:[%s1458 + $0xb0] sm:$0xff]
      %v1495 = vld [vmem:[%s1458 + $0xb8] sm:$0xff]
      %v1496 = vld [vmem:[%s1458 + $0xc0] sm:$0xff]
      %v1497 = vld [vmem:[%s1458 + $0xc8] sm:$0xff]
      %v1498 = vld [vmem:[%s1458 + $0xd0] sm:$0xff]
      %v1499 = vld [vmem:[%s1458 + $0xd8] sm:$0xff]
      %v1500 = vld [vmem:[%s1458 + $0xe0] sm:$0xff]
      %v1501 = vld [vmem:[%s1458 + $0xe8] sm:$0xff]
      %v1502 = vld [vmem:[%s1458 + $0xf0] sm:$0xff]
      %v1503 = vld [vmem:[%s1458 + $0xf8] sm:$0xff]
      %s1504 = scalar_lea.vmem [#allocation3], 48
      %v1505 = vld [vmem:[%s1504] sm:$0xff]
      %v1506 = vld [vmem:[%s1504 + $0x8] sm:$0xff]
      %v1507 = vld [vmem:[%s1504 + $0x10] sm:$0xff]
      %v1508 = vld [vmem:[%s1504 + $0x18] sm:$0xff]
      %v1509 = vld [vmem:[%s1504 + $0x20] sm:$0xff]
      %v1510 = vld [vmem:[%s1504 + $0x28] sm:$0xff]
      %v1511 = vld [vmem:[%s1504 + $0x30] sm:$0xff]
      %v1512 = vld [vmem:[%s1504 + $0x38] sm:$0xff]
      %v1513 = vld [vmem:[%s1504 + $0x40] sm:$0xff]
      %v1514 = vld [vmem:[%s1504 + $0x48] sm:$0xff]
      %v1515 = vld [vmem:[%s1504 + $0x50] sm:$0xff]
      %v1516 = vld [vmem:[%s1504 + $0x58] sm:$0xff]
      %v1517 = vld [vmem:[%s1504 + $0x60] sm:$0xff]
      %v1518 = vld [vmem:[%s1504 + $0x68] sm:$0xff]
      %v1519 = vld [vmem:[%s1504 + $0x70] sm:$0xff]
      %v1520 = vld [vmem:[%s1504 + $0x78] sm:$0xff]
      %v1521 = vld [vmem:[%s1504 + $0x80] sm:$0xff]
      %v1522 = vld [vmem:[%s1504 + $0x88] sm:$0xff]
      %v1523 = vld [vmem:[%s1504 + $0x90] sm:$0xff]
      %v1524 = vld [vmem:[%s1504 + $0x98] sm:$0xff]
      %v1525 = vld [vmem:[%s1504 + $0xa0] sm:$0xff]
      %v1526 = vld [vmem:[%s1504 + $0xa8] sm:$0xff]
      %v1527 = vld [vmem:[%s1504 + $0xb0] sm:$0xff]
      %v1528 = vld [vmem:[%s1504 + $0xb8] sm:$0xff]
      %v1529 = vld [vmem:[%s1504 + $0xc0] sm:$0xff]
      %v1530 = vld [vmem:[%s1504 + $0xc8] sm:$0xff]
      %v1531 = vld [vmem:[%s1504 + $0xd0] sm:$0xff]
      %v1532 = vld [vmem:[%s1504 + $0xd8] sm:$0xff]
      %v1533 = vld [vmem:[%s1504 + $0xe0] sm:$0xff]
      %v1534 = vld [vmem:[%s1504 + $0xe8] sm:$0xff]
      %v1535 = vld [vmem:[%s1504 + $0xf0] sm:$0xff]
      %v1536 = vld [vmem:[%s1504 + $0xf8] sm:$0xff]
      %v1537 = vmax.f32 %v1472, %v1505
      %v1538 = vmax.f32 %v1473, %v1506
      %v1539 = vmax.f32 %v1474, %v1507
      %v1540 = vmax.f32 %v1475, %v1508
      %v1541 = vmax.f32 %v1476, %v1509
      %v1542 = vmax.f32 %v1477, %v1510
      %v1543 = vmax.f32 %v1478, %v1511
      %v1544 = vmax.f32 %v1479, %v1512
      %v1545 = vmax.f32 %v1480, %v1513
      %v1546 = vmax.f32 %v1481, %v1514
      %v1547 = vmax.f32 %v1482, %v1515
      %v1548 = vmax.f32 %v1483, %v1516
      %v1549 = vmax.f32 %v1484, %v1517
      %v1550 = vmax.f32 %v1485, %v1518
      %v1551 = vmax.f32 %v1486, %v1519
      %v1552 = vmax.f32 %v1487, %v1520
      %v1553 = vmax.f32 %v1488, %v1521
      %v1554 = vmax.f32 %v1489, %v1522
      %v1555 = vmax.f32 %v1490, %v1523
      %v1556 = vmax.f32 %v1491, %v1524
      %v1557 = vmax.f32 %v1492, %v1525
      %v1558 = vmax.f32 %v1493, %v1526
      %v1559 = vmax.f32 %v1494, %v1527
      %v1560 = vmax.f32 %v1495, %v1528
      %v1561 = vmax.f32 %v1496, %v1529
      %v1562 = vmax.f32 %v1497, %v1530
      %v1563 = vmax.f32 %v1498, %v1531
      %v1564 = vmax.f32 %v1499, %v1532
      %v1565 = vmax.f32 %v1500, %v1533
      %v1566 = vmax.f32 %v1501, %v1534
      %v1567 = vmax.f32 %v1502, %v1535
      %v1568 = vmax.f32 %v1503, %v1536
      %s1569 = scalar_lea.vmem [#allocation3], 64
      %v1570 = vld [vmem:[%s1569] sm:$0xff]
      %v1571 = vld [vmem:[%s1569 + $0x8] sm:$0xff]
      %v1572 = vld [vmem:[%s1569 + $0x10] sm:$0xff]
      %v1573 = vld [vmem:[%s1569 + $0x18] sm:$0xff]
      %v1574 = vld [vmem:[%s1569 + $0x20] sm:$0xff]
      %v1575 = vld [vmem:[%s1569 + $0x28] sm:$0xff]
      %v1576 = vld [vmem:[%s1569 + $0x30] sm:$0xff]
      %v1577 = vld [vmem:[%s1569 + $0x38] sm:$0xff]
      %v1578 = vld [vmem:[%s1569 + $0x40] sm:$0xff]
      %v1579 = vld [vmem:[%s1569 + $0x48] sm:$0xff]
      %v1580 = vld [vmem:[%s1569 + $0x50] sm:$0xff]
      %v1581 = vld [vmem:[%s1569 + $0x58] sm:$0xff]
      %v1582 = vld [vmem:[%s1569 + $0x60] sm:$0xff]
      %v1583 = vld [vmem:[%s1569 + $0x68] sm:$0xff]
      %v1584 = vld [vmem:[%s1569 + $0x70] sm:$0xff]
      %v1585 = vld [vmem:[%s1569 + $0x78] sm:$0xff]
      %v1586 = vld [vmem:[%s1569 + $0x80] sm:$0xff]
      %v1587 = vld [vmem:[%s1569 + $0x88] sm:$0xff]
      %v1588 = vld [vmem:[%s1569 + $0x90] sm:$0xff]
      %v1589 = vld [vmem:[%s1569 + $0x98] sm:$0xff]
      %v1590 = vld [vmem:[%s1569 + $0xa0] sm:$0xff]
      %v1591 = vld [vmem:[%s1569 + $0xa8] sm:$0xff]
      %v1592 = vld [vmem:[%s1569 + $0xb0] sm:$0xff]
      %v1593 = vld [vmem:[%s1569 + $0xb8] sm:$0xff]
      %v1594 = vld [vmem:[%s1569 + $0xc0] sm:$0xff]
      %v1595 = vld [vmem:[%s1569 + $0xc8] sm:$0xff]
      %v1596 = vld [vmem:[%s1569 + $0xd0] sm:$0xff]
      %v1597 = vld [vmem:[%s1569 + $0xd8] sm:$0xff]
      %v1598 = vld [vmem:[%s1569 + $0xe0] sm:$0xff]
      %v1599 = vld [vmem:[%s1569 + $0xe8] sm:$0xff]
      %v1600 = vld [vmem:[%s1569 + $0xf0] sm:$0xff]
      %v1601 = vld [vmem:[%s1569 + $0xf8] sm:$0xff]
      %v1602 = vmax.f32 %v1537, %v1570
      %v1603 = vmax.f32 %v1538, %v1571
      %v1604 = vmax.f32 %v1539, %v1572
      %v1605 = vmax.f32 %v1540, %v1573
      %v1606 = vmax.f32 %v1541, %v1574
      %v1607 = vmax.f32 %v1542, %v1575
      %v1608 = vmax.f32 %v1543, %v1576
      %v1609 = vmax.f32 %v1544, %v1577
      %v1610 = vmax.f32 %v1545, %v1578
      %v1611 = vmax.f32 %v1546, %v1579
      %v1612 = vmax.f32 %v1547, %v1580
      %v1613 = vmax.f32 %v1548, %v1581
      %v1614 = vmax.f32 %v1549, %v1582
      %v1615 = vmax.f32 %v1550, %v1583
      %v1616 = vmax.f32 %v1551, %v1584
      %v1617 = vmax.f32 %v1552, %v1585
      %v1618 = vmax.f32 %v1553, %v1586
      %v1619 = vmax.f32 %v1554, %v1587
      %v1620 = vmax.f32 %v1555, %v1588
      %v1621 = vmax.f32 %v1556, %v1589
      %v1622 = vmax.f32 %v1557, %v1590
      %v1623 = vmax.f32 %v1558, %v1591
      %v1624 = vmax.f32 %v1559, %v1592
      %v1625 = vmax.f32 %v1560, %v1593
      %v1626 = vmax.f32 %v1561, %v1594
      %v1627 = vmax.f32 %v1562, %v1595
      %v1628 = vmax.f32 %v1563, %v1596
      %v1629 = vmax.f32 %v1564, %v1597
      %v1630 = vmax.f32 %v1565, %v1598
      %v1631 = vmax.f32 %v1566, %v1599
      %v1632 = vmax.f32 %v1567, %v1600
      %v1633 = vmax.f32 %v1568, %v1601
      %v1634 = vld [vmem:[%s1425] sm:$0xff]
      %v1635 = vld [vmem:[%s1425 + $0x8] sm:$0xff]
      %v1636 = vld [vmem:[%s1425 + $0x10] sm:$0xff]
      %v1637 = vld [vmem:[%s1425 + $0x18] sm:$0xff]
      %v1638 = vld [vmem:[%s1425 + $0x20] sm:$0xff]
      %v1639 = vld [vmem:[%s1425 + $0x28] sm:$0xff]
      %v1640 = vld [vmem:[%s1425 + $0x30] sm:$0xff]
      %v1641 = vld [vmem:[%s1425 + $0x38] sm:$0xff]
      %v1642 = vld [vmem:[%s1425 + $0x40] sm:$0xff]
      %v1643 = vld [vmem:[%s1425 + $0x48] sm:$0xff]
      %v1644 = vld [vmem:[%s1425 + $0x50] sm:$0xff]
      %v1645 = vld [vmem:[%s1425 + $0x58] sm:$0xff]
      %v1646 = vld [vmem:[%s1425 + $0x60] sm:$0xff]
      %v1647 = vld [vmem:[%s1425 + $0x68] sm:$0xff]
      %v1648 = vld [vmem:[%s1425 + $0x70] sm:$0xff]
      %v1649 = vld [vmem:[%s1425 + $0x78] sm:$0xff]
      %v1650 = vld [vmem:[%s1425 + $0x80] sm:$0xff]
      %v1651 = vld [vmem:[%s1425 + $0x88] sm:$0xff]
      %v1652 = vld [vmem:[%s1425 + $0x90] sm:$0xff]
      %v1653 = vld [vmem:[%s1425 + $0x98] sm:$0xff]
      %v1654 = vld [vmem:[%s1425 + $0xa0] sm:$0xff]
      %v1655 = vld [vmem:[%s1425 + $0xa8] sm:$0xff]
      %v1656 = vld [vmem:[%s1425 + $0xb0] sm:$0xff]
      %v1657 = vld [vmem:[%s1425 + $0xb8] sm:$0xff]
      %v1658 = vld [vmem:[%s1425 + $0xc0] sm:$0xff]
      %v1659 = vld [vmem:[%s1425 + $0xc8] sm:$0xff]
      %v1660 = vld [vmem:[%s1425 + $0xd0] sm:$0xff]
      %v1661 = vld [vmem:[%s1425 + $0xd8] sm:$0xff]
      %v1662 = vld [vmem:[%s1425 + $0xe0] sm:$0xff]
      %v1663 = vld [vmem:[%s1425 + $0xe8] sm:$0xff]
      %v1664 = vld [vmem:[%s1425 + $0xf0] sm:$0xff]
      %v1665 = vld [vmem:[%s1425 + $0xf8] sm:$0xff]
      %v1666 = vmax.f32 %v1602, %v1634
      %v1667 = vmax.f32 %v1603, %v1635
      %v1668 = vmax.f32 %v1604, %v1636
      %v1669 = vmax.f32 %v1605, %v1637
      %v1670 = vmax.f32 %v1606, %v1638
      %v1671 = vmax.f32 %v1607, %v1639
      %v1672 = vmax.f32 %v1608, %v1640
      %v1673 = vmax.f32 %v1609, %v1641
      %v1674 = vmax.f32 %v1610, %v1642
      %v1675 = vmax.f32 %v1611, %v1643
      %v1676 = vmax.f32 %v1612, %v1644
      %v1677 = vmax.f32 %v1613, %v1645
      %v1678 = vmax.f32 %v1614, %v1646
      %v1679 = vmax.f32 %v1615, %v1647
      %v1680 = vmax.f32 %v1616, %v1648
      %v1681 = vmax.f32 %v1617, %v1649
      %v1682 = vmax.f32 %v1618, %v1650
      %v1683 = vmax.f32 %v1619, %v1651
      %v1684 = vmax.f32 %v1620, %v1652
      %v1685 = vmax.f32 %v1621, %v1653
      %v1686 = vmax.f32 %v1622, %v1654
      %v1687 = vmax.f32 %v1623, %v1655
      %v1688 = vmax.f32 %v1624, %v1656
      %v1689 = vmax.f32 %v1625, %v1657
      %v1690 = vmax.f32 %v1626, %v1658
      %v1691 = vmax.f32 %v1627, %v1659
      %v1692 = vmax.f32 %v1628, %v1660
      %v1693 = vmax.f32 %v1629, %v1661
      %v1694 = vmax.f32 %v1630, %v1662
      %v1695 = vmax.f32 %v1631, %v1663
      %v1696 = vmax.f32 %v1632, %v1664
      %v1697 = vmax.f32 %v1633, %v1665
      %s1698 = scalar_lea.vmem [#allocation3], 96
      %v1699 = vld [vmem:[%s1698] sm:$0xff]
      %v1700 = vld [vmem:[%s1698 + $0x8] sm:$0xff]
      %v1701 = vld [vmem:[%s1698 + $0x10] sm:$0xff]
      %v1702 = vld [vmem:[%s1698 + $0x18] sm:$0xff]
      %v1703 = vld [vmem:[%s1698 + $0x20] sm:$0xff]
      %v1704 = vld [vmem:[%s1698 + $0x28] sm:$0xff]
      %v1705 = vld [vmem:[%s1698 + $0x30] sm:$0xff]
      %v1706 = vld [vmem:[%s1698 + $0x38] sm:$0xff]
      %v1707 = vld [vmem:[%s1698 + $0x40] sm:$0xff]
      %v1708 = vld [vmem:[%s1698 + $0x48] sm:$0xff]
      %v1709 = vld [vmem:[%s1698 + $0x50] sm:$0xff]
      %v1710 = vld [vmem:[%s1698 + $0x58] sm:$0xff]
      %v1711 = vld [vmem:[%s1698 + $0x60] sm:$0xff]
      %v1712 = vld [vmem:[%s1698 + $0x68] sm:$0xff]
      %v1713 = vld [vmem:[%s1698 + $0x70] sm:$0xff]
      %v1714 = vld [vmem:[%s1698 + $0x78] sm:$0xff]
      %v1715 = vld [vmem:[%s1698 + $0x80] sm:$0xff]
      %v1716 = vld [vmem:[%s1698 + $0x88] sm:$0xff]
      %v1717 = vld [vmem:[%s1698 + $0x90] sm:$0xff]
      %v1718 = vld [vmem:[%s1698 + $0x98] sm:$0xff]
      %v1719 = vld [vmem:[%s1698 + $0xa0] sm:$0xff]
      %v1720 = vld [vmem:[%s1698 + $0xa8] sm:$0xff]
      %v1721 = vld [vmem:[%s1698 + $0xb0] sm:$0xff]
      %v1722 = vld [vmem:[%s1698 + $0xb8] sm:$0xff]
      %v1723 = vld [vmem:[%s1698 + $0xc0] sm:$0xff]
      %v1724 = vld [vmem:[%s1698 + $0xc8] sm:$0xff]
      %v1725 = vld [vmem:[%s1698 + $0xd0] sm:$0xff]
      %v1726 = vld [vmem:[%s1698 + $0xd8] sm:$0xff]
      %v1727 = vld [vmem:[%s1698 + $0xe0] sm:$0xff]
      %v1728 = vld [vmem:[%s1698 + $0xe8] sm:$0xff]
      %v1729 = vld [vmem:[%s1698 + $0xf0] sm:$0xff]
      %v1730 = vld [vmem:[%s1698 + $0xf8] sm:$0xff]
      %v1731 = vmax.f32 %v1666, %v1699
      %v1732 = vmax.f32 %v1667, %v1700
      %v1733 = vmax.f32 %v1668, %v1701
      %v1734 = vmax.f32 %v1669, %v1702
      %v1735 = vmax.f32 %v1670, %v1703
      %v1736 = vmax.f32 %v1671, %v1704
      %v1737 = vmax.f32 %v1672, %v1705
      %v1738 = vmax.f32 %v1673, %v1706
      %v1739 = vmax.f32 %v1674, %v1707
      %v1740 = vmax.f32 %v1675, %v1708
      %v1741 = vmax.f32 %v1676, %v1709
      %v1742 = vmax.f32 %v1677, %v1710
      %v1743 = vmax.f32 %v1678, %v1711
      %v1744 = vmax.f32 %v1679, %v1712
      %v1745 = vmax.f32 %v1680, %v1713
      %v1746 = vmax.f32 %v1681, %v1714
      %v1747 = vmax.f32 %v1682, %v1715
      %v1748 = vmax.f32 %v1683, %v1716
      %v1749 = vmax.f32 %v1684, %v1717
      %v1750 = vmax.f32 %v1685, %v1718
      %v1751 = vmax.f32 %v1686, %v1719
      %v1752 = vmax.f32 %v1687, %v1720
      %v1753 = vmax.f32 %v1688, %v1721
      %v1754 = vmax.f32 %v1689, %v1722
      %v1755 = vmax.f32 %v1690, %v1723
      %v1756 = vmax.f32 %v1691, %v1724
      %v1757 = vmax.f32 %v1692, %v1725
      %v1758 = vmax.f32 %v1693, %v1726
      %v1759 = vmax.f32 %v1694, %v1727
      %v1760 = vmax.f32 %v1695, %v1728
      %v1761 = vmax.f32 %v1696, %v1729
      %v1762 = vmax.f32 %v1697, %v1730
      %s1763 = scalar_lea.vmem [#allocation3], 112
      %v1764 = vld [vmem:[%s1763] sm:$0xff]
      %v1765 = vld [vmem:[%s1763 + $0x8] sm:$0xff]
      %v1766 = vld [vmem:[%s1763 + $0x10] sm:$0xff]
      %v1767 = vld [vmem:[%s1763 + $0x18] sm:$0xff]
      %v1768 = vld [vmem:[%s1763 + $0x20] sm:$0xff]
      %v1769 = vld [vmem:[%s1763 + $0x28] sm:$0xff]
      %v1770 = vld [vmem:[%s1763 + $0x30] sm:$0xff]
      %v1771 = vld [vmem:[%s1763 + $0x38] sm:$0xff]
      %v1772 = vld [vmem:[%s1763 + $0x40] sm:$0xff]
      %v1773 = vld [vmem:[%s1763 + $0x48] sm:$0xff]
      %v1774 = vld [vmem:[%s1763 + $0x50] sm:$0xff]
      %v1775 = vld [vmem:[%s1763 + $0x58] sm:$0xff]
      %v1776 = vld [vmem:[%s1763 + $0x60] sm:$0xff]
      %v1777 = vld [vmem:[%s1763 + $0x68] sm:$0xff]
      %v1778 = vld [vmem:[%s1763 + $0x70] sm:$0xff]
      %v1779 = vld [vmem:[%s1763 + $0x78] sm:$0xff]
      %v1780 = vld [vmem:[%s1763 + $0x80] sm:$0xff]
      %v1781 = vld [vmem:[%s1763 + $0x88] sm:$0xff]
      %v1782 = vld [vmem:[%s1763 + $0x90] sm:$0xff]
      %v1783 = vld [vmem:[%s1763 + $0x98] sm:$0xff]
      %v1784 = vld [vmem:[%s1763 + $0xa0] sm:$0xff]
      %v1785 = vld [vmem:[%s1763 + $0xa8] sm:$0xff]
      %v1786 = vld [vmem:[%s1763 + $0xb0] sm:$0xff]
      %v1787 = vld [vmem:[%s1763 + $0xb8] sm:$0xff]
      %v1788 = vld [vmem:[%s1763 + $0xc0] sm:$0xff]
      %v1789 = vld [vmem:[%s1763 + $0xc8] sm:$0xff]
      %v1790 = vld [vmem:[%s1763 + $0xd0] sm:$0xff]
      %v1791 = vld [vmem:[%s1763 + $0xd8] sm:$0xff]
      %v1792 = vld [vmem:[%s1763 + $0xe0] sm:$0xff]
      %v1793 = vld [vmem:[%s1763 + $0xe8] sm:$0xff]
      %v1794 = vld [vmem:[%s1763 + $0xf0] sm:$0xff]
      %v1795 = vld [vmem:[%s1763 + $0xf8] sm:$0xff]
      %v1796 = vmax.f32 %v1731, %v1764
      %v1797 = vmax.f32 %v1732, %v1765
      %v1798 = vmax.f32 %v1733, %v1766
      %v1799 = vmax.f32 %v1734, %v1767
      %v1800 = vmax.f32 %v1735, %v1768
      %v1801 = vmax.f32 %v1736, %v1769
      %v1802 = vmax.f32 %v1737, %v1770
      %v1803 = vmax.f32 %v1738, %v1771
      %v1804 = vmax.f32 %v1739, %v1772
      %v1805 = vmax.f32 %v1740, %v1773
      %v1806 = vmax.f32 %v1741, %v1774
      %v1807 = vmax.f32 %v1742, %v1775
      %v1808 = vmax.f32 %v1743, %v1776
      %v1809 = vmax.f32 %v1744, %v1777
      %v1810 = vmax.f32 %v1745, %v1778
      %v1811 = vmax.f32 %v1746, %v1779
      %v1812 = vmax.f32 %v1747, %v1780
      %v1813 = vmax.f32 %v1748, %v1781
      %v1814 = vmax.f32 %v1749, %v1782
      %v1815 = vmax.f32 %v1750, %v1783
      %v1816 = vmax.f32 %v1751, %v1784
      %v1817 = vmax.f32 %v1752, %v1785
      %v1818 = vmax.f32 %v1753, %v1786
      %v1819 = vmax.f32 %v1754, %v1787
      %v1820 = vmax.f32 %v1755, %v1788
      %v1821 = vmax.f32 %v1756, %v1789
      %v1822 = vmax.f32 %v1757, %v1790
      %v1823 = vmax.f32 %v1758, %v1791
      %v1824 = vmax.f32 %v1759, %v1792
      %v1825 = vmax.f32 %v1760, %v1793
      %v1826 = vmax.f32 %v1761, %v1794
      %v1827 = vmax.f32 %v1762, %v1795
      %s1828 = scalar_lea.vmem [#allocation3], 128
      %v1829 = vld [vmem:[%s1828] sm:$0xff]
      %v1830 = vld [vmem:[%s1828 + $0x8] sm:$0xff]
      %v1831 = vld [vmem:[%s1828 + $0x10] sm:$0xff]
      %v1832 = vld [vmem:[%s1828 + $0x18] sm:$0xff]
      %v1833 = vld [vmem:[%s1828 + $0x20] sm:$0xff]
      %v1834 = vld [vmem:[%s1828 + $0x28] sm:$0xff]
      %v1835 = vld [vmem:[%s1828 + $0x30] sm:$0xff]
      %v1836 = vld [vmem:[%s1828 + $0x38] sm:$0xff]
      %v1837 = vld [vmem:[%s1828 + $0x40] sm:$0xff]
      %v1838 = vld [vmem:[%s1828 + $0x48] sm:$0xff]
      %v1839 = vld [vmem:[%s1828 + $0x50] sm:$0xff]
      %v1840 = vld [vmem:[%s1828 + $0x58] sm:$0xff]
      %v1841 = vld [vmem:[%s1828 + $0x60] sm:$0xff]
      %v1842 = vld [vmem:[%s1828 + $0x68] sm:$0xff]
      %v1843 = vld [vmem:[%s1828 + $0x70] sm:$0xff]
      %v1844 = vld [vmem:[%s1828 + $0x78] sm:$0xff]
      %v1845 = vld [vmem:[%s1828 + $0x80] sm:$0xff]
      %v1846 = vld [vmem:[%s1828 + $0x88] sm:$0xff]
      %v1847 = vld [vmem:[%s1828 + $0x90] sm:$0xff]
      %v1848 = vld [vmem:[%s1828 + $0x98] sm:$0xff]
      %v1849 = vld [vmem:[%s1828 + $0xa0] sm:$0xff]
      %v1850 = vld [vmem:[%s1828 + $0xa8] sm:$0xff]
      %v1851 = vld [vmem:[%s1828 + $0xb0] sm:$0xff]
      %v1852 = vld [vmem:[%s1828 + $0xb8] sm:$0xff]
      %v1853 = vld [vmem:[%s1828 + $0xc0] sm:$0xff]
      %v1854 = vld [vmem:[%s1828 + $0xc8] sm:$0xff]
      %v1855 = vld [vmem:[%s1828 + $0xd0] sm:$0xff]
      %v1856 = vld [vmem:[%s1828 + $0xd8] sm:$0xff]
      %v1857 = vld [vmem:[%s1828 + $0xe0] sm:$0xff]
      %v1858 = vld [vmem:[%s1828 + $0xe8] sm:$0xff]
      %v1859 = vld [vmem:[%s1828 + $0xf0] sm:$0xff]
      %v1860 = vld [vmem:[%s1828 + $0xf8] sm:$0xff]
      %v1861 = vmax.f32 %v1796, %v1829
      %v1862 = vmax.f32 %v1797, %v1830
      %v1863 = vmax.f32 %v1798, %v1831
      %v1864 = vmax.f32 %v1799, %v1832
      %v1865 = vmax.f32 %v1800, %v1833
      %v1866 = vmax.f32 %v1801, %v1834
      %v1867 = vmax.f32 %v1802, %v1835
      %v1868 = vmax.f32 %v1803, %v1836
      %v1869 = vmax.f32 %v1804, %v1837
      %v1870 = vmax.f32 %v1805, %v1838
      %v1871 = vmax.f32 %v1806, %v1839
      %v1872 = vmax.f32 %v1807, %v1840
      %v1873 = vmax.f32 %v1808, %v1841
      %v1874 = vmax.f32 %v1809, %v1842
      %v1875 = vmax.f32 %v1810, %v1843
      %v1876 = vmax.f32 %v1811, %v1844
      %v1877 = vmax.f32 %v1812, %v1845
      %v1878 = vmax.f32 %v1813, %v1846
      %v1879 = vmax.f32 %v1814, %v1847
      %v1880 = vmax.f32 %v1815, %v1848
      %v1881 = vmax.f32 %v1816, %v1849
      %v1882 = vmax.f32 %v1817, %v1850
      %v1883 = vmax.f32 %v1818, %v1851
      %v1884 = vmax.f32 %v1819, %v1852
      %v1885 = vmax.f32 %v1820, %v1853
      %v1886 = vmax.f32 %v1821, %v1854
      %v1887 = vmax.f32 %v1822, %v1855
      %v1888 = vmax.f32 %v1823, %v1856
      %v1889 = vmax.f32 %v1824, %v1857
      %v1890 = vmax.f32 %v1825, %v1858
      %v1891 = vmax.f32 %v1826, %v1859
      %v1892 = vmax.f32 %v1827, %v1860
      %1893 = vst.msk [vmem:[#allocation2] sm:$0xff] %vm555, 0.0
      %1894 = vst.msk [vmem:[#allocation2 + $0x20] sm:$0xff] %vm555, 0.0
      %1895 = vst.msk [vmem:[#allocation2 + $0x40] sm:$0xff] %vm555, 0.0
      %1896 = vst.msk [vmem:[#allocation2 + $0x60] sm:$0xff] %vm555, 0.0
      %1897 = vst.msk [vmem:[#allocation2 + $0x80] sm:$0xff] %vm555, 0.0
      %1898 = vst.msk [vmem:[#allocation2 + $0xa0] sm:$0xff] %vm555, 0.0
      %1899 = vst.msk [vmem:[#allocation2 + $0xc0] sm:$0xff] %vm555, 0.0
      %1900 = vst.msk [vmem:[#allocation2 + $0xe0] sm:$0xff] %vm555, 0.0
      %1901 = vst.msk [vmem:[#allocation2 + $0x100] sm:$0xff] %vm555, 0.0
      %1902 = vst.msk [vmem:[#allocation2 + $0x120] sm:$0xff] %vm555, 0.0
      %1903 = vst.msk [vmem:[#allocation2 + $0x140] sm:$0xff] %vm555, 0.0
      %1904 = vst.msk [vmem:[#allocation2 + $0x160] sm:$0xff] %vm555, 0.0
      %1905 = vst.msk [vmem:[#allocation2 + $0x180] sm:$0xff] %vm555, 0.0
      %1906 = vst.msk [vmem:[#allocation2 + $0x1a0] sm:$0xff] %vm555, 0.0
      %1907 = vst.msk [vmem:[#allocation2 + $0x1c0] sm:$0xff] %vm555, 0.0
      %1908 = vst.msk [vmem:[#allocation2 + $0x1e0] sm:$0xff] %vm555, 0.0
      %1909 = vst.msk [vmem:[#allocation2 + $0x18] sm:$0xff] %vm555, 0.0
      %1910 = vst.msk [vmem:[#allocation2 + $0x38] sm:$0xff] %vm555, 0.0
      %1911 = vst.msk [vmem:[#allocation2 + $0x58] sm:$0xff] %vm555, 0.0
      %1912 = vst.msk [vmem:[#allocation2 + $0x78] sm:$0xff] %vm555, 0.0
      %1913 = vst.msk [vmem:[#allocation2 + $0x98] sm:$0xff] %vm555, 0.0
      %1914 = vst.msk [vmem:[#allocation2 + $0xb8] sm:$0xff] %vm555, 0.0
      %1915 = vst.msk [vmem:[#allocation2 + $0xd8] sm:$0xff] %vm555, 0.0
      %1916 = vst.msk [vmem:[#allocation2 + $0xf8] sm:$0xff] %vm555, 0.0
      %1917 = vst.msk [vmem:[#allocation2 + $0x118] sm:$0xff] %vm555, 0.0
      %1918 = vst.msk [vmem:[#allocation2 + $0x138] sm:$0xff] %vm555, 0.0
      %1919 = vst.msk [vmem:[#allocation2 + $0x158] sm:$0xff] %vm555, 0.0
      %1920 = vst.msk [vmem:[#allocation2 + $0x178] sm:$0xff] %vm555, 0.0
      %1921 = vst.msk [vmem:[#allocation2 + $0x198] sm:$0xff] %vm555, 0.0
      %1922 = vst.msk [vmem:[#allocation2 + $0x1b8] sm:$0xff] %vm555, 0.0
      %1923 = vst.msk [vmem:[#allocation2 + $0x1d8] sm:$0xff] %vm555, 0.0
      %1924 = vst.msk [vmem:[#allocation2 + $0x1f8] sm:$0xff] %vm555, 0.0
      %v1925 = vld [vmem:[#allocation2 + $0x5] sm:$0xff]
      %v1926 = vld [vmem:[#allocation2 + $0xd] sm:$0xff]
      %v1927 = vld [vmem:[#allocation2 + $0x25] sm:$0xff]
      %v1928 = vld [vmem:[#allocation2 + $0x2d] sm:$0xff]
      %v1929 = vld [vmem:[#allocation2 + $0x45] sm:$0xff]
      %v1930 = vld [vmem:[#allocation2 + $0x4d] sm:$0xff]
      %v1931 = vld [vmem:[#allocation2 + $0x65] sm:$0xff]
      %v1932 = vld [vmem:[#allocation2 + $0x6d] sm:$0xff]
      %v1933 = vld [vmem:[#allocation2 + $0x85] sm:$0xff]
      %v1934 = vld [vmem:[#allocation2 + $0x8d] sm:$0xff]
      %v1935 = vld [vmem:[#allocation2 + $0xa5] sm:$0xff]
      %v1936 = vld [vmem:[#allocation2 + $0xad] sm:$0xff]
      %v1937 = vld [vmem:[#allocation2 + $0xc5] sm:$0xff]
      %v1938 = vld [vmem:[#allocation2 + $0xcd] sm:$0xff]
      %v1939 = vld [vmem:[#allocation2 + $0xe5] sm:$0xff]
      %v1940 = vld [vmem:[#allocation2 + $0xed] sm:$0xff]
      %v1941 = vld [vmem:[#allocation2 + $0x105] sm:$0xff]
      %v1942 = vld [vmem:[#allocation2 + $0x10d] sm:$0xff]
      %v1943 = vld [vmem:[#allocation2 + $0x125] sm:$0xff]
      %v1944 = vld [vmem:[#allocation2 + $0x12d] sm:$0xff]
      %v1945 = vld [vmem:[#allocation2 + $0x145] sm:$0xff]
      %v1946 = vld [vmem:[#allocation2 + $0x14d] sm:$0xff]
      %v1947 = vld [vmem:[#allocation2 + $0x165] sm:$0xff]
      %v1948 = vld [vmem:[#allocation2 + $0x16d] sm:$0xff]
      %v1949 = vld [vmem:[#allocation2 + $0x185] sm:$0xff]
      %v1950 = vld [vmem:[#allocation2 + $0x18d] sm:$0xff]
      %v1951 = vld [vmem:[#allocation2 + $0x1a5] sm:$0xff]
      %v1952 = vld [vmem:[#allocation2 + $0x1ad] sm:$0xff]
      %v1953 = vld [vmem:[#allocation2 + $0x1c5] sm:$0xff]
      %v1954 = vld [vmem:[#allocation2 + $0x1cd] sm:$0xff]
      %v1955 = vld [vmem:[#allocation2 + $0x1e5] sm:$0xff]
      %v1956 = vld [vmem:[#allocation2 + $0x1ed] sm:$0xff]
      %v1957 = vld [vmem:[#allocation2 + $0x6] sm:$0xff]
      %v1958 = vld [vmem:[#allocation2 + $0xe] sm:$0xff]
      %v1959 = vld [vmem:[#allocation2 + $0x26] sm:$0xff]
      %v1960 = vld [vmem:[#allocation2 + $0x2e] sm:$0xff]
      %v1961 = vld [vmem:[#allocation2 + $0x46] sm:$0xff]
      %v1962 = vld [vmem:[#allocation2 + $0x4e] sm:$0xff]
      %v1963 = vld [vmem:[#allocation2 + $0x66] sm:$0xff]
      %v1964 = vld [vmem:[#allocation2 + $0x6e] sm:$0xff]
      %v1965 = vld [vmem:[#allocation2 + $0x86] sm:$0xff]
      %v1966 = vld [vmem:[#allocation2 + $0x8e] sm:$0xff]
      %v1967 = vld [vmem:[#allocation2 + $0xa6] sm:$0xff]
      %v1968 = vld [vmem:[#allocation2 + $0xae] sm:$0xff]
      %v1969 = vld [vmem:[#allocation2 + $0xc6] sm:$0xff]
      %v1970 = vld [vmem:[#allocation2 + $0xce] sm:$0xff]
      %v1971 = vld [vmem:[#allocation2 + $0xe6] sm:$0xff]
      %v1972 = vld [vmem:[#allocation2 + $0xee] sm:$0xff]
      %v1973 = vld [vmem:[#allocation2 + $0x106] sm:$0xff]
      %v1974 = vld [vmem:[#allocation2 + $0x10e] sm:$0xff]
      %v1975 = vld [vmem:[#allocation2 + $0x126] sm:$0xff]
      %v1976 = vld [vmem:[#allocation2 + $0x12e] sm:$0xff]
      %v1977 = vld [vmem:[#allocation2 + $0x146] sm:$0xff]
      %v1978 = vld [vmem:[#allocation2 + $0x14e] sm:$0xff]
      %v1979 = vld [vmem:[#allocation2 + $0x166] sm:$0xff]
      %v1980 = vld [vmem:[#allocation2 + $0x16e] sm:$0xff]
      %v1981 = vld [vmem:[#allocation2 + $0x186] sm:$0xff]
      %v1982 = vld [vmem:[#allocation2 + $0x18e] sm:$0xff]
      %v1983 = vld [vmem:[#allocation2 + $0x1a6] sm:$0xff]
      %v1984 = vld [vmem:[#allocation2 + $0x1ae] sm:$0xff]
      %v1985 = vld [vmem:[#allocation2 + $0x1c6] sm:$0xff]
      %v1986 = vld [vmem:[#allocation2 + $0x1ce] sm:$0xff]
      %v1987 = vld [vmem:[#allocation2 + $0x1e6] sm:$0xff]
      %v1988 = vld [vmem:[#allocation2 + $0x1ee] sm:$0xff]
      %v1989 = vadd.f32 %v1925, %v1957
      %v1990 = vadd.f32 %v1926, %v1958
      %v1991 = vadd.f32 %v1927, %v1959
      %v1992 = vadd.f32 %v1928, %v1960
      %v1993 = vadd.f32 %v1929, %v1961
      %v1994 = vadd.f32 %v1930, %v1962
      %v1995 = vadd.f32 %v1931, %v1963
      %v1996 = vadd.f32 %v1932, %v1964
      %v1997 = vadd.f32 %v1933, %v1965
      %v1998 = vadd.f32 %v1934, %v1966
      %v1999 = vadd.f32 %v1935, %v1967
      %v2000 = vadd.f32 %v1936, %v1968
      %v2001 = vadd.f32 %v1937, %v1969
      %v2002 = vadd.f32 %v1938, %v1970
      %v2003 = vadd.f32 %v1939, %v1971
      %v2004 = vadd.f32 %v1940, %v1972
      %v2005 = vadd.f32 %v1941, %v1973
      %v2006 = vadd.f32 %v1942, %v1974
      %v2007 = vadd.f32 %v1943, %v1975
      %v2008 = vadd.f32 %v1944, %v1976
      %v2009 = vadd.f32 %v1945, %v1977
      %v2010 = vadd.f32 %v1946, %v1978
      %v2011 = vadd.f32 %v1947, %v1979
      %v2012 = vadd.f32 %v1948, %v1980
      %v2013 = vadd.f32 %v1949, %v1981
      %v2014 = vadd.f32 %v1950, %v1982
      %v2015 = vadd.f32 %v1951, %v1983
      %v2016 = vadd.f32 %v1952, %v1984
      %v2017 = vadd.f32 %v1953, %v1985
      %v2018 = vadd.f32 %v1954, %v1986
      %v2019 = vadd.f32 %v1955, %v1987
      %v2020 = vadd.f32 %v1956, %v1988
      %v2021 = vld [vmem:[#allocation2 + $0x7] sm:$0xff]
      %v2022 = vld [vmem:[#allocation2 + $0xf] sm:$0xff]
      %v2023 = vld [vmem:[#allocation2 + $0x27] sm:$0xff]
      %v2024 = vld [vmem:[#allocation2 + $0x2f] sm:$0xff]
      %v2025 = vld [vmem:[#allocation2 + $0x47] sm:$0xff]
      %v2026 = vld [vmem:[#allocation2 + $0x4f] sm:$0xff]
      %v2027 = vld [vmem:[#allocation2 + $0x67] sm:$0xff]
      %v2028 = vld [vmem:[#allocation2 + $0x6f] sm:$0xff]
      %v2029 = vld [vmem:[#allocation2 + $0x87] sm:$0xff]
      %v2030 = vld [vmem:[#allocation2 + $0x8f] sm:$0xff]
      %v2031 = vld [vmem:[#allocation2 + $0xa7] sm:$0xff]
      %v2032 = vld [vmem:[#allocation2 + $0xaf] sm:$0xff]
      %v2033 = vld [vmem:[#allocation2 + $0xc7] sm:$0xff]
      %v2034 = vld [vmem:[#allocation2 + $0xcf] sm:$0xff]
      %v2035 = vld [vmem:[#allocation2 + $0xe7] sm:$0xff]
      %v2036 = vld [vmem:[#allocation2 + $0xef] sm:$0xff]
      %v2037 = vld [vmem:[#allocation2 + $0x107] sm:$0xff]
      %v2038 = vld [vmem:[#allocation2 + $0x10f] sm:$0xff]
      %v2039 = vld [vmem:[#allocation2 + $0x127] sm:$0xff]
      %v2040 = vld [vmem:[#allocation2 + $0x12f] sm:$0xff]
      %v2041 = vld [vmem:[#allocation2 + $0x147] sm:$0xff]
      %v2042 = vld [vmem:[#allocation2 + $0x14f] sm:$0xff]
      %v2043 = vld [vmem:[#allocation2 + $0x167] sm:$0xff]
      %v2044 = vld [vmem:[#allocation2 + $0x16f] sm:$0xff]
      %v2045 = vld [vmem:[#allocation2 + $0x187] sm:$0xff]
      %v2046 = vld [vmem:[#allocation2 + $0x18f] sm:$0xff]
      %v2047 = vld [vmem:[#allocation2 + $0x1a7] sm:$0xff]
      %v2048 = vld [vmem:[#allocation2 + $0x1af] sm:$0xff]
      %v2049 = vld [vmem:[#allocation2 + $0x1c7] sm:$0xff]
      %v2050 = vld [vmem:[#allocation2 + $0x1cf] sm:$0xff]
      %v2051 = vld [vmem:[#allocation2 + $0x1e7] sm:$0xff]
      %v2052 = vld [vmem:[#allocation2 + $0x1ef] sm:$0xff]
      %v2053 = vadd.f32 %v1989, %v2021
      %v2054 = vadd.f32 %v1990, %v2022
      %v2055 = vadd.f32 %v1991, %v2023
      %v2056 = vadd.f32 %v1992, %v2024
      %v2057 = vadd.f32 %v1993, %v2025
      %v2058 = vadd.f32 %v1994, %v2026
      %v2059 = vadd.f32 %v1995, %v2027
      %v2060 = vadd.f32 %v1996, %v2028
      %v2061 = vadd.f32 %v1997, %v2029
      %v2062 = vadd.f32 %v1998, %v2030
      %v2063 = vadd.f32 %v1999, %v2031
      %v2064 = vadd.f32 %v2000, %v2032
      %v2065 = vadd.f32 %v2001, %v2033
      %v2066 = vadd.f32 %v2002, %v2034
      %v2067 = vadd.f32 %v2003, %v2035
      %v2068 = vadd.f32 %v2004, %v2036
      %v2069 = vadd.f32 %v2005, %v2037
      %v2070 = vadd.f32 %v2006, %v2038
      %v2071 = vadd.f32 %v2007, %v2039
      %v2072 = vadd.f32 %v2008, %v2040
      %v2073 = vadd.f32 %v2009, %v2041
      %v2074 = vadd.f32 %v2010, %v2042
      %v2075 = vadd.f32 %v2011, %v2043
      %v2076 = vadd.f32 %v2012, %v2044
      %v2077 = vadd.f32 %v2013, %v2045
      %v2078 = vadd.f32 %v2014, %v2046
      %v2079 = vadd.f32 %v2015, %v2047
      %v2080 = vadd.f32 %v2016, %v2048
      %v2081 = vadd.f32 %v2017, %v2049
      %v2082 = vadd.f32 %v2018, %v2050
      %v2083 = vadd.f32 %v2019, %v2051
      %v2084 = vadd.f32 %v2020, %v2052
      %v2085 = vld [vmem:[#allocation2 + $0x8] sm:$0xff]
      %v2086 = vld [vmem:[#allocation2 + $0x10] sm:$0xff]
      %v2087 = vld [vmem:[#allocation2 + $0x28] sm:$0xff]
      %v2088 = vld [vmem:[#allocation2 + $0x30] sm:$0xff]
      %v2089 = vld [vmem:[#allocation2 + $0x48] sm:$0xff]
      %v2090 = vld [vmem:[#allocation2 + $0x50] sm:$0xff]
      %v2091 = vld [vmem:[#allocation2 + $0x68] sm:$0xff]
      %v2092 = vld [vmem:[#allocation2 + $0x70] sm:$0xff]
      %v2093 = vld [vmem:[#allocation2 + $0x88] sm:$0xff]
      %v2094 = vld [vmem:[#allocation2 + $0x90] sm:$0xff]
      %v2095 = vld [vmem:[#allocation2 + $0xa8] sm:$0xff]
      %v2096 = vld [vmem:[#allocation2 + $0xb0] sm:$0xff]
      %v2097 = vld [vmem:[#allocation2 + $0xc8] sm:$0xff]
      %v2098 = vld [vmem:[#allocation2 + $0xd0] sm:$0xff]
      %v2099 = vld [vmem:[#allocation2 + $0xe8] sm:$0xff]
      %v2100 = vld [vmem:[#allocation2 + $0xf0] sm:$0xff]
      %v2101 = vld [vmem:[#allocation2 + $0x108] sm:$0xff]
      %v2102 = vld [vmem:[#allocation2 + $0x110] sm:$0xff]
      %v2103 = vld [vmem:[#allocation2 + $0x128] sm:$0xff]
      %v2104 = vld [vmem:[#allocation2 + $0x130] sm:$0xff]
      %v2105 = vld [vmem:[#allocation2 + $0x148] sm:$0xff]
      %v2106 = vld [vmem:[#allocation2 + $0x150] sm:$0xff]
      %v2107 = vld [vmem:[#allocation2 + $0x168] sm:$0xff]
      %v2108 = vld [vmem:[#allocation2 + $0x170] sm:$0xff]
      %v2109 = vld [vmem:[#allocation2 + $0x188] sm:$0xff]
      %v2110 = vld [vmem:[#allocation2 + $0x190] sm:$0xff]
      %v2111 = vld [vmem:[#allocation2 + $0x1a8] sm:$0xff]
      %v2112 = vld [vmem:[#allocation2 + $0x1b0] sm:$0xff]
      %v2113 = vld [vmem:[#allocation2 + $0x1c8] sm:$0xff]
      %v2114 = vld [vmem:[#allocation2 + $0x1d0] sm:$0xff]
      %v2115 = vld [vmem:[#allocation2 + $0x1e8] sm:$0xff]
      %v2116 = vld [vmem:[#allocation2 + $0x1f0] sm:$0xff]
      %v2117 = vadd.f32 %v2053, %v2085
      %v2118 = vadd.f32 %v2054, %v2086
      %v2119 = vadd.f32 %v2055, %v2087
      %v2120 = vadd.f32 %v2056, %v2088
      %v2121 = vadd.f32 %v2057, %v2089
      %v2122 = vadd.f32 %v2058, %v2090
      %v2123 = vadd.f32 %v2059, %v2091
      %v2124 = vadd.f32 %v2060, %v2092
      %v2125 = vadd.f32 %v2061, %v2093
      %v2126 = vadd.f32 %v2062, %v2094
      %v2127 = vadd.f32 %v2063, %v2095
      %v2128 = vadd.f32 %v2064, %v2096
      %v2129 = vadd.f32 %v2065, %v2097
      %v2130 = vadd.f32 %v2066, %v2098
      %v2131 = vadd.f32 %v2067, %v2099
      %v2132 = vadd.f32 %v2068, %v2100
      %v2133 = vadd.f32 %v2069, %v2101
      %v2134 = vadd.f32 %v2070, %v2102
      %v2135 = vadd.f32 %v2071, %v2103
      %v2136 = vadd.f32 %v2072, %v2104
      %v2137 = vadd.f32 %v2073, %v2105
      %v2138 = vadd.f32 %v2074, %v2106
      %v2139 = vadd.f32 %v2075, %v2107
      %v2140 = vadd.f32 %v2076, %v2108
      %v2141 = vadd.f32 %v2077, %v2109
      %v2142 = vadd.f32 %v2078, %v2110
      %v2143 = vadd.f32 %v2079, %v2111
      %v2144 = vadd.f32 %v2080, %v2112
      %v2145 = vadd.f32 %v2081, %v2113
      %v2146 = vadd.f32 %v2082, %v2114
      %v2147 = vadd.f32 %v2083, %v2115
      %v2148 = vadd.f32 %v2084, %v2116
      %v2149 = vld [vmem:[#allocation2 + $0x9] sm:$0xff]
      %v2150 = vld [vmem:[#allocation2 + $0x11] sm:$0xff]
      %v2151 = vld [vmem:[#allocation2 + $0x29] sm:$0xff]
      %v2152 = vld [vmem:[#allocation2 + $0x31] sm:$0xff]
      %v2153 = vld [vmem:[#allocation2 + $0x49] sm:$0xff]
      %v2154 = vld [vmem:[#allocation2 + $0x51] sm:$0xff]
      %v2155 = vld [vmem:[#allocation2 + $0x69] sm:$0xff]
      %v2156 = vld [vmem:[#allocation2 + $0x71] sm:$0xff]
      %v2157 = vld [vmem:[#allocation2 + $0x89] sm:$0xff]
      %v2158 = vld [vmem:[#allocation2 + $0x91] sm:$0xff]
      %v2159 = vld [vmem:[#allocation2 + $0xa9] sm:$0xff]
      %v2160 = vld [vmem:[#allocation2 + $0xb1] sm:$0xff]
      %v2161 = vld [vmem:[#allocation2 + $0xc9] sm:$0xff]
      %v2162 = vld [vmem:[#allocation2 + $0xd1] sm:$0xff]
      %v2163 = vld [vmem:[#allocation2 + $0xe9] sm:$0xff]
      %v2164 = vld [vmem:[#allocation2 + $0xf1] sm:$0xff]
      %v2165 = vld [vmem:[#allocation2 + $0x109] sm:$0xff]
      %v2166 = vld [vmem:[#allocation2 + $0x111] sm:$0xff]
      %v2167 = vld [vmem:[#allocation2 + $0x129] sm:$0xff]
      %v2168 = vld [vmem:[#allocation2 + $0x131] sm:$0xff]
      %v2169 = vld [vmem:[#allocation2 + $0x149] sm:$0xff]
      %v2170 = vld [vmem:[#allocation2 + $0x151] sm:$0xff]
      %v2171 = vld [vmem:[#allocation2 + $0x169] sm:$0xff]
      %v2172 = vld [vmem:[#allocation2 + $0x171] sm:$0xff]
      %v2173 = vld [vmem:[#allocation2 + $0x189] sm:$0xff]
      %v2174 = vld [vmem:[#allocation2 + $0x191] sm:$0xff]
      %v2175 = vld [vmem:[#allocation2 + $0x1a9] sm:$0xff]
      %v2176 = vld [vmem:[#allocation2 + $0x1b1] sm:$0xff]
      %v2177 = vld [vmem:[#allocation2 + $0x1c9] sm:$0xff]
      %v2178 = vld [vmem:[#allocation2 + $0x1d1] sm:$0xff]
      %v2179 = vld [vmem:[#allocation2 + $0x1e9] sm:$0xff]
      %v2180 = vld [vmem:[#allocation2 + $0x1f1] sm:$0xff]
      %v2181 = vadd.f32 %v2117, %v2149
      %v2182 = vadd.f32 %v2118, %v2150
      %v2183 = vadd.f32 %v2119, %v2151
      %v2184 = vadd.f32 %v2120, %v2152
      %v2185 = vadd.f32 %v2121, %v2153
      %v2186 = vadd.f32 %v2122, %v2154
      %v2187 = vadd.f32 %v2123, %v2155
      %v2188 = vadd.f32 %v2124, %v2156
      %v2189 = vadd.f32 %v2125, %v2157
      %v2190 = vadd.f32 %v2126, %v2158
      %v2191 = vadd.f32 %v2127, %v2159
      %v2192 = vadd.f32 %v2128, %v2160
      %v2193 = vadd.f32 %v2129, %v2161
      %v2194 = vadd.f32 %v2130, %v2162
      %v2195 = vadd.f32 %v2131, %v2163
      %v2196 = vadd.f32 %v2132, %v2164
      %v2197 = vadd.f32 %v2133, %v2165
      %v2198 = vadd.f32 %v2134, %v2166
      %v2199 = vadd.f32 %v2135, %v2167
      %v2200 = vadd.f32 %v2136, %v2168
      %v2201 = vadd.f32 %v2137, %v2169
      %v2202 = vadd.f32 %v2138, %v2170
      %v2203 = vadd.f32 %v2139, %v2171
      %v2204 = vadd.f32 %v2140, %v2172
      %v2205 = vadd.f32 %v2141, %v2173
      %v2206 = vadd.f32 %v2142, %v2174
      %v2207 = vadd.f32 %v2143, %v2175
      %v2208 = vadd.f32 %v2144, %v2176
      %v2209 = vadd.f32 %v2145, %v2177
      %v2210 = vadd.f32 %v2146, %v2178
      %v2211 = vadd.f32 %v2147, %v2179
      %v2212 = vadd.f32 %v2148, %v2180
      %v2213 = vld [vmem:[#allocation2 + $0xa] sm:$0xff]
      %v2214 = vld [vmem:[#allocation2 + $0x12] sm:$0xff]
      %v2215 = vld [vmem:[#allocation2 + $0x2a] sm:$0xff]
      %v2216 = vld [vmem:[#allocation2 + $0x32] sm:$0xff]
      %v2217 = vld [vmem:[#allocation2 + $0x4a] sm:$0xff]
      %v2218 = vld [vmem:[#allocation2 + $0x52] sm:$0xff]
      %v2219 = vld [vmem:[#allocation2 + $0x6a] sm:$0xff]
      %v2220 = vld [vmem:[#allocation2 + $0x72] sm:$0xff]
      %v2221 = vld [vmem:[#allocation2 + $0x8a] sm:$0xff]
      %v2222 = vld [vmem:[#allocation2 + $0x92] sm:$0xff]
      %v2223 = vld [vmem:[#allocation2 + $0xaa] sm:$0xff]
      %v2224 = vld [vmem:[#allocation2 + $0xb2] sm:$0xff]
      %v2225 = vld [vmem:[#allocation2 + $0xca] sm:$0xff]
      %v2226 = vld [vmem:[#allocation2 + $0xd2] sm:$0xff]
      %v2227 = vld [vmem:[#allocation2 + $0xea] sm:$0xff]
      %v2228 = vld [vmem:[#allocation2 + $0xf2] sm:$0xff]
      %v2229 = vld [vmem:[#allocation2 + $0x10a] sm:$0xff]
      %v2230 = vld [vmem:[#allocation2 + $0x112] sm:$0xff]
      %v2231 = vld [vmem:[#allocation2 + $0x12a] sm:$0xff]
      %v2232 = vld [vmem:[#allocation2 + $0x132] sm:$0xff]
      %v2233 = vld [vmem:[#allocation2 + $0x14a] sm:$0xff]
      %v2234 = vld [vmem:[#allocation2 + $0x152] sm:$0xff]
      %v2235 = vld [vmem:[#allocation2 + $0x16a] sm:$0xff]
      %v2236 = vld [vmem:[#allocation2 + $0x172] sm:$0xff]
      %v2237 = vld [vmem:[#allocation2 + $0x18a] sm:$0xff]
      %v2238 = vld [vmem:[#allocation2 + $0x192] sm:$0xff]
      %v2239 = vld [vmem:[#allocation2 + $0x1aa] sm:$0xff]
      %v2240 = vld [vmem:[#allocation2 + $0x1b2] sm:$0xff]
      %v2241 = vld [vmem:[#allocation2 + $0x1ca] sm:$0xff]
      %v2242 = vld [vmem:[#allocation2 + $0x1d2] sm:$0xff]
      %v2243 = vld [vmem:[#allocation2 + $0x1ea] sm:$0xff]
      %v2244 = vld [vmem:[#allocation2 + $0x1f2] sm:$0xff]
      %v2245 = vadd.f32 %v2181, %v2213
      %v2246 = vadd.f32 %v2182, %v2214
      %v2247 = vadd.f32 %v2183, %v2215
      %v2248 = vadd.f32 %v2184, %v2216
      %v2249 = vadd.f32 %v2185, %v2217
      %v2250 = vadd.f32 %v2186, %v2218
      %v2251 = vadd.f32 %v2187, %v2219
      %v2252 = vadd.f32 %v2188, %v2220
      %v2253 = vadd.f32 %v2189, %v2221
      %v2254 = vadd.f32 %v2190, %v2222
      %v2255 = vadd.f32 %v2191, %v2223
      %v2256 = vadd.f32 %v2192, %v2224
      %v2257 = vadd.f32 %v2193, %v2225
      %v2258 = vadd.f32 %v2194, %v2226
      %v2259 = vadd.f32 %v2195, %v2227
      %v2260 = vadd.f32 %v2196, %v2228
      %v2261 = vadd.f32 %v2197, %v2229
      %v2262 = vadd.f32 %v2198, %v2230
      %v2263 = vadd.f32 %v2199, %v2231
      %v2264 = vadd.f32 %v2200, %v2232
      %v2265 = vadd.f32 %v2201, %v2233
      %v2266 = vadd.f32 %v2202, %v2234
      %v2267 = vadd.f32 %v2203, %v2235
      %v2268 = vadd.f32 %v2204, %v2236
      %v2269 = vadd.f32 %v2205, %v2237
      %v2270 = vadd.f32 %v2206, %v2238
      %v2271 = vadd.f32 %v2207, %v2239
      %v2272 = vadd.f32 %v2208, %v2240
      %v2273 = vadd.f32 %v2209, %v2241
      %v2274 = vadd.f32 %v2210, %v2242
      %v2275 = vadd.f32 %v2211, %v2243
      %v2276 = vadd.f32 %v2212, %v2244
      %v2277 = vld [vmem:[#allocation2 + $0xb] sm:$0xff]
      %v2278 = vld [vmem:[#allocation2 + $0x13] sm:$0xff]
      %v2279 = vld [vmem:[#allocation2 + $0x2b] sm:$0xff]
      %v2280 = vld [vmem:[#allocation2 + $0x33] sm:$0xff]
      %v2281 = vld [vmem:[#allocation2 + $0x4b] sm:$0xff]
      %v2282 = vld [vmem:[#allocation2 + $0x53] sm:$0xff]
      %v2283 = vld [vmem:[#allocation2 + $0x6b] sm:$0xff]
      %v2284 = vld [vmem:[#allocation2 + $0x73] sm:$0xff]
      %v2285 = vld [vmem:[#allocation2 + $0x8b] sm:$0xff]
      %v2286 = vld [vmem:[#allocation2 + $0x93] sm:$0xff]
      %v2287 = vld [vmem:[#allocation2 + $0xab] sm:$0xff]
      %v2288 = vld [vmem:[#allocation2 + $0xb3] sm:$0xff]
      %v2289 = vld [vmem:[#allocation2 + $0xcb] sm:$0xff]
      %v2290 = vld [vmem:[#allocation2 + $0xd3] sm:$0xff]
      %v2291 = vld [vmem:[#allocation2 + $0xeb] sm:$0xff]
      %v2292 = vld [vmem:[#allocation2 + $0xf3] sm:$0xff]
      %v2293 = vld [vmem:[#allocation2 + $0x10b] sm:$0xff]
      %v2294 = vld [vmem:[#allocation2 + $0x113] sm:$0xff]
      %v2295 = vld [vmem:[#allocation2 + $0x12b] sm:$0xff]
      %v2296 = vld [vmem:[#allocation2 + $0x133] sm:$0xff]
      %v2297 = vld [vmem:[#allocation2 + $0x14b] sm:$0xff]
      %v2298 = vld [vmem:[#allocation2 + $0x153] sm:$0xff]
      %v2299 = vld [vmem:[#allocation2 + $0x16b] sm:$0xff]
      %v2300 = vld [vmem:[#allocation2 + $0x173] sm:$0xff]
      %v2301 = vld [vmem:[#allocation2 + $0x18b] sm:$0xff]
      %v2302 = vld [vmem:[#allocation2 + $0x193] sm:$0xff]
      %v2303 = vld [vmem:[#allocation2 + $0x1ab] sm:$0xff]
      %v2304 = vld [vmem:[#allocation2 + $0x1b3] sm:$0xff]
      %v2305 = vld [vmem:[#allocation2 + $0x1cb] sm:$0xff]
      %v2306 = vld [vmem:[#allocation2 + $0x1d3] sm:$0xff]
      %v2307 = vld [vmem:[#allocation2 + $0x1eb] sm:$0xff]
      %v2308 = vld [vmem:[#allocation2 + $0x1f3] sm:$0xff]
      %v2309 = vadd.f32 %v2245, %v2277
      %v2310 = vadd.f32 %v2246, %v2278
      %v2311 = vadd.f32 %v2247, %v2279
      %v2312 = vadd.f32 %v2248, %v2280
      %v2313 = vadd.f32 %v2249, %v2281
      %v2314 = vadd.f32 %v2250, %v2282
      %v2315 = vadd.f32 %v2251, %v2283
      %v2316 = vadd.f32 %v2252, %v2284
      %v2317 = vadd.f32 %v2253, %v2285
      %v2318 = vadd.f32 %v2254, %v2286
      %v2319 = vadd.f32 %v2255, %v2287
      %v2320 = vadd.f32 %v2256, %v2288
      %v2321 = vadd.f32 %v2257, %v2289
      %v2322 = vadd.f32 %v2258, %v2290
      %v2323 = vadd.f32 %v2259, %v2291
      %v2324 = vadd.f32 %v2260, %v2292
      %v2325 = vadd.f32 %v2261, %v2293
      %v2326 = vadd.f32 %v2262, %v2294
      %v2327 = vadd.f32 %v2263, %v2295
      %v2328 = vadd.f32 %v2264, %v2296
      %v2329 = vadd.f32 %v2265, %v2297
      %v2330 = vadd.f32 %v2266, %v2298
      %v2331 = vadd.f32 %v2267, %v2299
      %v2332 = vadd.f32 %v2268, %v2300
      %v2333 = vadd.f32 %v2269, %v2301
      %v2334 = vadd.f32 %v2270, %v2302
      %v2335 = vadd.f32 %v2271, %v2303
      %v2336 = vadd.f32 %v2272, %v2304
      %v2337 = vadd.f32 %v2273, %v2305
      %v2338 = vadd.f32 %v2274, %v2306
      %v2339 = vadd.f32 %v2275, %v2307
      %v2340 = vadd.f32 %v2276, %v2308
      %2341 = vst.msk [vmem:[%s1425] sm:$0xff] %vm555, %v2309
      %2342 = vst.msk [vmem:[%s1425 + $0x8] sm:$0xff] %vm555, %v2310
      %2343 = vst.msk [vmem:[%s1425 + $0x10] sm:$0xff] %vm555, %v2311
      %2344 = vst.msk [vmem:[%s1425 + $0x18] sm:$0xff] %vm555, %v2312
      %2345 = vst.msk [vmem:[%s1425 + $0x20] sm:$0xff] %vm555, %v2313
      %2346 = vst.msk [vmem:[%s1425 + $0x28] sm:$0xff] %vm555, %v2314
      %2347 = vst.msk [vmem:[%s1425 + $0x30] sm:$0xff] %vm555, %v2315
      %2348 = vst.msk [vmem:[%s1425 + $0x38] sm:$0xff] %vm555, %v2316
      %2349 = vst.msk [vmem:[%s1425 + $0x40] sm:$0xff] %vm555, %v2317
      %2350 = vst.msk [vmem:[%s1425 + $0x48] sm:$0xff] %vm555, %v2318
      %2351 = vst.msk [vmem:[%s1425 + $0x50] sm:$0xff] %vm555, %v2319
      %2352 = vst.msk [vmem:[%s1425 + $0x58] sm:$0xff] %vm555, %v2320
      %2353 = vst.msk [vmem:[%s1425 + $0x60] sm:$0xff] %vm555, %v2321
      %2354 = vst.msk [vmem:[%s1425 + $0x68] sm:$0xff] %vm555, %v2322
      %2355 = vst.msk [vmem:[%s1425 + $0x70] sm:$0xff] %vm555, %v2323
      %2356 = vst.msk [vmem:[%s1425 + $0x78] sm:$0xff] %vm555, %v2324
      %2357 = vst.msk [vmem:[%s1425 + $0x80] sm:$0xff] %vm555, %v2325
      %2358 = vst.msk [vmem:[%s1425 + $0x88] sm:$0xff] %vm555, %v2326
      %2359 = vst.msk [vmem:[%s1425 + $0x90] sm:$0xff] %vm555, %v2327
      %2360 = vst.msk [vmem:[%s1425 + $0x98] sm:$0xff] %vm555, %v2328
      %2361 = vst.msk [vmem:[%s1425 + $0xa0] sm:$0xff] %vm555, %v2329
      %2362 = vst.msk [vmem:[%s1425 + $0xa8] sm:$0xff] %vm555, %v2330
      %2363 = vst.msk [vmem:[%s1425 + $0xb0] sm:$0xff] %vm555, %v2331
      %2364 = vst.msk [vmem:[%s1425 + $0xb8] sm:$0xff] %vm555, %v2332
      %2365 = vst.msk [vmem:[%s1425 + $0xc0] sm:$0xff] %vm555, %v2333
      %2366 = vst.msk [vmem:[%s1425 + $0xc8] sm:$0xff] %vm555, %v2334
      %2367 = vst.msk [vmem:[%s1425 + $0xd0] sm:$0xff] %vm555, %v2335
      %2368 = vst.msk [vmem:[%s1425 + $0xd8] sm:$0xff] %vm555, %v2336
      %2369 = vst.msk [vmem:[%s1425 + $0xe0] sm:$0xff] %vm555, %v2337
      %2370 = vst.msk [vmem:[%s1425 + $0xe8] sm:$0xff] %vm555, %v2338
      %2371 = vst.msk [vmem:[%s1425 + $0xf0] sm:$0xff] %vm555, %v2339
      %2372 = vst.msk [vmem:[%s1425 + $0xf8] sm:$0xff] %vm555, %v2340
      %2373 = vst.msk [vmem:[#allocation3] sm:$0xff] %vm555, 0.0
      %2374 = vst.msk [vmem:[#allocation3 + $0x8] sm:$0xff] %vm555, 0.0
      %2375 = vst.msk [vmem:[#allocation3 + $0x10] sm:$0xff] %vm555, 0.0
      %2376 = vst.msk [vmem:[#allocation3 + $0x18] sm:$0xff] %vm555, 0.0
      %2377 = vst.msk [vmem:[#allocation3 + $0x20] sm:$0xff] %vm555, 0.0
      %2378 = vst.msk [vmem:[#allocation3 + $0x28] sm:$0xff] %vm555, 0.0
      %2379 = vst.msk [vmem:[#allocation3 + $0x30] sm:$0xff] %vm555, 0.0
      %2380 = vst.msk [vmem:[#allocation3 + $0x38] sm:$0xff] %vm555, 0.0
      %2381 = vst.msk [vmem:[#allocation3 + $0x40] sm:$0xff] %vm555, 0.0
      %2382 = vst.msk [vmem:[#allocation3 + $0x48] sm:$0xff] %vm555, 0.0
      %2383 = vst.msk [vmem:[%s1465] sm:$0xff] %vm555, 0.0
      %2384 = vst.msk [vmem:[%s1465 + $0x8] sm:$0xff] %vm555, 0.0
      %2385 = vst.msk [vmem:[%s1465 + $0x10] sm:$0xff] %vm555, 0.0
      %2386 = vst.msk [vmem:[%s1465 + $0x18] sm:$0xff] %vm555, 0.0
      %2387 = vst.msk [vmem:[%s1465 + $0x20] sm:$0xff] %vm555, 0.0
      %2388 = vst.msk [vmem:[%s1465 + $0x28] sm:$0xff] %vm555, 0.0
      %2389 = vst.msk [vmem:[%s1465 + $0x30] sm:$0xff] %vm555, 0.0
      %2390 = vst.msk [vmem:[%s1465 + $0x38] sm:$0xff] %vm555, 0.0
      %2391 = vst.msk [vmem:[%s1465 + $0x40] sm:$0xff] %vm555, 0.0
      %2392 = vst.msk [vmem:[%s1465 + $0x48] sm:$0xff] %vm555, 0.0
      %v2393 = vld [vmem:[%s1458] sm:$0xff]
      %v2394 = vld [vmem:[%s1458 + $0x8] sm:$0xff]
      %v2395 = vld [vmem:[%s1458 + $0x10] sm:$0xff]
      %v2396 = vld [vmem:[%s1458 + $0x18] sm:$0xff]
      %v2397 = vld [vmem:[%s1458 + $0x20] sm:$0xff]
      %v2398 = vld [vmem:[%s1458 + $0x28] sm:$0xff]
      %v2399 = vld [vmem:[%s1458 + $0x30] sm:$0xff]
      %v2400 = vld [vmem:[%s1458 + $0x38] sm:$0xff]
      %v2401 = vld [vmem:[%s1458 + $0x40] sm:$0xff]
      %v2402 = vld [vmem:[%s1458 + $0x48] sm:$0xff]
      %v2403 = vld [vmem:[%s1458 + $0x50] sm:$0xff]
      %v2404 = vld [vmem:[%s1458 + $0x58] sm:$0xff]
      %v2405 = vld [vmem:[%s1458 + $0x60] sm:$0xff]
      %v2406 = vld [vmem:[%s1458 + $0x68] sm:$0xff]
      %v2407 = vld [vmem:[%s1458 + $0x70] sm:$0xff]
      %v2408 = vld [vmem:[%s1458 + $0x78] sm:$0xff]
      %v2409 = vld [vmem:[%s1458 + $0x80] sm:$0xff]
      %v2410 = vld [vmem:[%s1458 + $0x88] sm:$0xff]
      %v2411 = vld [vmem:[%s1458 + $0x90] sm:$0xff]
      %v2412 = vld [vmem:[%s1458 + $0x98] sm:$0xff]
      %v2413 = vld [vmem:[%s1458 + $0xa0] sm:$0xff]
      %v2414 = vld [vmem:[%s1458 + $0xa8] sm:$0xff]
      %v2415 = vld [vmem:[%s1458 + $0xb0] sm:$0xff]
      %v2416 = vld [vmem:[%s1458 + $0xb8] sm:$0xff]
      %v2417 = vld [vmem:[%s1458 + $0xc0] sm:$0xff]
      %v2418 = vld [vmem:[%s1458 + $0xc8] sm:$0xff]
      %v2419 = vld [vmem:[%s1458 + $0xd0] sm:$0xff]
      %v2420 = vld [vmem:[%s1458 + $0xd8] sm:$0xff]
      %v2421 = vld [vmem:[%s1458 + $0xe0] sm:$0xff]
      %v2422 = vld [vmem:[%s1458 + $0xe8] sm:$0xff]
      %v2423 = vld [vmem:[%s1458 + $0xf0] sm:$0xff]
      %v2424 = vld [vmem:[%s1458 + $0xf8] sm:$0xff]
      %v2425 = vld [vmem:[%s1504] sm:$0xff]
      %v2426 = vld [vmem:[%s1504 + $0x8] sm:$0xff]
      %v2427 = vld [vmem:[%s1504 + $0x10] sm:$0xff]
      %v2428 = vld [vmem:[%s1504 + $0x18] sm:$0xff]
      %v2429 = vld [vmem:[%s1504 + $0x20] sm:$0xff]
      %v2430 = vld [vmem:[%s1504 + $0x28] sm:$0xff]
      %v2431 = vld [vmem:[%s1504 + $0x30] sm:$0xff]
      %v2432 = vld [vmem:[%s1504 + $0x38] sm:$0xff]
      %v2433 = vld [vmem:[%s1504 + $0x40] sm:$0xff]
      %v2434 = vld [vmem:[%s1504 + $0x48] sm:$0xff]
      %v2435 = vld [vmem:[%s1504 + $0x50] sm:$0xff]
      %v2436 = vld [vmem:[%s1504 + $0x58] sm:$0xff]
      %v2437 = vld [vmem:[%s1504 + $0x60] sm:$0xff]
      %v2438 = vld [vmem:[%s1504 + $0x68] sm:$0xff]
      %v2439 = vld [vmem:[%s1504 + $0x70] sm:$0xff]
      %v2440 = vld [vmem:[%s1504 + $0x78] sm:$0xff]
      %v2441 = vld [vmem:[%s1504 + $0x80] sm:$0xff]
      %v2442 = vld [vmem:[%s1504 + $0x88] sm:$0xff]
      %v2443 = vld [vmem:[%s1504 + $0x90] sm:$0xff]
      %v2444 = vld [vmem:[%s1504 + $0x98] sm:$0xff]
      %v2445 = vld [vmem:[%s1504 + $0xa0] sm:$0xff]
      %v2446 = vld [vmem:[%s1504 + $0xa8] sm:$0xff]
      %v2447 = vld [vmem:[%s1504 + $0xb0] sm:$0xff]
      %v2448 = vld [vmem:[%s1504 + $0xb8] sm:$0xff]
      %v2449 = vld [vmem:[%s1504 + $0xc0] sm:$0xff]
      %v2450 = vld [vmem:[%s1504 + $0xc8] sm:$0xff]
      %v2451 = vld [vmem:[%s1504 + $0xd0] sm:$0xff]
      %v2452 = vld [vmem:[%s1504 + $0xd8] sm:$0xff]
      %v2453 = vld [vmem:[%s1504 + $0xe0] sm:$0xff]
      %v2454 = vld [vmem:[%s1504 + $0xe8] sm:$0xff]
      %v2455 = vld [vmem:[%s1504 + $0xf0] sm:$0xff]
      %v2456 = vld [vmem:[%s1504 + $0xf8] sm:$0xff]
      %v2457 = vadd.f32 %v2393, %v2425
      %v2458 = vadd.f32 %v2394, %v2426
      %v2459 = vadd.f32 %v2395, %v2427
      %v2460 = vadd.f32 %v2396, %v2428
      %v2461 = vadd.f32 %v2397, %v2429
      %v2462 = vadd.f32 %v2398, %v2430
      %v2463 = vadd.f32 %v2399, %v2431
      %v2464 = vadd.f32 %v2400, %v2432
      %v2465 = vadd.f32 %v2401, %v2433
      %v2466 = vadd.f32 %v2402, %v2434
      %v2467 = vadd.f32 %v2403, %v2435
      %v2468 = vadd.f32 %v2404, %v2436
      %v2469 = vadd.f32 %v2405, %v2437
      %v2470 = vadd.f32 %v2406, %v2438
      %v2471 = vadd.f32 %v2407, %v2439
      %v2472 = vadd.f32 %v2408, %v2440
      %v2473 = vadd.f32 %v2409, %v2441
      %v2474 = vadd.f32 %v2410, %v2442
      %v2475 = vadd.f32 %v2411, %v2443
      %v2476 = vadd.f32 %v2412, %v2444
      %v2477 = vadd.f32 %v2413, %v2445
      %v2478 = vadd.f32 %v2414, %v2446
      %v2479 = vadd.f32 %v2415, %v2447
      %v2480 = vadd.f32 %v2416, %v2448
      %v2481 = vadd.f32 %v2417, %v2449
      %v2482 = vadd.f32 %v2418, %v2450
      %v2483 = vadd.f32 %v2419, %v2451
      %v2484 = vadd.f32 %v2420, %v2452
      %v2485 = vadd.f32 %v2421, %v2453
      %v2486 = vadd.f32 %v2422, %v2454
      %v2487 = vadd.f32 %v2423, %v2455
      %v2488 = vadd.f32 %v2424, %v2456
      %v2489 = vld [vmem:[%s1569] sm:$0xff]
      %v2490 = vld [vmem:[%s1569 + $0x8] sm:$0xff]
      %v2491 = vld [vmem:[%s1569 + $0x10] sm:$0xff]
      %v2492 = vld [vmem:[%s1569 + $0x18] sm:$0xff]
      %v2493 = vld [vmem:[%s1569 + $0x20] sm:$0xff]
      %v2494 = vld [vmem:[%s1569 + $0x28] sm:$0xff]
      %v2495 = vld [vmem:[%s1569 + $0x30] sm:$0xff]
      %v2496 = vld [vmem:[%s1569 + $0x38] sm:$0xff]
      %v2497 = vld [vmem:[%s1569 + $0x40] sm:$0xff]
      %v2498 = vld [vmem:[%s1569 + $0x48] sm:$0xff]
      %v2499 = vld [vmem:[%s1569 + $0x50] sm:$0xff]
      %v2500 = vld [vmem:[%s1569 + $0x58] sm:$0xff]
      %v2501 = vld [vmem:[%s1569 + $0x60] sm:$0xff]
      %v2502 = vld [vmem:[%s1569 + $0x68] sm:$0xff]
      %v2503 = vld [vmem:[%s1569 + $0x70] sm:$0xff]
      %v2504 = vld [vmem:[%s1569 + $0x78] sm:$0xff]
      %v2505 = vld [vmem:[%s1569 + $0x80] sm:$0xff]
      %v2506 = vld [vmem:[%s1569 + $0x88] sm:$0xff]
      %v2507 = vld [vmem:[%s1569 + $0x90] sm:$0xff]
      %v2508 = vld [vmem:[%s1569 + $0x98] sm:$0xff]
      %v2509 = vld [vmem:[%s1569 + $0xa0] sm:$0xff]
      %v2510 = vld [vmem:[%s1569 + $0xa8] sm:$0xff]
      %v2511 = vld [vmem:[%s1569 + $0xb0] sm:$0xff]
      %v2512 = vld [vmem:[%s1569 + $0xb8] sm:$0xff]
      %v2513 = vld [vmem:[%s1569 + $0xc0] sm:$0xff]
      %v2514 = vld [vmem:[%s1569 + $0xc8] sm:$0xff]
      %v2515 = vld [vmem:[%s1569 + $0xd0] sm:$0xff]
      %v2516 = vld [vmem:[%s1569 + $0xd8] sm:$0xff]
      %v2517 = vld [vmem:[%s1569 + $0xe0] sm:$0xff]
      %v2518 = vld [vmem:[%s1569 + $0xe8] sm:$0xff]
      %v2519 = vld [vmem:[%s1569 + $0xf0] sm:$0xff]
      %v2520 = vld [vmem:[%s1569 + $0xf8] sm:$0xff]
      %v2521 = vadd.f32 %v2457, %v2489
      %v2522 = vadd.f32 %v2458, %v2490
      %v2523 = vadd.f32 %v2459, %v2491
      %v2524 = vadd.f32 %v2460, %v2492
      %v2525 = vadd.f32 %v2461, %v2493
      %v2526 = vadd.f32 %v2462, %v2494
      %v2527 = vadd.f32 %v2463, %v2495
      %v2528 = vadd.f32 %v2464, %v2496
      %v2529 = vadd.f32 %v2465, %v2497
      %v2530 = vadd.f32 %v2466, %v2498
      %v2531 = vadd.f32 %v2467, %v2499
      %v2532 = vadd.f32 %v2468, %v2500
      %v2533 = vadd.f32 %v2469, %v2501
      %v2534 = vadd.f32 %v2470, %v2502
      %v2535 = vadd.f32 %v2471, %v2503
      %v2536 = vadd.f32 %v2472, %v2504
      %v2537 = vadd.f32 %v2473, %v2505
      %v2538 = vadd.f32 %v2474, %v2506
      %v2539 = vadd.f32 %v2475, %v2507
      %v2540 = vadd.f32 %v2476, %v2508
      %v2541 = vadd.f32 %v2477, %v2509
      %v2542 = vadd.f32 %v2478, %v2510
      %v2543 = vadd.f32 %v2479, %v2511
      %v2544 = vadd.f32 %v2480, %v2512
      %v2545 = vadd.f32 %v2481, %v2513
      %v2546 = vadd.f32 %v2482, %v2514
      %v2547 = vadd.f32 %v2483, %v2515
      %v2548 = vadd.f32 %v2484, %v2516
      %v2549 = vadd.f32 %v2485, %v2517
      %v2550 = vadd.f32 %v2486, %v2518
      %v2551 = vadd.f32 %v2487, %v2519
      %v2552 = vadd.f32 %v2488, %v2520
      %v2553 = vld [vmem:[%s1425] sm:$0xff]
      %v2554 = vld [vmem:[%s1425 + $0x8] sm:$0xff]
      %v2555 = vld [vmem:[%s1425 + $0x10] sm:$0xff]
      %v2556 = vld [vmem:[%s1425 + $0x18] sm:$0xff]
      %v2557 = vld [vmem:[%s1425 + $0x20] sm:$0xff]
      %v2558 = vld [vmem:[%s1425 + $0x28] sm:$0xff]
      %v2559 = vld [vmem:[%s1425 + $0x30] sm:$0xff]
      %v2560 = vld [vmem:[%s1425 + $0x38] sm:$0xff]
      %v2561 = vld [vmem:[%s1425 + $0x40] sm:$0xff]
      %v2562 = vld [vmem:[%s1425 + $0x48] sm:$0xff]
      %v2563 = vld [vmem:[%s1425 + $0x50] sm:$0xff]
      %v2564 = vld [vmem:[%s1425 + $0x58] sm:$0xff]
      %v2565 = vld [vmem:[%s1425 + $0x60] sm:$0xff]
      %v2566 = vld [vmem:[%s1425 + $0x68] sm:$0xff]
      %v2567 = vld [vmem:[%s1425 + $0x70] sm:$0xff]
      %v2568 = vld [vmem:[%s1425 + $0x78] sm:$0xff]
      %v2569 = vld [vmem:[%s1425 + $0x80] sm:$0xff]
      %v2570 = vld [vmem:[%s1425 + $0x88] sm:$0xff]
      %v2571 = vld [vmem:[%s1425 + $0x90] sm:$0xff]
      %v2572 = vld [vmem:[%s1425 + $0x98] sm:$0xff]
      %v2573 = vld [vmem:[%s1425 + $0xa0] sm:$0xff]
      %v2574 = vld [vmem:[%s1425 + $0xa8] sm:$0xff]
      %v2575 = vld [vmem:[%s1425 + $0xb0] sm:$0xff]
      %v2576 = vld [vmem:[%s1425 + $0xb8] sm:$0xff]
      %v2577 = vld [vmem:[%s1425 + $0xc0] sm:$0xff]
      %v2578 = vld [vmem:[%s1425 + $0xc8] sm:$0xff]
      %v2579 = vld [vmem:[%s1425 + $0xd0] sm:$0xff]
      %v2580 = vld [vmem:[%s1425 + $0xd8] sm:$0xff]
      %v2581 = vld [vmem:[%s1425 + $0xe0] sm:$0xff]
      %v2582 = vld [vmem:[%s1425 + $0xe8] sm:$0xff]
      %v2583 = vld [vmem:[%s1425 + $0xf0] sm:$0xff]
      %v2584 = vld [vmem:[%s1425 + $0xf8] sm:$0xff]
      %v2585 = vadd.f32 %v2521, %v2553
      %v2586 = vadd.f32 %v2522, %v2554
      %v2587 = vadd.f32 %v2523, %v2555
      %v2588 = vadd.f32 %v2524, %v2556
      %v2589 = vadd.f32 %v2525, %v2557
      %v2590 = vadd.f32 %v2526, %v2558
      %v2591 = vadd.f32 %v2527, %v2559
      %v2592 = vadd.f32 %v2528, %v2560
      %v2593 = vadd.f32 %v2529, %v2561
      %v2594 = vadd.f32 %v2530, %v2562
      %v2595 = vadd.f32 %v2531, %v2563
      %v2596 = vadd.f32 %v2532, %v2564
      %v2597 = vadd.f32 %v2533, %v2565
      %v2598 = vadd.f32 %v2534, %v2566
      %v2599 = vadd.f32 %v2535, %v2567
      %v2600 = vadd.f32 %v2536, %v2568
      %v2601 = vadd.f32 %v2537, %v2569
      %v2602 = vadd.f32 %v2538, %v2570
      %v2603 = vadd.f32 %v2539, %v2571
      %v2604 = vadd.f32 %v2540, %v2572
      %v2605 = vadd.f32 %v2541, %v2573
      %v2606 = vadd.f32 %v2542, %v2574
      %v2607 = vadd.f32 %v2543, %v2575
      %v2608 = vadd.f32 %v2544, %v2576
      %v2609 = vadd.f32 %v2545, %v2577
      %v2610 = vadd.f32 %v2546, %v2578
      %v2611 = vadd.f32 %v2547, %v2579
      %v2612 = vadd.f32 %v2548, %v2580
      %v2613 = vadd.f32 %v2549, %v2581
      %v2614 = vadd.f32 %v2550, %v2582
      %v2615 = vadd.f32 %v2551, %v2583
      %v2616 = vadd.f32 %v2552, %v2584
      %v2617 = vld [vmem:[%s1698] sm:$0xff]
      %v2618 = vld [vmem:[%s1698 + $0x8] sm:$0xff]
      %v2619 = vld [vmem:[%s1698 + $0x10] sm:$0xff]
      %v2620 = vld [vmem:[%s1698 + $0x18] sm:$0xff]
      %v2621 = vld [vmem:[%s1698 + $0x20] sm:$0xff]
      %v2622 = vld [vmem:[%s1698 + $0x28] sm:$0xff]
      %v2623 = vld [vmem:[%s1698 + $0x30] sm:$0xff]
      %v2624 = vld [vmem:[%s1698 + $0x38] sm:$0xff]
      %v2625 = vld [vmem:[%s1698 + $0x40] sm:$0xff]
      %v2626 = vld [vmem:[%s1698 + $0x48] sm:$0xff]
      %v2627 = vld [vmem:[%s1698 + $0x50] sm:$0xff]
      %v2628 = vld [vmem:[%s1698 + $0x58] sm:$0xff]
      %v2629 = vld [vmem:[%s1698 + $0x60] sm:$0xff]
      %v2630 = vld [vmem:[%s1698 + $0x68] sm:$0xff]
      %v2631 = vld [vmem:[%s1698 + $0x70] sm:$0xff]
      %v2632 = vld [vmem:[%s1698 + $0x78] sm:$0xff]
      %v2633 = vld [vmem:[%s1698 + $0x80] sm:$0xff]
      %v2634 = vld [vmem:[%s1698 + $0x88] sm:$0xff]
      %v2635 = vld [vmem:[%s1698 + $0x90] sm:$0xff]
      %v2636 = vld [vmem:[%s1698 + $0x98] sm:$0xff]
      %v2637 = vld [vmem:[%s1698 + $0xa0] sm:$0xff]
      %v2638 = vld [vmem:[%s1698 + $0xa8] sm:$0xff]
      %v2639 = vld [vmem:[%s1698 + $0xb0] sm:$0xff]
      %v2640 = vld [vmem:[%s1698 + $0xb8] sm:$0xff]
      %v2641 = vld [vmem:[%s1698 + $0xc0] sm:$0xff]
      %v2642 = vld [vmem:[%s1698 + $0xc8] sm:$0xff]
      %v2643 = vld [vmem:[%s1698 + $0xd0] sm:$0xff]
      %v2644 = vld [vmem:[%s1698 + $0xd8] sm:$0xff]
      %v2645 = vld [vmem:[%s1698 + $0xe0] sm:$0xff]
      %v2646 = vld [vmem:[%s1698 + $0xe8] sm:$0xff]
      %v2647 = vld [vmem:[%s1698 + $0xf0] sm:$0xff]
      %v2648 = vld [vmem:[%s1698 + $0xf8] sm:$0xff]
      %v2649 = vadd.f32 %v2585, %v2617
      %v2650 = vadd.f32 %v2586, %v2618
      %v2651 = vadd.f32 %v2587, %v2619
      %v2652 = vadd.f32 %v2588, %v2620
      %v2653 = vadd.f32 %v2589, %v2621
      %v2654 = vadd.f32 %v2590, %v2622
      %v2655 = vadd.f32 %v2591, %v2623
      %v2656 = vadd.f32 %v2592, %v2624
      %v2657 = vadd.f32 %v2593, %v2625
      %v2658 = vadd.f32 %v2594, %v2626
      %v2659 = vadd.f32 %v2595, %v2627
      %v2660 = vadd.f32 %v2596, %v2628
      %v2661 = vadd.f32 %v2597, %v2629
      %v2662 = vadd.f32 %v2598, %v2630
      %v2663 = vadd.f32 %v2599, %v2631
      %v2664 = vadd.f32 %v2600, %v2632
      %v2665 = vadd.f32 %v2601, %v2633
      %v2666 = vadd.f32 %v2602, %v2634
      %v2667 = vadd.f32 %v2603, %v2635
      %v2668 = vadd.f32 %v2604, %v2636
      %v2669 = vadd.f32 %v2605, %v2637
      %v2670 = vadd.f32 %v2606, %v2638
      %v2671 = vadd.f32 %v2607, %v2639
      %v2672 = vadd.f32 %v2608, %v2640
      %v2673 = vadd.f32 %v2609, %v2641
      %v2674 = vadd.f32 %v2610, %v2642
      %v2675 = vadd.f32 %v2611, %v2643
      %v2676 = vadd.f32 %v2612, %v2644
      %v2677 = vadd.f32 %v2613, %v2645
      %v2678 = vadd.f32 %v2614, %v2646
      %v2679 = vadd.f32 %v2615, %v2647
      %v2680 = vadd.f32 %v2616, %v2648
      %v2681 = vld [vmem:[%s1763] sm:$0xff]
      %v2682 = vld [vmem:[%s1763 + $0x8] sm:$0xff]
      %v2683 = vld [vmem:[%s1763 + $0x10] sm:$0xff]
      %v2684 = vld [vmem:[%s1763 + $0x18] sm:$0xff]
      %v2685 = vld [vmem:[%s1763 + $0x20] sm:$0xff]
      %v2686 = vld [vmem:[%s1763 + $0x28] sm:$0xff]
      %v2687 = vld [vmem:[%s1763 + $0x30] sm:$0xff]
      %v2688 = vld [vmem:[%s1763 + $0x38] sm:$0xff]
      %v2689 = vld [vmem:[%s1763 + $0x40] sm:$0xff]
      %v2690 = vld [vmem:[%s1763 + $0x48] sm:$0xff]
      %v2691 = vld [vmem:[%s1763 + $0x50] sm:$0xff]
      %v2692 = vld [vmem:[%s1763 + $0x58] sm:$0xff]
      %v2693 = vld [vmem:[%s1763 + $0x60] sm:$0xff]
      %v2694 = vld [vmem:[%s1763 + $0x68] sm:$0xff]
      %v2695 = vld [vmem:[%s1763 + $0x70] sm:$0xff]
      %v2696 = vld [vmem:[%s1763 + $0x78] sm:$0xff]
      %v2697 = vld [vmem:[%s1763 + $0x80] sm:$0xff]
      %v2698 = vld [vmem:[%s1763 + $0x88] sm:$0xff]
      %v2699 = vld [vmem:[%s1763 + $0x90] sm:$0xff]
      %v2700 = vld [vmem:[%s1763 + $0x98] sm:$0xff]
      %v2701 = vld [vmem:[%s1763 + $0xa0] sm:$0xff]
      %v2702 = vld [vmem:[%s1763 + $0xa8] sm:$0xff]
      %v2703 = vld [vmem:[%s1763 + $0xb0] sm:$0xff]
      %v2704 = vld [vmem:[%s1763 + $0xb8] sm:$0xff]
      %v2705 = vld [vmem:[%s1763 + $0xc0] sm:$0xff]
      %v2706 = vld [vmem:[%s1763 + $0xc8] sm:$0xff]
      %v2707 = vld [vmem:[%s1763 + $0xd0] sm:$0xff]
      %v2708 = vld [vmem:[%s1763 + $0xd8] sm:$0xff]
      %v2709 = vld [vmem:[%s1763 + $0xe0] sm:$0xff]
      %v2710 = vld [vmem:[%s1763 + $0xe8] sm:$0xff]
      %v2711 = vld [vmem:[%s1763 + $0xf0] sm:$0xff]
      %v2712 = vld [vmem:[%s1763 + $0xf8] sm:$0xff]
      %v2713 = vadd.f32 %v2649, %v2681
      %v2714 = vadd.f32 %v2650, %v2682
      %v2715 = vadd.f32 %v2651, %v2683
      %v2716 = vadd.f32 %v2652, %v2684
      %v2717 = vadd.f32 %v2653, %v2685
      %v2718 = vadd.f32 %v2654, %v2686
      %v2719 = vadd.f32 %v2655, %v2687
      %v2720 = vadd.f32 %v2656, %v2688
      %v2721 = vadd.f32 %v2657, %v2689
      %v2722 = vadd.f32 %v2658, %v2690
      %v2723 = vadd.f32 %v2659, %v2691
      %v2724 = vadd.f32 %v2660, %v2692
      %v2725 = vadd.f32 %v2661, %v2693
      %v2726 = vadd.f32 %v2662, %v2694
      %v2727 = vadd.f32 %v2663, %v2695
      %v2728 = vadd.f32 %v2664, %v2696
      %v2729 = vadd.f32 %v2665, %v2697
      %v2730 = vadd.f32 %v2666, %v2698
      %v2731 = vadd.f32 %v2667, %v2699
      %v2732 = vadd.f32 %v2668, %v2700
      %v2733 = vadd.f32 %v2669, %v2701
      %v2734 = vadd.f32 %v2670, %v2702
      %v2735 = vadd.f32 %v2671, %v2703
      %v2736 = vadd.f32 %v2672, %v2704
      %v2737 = vadd.f32 %v2673, %v2705
      %v2738 = vadd.f32 %v2674, %v2706
      %v2739 = vadd.f32 %v2675, %v2707
      %v2740 = vadd.f32 %v2676, %v2708
      %v2741 = vadd.f32 %v2677, %v2709
      %v2742 = vadd.f32 %v2678, %v2710
      %v2743 = vadd.f32 %v2679, %v2711
      %v2744 = vadd.f32 %v2680, %v2712
      %v2745 = vld [vmem:[%s1828] sm:$0xff]
      %v2746 = vld [vmem:[%s1828 + $0x8] sm:$0xff]
      %v2747 = vld [vmem:[%s1828 + $0x10] sm:$0xff]
      %v2748 = vld [vmem:[%s1828 + $0x18] sm:$0xff]
      %v2749 = vld [vmem:[%s1828 + $0x20] sm:$0xff]
      %v2750 = vld [vmem:[%s1828 + $0x28] sm:$0xff]
      %v2751 = vld [vmem:[%s1828 + $0x30] sm:$0xff]
      %v2752 = vld [vmem:[%s1828 + $0x38] sm:$0xff]
      %v2753 = vld [vmem:[%s1828 + $0x40] sm:$0xff]
      %v2754 = vld [vmem:[%s1828 + $0x48] sm:$0xff]
      %v2755 = vld [vmem:[%s1828 + $0x50] sm:$0xff]
      %v2756 = vld [vmem:[%s1828 + $0x58] sm:$0xff]
      %v2757 = vld [vmem:[%s1828 + $0x60] sm:$0xff]
      %v2758 = vld [vmem:[%s1828 + $0x68] sm:$0xff]
      %v2759 = vld [vmem:[%s1828 + $0x70] sm:$0xff]
      %v2760 = vld [vmem:[%s1828 + $0x78] sm:$0xff]
      %v2761 = vld [vmem:[%s1828 + $0x80] sm:$0xff]
      %v2762 = vld [vmem:[%s1828 + $0x88] sm:$0xff]
      %v2763 = vld [vmem:[%s1828 + $0x90] sm:$0xff]
      %v2764 = vld [vmem:[%s1828 + $0x98] sm:$0xff]
      %v2765 = vld [vmem:[%s1828 + $0xa0] sm:$0xff]
      %v2766 = vld [vmem:[%s1828 + $0xa8] sm:$0xff]
      %v2767 = vld [vmem:[%s1828 + $0xb0] sm:$0xff]
      %v2768 = vld [vmem:[%s1828 + $0xb8] sm:$0xff]
      %v2769 = vld [vmem:[%s1828 + $0xc0] sm:$0xff]
      %v2770 = vld [vmem:[%s1828 + $0xc8] sm:$0xff]
      %v2771 = vld [vmem:[%s1828 + $0xd0] sm:$0xff]
      %v2772 = vld [vmem:[%s1828 + $0xd8] sm:$0xff]
      %v2773 = vld [vmem:[%s1828 + $0xe0] sm:$0xff]
      %v2774 = vld [vmem:[%s1828 + $0xe8] sm:$0xff]
      %v2775 = vld [vmem:[%s1828 + $0xf0] sm:$0xff]
      %v2776 = vld [vmem:[%s1828 + $0xf8] sm:$0xff]
      %v2777 = vadd.f32 %v2713, %v2745
      %v2778 = vadd.f32 %v2714, %v2746
      %v2779 = vadd.f32 %v2715, %v2747
      %v2780 = vadd.f32 %v2716, %v2748
      %v2781 = vadd.f32 %v2717, %v2749
      %v2782 = vadd.f32 %v2718, %v2750
      %v2783 = vadd.f32 %v2719, %v2751
      %v2784 = vadd.f32 %v2720, %v2752
      %v2785 = vadd.f32 %v2721, %v2753
      %v2786 = vadd.f32 %v2722, %v2754
      %v2787 = vadd.f32 %v2723, %v2755
      %v2788 = vadd.f32 %v2724, %v2756
      %v2789 = vadd.f32 %v2725, %v2757
      %v2790 = vadd.f32 %v2726, %v2758
      %v2791 = vadd.f32 %v2727, %v2759
      %v2792 = vadd.f32 %v2728, %v2760
      %v2793 = vadd.f32 %v2729, %v2761
      %v2794 = vadd.f32 %v2730, %v2762
      %v2795 = vadd.f32 %v2731, %v2763
      %v2796 = vadd.f32 %v2732, %v2764
      %v2797 = vadd.f32 %v2733, %v2765
      %v2798 = vadd.f32 %v2734, %v2766
      %v2799 = vadd.f32 %v2735, %v2767
      %v2800 = vadd.f32 %v2736, %v2768
      %v2801 = vadd.f32 %v2737, %v2769
      %v2802 = vadd.f32 %v2738, %v2770
      %v2803 = vadd.f32 %v2739, %v2771
      %v2804 = vadd.f32 %v2740, %v2772
      %v2805 = vadd.f32 %v2741, %v2773
      %v2806 = vadd.f32 %v2742, %v2774
      %v2807 = vadd.f32 %v2743, %v2775
      %v2808 = vadd.f32 %v2744, %v2776
      %v2809 = vmul.f32 %v2777, 0.020408163
      %v2810 = vmul.f32 %v2778, 0.020408163
      %v2811 = vmul.f32 %v2779, 0.020408163
      %v2812 = vmul.f32 %v2780, 0.020408163
      %v2813 = vmul.f32 %v2781, 0.020408163
      %v2814 = vmul.f32 %v2782, 0.020408163
      %v2815 = vmul.f32 %v2783, 0.020408163
      %v2816 = vmul.f32 %v2784, 0.020408163
      %v2817 = vmul.f32 %v2785, 0.020408163
      %v2818 = vmul.f32 %v2786, 0.020408163
      %v2819 = vmul.f32 %v2787, 0.020408163
      %v2820 = vmul.f32 %v2788, 0.020408163
      %v2821 = vmul.f32 %v2789, 0.020408163
      %v2822 = vmul.f32 %v2790, 0.020408163
      %v2823 = vmul.f32 %v2791, 0.020408163
      %v2824 = vmul.f32 %v2792, 0.020408163
      %v2825 = vmul.f32 %v2793, 0.020408163
      %v2826 = vmul.f32 %v2794, 0.020408163
      %v2827 = vmul.f32 %v2795, 0.020408163
      %v2828 = vmul.f32 %v2796, 0.020408163
      %v2829 = vmul.f32 %v2797, 0.020408163
      %v2830 = vmul.f32 %v2798, 0.020408163
      %v2831 = vmul.f32 %v2799, 0.020408163
      %v2832 = vmul.f32 %v2800, 0.020408163
      %v2833 = vmul.f32 %v2801, 0.020408163
      %v2834 = vmul.f32 %v2802, 0.020408163
      %v2835 = vmul.f32 %v2803, 0.020408163
      %v2836 = vmul.f32 %v2804, 0.020408163
      %v2837 = vmul.f32 %v2805, 0.020408163
      %v2838 = vmul.f32 %v2806, 0.020408163
      %v2839 = vmul.f32 %v2807, 0.020408163
      %v2840 = vmul.f32 %v2808, 0.020408163
      %v2841 = vld [vmem:[%s4] sm:$0xf]
      %v2842 = vld [vmem:[%s5] sm:$0xf]
      %v2844 = vsel %vm555, %v1861, 0
      %v2847 = vsel %vm555, %v1862, 0
      %v2850 = vsel %vm555, %v1863, 0
      %v2853 = vsel %vm555, %v1864, 0
      %v2856 = vsel %vm555, %v1865, 0
      %v2859 = vsel %vm555, %v1866, 0
      %v2862 = vsel %vm555, %v1867, 0
      %v2865 = vsel %vm555, %v1868, 0
      %v2868 = vsel %vm555, %v1869, 0
      %v2871 = vsel %vm555, %v1870, 0
      %v2874 = vsel %vm555, %v1871, 0
      %v2877 = vsel %vm555, %v1872, 0
      %v2880 = vsel %vm555, %v1873, 0
      %v2883 = vsel %vm555, %v1874, 0
      %v2886 = vsel %vm555, %v1875, 0
      %v2889 = vsel %vm555, %v1876, 0
      %v2892 = vsel %vm555, %v1877, 0
      %v2895 = vsel %vm555, %v1878, 0
      %v2898 = vsel %vm555, %v1879, 0
      %v2901 = vsel %vm555, %v1880, 0
      %v2904 = vsel %vm555, %v1881, 0
      %v2907 = vsel %vm555, %v1882, 0
      %v2910 = vsel %vm555, %v1883, 0
      %v2913 = vsel %vm555, %v1884, 0
      %v2916 = vsel %vm555, %v1885, 0
      %v2919 = vsel %vm555, %v1886, 0
      %v2922 = vsel %vm555, %v1887, 0
      %v2925 = vsel %vm555, %v1888, 0
      %v2928 = vsel %vm555, %v1889, 0
      %v2931 = vsel %vm555, %v1890, 0
      %v2934 = vsel %vm555, %v1891, 0
      %v2937 = vsel %vm555, %v1892, 0
      %v2940 = vsel %vm652, %v2842, 0
      %2942 = vmatprep.subr.mxu0 0.0
      %2943 = vmatpush1.msra.mxu0 0.0
      %2944 = vmatprep.subr.mxu0 0.0
      %2945 = vmatpush1.msra.mxu0 0.0
      %2946 = vmatprep.subr.mxu0 0.0
      %2947 = vmatpush1.msra.mxu0 0.0
      %2948 = vmatprep.subr.mxu0 0.0
      %2949 = vmatpush1.msra.mxu0 0.0
      %2950 = vmatprep.subr.mxu0 0.0
      %2951 = vmatpush1.msra.mxu0 0.0
      %2952 = vmatprep.subr.mxu0 0.0
      %2953 = vmatpush1.msra.mxu0 0.0
      %2954 = vmatprep.subr.mxu0 0.0
      %2955 = vmatpush1.msra.mxu0 0.0
      %2956 = vmatprep.subr.mxu0 0.0
      %2957 = vmatpush1.msra.mxu0 0.0
      %2958 = vmatprep.subr.mxu0 0.0
      %2959 = vmatpush1.msra.mxu0 0.0
      %2960 = vmatprep.subr.mxu0 0.0
      %2961 = vmatpush1.msra.mxu0 0.0
      %2962 = vmatprep.subr.mxu0 0.0
      %2963 = vmatpush1.msra.mxu0 0.0
      %2964 = vmatprep.subr.mxu0 0.0
      %2965 = vmatpush1.msra.mxu0 0.0
      %2966 = vmatprep.subr.mxu0 0.0
      %2967 = vmatpush1.msra.mxu0 0.0
      %2968 = vmatprep.subr.mxu0 0.0
      %2969 = vmatpush1.msra.mxu0 0.0
      %2970 = vmatprep.subr.mxu0 0.0
      %2971 = vmatpush1.msra.mxu0 0.0
      %2972 = vmatprep.subr.mxu0 0.0
      %2973 = vmatpush1.msra.mxu0 %v2940
      %2974 = vmatprep.subr.mxu0 0.0
      %2975 = vmatpush2.msra.mxu0 0.0
      %2976 = vmatprep.subr.mxu0 0.0
      %2977 = vmatpush2.msra.mxu0 0.0
      %2978 = vmatprep.subr.mxu0 0.0
      %2979 = vmatpush2.msra.mxu0 0.0
      %2980 = vmatprep.subr.mxu0 0.0
      %2981 = vmatpush2.msra.mxu0 0.0
      %2982 = vmatprep.subr.mxu0 0.0
      %2983 = vmatpush2.msra.mxu0 0.0
      %2984 = vmatprep.subr.mxu0 0.0
      %2985 = vmatpush2.msra.mxu0 0.0
      %2986 = vmatprep.subr.mxu0 0.0
      %2987 = vmatpush2.msra.mxu0 0.0
      %2988 = vmatprep.subr.mxu0 0.0
      %2989 = vmatpush2.msra.mxu0 0.0
      %2990 = vmatprep.subr.mxu0 0.0
      %2991 = vmatpush2.msra.mxu0 0.0
      %2992 = vmatprep.subr.mxu0 0.0
      %2993 = vmatpush2.msra.mxu0 0.0
      %2994 = vmatprep.subr.mxu0 0.0
      %2995 = vmatpush2.msra.mxu0 0.0
      %2996 = vmatprep.subr.mxu0 0.0
      %2997 = vmatpush2.msra.mxu0 0.0
      %2998 = vmatprep.subr.mxu0 0.0
      %2999 = vmatpush2.msra.mxu0 0.0
      %3000 = vmatprep.subr.mxu0 0.0
      %3001 = vmatpush2.msra.mxu0 0.0
      %3002 = vmatprep.subr.mxu0 0.0
      %3003 = vmatpush2.msra.mxu0 0.0
      %3004 = vmatprep.subr.mxu0 0.0
      %3005 = vmatpush2.msra.mxu0 0.0
      %3006 = vmatprep.mubr.f32.mxu0 0.0
      %3007 = vmatmul.mubr.f32.gmra.mxu0 %v2844
      %v3008 = vpop.f32.mrf.mxu0
      %v3009 = vadd.f32 0.0, %v3008
      %v3010 = vpop.f32.mrf.mxu0
      %3011 = vmatprep.mubr.f32.mxu0 0.0
      %3012 = vmatmul.mubr.f32.gmra.mxu0 %v2847
      %v3013 = vpop.f32.mrf.mxu0
      %v3014 = vadd.f32 0.0, %v3013
      %v3015 = vpop.f32.mrf.mxu0
      %3016 = vmatprep.mubr.f32.mxu0 0.0
      %3017 = vmatmul.mubr.f32.gmra.mxu0 %v2850
      %v3018 = vpop.f32.mrf.mxu0
      %v3019 = vadd.f32 0.0, %v3018
      %v3020 = vpop.f32.mrf.mxu0
      %3021 = vmatprep.mubr.f32.mxu0 0.0
      %3022 = vmatmul.mubr.f32.gmra.mxu0 %v2853
      %v3023 = vpop.f32.mrf.mxu0
      %v3024 = vadd.f32 0.0, %v3023
      %v3025 = vpop.f32.mrf.mxu0
      %3026 = vmatprep.mubr.f32.mxu0 0.0
      %3027 = vmatmul.mubr.f32.gmra.mxu0 %v2856
      %v3028 = vpop.f32.mrf.mxu0
      %v3029 = vadd.f32 0.0, %v3028
      %v3030 = vpop.f32.mrf.mxu0
      %3031 = vmatprep.mubr.f32.mxu0 0.0
      %3032 = vmatmul.mubr.f32.gmra.mxu0 %v2859
      %v3033 = vpop.f32.mrf.mxu0
      %v3034 = vadd.f32 0.0, %v3033
      %v3035 = vpop.f32.mrf.mxu0
      %3036 = vmatprep.mubr.f32.mxu0 0.0
      %3037 = vmatmul.mubr.f32.gmra.mxu0 %v2862
      %v3038 = vpop.f32.mrf.mxu0
      %v3039 = vadd.f32 0.0, %v3038
      %v3040 = vpop.f32.mrf.mxu0
      %3041 = vmatprep.mubr.f32.mxu0 0.0
      %3042 = vmatmul.mubr.f32.gmra.mxu0 %v2865
      %v3043 = vpop.f32.mrf.mxu0
      %v3044 = vadd.f32 0.0, %v3043
      %v3045 = vpop.f32.mrf.mxu0
      %3046 = vmatprep.mubr.f32.mxu0 0.0
      %3047 = vmatmul.mubr.f32.gmra.mxu0 %v2868
      %v3048 = vpop.f32.mrf.mxu0
      %v3049 = vadd.f32 0.0, %v3048
      %v3050 = vpop.f32.mrf.mxu0
      %3051 = vmatprep.mubr.f32.mxu0 0.0
      %3052 = vmatmul.mubr.f32.gmra.mxu0 %v2871
      %v3053 = vpop.f32.mrf.mxu0
      %v3054 = vadd.f32 0.0, %v3053
      %v3055 = vpop.f32.mrf.mxu0
      %3056 = vmatprep.mubr.f32.mxu0 0.0
      %3057 = vmatmul.mubr.f32.gmra.mxu0 %v2874
      %v3058 = vpop.f32.mrf.mxu0
      %v3059 = vadd.f32 0.0, %v3058
      %v3060 = vpop.f32.mrf.mxu0
      %3061 = vmatprep.mubr.f32.mxu0 0.0
      %3062 = vmatmul.mubr.f32.gmra.mxu0 %v2877
      %v3063 = vpop.f32.mrf.mxu0
      %v3064 = vadd.f32 0.0, %v3063
      %v3065 = vpop.f32.mrf.mxu0
      %3066 = vmatprep.mubr.f32.mxu0 0.0
      %3067 = vmatmul.mubr.f32.gmra.mxu0 %v2880
      %v3068 = vpop.f32.mrf.mxu0
      %v3069 = vadd.f32 0.0, %v3068
      %v3070 = vpop.f32.mrf.mxu0
      %3071 = vmatprep.mubr.f32.mxu0 0.0
      %3072 = vmatmul.mubr.f32.gmra.mxu0 %v2883
      %v3073 = vpop.f32.mrf.mxu0
      %v3074 = vadd.f32 0.0, %v3073
      %v3075 = vpop.f32.mrf.mxu0
      %3076 = vmatprep.mubr.f32.mxu0 0.0
      %3077 = vmatmul.mubr.f32.gmra.mxu0 %v2886
      %v3078 = vpop.f32.mrf.mxu0
      %v3079 = vadd.f32 0.0, %v3078
      %v3080 = vpop.f32.mrf.mxu0
      %3081 = vmatprep.mubr.f32.mxu0 0.0
      %3082 = vmatmul.mubr.f32.gmra.mxu0 %v2889
      %v3083 = vpop.f32.mrf.mxu0
      %v3084 = vadd.f32 0.0, %v3083
      %v3085 = vpop.f32.mrf.mxu0
      %3086 = vmatprep.mubr.f32.mxu0 0.0
      %3087 = vmatmul.mubr.f32.gmra.mxu0 %v2892
      %v3088 = vpop.f32.mrf.mxu0
      %v3089 = vadd.f32 0.0, %v3088
      %v3090 = vpop.f32.mrf.mxu0
      %3091 = vmatprep.mubr.f32.mxu0 0.0
      %3092 = vmatmul.mubr.f32.gmra.mxu0 %v2895
      %v3093 = vpop.f32.mrf.mxu0
      %v3094 = vadd.f32 0.0, %v3093
      %v3095 = vpop.f32.mrf.mxu0
      %3096 = vmatprep.mubr.f32.mxu0 0.0
      %3097 = vmatmul.mubr.f32.gmra.mxu0 %v2898
      %v3098 = vpop.f32.mrf.mxu0
      %v3099 = vadd.f32 0.0, %v3098
      %v3100 = vpop.f32.mrf.mxu0
      %3101 = vmatprep.mubr.f32.mxu0 0.0
      %3102 = vmatmul.mubr.f32.gmra.mxu0 %v2901
      %v3103 = vpop.f32.mrf.mxu0
      %v3104 = vadd.f32 0.0, %v3103
      %v3105 = vpop.f32.mrf.mxu0
      %3106 = vmatprep.mubr.f32.mxu0 0.0
      %3107 = vmatmul.mubr.f32.gmra.mxu0 %v2904
      %v3108 = vpop.f32.mrf.mxu0
      %v3109 = vadd.f32 0.0, %v3108
      %v3110 = vpop.f32.mrf.mxu0
      %3111 = vmatprep.mubr.f32.mxu0 0.0
      %3112 = vmatmul.mubr.f32.gmra.mxu0 %v2907
      %v3113 = vpop.f32.mrf.mxu0
      %v3114 = vadd.f32 0.0, %v3113
      %v3115 = vpop.f32.mrf.mxu0
      %3116 = vmatprep.mubr.f32.mxu0 0.0
      %3117 = vmatmul.mubr.f32.gmra.mxu0 %v2910
      %v3118 = vpop.f32.mrf.mxu0
      %v3119 = vadd.f32 0.0, %v3118
      %v3120 = vpop.f32.mrf.mxu0
      %3121 = vmatprep.mubr.f32.mxu0 0.0
      %3122 = vmatmul.mubr.f32.gmra.mxu0 %v2913
      %v3123 = vpop.f32.mrf.mxu0
      %v3124 = vadd.f32 0.0, %v3123
      %v3125 = vpop.f32.mrf.mxu0
      %3126 = vmatprep.mubr.f32.mxu0 0.0
      %3127 = vmatmul.mubr.f32.gmra.mxu0 %v2916
      %v3128 = vpop.f32.mrf.mxu0
      %v3129 = vadd.f32 0.0, %v3128
      %v3130 = vpop.f32.mrf.mxu0
      %3131 = vmatprep.mubr.f32.mxu0 0.0
      %3132 = vmatmul.mubr.f32.gmra.mxu0 %v2919
      %v3133 = vpop.f32.mrf.mxu0
      %v3134 = vadd.f32 0.0, %v3133
      %v3135 = vpop.f32.mrf.mxu0
      %3136 = vmatprep.mubr.f32.mxu0 0.0
      %3137 = vmatmul.mubr.f32.gmra.mxu0 %v2922
      %v3138 = vpop.f32.mrf.mxu0
      %v3139 = vadd.f32 0.0, %v3138
      %v3140 = vpop.f32.mrf.mxu0
      %3141 = vmatprep.mubr.f32.mxu0 0.0
      %3142 = vmatmul.mubr.f32.gmra.mxu0 %v2925
      %v3143 = vpop.f32.mrf.mxu0
      %v3144 = vadd.f32 0.0, %v3143
      %v3145 = vpop.f32.mrf.mxu0
      %3146 = vmatprep.mubr.f32.mxu0 0.0
      %3147 = vmatmul.mubr.f32.gmra.mxu0 %v2928
      %v3148 = vpop.f32.mrf.mxu0
      %v3149 = vadd.f32 0.0, %v3148
      %v3150 = vpop.f32.mrf.mxu0
      %3151 = vmatprep.mubr.f32.mxu0 0.0
      %3152 = vmatmul.mubr.f32.gmra.mxu0 %v2931
      %v3153 = vpop.f32.mrf.mxu0
      %v3154 = vadd.f32 0.0, %v3153
      %v3155 = vpop.f32.mrf.mxu0
      %3156 = vmatprep.mubr.f32.mxu0 0.0
      %3157 = vmatmul.mubr.f32.gmra.mxu0 %v2934
      %v3158 = vpop.f32.mrf.mxu0
      %v3159 = vadd.f32 0.0, %v3158
      %v3160 = vpop.f32.mrf.mxu0
      %3161 = vmatprep.mubr.f32.mxu0 0.0
      %3162 = vmatmul.mubr.f32.gmra.mxu0 %v2937
      %v3163 = vpop.f32.mrf.mxu0
      %v3164 = vadd.f32 0.0, %v3163
      %v3165 = vpop.f32.mrf.mxu0
      %3166 = vdwg.mxu0
      %v3168 = vsel %vm555, %v2809, 0
      %v3171 = vsel %vm555, %v2810, 0
      %v3174 = vsel %vm555, %v2811, 0
      %v3177 = vsel %vm555, %v2812, 0
      %v3180 = vsel %vm555, %v2813, 0
      %v3183 = vsel %vm555, %v2814, 0
      %v3186 = vsel %vm555, %v2815, 0
      %v3189 = vsel %vm555, %v2816, 0
      %v3192 = vsel %vm555, %v2817, 0
      %v3195 = vsel %vm555, %v2818, 0
      %v3198 = vsel %vm555, %v2819, 0
      %v3201 = vsel %vm555, %v2820, 0
      %v3204 = vsel %vm555, %v2821, 0
      %v3207 = vsel %vm555, %v2822, 0
      %v3210 = vsel %vm555, %v2823, 0
      %v3213 = vsel %vm555, %v2824, 0
      %v3216 = vsel %vm555, %v2825, 0
      %v3219 = vsel %vm555, %v2826, 0
      %v3222 = vsel %vm555, %v2827, 0
      %v3225 = vsel %vm555, %v2828, 0
      %v3228 = vsel %vm555, %v2829, 0
      %v3231 = vsel %vm555, %v2830, 0
      %v3234 = vsel %vm555, %v2831, 0
      %v3237 = vsel %vm555, %v2832, 0
      %v3240 = vsel %vm555, %v2833, 0
      %v3243 = vsel %vm555, %v2834, 0
      %v3246 = vsel %vm555, %v2835, 0
      %v3249 = vsel %vm555, %v2836, 0
      %v3252 = vsel %vm555, %v2837, 0
      %v3255 = vsel %vm555, %v2838, 0
      %v3258 = vsel %vm555, %v2839, 0
      %v3261 = vsel %vm555, %v2840, 0
      %v3264 = vsel %vm652, %v2841, 0
      %3266 = vmatprep.subr.mxu0 0.0
      %3267 = vmatpush1.msra.mxu0 0.0
      %3268 = vmatprep.subr.mxu0 0.0
      %3269 = vmatpush1.msra.mxu0 0.0
      %3270 = vmatprep.subr.mxu0 0.0
      %3271 = vmatpush1.msra.mxu0 0.0
      %3272 = vmatprep.subr.mxu0 0.0
      %3273 = vmatpush1.msra.mxu0 0.0
      %3274 = vmatprep.subr.mxu0 0.0
      %3275 = vmatpush1.msra.mxu0 0.0
      %3276 = vmatprep.subr.mxu0 0.0
      %3277 = vmatpush1.msra.mxu0 0.0
      %3278 = vmatprep.subr.mxu0 0.0
      %3279 = vmatpush1.msra.mxu0 0.0
      %3280 = vmatprep.subr.mxu0 0.0
      %3281 = vmatpush1.msra.mxu0 0.0
      %3282 = vmatprep.subr.mxu0 0.0
      %3283 = vmatpush1.msra.mxu0 0.0
      %3284 = vmatprep.subr.mxu0 0.0
      %3285 = vmatpush1.msra.mxu0 0.0
      %3286 = vmatprep.subr.mxu0 0.0
      %3287 = vmatpush1.msra.mxu0 0.0
      %3288 = vmatprep.subr.mxu0 0.0
      %3289 = vmatpush1.msra.mxu0 0.0
      %3290 = vmatprep.subr.mxu0 0.0
      %3291 = vmatpush1.msra.mxu0 0.0
      %3292 = vmatprep.subr.mxu0 0.0
      %3293 = vmatpush1.msra.mxu0 0.0
      %3294 = vmatprep.subr.mxu0 0.0
      %3295 = vmatpush1.msra.mxu0 0.0
      %3296 = vmatprep.subr.mxu0 0.0
      %3297 = vmatpush1.msra.mxu0 %v3264
      %3298 = vmatprep.subr.mxu0 0.0
      %3299 = vmatpush2.msra.mxu0 0.0
      %3300 = vmatprep.subr.mxu0 0.0
      %3301 = vmatpush2.msra.mxu0 0.0
      %3302 = vmatprep.subr.mxu0 0.0
      %3303 = vmatpush2.msra.mxu0 0.0
      %3304 = vmatprep.subr.mxu0 0.0
      %3305 = vmatpush2.msra.mxu0 0.0
      %3306 = vmatprep.subr.mxu0 0.0
      %3307 = vmatpush2.msra.mxu0 0.0
      %3308 = vmatprep.subr.mxu0 0.0
      %3309 = vmatpush2.msra.mxu0 0.0
      %3310 = vmatprep.subr.mxu0 0.0
      %3311 = vmatpush2.msra.mxu0 0.0
      %3312 = vmatprep.subr.mxu0 0.0
      %3313 = vmatpush2.msra.mxu0 0.0
      %3314 = vmatprep.subr.mxu0 0.0
      %3315 = vmatpush2.msra.mxu0 0.0
      %3316 = vmatprep.subr.mxu0 0.0
      %3317 = vmatpush2.msra.mxu0 0.0
      %3318 = vmatprep.subr.mxu0 0.0
      %3319 = vmatpush2.msra.mxu0 0.0
      %3320 = vmatprep.subr.mxu0 0.0
      %3321 = vmatpush2.msra.mxu0 0.0
      %3322 = vmatprep.subr.mxu0 0.0
      %3323 = vmatpush2.msra.mxu0 0.0
      %3324 = vmatprep.subr.mxu0 0.0
      %3325 = vmatpush2.msra.mxu0 0.0
      %3326 = vmatprep.subr.mxu0 0.0
      %3327 = vmatpush2.msra.mxu0 0.0
      %3328 = vmatprep.subr.mxu0 0.0
      %3329 = vmatpush2.msra.mxu0 0.0
      %3330 = vmatprep.mubr.f32.mxu0 0.0
      %3331 = vmatmul.mubr.f32.gmra.mxu0 %v3168
      %v3332 = vpop.f32.mrf.mxu0
      %v3333 = vadd.f32 %v3009, %v3332
      %v3334 = vpop.f32.mrf.mxu0
      %3335 = vmatprep.mubr.f32.mxu0 0.0
      %3336 = vmatmul.mubr.f32.gmra.mxu0 %v3171
      %v3337 = vpop.f32.mrf.mxu0
      %v3338 = vadd.f32 %v3014, %v3337
      %v3339 = vpop.f32.mrf.mxu0
      %3340 = vmatprep.mubr.f32.mxu0 0.0
      %3341 = vmatmul.mubr.f32.gmra.mxu0 %v3174
      %v3342 = vpop.f32.mrf.mxu0
      %v3343 = vadd.f32 %v3019, %v3342
      %v3344 = vpop.f32.mrf.mxu0
      %3345 = vmatprep.mubr.f32.mxu0 0.0
      %3346 = vmatmul.mubr.f32.gmra.mxu0 %v3177
      %v3347 = vpop.f32.mrf.mxu0
      %v3348 = vadd.f32 %v3024, %v3347
      %v3349 = vpop.f32.mrf.mxu0
      %3350 = vmatprep.mubr.f32.mxu0 0.0
      %3351 = vmatmul.mubr.f32.gmra.mxu0 %v3180
      %v3352 = vpop.f32.mrf.mxu0
      %v3353 = vadd.f32 %v3029, %v3352
      %v3354 = vpop.f32.mrf.mxu0
      %3355 = vmatprep.mubr.f32.mxu0 0.0
      %3356 = vmatmul.mubr.f32.gmra.mxu0 %v3183
      %v3357 = vpop.f32.mrf.mxu0
      %v3358 = vadd.f32 %v3034, %v3357
      %v3359 = vpop.f32.mrf.mxu0
      %3360 = vmatprep.mubr.f32.mxu0 0.0
      %3361 = vmatmul.mubr.f32.gmra.mxu0 %v3186
      %v3362 = vpop.f32.mrf.mxu0
      %v3363 = vadd.f32 %v3039, %v3362
      %v3364 = vpop.f32.mrf.mxu0
      %3365 = vmatprep.mubr.f32.mxu0 0.0
      %3366 = vmatmul.mubr.f32.gmra.mxu0 %v3189
      %v3367 = vpop.f32.mrf.mxu0
      %v3368 = vadd.f32 %v3044, %v3367
      %v3369 = vpop.f32.mrf.mxu0
      %3370 = vmatprep.mubr.f32.mxu0 0.0
      %3371 = vmatmul.mubr.f32.gmra.mxu0 %v3192
      %v3372 = vpop.f32.mrf.mxu0
      %v3373 = vadd.f32 %v3049, %v3372
      %v3374 = vpop.f32.mrf.mxu0
      %3375 = vmatprep.mubr.f32.mxu0 0.0
      %3376 = vmatmul.mubr.f32.gmra.mxu0 %v3195
      %v3377 = vpop.f32.mrf.mxu0
      %v3378 = vadd.f32 %v3054, %v3377
      %v3379 = vpop.f32.mrf.mxu0
      %3380 = vmatprep.mubr.f32.mxu0 0.0
      %3381 = vmatmul.mubr.f32.gmra.mxu0 %v3198
      %v3382 = vpop.f32.mrf.mxu0
      %v3383 = vadd.f32 %v3059, %v3382
      %v3384 = vpop.f32.mrf.mxu0
      %3385 = vmatprep.mubr.f32.mxu0 0.0
      %3386 = vmatmul.mubr.f32.gmra.mxu0 %v3201
      %v3387 = vpop.f32.mrf.mxu0
      %v3388 = vadd.f32 %v3064, %v3387
      %v3389 = vpop.f32.mrf.mxu0
      %3390 = vmatprep.mubr.f32.mxu0 0.0
      %3391 = vmatmul.mubr.f32.gmra.mxu0 %v3204
      %v3392 = vpop.f32.mrf.mxu0
      %v3393 = vadd.f32 %v3069, %v3392
      %v3394 = vpop.f32.mrf.mxu0
      %3395 = vmatprep.mubr.f32.mxu0 0.0
      %3396 = vmatmul.mubr.f32.gmra.mxu0 %v3207
      %v3397 = vpop.f32.mrf.mxu0
      %v3398 = vadd.f32 %v3074, %v3397
      %v3399 = vpop.f32.mrf.mxu0
      %3400 = vmatprep.mubr.f32.mxu0 0.0
      %3401 = vmatmul.mubr.f32.gmra.mxu0 %v3210
      %v3402 = vpop.f32.mrf.mxu0
      %v3403 = vadd.f32 %v3079, %v3402
      %v3404 = vpop.f32.mrf.mxu0
      %3405 = vmatprep.mubr.f32.mxu0 0.0
      %3406 = vmatmul.mubr.f32.gmra.mxu0 %v3213
      %v3407 = vpop.f32.mrf.mxu0
      %v3408 = vadd.f32 %v3084, %v3407
      %v3409 = vpop.f32.mrf.mxu0
      %3410 = vmatprep.mubr.f32.mxu0 0.0
      %3411 = vmatmul.mubr.f32.gmra.mxu0 %v3216
      %v3412 = vpop.f32.mrf.mxu0
      %v3413 = vadd.f32 %v3089, %v3412
      %v3414 = vpop.f32.mrf.mxu0
      %3415 = vmatprep.mubr.f32.mxu0 0.0
      %3416 = vmatmul.mubr.f32.gmra.mxu0 %v3219
      %v3417 = vpop.f32.mrf.mxu0
      %v3418 = vadd.f32 %v3094, %v3417
      %v3419 = vpop.f32.mrf.mxu0
      %3420 = vmatprep.mubr.f32.mxu0 0.0
      %3421 = vmatmul.mubr.f32.gmra.mxu0 %v3222
      %v3422 = vpop.f32.mrf.mxu0
      %v3423 = vadd.f32 %v3099, %v3422
      %v3424 = vpop.f32.mrf.mxu0
      %3425 = vmatprep.mubr.f32.mxu0 0.0
      %3426 = vmatmul.mubr.f32.gmra.mxu0 %v3225
      %v3427 = vpop.f32.mrf.mxu0
      %v3428 = vadd.f32 %v3104, %v3427
      %v3429 = vpop.f32.mrf.mxu0
      %3430 = vmatprep.mubr.f32.mxu0 0.0
      %3431 = vmatmul.mubr.f32.gmra.mxu0 %v3228
      %v3432 = vpop.f32.mrf.mxu0
      %v3433 = vadd.f32 %v3109, %v3432
      %v3434 = vpop.f32.mrf.mxu0
      %3435 = vmatprep.mubr.f32.mxu0 0.0
      %3436 = vmatmul.mubr.f32.gmra.mxu0 %v3231
      %v3437 = vpop.f32.mrf.mxu0
      %v3438 = vadd.f32 %v3114, %v3437
      %v3439 = vpop.f32.mrf.mxu0
      %3440 = vmatprep.mubr.f32.mxu0 0.0
      %3441 = vmatmul.mubr.f32.gmra.mxu0 %v3234
      %v3442 = vpop.f32.mrf.mxu0
      %v3443 = vadd.f32 %v3119, %v3442
      %v3444 = vpop.f32.mrf.mxu0
      %3445 = vmatprep.mubr.f32.mxu0 0.0
      %3446 = vmatmul.mubr.f32.gmra.mxu0 %v3237
      %v3447 = vpop.f32.mrf.mxu0
      %v3448 = vadd.f32 %v3124, %v3447
      %v3449 = vpop.f32.mrf.mxu0
      %3450 = vmatprep.mubr.f32.mxu0 0.0
      %3451 = vmatmul.mubr.f32.gmra.mxu0 %v3240
      %v3452 = vpop.f32.mrf.mxu0
      %v3453 = vadd.f32 %v3129, %v3452
      %v3454 = vpop.f32.mrf.mxu0
      %3455 = vmatprep.mubr.f32.mxu0 0.0
      %3456 = vmatmul.mubr.f32.gmra.mxu0 %v3243
      %v3457 = vpop.f32.mrf.mxu0
      %v3458 = vadd.f32 %v3134, %v3457
      %v3459 = vpop.f32.mrf.mxu0
      %3460 = vmatprep.mubr.f32.mxu0 0.0
      %3461 = vmatmul.mubr.f32.gmra.mxu0 %v3246
      %v3462 = vpop.f32.mrf.mxu0
      %v3463 = vadd.f32 %v3139, %v3462
      %v3464 = vpop.f32.mrf.mxu0
      %3465 = vmatprep.mubr.f32.mxu0 0.0
      %3466 = vmatmul.mubr.f32.gmra.mxu0 %v3249
      %v3467 = vpop.f32.mrf.mxu0
      %v3468 = vadd.f32 %v3144, %v3467
      %v3469 = vpop.f32.mrf.mxu0
      %3470 = vmatprep.mubr.f32.mxu0 0.0
      %3471 = vmatmul.mubr.f32.gmra.mxu0 %v3252
      %v3472 = vpop.f32.mrf.mxu0
      %v3473 = vadd.f32 %v3149, %v3472
      %v3474 = vpop.f32.mrf.mxu0
      %3475 = vmatprep.mubr.f32.mxu0 0.0
      %3476 = vmatmul.mubr.f32.gmra.mxu0 %v3255
      %v3477 = vpop.f32.mrf.mxu0
      %v3478 = vadd.f32 %v3154, %v3477
      %v3479 = vpop.f32.mrf.mxu0
      %3480 = vmatprep.mubr.f32.mxu0 0.0
      %3481 = vmatmul.mubr.f32.gmra.mxu0 %v3258
      %v3482 = vpop.f32.mrf.mxu0
      %v3483 = vadd.f32 %v3159, %v3482
      %v3484 = vpop.f32.mrf.mxu0
      %3485 = vmatprep.mubr.f32.mxu0 0.0
      %3486 = vmatmul.mubr.f32.gmra.mxu0 %v3261
      %v3487 = vpop.f32.mrf.mxu0
      %v3488 = vadd.f32 %v3164, %v3487
      %v3489 = vpop.f32.mrf.mxu0
      %3490 = vdwg.mxu0
      %v3491 = vld [vmem:[%s6] sm:$0x1]
      %v3493 = vlaneseq
      %v3494 = vshrl.u32 %v3493, 7
      %v3495 = vsub.s32 0, %v3494
      %v3496 = vrot.slane %v3491, %v3495
      %v3498 = vmul.f32 %v3333, %v3496
      %v3499 = vmul.f32 %v3338, %v3496
      %v3500 = vmul.f32 %v3343, %v3496
      %v3501 = vmul.f32 %v3348, %v3496
      %v3502 = vmul.f32 %v3353, %v3496
      %v3503 = vmul.f32 %v3358, %v3496
      %v3504 = vmul.f32 %v3363, %v3496
      %v3505 = vmul.f32 %v3368, %v3496
      %v3506 = vmul.f32 %v3373, %v3496
      %v3507 = vmul.f32 %v3378, %v3496
      %v3508 = vmul.f32 %v3383, %v3496
      %v3509 = vmul.f32 %v3388, %v3496
      %v3510 = vmul.f32 %v3393, %v3496
      %v3511 = vmul.f32 %v3398, %v3496
      %v3512 = vmul.f32 %v3403, %v3496
      %v3513 = vmul.f32 %v3408, %v3496
      %v3514 = vmul.f32 %v3413, %v3496
      %v3515 = vmul.f32 %v3418, %v3496
      %v3516 = vmul.f32 %v3423, %v3496
      %v3517 = vmul.f32 %v3428, %v3496
      %v3518 = vmul.f32 %v3433, %v3496
      %v3519 = vmul.f32 %v3438, %v3496
      %v3520 = vmul.f32 %v3443, %v3496
      %v3521 = vmul.f32 %v3448, %v3496
      %v3522 = vmul.f32 %v3453, %v3496
      %v3523 = vmul.f32 %v3458, %v3496
      %v3524 = vmul.f32 %v3463, %v3496
      %v3525 = vmul.f32 %v3468, %v3496
      %v3526 = vmul.f32 %v3473, %v3496
      %v3527 = vmul.f32 %v3478, %v3496
      %v3528 = vmul.f32 %v3483, %v3496
      %v3529 = vmul.f32 %v3488, %v3496
      %v3530 = vld [vmem:[%s7] sm:$0x1]
      %v3532 = vlaneseq
      %v3533 = vshrl.u32 %v3532, 7
      %v3534 = vsub.s32 0, %v3533
      %v3535 = vrot.slane %v3530, %v3534
      %v3537 = vadd.f32 %v3498, %v3535
      %v3538 = vadd.f32 %v3499, %v3535
      %v3539 = vadd.f32 %v3500, %v3535
      %v3540 = vadd.f32 %v3501, %v3535
      %v3541 = vadd.f32 %v3502, %v3535
      %v3542 = vadd.f32 %v3503, %v3535
      %v3543 = vadd.f32 %v3504, %v3535
      %v3544 = vadd.f32 %v3505, %v3535
      %v3545 = vadd.f32 %v3506, %v3535
      %v3546 = vadd.f32 %v3507, %v3535
      %v3547 = vadd.f32 %v3508, %v3535
      %v3548 = vadd.f32 %v3509, %v3535
      %v3549 = vadd.f32 %v3510, %v3535
      %v3550 = vadd.f32 %v3511, %v3535
      %v3551 = vadd.f32 %v3512, %v3535
      %v3552 = vadd.f32 %v3513, %v3535
      %v3553 = vadd.f32 %v3514, %v3535
      %v3554 = vadd.f32 %v3515, %v3535
      %v3555 = vadd.f32 %v3516, %v3535
      %v3556 = vadd.f32 %v3517, %v3535
      %v3557 = vadd.f32 %v3518, %v3535
      %v3558 = vadd.f32 %v3519, %v3535
      %v3559 = vadd.f32 %v3520, %v3535
      %v3560 = vadd.f32 %v3521, %v3535
      %v3561 = vadd.f32 %v3522, %v3535
      %v3562 = vadd.f32 %v3523, %v3535
      %v3563 = vadd.f32 %v3524, %v3535
      %v3564 = vadd.f32 %v3525, %v3535
      %v3565 = vadd.f32 %v3526, %v3535
      %v3566 = vadd.f32 %v3527, %v3535
      %v3567 = vadd.f32 %v3528, %v3535
      %v3568 = vadd.f32 %v3529, %v3535
      %v3569 = vxor.u32 %v3537, 2147483648
      %v3570 = vxor.u32 %v3538, 2147483648
      %v3571 = vxor.u32 %v3539, 2147483648
      %v3572 = vxor.u32 %v3540, 2147483648
      %v3573 = vxor.u32 %v3541, 2147483648
      %v3574 = vxor.u32 %v3542, 2147483648
      %v3575 = vxor.u32 %v3543, 2147483648
      %v3576 = vxor.u32 %v3544, 2147483648
      %v3577 = vxor.u32 %v3545, 2147483648
      %v3578 = vxor.u32 %v3546, 2147483648
      %v3579 = vxor.u32 %v3547, 2147483648
      %v3580 = vxor.u32 %v3548, 2147483648
      %v3581 = vxor.u32 %v3549, 2147483648
      %v3582 = vxor.u32 %v3550, 2147483648
      %v3583 = vxor.u32 %v3551, 2147483648
      %v3584 = vxor.u32 %v3552, 2147483648
      %v3585 = vxor.u32 %v3553, 2147483648
      %v3586 = vxor.u32 %v3554, 2147483648
      %v3587 = vxor.u32 %v3555, 2147483648
      %v3588 = vxor.u32 %v3556, 2147483648
      %v3589 = vxor.u32 %v3557, 2147483648
      %v3590 = vxor.u32 %v3558, 2147483648
      %v3591 = vxor.u32 %v3559, 2147483648
      %v3592 = vxor.u32 %v3560, 2147483648
      %v3593 = vxor.u32 %v3561, 2147483648
      %v3594 = vxor.u32 %v3562, 2147483648
      %v3595 = vxor.u32 %v3563, 2147483648
      %v3596 = vxor.u32 %v3564, 2147483648
      %v3597 = vxor.u32 %v3565, 2147483648
      %v3598 = vxor.u32 %v3566, 2147483648
      %v3599 = vxor.u32 %v3567, 2147483648
      %v3600 = vxor.u32 %v3568, 2147483648
      %v3601 = vmul.f32 %v3569, 1.442695
      %v3602 = vpow.pop %v3601
      %v3603 = vmul.f32 %v3570, 1.442695
      %v3604 = vpow.pop %v3603
      %v3605 = vmul.f32 %v3571, 1.442695
      %v3606 = vpow.pop %v3605
      %v3607 = vmul.f32 %v3572, 1.442695
      %v3608 = vpow.pop %v3607
      %v3609 = vmul.f32 %v3573, 1.442695
      %v3610 = vpow.pop %v3609
      %v3611 = vmul.f32 %v3574, 1.442695
      %v3612 = vpow.pop %v3611
      %v3613 = vmul.f32 %v3575, 1.442695
      %v3614 = vpow.pop %v3613
      %v3615 = vmul.f32 %v3576, 1.442695
      %v3616 = vpow.pop %v3615
      %v3617 = vmul.f32 %v3577, 1.442695
      %v3618 = vpow.pop %v3617
      %v3619 = vmul.f32 %v3578, 1.442695
      %v3620 = vpow.pop %v3619
      %v3621 = vmul.f32 %v3579, 1.442695
      %v3622 = vpow.pop %v3621
      %v3623 = vmul.f32 %v3580, 1.442695
      %v3624 = vpow.pop %v3623
      %v3625 = vmul.f32 %v3581, 1.442695
      %v3626 = vpow.pop %v3625
      %v3627 = vmul.f32 %v3582, 1.442695
      %v3628 = vpow.pop %v3627
      %v3629 = vmul.f32 %v3583, 1.442695
      %v3630 = vpow.pop %v3629
      %v3631 = vmul.f32 %v3584, 1.442695
      %v3632 = vpow.pop %v3631
      %v3633 = vmul.f32 %v3585, 1.442695
      %v3634 = vpow.pop %v3633
      %v3635 = vmul.f32 %v3586, 1.442695
      %v3636 = vpow.pop %v3635
      %v3637 = vmul.f32 %v3587, 1.442695
      %v3638 = vpow.pop %v3637
      %v3639 = vmul.f32 %v3588, 1.442695
      %v3640 = vpow.pop %v3639
      %v3641 = vmul.f32 %v3589, 1.442695
      %v3642 = vpow.pop %v3641
      %v3643 = vmul.f32 %v3590, 1.442695
      %v3644 = vpow.pop %v3643
      %v3645 = vmul.f32 %v3591, 1.442695
      %v3646 = vpow.pop %v3645
      %v3647 = vmul.f32 %v3592, 1.442695
      %v3648 = vpow.pop %v3647
      %v3649 = vmul.f32 %v3593, 1.442695
      %v3650 = vpow.pop %v3649
      %v3651 = vmul.f32 %v3594, 1.442695
      %v3652 = vpow.pop %v3651
      %v3653 = vmul.f32 %v3595, 1.442695
      %v3654 = vpow.pop %v3653
      %v3655 = vmul.f32 %v3596, 1.442695
      %v3656 = vpow.pop %v3655
      %v3657 = vmul.f32 %v3597, 1.442695
      %v3658 = vpow.pop %v3657
      %v3659 = vmul.f32 %v3598, 1.442695
      %v3660 = vpow.pop %v3659
      %v3661 = vmul.f32 %v3599, 1.442695
      %v3662 = vpow.pop %v3661
      %v3663 = vmul.f32 %v3600, 1.442695
      %v3664 = vpow.pop %v3663
      %v3665 = vadd.f32 %v3602, 1.0
      %v3666 = vadd.f32 %v3604, 1.0
      %v3667 = vadd.f32 %v3606, 1.0
      %v3668 = vadd.f32 %v3608, 1.0
      %v3669 = vadd.f32 %v3610, 1.0
      %v3670 = vadd.f32 %v3612, 1.0
      %v3671 = vadd.f32 %v3614, 1.0
      %v3672 = vadd.f32 %v3616, 1.0
      %v3673 = vadd.f32 %v3618, 1.0
      %v3674 = vadd.f32 %v3620, 1.0
      %v3675 = vadd.f32 %v3622, 1.0
      %v3676 = vadd.f32 %v3624, 1.0
      %v3677 = vadd.f32 %v3626, 1.0
      %v3678 = vadd.f32 %v3628, 1.0
      %v3679 = vadd.f32 %v3630, 1.0
      %v3680 = vadd.f32 %v3632, 1.0
      %v3681 = vadd.f32 %v3634, 1.0
      %v3682 = vadd.f32 %v3636, 1.0
      %v3683 = vadd.f32 %v3638, 1.0
      %v3684 = vadd.f32 %v3640, 1.0
      %v3685 = vadd.f32 %v3642, 1.0
      %v3686 = vadd.f32 %v3644, 1.0
      %v3687 = vadd.f32 %v3646, 1.0
      %v3688 = vadd.f32 %v3648, 1.0
      %v3689 = vadd.f32 %v3650, 1.0
      %v3690 = vadd.f32 %v3652, 1.0
      %v3691 = vadd.f32 %v3654, 1.0
      %v3692 = vadd.f32 %v3656, 1.0
      %v3693 = vadd.f32 %v3658, 1.0
      %v3694 = vadd.f32 %v3660, 1.0
      %v3695 = vadd.f32 %v3662, 1.0
      %v3696 = vadd.f32 %v3664, 1.0
      %v3697 = vrcp.pop %v3665
      %v3698 = vmul.f32 1.0, %v3697
      %v3699 = vrcp.pop %v3666
      %v3700 = vmul.f32 1.0, %v3699
      %v3701 = vrcp.pop %v3667
      %v3702 = vmul.f32 1.0, %v3701
      %v3703 = vrcp.pop %v3668
      %v3704 = vmul.f32 1.0, %v3703
      %v3705 = vrcp.pop %v3669
      %v3706 = vmul.f32 1.0, %v3705
      %v3707 = vrcp.pop %v3670
      %v3708 = vmul.f32 1.0, %v3707
      %v3709 = vrcp.pop %v3671
      %v3710 = vmul.f32 1.0, %v3709
      %v3711 = vrcp.pop %v3672
      %v3712 = vmul.f32 1.0, %v3711
      %v3713 = vrcp.pop %v3673
      %v3714 = vmul.f32 1.0, %v3713
      %v3715 = vrcp.pop %v3674
      %v3716 = vmul.f32 1.0, %v3715
      %v3717 = vrcp.pop %v3675
      %v3718 = vmul.f32 1.0, %v3717
      %v3719 = vrcp.pop %v3676
      %v3720 = vmul.f32 1.0, %v3719
      %v3721 = vrcp.pop %v3677
      %v3722 = vmul.f32 1.0, %v3721
      %v3723 = vrcp.pop %v3678
      %v3724 = vmul.f32 1.0, %v3723
      %v3725 = vrcp.pop %v3679
      %v3726 = vmul.f32 1.0, %v3725
      %v3727 = vrcp.pop %v3680
      %v3728 = vmul.f32 1.0, %v3727
      %v3729 = vrcp.pop %v3681
      %v3730 = vmul.f32 1.0, %v3729
      %v3731 = vrcp.pop %v3682
      %v3732 = vmul.f32 1.0, %v3731
      %v3733 = vrcp.pop %v3683
      %v3734 = vmul.f32 1.0, %v3733
      %v3735 = vrcp.pop %v3684
      %v3736 = vmul.f32 1.0, %v3735
      %v3737 = vrcp.pop %v3685
      %v3738 = vmul.f32 1.0, %v3737
      %v3739 = vrcp.pop %v3686
      %v3740 = vmul.f32 1.0, %v3739
      %v3741 = vrcp.pop %v3687
      %v3742 = vmul.f32 1.0, %v3741
      %v3743 = vrcp.pop %v3688
      %v3744 = vmul.f32 1.0, %v3743
      %v3745 = vrcp.pop %v3689
      %v3746 = vmul.f32 1.0, %v3745
      %v3747 = vrcp.pop %v3690
      %v3748 = vmul.f32 1.0, %v3747
      %v3749 = vrcp.pop %v3691
      %v3750 = vmul.f32 1.0, %v3749
      %v3751 = vrcp.pop %v3692
      %v3752 = vmul.f32 1.0, %v3751
      %v3753 = vrcp.pop %v3693
      %v3754 = vmul.f32 1.0, %v3753
      %v3755 = vrcp.pop %v3694
      %v3756 = vmul.f32 1.0, %v3755
      %v3757 = vrcp.pop %v3695
      %v3758 = vmul.f32 1.0, %v3757
      %v3759 = vrcp.pop %v3696
      %v3760 = vmul.f32 1.0, %v3759
      %v3761 = vmul.f32 %v3537, %v3698
      %v3762 = vmul.f32 %v3538, %v3700
      %v3763 = vmul.f32 %v3539, %v3702
      %v3764 = vmul.f32 %v3540, %v3704
      %v3765 = vmul.f32 %v3541, %v3706
      %v3766 = vmul.f32 %v3542, %v3708
      %v3767 = vmul.f32 %v3543, %v3710
      %v3768 = vmul.f32 %v3544, %v3712
      %v3769 = vmul.f32 %v3545, %v3714
      %v3770 = vmul.f32 %v3546, %v3716
      %v3771 = vmul.f32 %v3547, %v3718
      %v3772 = vmul.f32 %v3548, %v3720
      %v3773 = vmul.f32 %v3549, %v3722
      %v3774 = vmul.f32 %v3550, %v3724
      %v3775 = vmul.f32 %v3551, %v3726
      %v3776 = vmul.f32 %v3552, %v3728
      %v3777 = vmul.f32 %v3553, %v3730
      %v3778 = vmul.f32 %v3554, %v3732
      %v3779 = vmul.f32 %v3555, %v3734
      %v3780 = vmul.f32 %v3556, %v3736
      %v3781 = vmul.f32 %v3557, %v3738
      %v3782 = vmul.f32 %v3558, %v3740
      %v3783 = vmul.f32 %v3559, %v3742
      %v3784 = vmul.f32 %v3560, %v3744
      %v3785 = vmul.f32 %v3561, %v3746
      %v3786 = vmul.f32 %v3562, %v3748
      %v3787 = vmul.f32 %v3563, %v3750
      %v3788 = vmul.f32 %v3564, %v3752
      %v3789 = vmul.f32 %v3565, %v3754
      %v3790 = vmul.f32 %v3566, %v3756
      %v3791 = vmul.f32 %v3567, %v3758
      %v3792 = vmul.f32 %v3568, %v3760
      %3793 = vst.msk [vmem:[#allocation2 + $0x8] sm:$0xff] %vm555, %v3761
      %3794 = vst.msk [vmem:[#allocation2 + $0x10] sm:$0xff] %vm555, %v3762
      %3795 = vst.msk [vmem:[#allocation2 + $0x28] sm:$0xff] %vm555, %v3763
      %3796 = vst.msk [vmem:[#allocation2 + $0x30] sm:$0xff] %vm555, %v3764
      %3797 = vst.msk [vmem:[#allocation2 + $0x48] sm:$0xff] %vm555, %v3765
      %3798 = vst.msk [vmem:[#allocation2 + $0x50] sm:$0xff] %vm555, %v3766
      %3799 = vst.msk [vmem:[#allocation2 + $0x68] sm:$0xff] %vm555, %v3767
      %3800 = vst.msk [vmem:[#allocation2 + $0x70] sm:$0xff] %vm555, %v3768
      %3801 = vst.msk [vmem:[#allocation2 + $0x88] sm:$0xff] %vm555, %v3769
      %3802 = vst.msk [vmem:[#allocation2 + $0x90] sm:$0xff] %vm555, %v3770
      %3803 = vst.msk [vmem:[#allocation2 + $0xa8] sm:$0xff] %vm555, %v3771
      %3804 = vst.msk [vmem:[#allocation2 + $0xb0] sm:$0xff] %vm555, %v3772
      %3805 = vst.msk [vmem:[#allocation2 + $0xc8] sm:$0xff] %vm555, %v3773
      %3806 = vst.msk [vmem:[#allocation2 + $0xd0] sm:$0xff] %vm555, %v3774
      %3807 = vst.msk [vmem:[#allocation2 + $0xe8] sm:$0xff] %vm555, %v3775
      %3808 = vst.msk [vmem:[#allocation2 + $0xf0] sm:$0xff] %vm555, %v3776
      %3809 = vst.msk [vmem:[#allocation2 + $0x108] sm:$0xff] %vm555, %v3777
      %3810 = vst.msk [vmem:[#allocation2 + $0x110] sm:$0xff] %vm555, %v3778
      %3811 = vst.msk [vmem:[#allocation2 + $0x128] sm:$0xff] %vm555, %v3779
      %3812 = vst.msk [vmem:[#allocation2 + $0x130] sm:$0xff] %vm555, %v3780
      %3813 = vst.msk [vmem:[#allocation2 + $0x148] sm:$0xff] %vm555, %v3781
      %3814 = vst.msk [vmem:[#allocation2 + $0x150] sm:$0xff] %vm555, %v3782
      %3815 = vst.msk [vmem:[#allocation2 + $0x168] sm:$0xff] %vm555, %v3783
      %3816 = vst.msk [vmem:[#allocation2 + $0x170] sm:$0xff] %vm555, %v3784
      %3817 = vst.msk [vmem:[#allocation2 + $0x188] sm:$0xff] %vm555, %v3785
      %3818 = vst.msk [vmem:[#allocation2 + $0x190] sm:$0xff] %vm555, %v3786
      %3819 = vst.msk [vmem:[#allocation2 + $0x1a8] sm:$0xff] %vm555, %v3787
      %3820 = vst.msk [vmem:[#allocation2 + $0x1b0] sm:$0xff] %vm555, %v3788
      %3821 = vst.msk [vmem:[#allocation2 + $0x1c8] sm:$0xff] %vm555, %v3789
      %3822 = vst.msk [vmem:[#allocation2 + $0x1d0] sm:$0xff] %vm555, %v3790
      %3823 = vst.msk [vmem:[#allocation2 + $0x1e8] sm:$0xff] %vm555, %v3791
      %3824 = vst.msk [vmem:[#allocation2 + $0x1f0] sm:$0xff] %vm555, %v3792
      %v3825 = vld [vmem:[%s8] sm:$0xff]
      %v3826 = vld [vmem:[%s8 + $0x8] sm:$0x7]
      %v3827 = vld [vmem:[#allocation2 + $0x3] sm:$0xff]
      %v3828 = vld [vmem:[#allocation2 + $0xb] sm:$0xff]
      %v3829 = vld [vmem:[#allocation2 + $0x23] sm:$0xff]
      %v3830 = vld [vmem:[#allocation2 + $0x2b] sm:$0xff]
      %v3831 = vld [vmem:[#allocation2 + $0x43] sm:$0xff]
      %v3832 = vld [vmem:[#allocation2 + $0x4b] sm:$0xff]
      %v3833 = vld [vmem:[#allocation2 + $0x63] sm:$0xff]
      %v3834 = vld [vmem:[#allocation2 + $0x6b] sm:$0xff]
      %v3835 = vld [vmem:[#allocation2 + $0x83] sm:$0xff]
      %v3836 = vld [vmem:[#allocation2 + $0x8b] sm:$0xff]
      %v3837 = vld [vmem:[#allocation2 + $0xa3] sm:$0xff]
      %v3838 = vld [vmem:[#allocation2 + $0xab] sm:$0xff]
      %v3839 = vld [vmem:[#allocation2 + $0xc3] sm:$0xff]
      %v3840 = vld [vmem:[#allocation2 + $0xcb] sm:$0xff]
      %v3841 = vld [vmem:[#allocation2 + $0xe3] sm:$0xff]
      %v3842 = vld [vmem:[#allocation2 + $0xeb] sm:$0xff]
      %v3843 = vld [vmem:[#allocation2 + $0x103] sm:$0xff]
      %v3844 = vld [vmem:[#allocation2 + $0x10b] sm:$0xff]
      %v3845 = vld [vmem:[#allocation2 + $0x123] sm:$0xff]
      %v3846 = vld [vmem:[#allocation2 + $0x12b] sm:$0xff]
      %v3847 = vld [vmem:[#allocation2 + $0x143] sm:$0xff]
      %v3848 = vld [vmem:[#allocation2 + $0x14b] sm:$0xff]
      %v3849 = vld [vmem:[#allocation2 + $0x163] sm:$0xff]
      %v3850 = vld [vmem:[#allocation2 + $0x16b] sm:$0xff]
      %v3851 = vld [vmem:[#allocation2 + $0x183] sm:$0xff]
      %v3852 = vld [vmem:[#allocation2 + $0x18b] sm:$0xff]
      %v3853 = vld [vmem:[#allocation2 + $0x1a3] sm:$0xff]
      %v3854 = vld [vmem:[#allocation2 + $0x1ab] sm:$0xff]
      %v3855 = vld [vmem:[#allocation2 + $0x1c3] sm:$0xff]
      %v3856 = vld [vmem:[#allocation2 + $0x1cb] sm:$0xff]
      %v3857 = vld [vmem:[#allocation2 + $0x1e3] sm:$0xff]
      %v3858 = vld [vmem:[#allocation2 + $0x1eb] sm:$0xff]
      %v3859 = vlaneseq
      %v3860 = vshrl.u32 %v3859, 7
      %v3861 = vsub.s32 0, %v3860
      %v3862 = vrot.slane %v3825, %v3861
      %v3863 = vmul.f32 %v3827, %v3862
      %v3864 = vmul.f32 %v3828, %v3862
      %v3865 = vmul.f32 %v3829, %v3862
      %v3866 = vmul.f32 %v3830, %v3862
      %v3867 = vmul.f32 %v3831, %v3862
      %v3868 = vmul.f32 %v3832, %v3862
      %v3869 = vmul.f32 %v3833, %v3862
      %v3870 = vmul.f32 %v3834, %v3862
      %v3871 = vmul.f32 %v3835, %v3862
      %v3872 = vmul.f32 %v3836, %v3862
      %v3873 = vmul.f32 %v3837, %v3862
      %v3874 = vmul.f32 %v3838, %v3862
      %v3875 = vmul.f32 %v3839, %v3862
      %v3876 = vmul.f32 %v3840, %v3862
      %v3877 = vmul.f32 %v3841, %v3862
      %v3878 = vmul.f32 %v3842, %v3862
      %v3879 = vmul.f32 %v3843, %v3862
      %v3880 = vmul.f32 %v3844, %v3862
      %v3881 = vmul.f32 %v3845, %v3862
      %v3882 = vmul.f32 %v3846, %v3862
      %v3883 = vmul.f32 %v3847, %v3862
      %v3884 = vmul.f32 %v3848, %v3862
      %v3885 = vmul.f32 %v3849, %v3862
      %v3886 = vmul.f32 %v3850, %v3862
      %v3887 = vmul.f32 %v3851, %v3862
      %v3888 = vmul.f32 %v3852, %v3862
      %v3889 = vmul.f32 %v3853, %v3862
      %v3890 = vmul.f32 %v3854, %v3862
      %v3891 = vmul.f32 %v3855, %v3862
      %v3892 = vmul.f32 %v3856, %v3862
      %v3893 = vmul.f32 %v3857, %v3862
      %v3894 = vmul.f32 %v3858, %v3862
      %v3895 = vld [vmem:[#allocation2 + $0x4] sm:$0xff]
      %v3896 = vld [vmem:[#allocation2 + $0xc] sm:$0xff]
      %v3897 = vld [vmem:[#allocation2 + $0x24] sm:$0xff]
      %v3898 = vld [vmem:[#allocation2 + $0x2c] sm:$0xff]
      %v3899 = vld [vmem:[#allocation2 + $0x44] sm:$0xff]
      %v3900 = vld [vmem:[#allocation2 + $0x4c] sm:$0xff]
      %v3901 = vld [vmem:[#allocation2 + $0x64] sm:$0xff]
      %v3902 = vld [vmem:[#allocation2 + $0x6c] sm:$0xff]
      %v3903 = vld [vmem:[#allocation2 + $0x84] sm:$0xff]
      %v3904 = vld [vmem:[#allocation2 + $0x8c] sm:$0xff]
      %v3905 = vld [vmem:[#allocation2 + $0xa4] sm:$0xff]
      %v3906 = vld [vmem:[#allocation2 + $0xac] sm:$0xff]
      %v3907 = vld [vmem:[#allocation2 + $0xc4] sm:$0xff]
      %v3908 = vld [vmem:[#allocation2 + $0xcc] sm:$0xff]
      %v3909 = vld [vmem:[#allocation2 + $0xe4] sm:$0xff]
      %v3910 = vld [vmem:[#allocation2 + $0xec] sm:$0xff]
      %v3911 = vld [vmem:[#allocation2 + $0x104] sm:$0xff]
      %v3912 = vld [vmem:[#allocation2 + $0x10c] sm:$0xff]
      %v3913 = vld [vmem:[#allocation2 + $0x124] sm:$0xff]
      %v3914 = vld [vmem:[#allocation2 + $0x12c] sm:$0xff]
      %v3915 = vld [vmem:[#allocation2 + $0x144] sm:$0xff]
      %v3916 = vld [vmem:[#allocation2 + $0x14c] sm:$0xff]
      %v3917 = vld [vmem:[#allocation2 + $0x164] sm:$0xff]
      %v3918 = vld [vmem:[#allocation2 + $0x16c] sm:$0xff]
      %v3919 = vld [vmem:[#allocation2 + $0x184] sm:$0xff]
      %v3920 = vld [vmem:[#allocation2 + $0x18c] sm:$0xff]
      %v3921 = vld [vmem:[#allocation2 + $0x1a4] sm:$0xff]
      %v3922 = vld [vmem:[#allocation2 + $0x1ac] sm:$0xff]
      %v3923 = vld [vmem:[#allocation2 + $0x1c4] sm:$0xff]
      %v3924 = vld [vmem:[#allocation2 + $0x1cc] sm:$0xff]
      %v3925 = vld [vmem:[#allocation2 + $0x1e4] sm:$0xff]
      %v3926 = vld [vmem:[#allocation2 + $0x1ec] sm:$0xff]
      %v3927 = vlaneseq
      %v3928 = vshrl.u32 %v3927, 7
      %v3929 = vsub.s32 1, %v3928
      %v3930 = vrot.slane %v3825, %v3929
      %v3931 = vmul.f32 %v3895, %v3930
      %v3932 = vmul.f32 %v3896, %v3930
      %v3933 = vmul.f32 %v3897, %v3930
      %v3934 = vmul.f32 %v3898, %v3930
      %v3935 = vmul.f32 %v3899, %v3930
      %v3936 = vmul.f32 %v3900, %v3930
      %v3937 = vmul.f32 %v3901, %v3930
      %v3938 = vmul.f32 %v3902, %v3930
      %v3939 = vmul.f32 %v3903, %v3930
      %v3940 = vmul.f32 %v3904, %v3930
      %v3941 = vmul.f32 %v3905, %v3930
      %v3942 = vmul.f32 %v3906, %v3930
      %v3943 = vmul.f32 %v3907, %v3930
      %v3944 = vmul.f32 %v3908, %v3930
      %v3945 = vmul.f32 %v3909, %v3930
      %v3946 = vmul.f32 %v3910, %v3930
      %v3947 = vmul.f32 %v3911, %v3930
      %v3948 = vmul.f32 %v3912, %v3930
      %v3949 = vmul.f32 %v3913, %v3930
      %v3950 = vmul.f32 %v3914, %v3930
      %v3951 = vmul.f32 %v3915, %v3930
      %v3952 = vmul.f32 %v3916, %v3930
      %v3953 = vmul.f32 %v3917, %v3930
      %v3954 = vmul.f32 %v3918, %v3930
      %v3955 = vmul.f32 %v3919, %v3930
      %v3956 = vmul.f32 %v3920, %v3930
      %v3957 = vmul.f32 %v3921, %v3930
      %v3958 = vmul.f32 %v3922, %v3930
      %v3959 = vmul.f32 %v3923, %v3930
      %v3960 = vmul.f32 %v3924, %v3930
      %v3961 = vmul.f32 %v3925, %v3930
      %v3962 = vmul.f32 %v3926, %v3930
      %v3963 = vadd.f32 %v3863, %v3931
      %v3964 = vadd.f32 %v3864, %v3932
      %v3965 = vadd.f32 %v3865, %v3933
      %v3966 = vadd.f32 %v3866, %v3934
      %v3967 = vadd.f32 %v3867, %v3935
      %v3968 = vadd.f32 %v3868, %v3936
      %v3969 = vadd.f32 %v3869, %v3937
      %v3970 = vadd.f32 %v3870, %v3938
      %v3971 = vadd.f32 %v3871, %v3939
      %v3972 = vadd.f32 %v3872, %v3940
      %v3973 = vadd.f32 %v3873, %v3941
      %v3974 = vadd.f32 %v3874, %v3942
      %v3975 = vadd.f32 %v3875, %v3943
      %v3976 = vadd.f32 %v3876, %v3944
      %v3977 = vadd.f32 %v3877, %v3945
      %v3978 = vadd.f32 %v3878, %v3946
      %v3979 = vadd.f32 %v3879, %v3947
      %v3980 = vadd.f32 %v3880, %v3948
      %v3981 = vadd.f32 %v3881, %v3949
      %v3982 = vadd.f32 %v3882, %v3950
      %v3983 = vadd.f32 %v3883, %v3951
      %v3984 = vadd.f32 %v3884, %v3952
      %v3985 = vadd.f32 %v3885, %v3953
      %v3986 = vadd.f32 %v3886, %v3954
      %v3987 = vadd.f32 %v3887, %v3955
      %v3988 = vadd.f32 %v3888, %v3956
      %v3989 = vadd.f32 %v3889, %v3957
      %v3990 = vadd.f32 %v3890, %v3958
      %v3991 = vadd.f32 %v3891, %v3959
      %v3992 = vadd.f32 %v3892, %v3960
      %v3993 = vadd.f32 %v3893, %v3961
      %v3994 = vadd.f32 %v3894, %v3962
      %v3995 = vld [vmem:[#allocation2 + $0x5] sm:$0xff]
      %v3996 = vld [vmem:[#allocation2 + $0xd] sm:$0xff]
      %v3997 = vld [vmem:[#allocation2 + $0x25] sm:$0xff]
      %v3998 = vld [vmem:[#allocation2 + $0x2d] sm:$0xff]
      %v3999 = vld [vmem:[#allocation2 + $0x45] sm:$0xff]
      %v4000 = vld [vmem:[#allocation2 + $0x4d] sm:$0xff]
      %v4001 = vld [vmem:[#allocation2 + $0x65] sm:$0xff]
      %v4002 = vld [vmem:[#allocation2 + $0x6d] sm:$0xff]
      %v4003 = vld [vmem:[#allocation2 + $0x85] sm:$0xff]
      %v4004 = vld [vmem:[#allocation2 + $0x8d] sm:$0xff]
      %v4005 = vld [vmem:[#allocation2 + $0xa5] sm:$0xff]
      %v4006 = vld [vmem:[#allocation2 + $0xad] sm:$0xff]
      %v4007 = vld [vmem:[#allocation2 + $0xc5] sm:$0xff]
      %v4008 = vld [vmem:[#allocation2 + $0xcd] sm:$0xff]
      %v4009 = vld [vmem:[#allocation2 + $0xe5] sm:$0xff]
      %v4010 = vld [vmem:[#allocation2 + $0xed] sm:$0xff]
      %v4011 = vld [vmem:[#allocation2 + $0x105] sm:$0xff]
      %v4012 = vld [vmem:[#allocation2 + $0x10d] sm:$0xff]
      %v4013 = vld [vmem:[#allocation2 + $0x125] sm:$0xff]
      %v4014 = vld [vmem:[#allocation2 + $0x12d] sm:$0xff]
      %v4015 = vld [vmem:[#allocation2 + $0x145] sm:$0xff]
      %v4016 = vld [vmem:[#allocation2 + $0x14d] sm:$0xff]
      %v4017 = vld [vmem:[#allocation2 + $0x165] sm:$0xff]
      %v4018 = vld [vmem:[#allocation2 + $0x16d] sm:$0xff]
      %v4019 = vld [vmem:[#allocation2 + $0x185] sm:$0xff]
      %v4020 = vld [vmem:[#allocation2 + $0x18d] sm:$0xff]
      %v4021 = vld [vmem:[#allocation2 + $0x1a5] sm:$0xff]
      %v4022 = vld [vmem:[#allocation2 + $0x1ad] sm:$0xff]
      %v4023 = vld [vmem:[#allocation2 + $0x1c5] sm:$0xff]
      %v4024 = vld [vmem:[#allocation2 + $0x1cd] sm:$0xff]
      %v4025 = vld [vmem:[#allocation2 + $0x1e5] sm:$0xff]
      %v4026 = vld [vmem:[#allocation2 + $0x1ed] sm:$0xff]
      %v4027 = vlaneseq
      %v4028 = vshrl.u32 %v4027, 7
      %v4029 = vsub.s32 2, %v4028
      %v4030 = vrot.slane %v3825, %v4029
      %v4031 = vmul.f32 %v3995, %v4030
      %v4032 = vmul.f32 %v3996, %v4030
      %v4033 = vmul.f32 %v3997, %v4030
      %v4034 = vmul.f32 %v3998, %v4030
      %v4035 = vmul.f32 %v3999, %v4030
      %v4036 = vmul.f32 %v4000, %v4030
      %v4037 = vmul.f32 %v4001, %v4030
      %v4038 = vmul.f32 %v4002, %v4030
      %v4039 = vmul.f32 %v4003, %v4030
      %v4040 = vmul.f32 %v4004, %v4030
      %v4041 = vmul.f32 %v4005, %v4030
      %v4042 = vmul.f32 %v4006, %v4030
      %v4043 = vmul.f32 %v4007, %v4030
      %v4044 = vmul.f32 %v4008, %v4030
      %v4045 = vmul.f32 %v4009, %v4030
      %v4046 = vmul.f32 %v4010, %v4030
      %v4047 = vmul.f32 %v4011, %v4030
      %v4048 = vmul.f32 %v4012, %v4030
      %v4049 = vmul.f32 %v4013, %v4030
      %v4050 = vmul.f32 %v4014, %v4030
      %v4051 = vmul.f32 %v4015, %v4030
      %v4052 = vmul.f32 %v4016, %v4030
      %v4053 = vmul.f32 %v4017, %v4030
      %v4054 = vmul.f32 %v4018, %v4030
      %v4055 = vmul.f32 %v4019, %v4030
      %v4056 = vmul.f32 %v4020, %v4030
      %v4057 = vmul.f32 %v4021, %v4030
      %v4058 = vmul.f32 %v4022, %v4030
      %v4059 = vmul.f32 %v4023, %v4030
      %v4060 = vmul.f32 %v4024, %v4030
      %v4061 = vmul.f32 %v4025, %v4030
      %v4062 = vmul.f32 %v4026, %v4030
      %v4063 = vadd.f32 %v3963, %v4031
      %v4064 = vadd.f32 %v3964, %v4032
      %v4065 = vadd.f32 %v3965, %v4033
      %v4066 = vadd.f32 %v3966, %v4034
      %v4067 = vadd.f32 %v3967, %v4035
      %v4068 = vadd.f32 %v3968, %v4036
      %v4069 = vadd.f32 %v3969, %v4037
      %v4070 = vadd.f32 %v3970, %v4038
      %v4071 = vadd.f32 %v3971, %v4039
      %v4072 = vadd.f32 %v3972, %v4040
      %v4073 = vadd.f32 %v3973, %v4041
      %v4074 = vadd.f32 %v3974, %v4042
      %v4075 = vadd.f32 %v3975, %v4043
      %v4076 = vadd.f32 %v3976, %v4044
      %v4077 = vadd.f32 %v3977, %v4045
      %v4078 = vadd.f32 %v3978, %v4046
      %v4079 = vadd.f32 %v3979, %v4047
      %v4080 = vadd.f32 %v3980, %v4048
      %v4081 = vadd.f32 %v3981, %v4049
      %v4082 = vadd.f32 %v3982, %v4050
      %v4083 = vadd.f32 %v3983, %v4051
      %v4084 = vadd.f32 %v3984, %v4052
      %v4085 = vadd.f32 %v3985, %v4053
      %v4086 = vadd.f32 %v3986, %v4054
      %v4087 = vadd.f32 %v3987, %v4055
      %v4088 = vadd.f32 %v3988, %v4056
      %v4089 = vadd.f32 %v3989, %v4057
      %v4090 = vadd.f32 %v3990, %v4058
      %v4091 = vadd.f32 %v3991, %v4059
      %v4092 = vadd.f32 %v3992, %v4060
      %v4093 = vadd.f32 %v3993, %v4061
      %v4094 = vadd.f32 %v3994, %v4062
      %v4095 = vld [vmem:[#allocation2 + $0x6] sm:$0xff]
      %v4096 = vld [vmem:[#allocation2 + $0xe] sm:$0xff]
      %v4097 = vld [vmem:[#allocation2 + $0x26] sm:$0xff]
      %v4098 = vld [vmem:[#allocation2 + $0x2e] sm:$0xff]
      %v4099 = vld [vmem:[#allocation2 + $0x46] sm:$0xff]
      %v4100 = vld [vmem:[#allocation2 + $0x4e] sm:$0xff]
      %v4101 = vld [vmem:[#allocation2 + $0x66] sm:$0xff]
      %v4102 = vld [vmem:[#allocation2 + $0x6e] sm:$0xff]
      %v4103 = vld [vmem:[#allocation2 + $0x86] sm:$0xff]
      %v4104 = vld [vmem:[#allocation2 + $0x8e] sm:$0xff]
      %v4105 = vld [vmem:[#allocation2 + $0xa6] sm:$0xff]
      %v4106 = vld [vmem:[#allocation2 + $0xae] sm:$0xff]
      %v4107 = vld [vmem:[#allocation2 + $0xc6] sm:$0xff]
      %v4108 = vld [vmem:[#allocation2 + $0xce] sm:$0xff]
      %v4109 = vld [vmem:[#allocation2 + $0xe6] sm:$0xff]
      %v4110 = vld [vmem:[#allocation2 + $0xee] sm:$0xff]
      %v4111 = vld [vmem:[#allocation2 + $0x106] sm:$0xff]
      %v4112 = vld [vmem:[#allocation2 + $0x10e] sm:$0xff]
      %v4113 = vld [vmem:[#allocation2 + $0x126] sm:$0xff]
      %v4114 = vld [vmem:[#allocation2 + $0x12e] sm:$0xff]
      %v4115 = vld [vmem:[#allocation2 + $0x146] sm:$0xff]
      %v4116 = vld [vmem:[#allocation2 + $0x14e] sm:$0xff]
      %v4117 = vld [vmem:[#allocation2 + $0x166] sm:$0xff]
      %v4118 = vld [vmem:[#allocation2 + $0x16e] sm:$0xff]
      %v4119 = vld [vmem:[#allocation2 + $0x186] sm:$0xff]
      %v4120 = vld [vmem:[#allocation2 + $0x18e] sm:$0xff]
      %v4121 = vld [vmem:[#allocation2 + $0x1a6] sm:$0xff]
      %v4122 = vld [vmem:[#allocation2 + $0x1ae] sm:$0xff]
      %v4123 = vld [vmem:[#allocation2 + $0x1c6] sm:$0xff]
      %v4124 = vld [vmem:[#allocation2 + $0x1ce] sm:$0xff]
      %v4125 = vld [vmem:[#allocation2 + $0x1e6] sm:$0xff]
      %v4126 = vld [vmem:[#allocation2 + $0x1ee] sm:$0xff]
      %v4127 = vlaneseq
      %v4128 = vshrl.u32 %v4127, 7
      %v4129 = vsub.s32 3, %v4128
      %v4130 = vrot.slane %v3825, %v4129
      %v4131 = vmul.f32 %v4095, %v4130
      %v4132 = vmul.f32 %v4096, %v4130
      %v4133 = vmul.f32 %v4097, %v4130
      %v4134 = vmul.f32 %v4098, %v4130
      %v4135 = vmul.f32 %v4099, %v4130
      %v4136 = vmul.f32 %v4100, %v4130
      %v4137 = vmul.f32 %v4101, %v4130
      %v4138 = vmul.f32 %v4102, %v4130
      %v4139 = vmul.f32 %v4103, %v4130
      %v4140 = vmul.f32 %v4104, %v4130
      %v4141 = vmul.f32 %v4105, %v4130
      %v4142 = vmul.f32 %v4106, %v4130
      %v4143 = vmul.f32 %v4107, %v4130
      %v4144 = vmul.f32 %v4108, %v4130
      %v4145 = vmul.f32 %v4109, %v4130
      %v4146 = vmul.f32 %v4110, %v4130
      %v4147 = vmul.f32 %v4111, %v4130
      %v4148 = vmul.f32 %v4112, %v4130
      %v4149 = vmul.f32 %v4113, %v4130
      %v4150 = vmul.f32 %v4114, %v4130
      %v4151 = vmul.f32 %v4115, %v4130
      %v4152 = vmul.f32 %v4116, %v4130
      %v4153 = vmul.f32 %v4117, %v4130
      %v4154 = vmul.f32 %v4118, %v4130
      %v4155 = vmul.f32 %v4119, %v4130
      %v4156 = vmul.f32 %v4120, %v4130
      %v4157 = vmul.f32 %v4121, %v4130
      %v4158 = vmul.f32 %v4122, %v4130
      %v4159 = vmul.f32 %v4123, %v4130
      %v4160 = vmul.f32 %v4124, %v4130
      %v4161 = vmul.f32 %v4125, %v4130
      %v4162 = vmul.f32 %v4126, %v4130
      %v4163 = vadd.f32 %v4063, %v4131
      %v4164 = vadd.f32 %v4064, %v4132
      %v4165 = vadd.f32 %v4065, %v4133
      %v4166 = vadd.f32 %v4066, %v4134
      %v4167 = vadd.f32 %v4067, %v4135
      %v4168 = vadd.f32 %v4068, %v4136
      %v4169 = vadd.f32 %v4069, %v4137
      %v4170 = vadd.f32 %v4070, %v4138
      %v4171 = vadd.f32 %v4071, %v4139
      %v4172 = vadd.f32 %v4072, %v4140
      %v4173 = vadd.f32 %v4073, %v4141
      %v4174 = vadd.f32 %v4074, %v4142
      %v4175 = vadd.f32 %v4075, %v4143
      %v4176 = vadd.f32 %v4076, %v4144
      %v4177 = vadd.f32 %v4077, %v4145
      %v4178 = vadd.f32 %v4078, %v4146
      %v4179 = vadd.f32 %v4079, %v4147
      %v4180 = vadd.f32 %v4080, %v4148
      %v4181 = vadd.f32 %v4081, %v4149
      %v4182 = vadd.f32 %v4082, %v4150
      %v4183 = vadd.f32 %v4083, %v4151
      %v4184 = vadd.f32 %v4084, %v4152
      %v4185 = vadd.f32 %v4085, %v4153
      %v4186 = vadd.f32 %v4086, %v4154
      %v4187 = vadd.f32 %v4087, %v4155
      %v4188 = vadd.f32 %v4088, %v4156
      %v4189 = vadd.f32 %v4089, %v4157
      %v4190 = vadd.f32 %v4090, %v4158
      %v4191 = vadd.f32 %v4091, %v4159
      %v4192 = vadd.f32 %v4092, %v4160
      %v4193 = vadd.f32 %v4093, %v4161
      %v4194 = vadd.f32 %v4094, %v4162
      %v4195 = vld [vmem:[#allocation2 + $0x7] sm:$0xff]
      %v4196 = vld [vmem:[#allocation2 + $0xf] sm:$0xff]
      %v4197 = vld [vmem:[#allocation2 + $0x27] sm:$0xff]
      %v4198 = vld [vmem:[#allocation2 + $0x2f] sm:$0xff]
      %v4199 = vld [vmem:[#allocation2 + $0x47] sm:$0xff]
      %v4200 = vld [vmem:[#allocation2 + $0x4f] sm:$0xff]
      %v4201 = vld [vmem:[#allocation2 + $0x67] sm:$0xff]
      %v4202 = vld [vmem:[#allocation2 + $0x6f] sm:$0xff]
      %v4203 = vld [vmem:[#allocation2 + $0x87] sm:$0xff]
      %v4204 = vld [vmem:[#allocation2 + $0x8f] sm:$0xff]
      %v4205 = vld [vmem:[#allocation2 + $0xa7] sm:$0xff]
      %v4206 = vld [vmem:[#allocation2 + $0xaf] sm:$0xff]
      %v4207 = vld [vmem:[#allocation2 + $0xc7] sm:$0xff]
      %v4208 = vld [vmem:[#allocation2 + $0xcf] sm:$0xff]
      %v4209 = vld [vmem:[#allocation2 + $0xe7] sm:$0xff]
      %v4210 = vld [vmem:[#allocation2 + $0xef] sm:$0xff]
      %v4211 = vld [vmem:[#allocation2 + $0x107] sm:$0xff]
      %v4212 = vld [vmem:[#allocation2 + $0x10f] sm:$0xff]
      %v4213 = vld [vmem:[#allocation2 + $0x127] sm:$0xff]
      %v4214 = vld [vmem:[#allocation2 + $0x12f] sm:$0xff]
      %v4215 = vld [vmem:[#allocation2 + $0x147] sm:$0xff]
      %v4216 = vld [vmem:[#allocation2 + $0x14f] sm:$0xff]
      %v4217 = vld [vmem:[#allocation2 + $0x167] sm:$0xff]
      %v4218 = vld [vmem:[#allocation2 + $0x16f] sm:$0xff]
      %v4219 = vld [vmem:[#allocation2 + $0x187] sm:$0xff]
      %v4220 = vld [vmem:[#allocation2 + $0x18f] sm:$0xff]
      %v4221 = vld [vmem:[#allocation2 + $0x1a7] sm:$0xff]
      %v4222 = vld [vmem:[#allocation2 + $0x1af] sm:$0xff]
      %v4223 = vld [vmem:[#allocation2 + $0x1c7] sm:$0xff]
      %v4224 = vld [vmem:[#allocation2 + $0x1cf] sm:$0xff]
      %v4225 = vld [vmem:[#allocation2 + $0x1e7] sm:$0xff]
      %v4226 = vld [vmem:[#allocation2 + $0x1ef] sm:$0xff]
      %v4227 = vlaneseq
      %v4228 = vshrl.u32 %v4227, 7
      %v4229 = vsub.s32 4, %v4228
      %v4230 = vrot.slane %v3825, %v4229
      %v4231 = vmul.f32 %v4195, %v4230
      %v4232 = vmul.f32 %v4196, %v4230
      %v4233 = vmul.f32 %v4197, %v4230
      %v4234 = vmul.f32 %v4198, %v4230
      %v4235 = vmul.f32 %v4199, %v4230
      %v4236 = vmul.f32 %v4200, %v4230
      %v4237 = vmul.f32 %v4201, %v4230
      %v4238 = vmul.f32 %v4202, %v4230
      %v4239 = vmul.f32 %v4203, %v4230
      %v4240 = vmul.f32 %v4204, %v4230
      %v4241 = vmul.f32 %v4205, %v4230
      %v4242 = vmul.f32 %v4206, %v4230
      %v4243 = vmul.f32 %v4207, %v4230
      %v4244 = vmul.f32 %v4208, %v4230
      %v4245 = vmul.f32 %v4209, %v4230
      %v4246 = vmul.f32 %v4210, %v4230
      %v4247 = vmul.f32 %v4211, %v4230
      %v4248 = vmul.f32 %v4212, %v4230
      %v4249 = vmul.f32 %v4213, %v4230
      %v4250 = vmul.f32 %v4214, %v4230
      %v4251 = vmul.f32 %v4215, %v4230
      %v4252 = vmul.f32 %v4216, %v4230
      %v4253 = vmul.f32 %v4217, %v4230
      %v4254 = vmul.f32 %v4218, %v4230
      %v4255 = vmul.f32 %v4219, %v4230
      %v4256 = vmul.f32 %v4220, %v4230
      %v4257 = vmul.f32 %v4221, %v4230
      %v4258 = vmul.f32 %v4222, %v4230
      %v4259 = vmul.f32 %v4223, %v4230
      %v4260 = vmul.f32 %v4224, %v4230
      %v4261 = vmul.f32 %v4225, %v4230
      %v4262 = vmul.f32 %v4226, %v4230
      %v4263 = vadd.f32 %v4163, %v4231
      %v4264 = vadd.f32 %v4164, %v4232
      %v4265 = vadd.f32 %v4165, %v4233
      %v4266 = vadd.f32 %v4166, %v4234
      %v4267 = vadd.f32 %v4167, %v4235
      %v4268 = vadd.f32 %v4168, %v4236
      %v4269 = vadd.f32 %v4169, %v4237
      %v4270 = vadd.f32 %v4170, %v4238
      %v4271 = vadd.f32 %v4171, %v4239
      %v4272 = vadd.f32 %v4172, %v4240
      %v4273 = vadd.f32 %v4173, %v4241
      %v4274 = vadd.f32 %v4174, %v4242
      %v4275 = vadd.f32 %v4175, %v4243
      %v4276 = vadd.f32 %v4176, %v4244
      %v4277 = vadd.f32 %v4177, %v4245
      %v4278 = vadd.f32 %v4178, %v4246
      %v4279 = vadd.f32 %v4179, %v4247
      %v4280 = vadd.f32 %v4180, %v4248
      %v4281 = vadd.f32 %v4181, %v4249
      %v4282 = vadd.f32 %v4182, %v4250
      %v4283 = vadd.f32 %v4183, %v4251
      %v4284 = vadd.f32 %v4184, %v4252
      %v4285 = vadd.f32 %v4185, %v4253
      %v4286 = vadd.f32 %v4186, %v4254
      %v4287 = vadd.f32 %v4187, %v4255
      %v4288 = vadd.f32 %v4188, %v4256
      %v4289 = vadd.f32 %v4189, %v4257
      %v4290 = vadd.f32 %v4190, %v4258
      %v4291 = vadd.f32 %v4191, %v4259
      %v4292 = vadd.f32 %v4192, %v4260
      %v4293 = vadd.f32 %v4193, %v4261
      %v4294 = vadd.f32 %v4194, %v4262
      %v4295 = vld [vmem:[#allocation2 + $0x8] sm:$0xff]
      %v4296 = vld [vmem:[#allocation2 + $0x10] sm:$0xff]
      %v4297 = vld [vmem:[#allocation2 + $0x28] sm:$0xff]
      %v4298 = vld [vmem:[#allocation2 + $0x30] sm:$0xff]
      %v4299 = vld [vmem:[#allocation2 + $0x48] sm:$0xff]
      %v4300 = vld [vmem:[#allocation2 + $0x50] sm:$0xff]
      %v4301 = vld [vmem:[#allocation2 + $0x68] sm:$0xff]
      %v4302 = vld [vmem:[#allocation2 + $0x70] sm:$0xff]
      %v4303 = vld [vmem:[#allocation2 + $0x88] sm:$0xff]
      %v4304 = vld [vmem:[#allocation2 + $0x90] sm:$0xff]
      %v4305 = vld [vmem:[#allocation2 + $0xa8] sm:$0xff]
      %v4306 = vld [vmem:[#allocation2 + $0xb0] sm:$0xff]
      %v4307 = vld [vmem:[#allocation2 + $0xc8] sm:$0xff]
      %v4308 = vld [vmem:[#allocation2 + $0xd0] sm:$0xff]
      %v4309 = vld [vmem:[#allocation2 + $0xe8] sm:$0xff]
      %v4310 = vld [vmem:[#allocation2 + $0xf0] sm:$0xff]
      %v4311 = vld [vmem:[#allocation2 + $0x108] sm:$0xff]
      %v4312 = vld [vmem:[#allocation2 + $0x110] sm:$0xff]
      %v4313 = vld [vmem:[#allocation2 + $0x128] sm:$0xff]
      %v4314 = vld [vmem:[#allocation2 + $0x130] sm:$0xff]
      %v4315 = vld [vmem:[#allocation2 + $0x148] sm:$0xff]
      %v4316 = vld [vmem:[#allocation2 + $0x150] sm:$0xff]
      %v4317 = vld [vmem:[#allocation2 + $0x168] sm:$0xff]
      %v4318 = vld [vmem:[#allocation2 + $0x170] sm:$0xff]
      %v4319 = vld [vmem:[#allocation2 + $0x188] sm:$0xff]
      %v4320 = vld [vmem:[#allocation2 + $0x190] sm:$0xff]
      %v4321 = vld [vmem:[#allocation2 + $0x1a8] sm:$0xff]
      %v4322 = vld [vmem:[#allocation2 + $0x1b0] sm:$0xff]
      %v4323 = vld [vmem:[#allocation2 + $0x1c8] sm:$0xff]
      %v4324 = vld [vmem:[#allocation2 + $0x1d0] sm:$0xff]
      %v4325 = vld [vmem:[#allocation2 + $0x1e8] sm:$0xff]
      %v4326 = vld [vmem:[#allocation2 + $0x1f0] sm:$0xff]
      %v4327 = vlaneseq
      %v4328 = vshrl.u32 %v4327, 7
      %v4329 = vsub.s32 5, %v4328
      %v4330 = vrot.slane %v3825, %v4329
      %v4331 = vmul.f32 %v4295, %v4330
      %v4332 = vmul.f32 %v4296, %v4330
      %v4333 = vmul.f32 %v4297, %v4330
      %v4334 = vmul.f32 %v4298, %v4330
      %v4335 = vmul.f32 %v4299, %v4330
      %v4336 = vmul.f32 %v4300, %v4330
      %v4337 = vmul.f32 %v4301, %v4330
      %v4338 = vmul.f32 %v4302, %v4330
      %v4339 = vmul.f32 %v4303, %v4330
      %v4340 = vmul.f32 %v4304, %v4330
      %v4341 = vmul.f32 %v4305, %v4330
      %v4342 = vmul.f32 %v4306, %v4330
      %v4343 = vmul.f32 %v4307, %v4330
      %v4344 = vmul.f32 %v4308, %v4330
      %v4345 = vmul.f32 %v4309, %v4330
      %v4346 = vmul.f32 %v4310, %v4330
      %v4347 = vmul.f32 %v4311, %v4330
      %v4348 = vmul.f32 %v4312, %v4330
      %v4349 = vmul.f32 %v4313, %v4330
      %v4350 = vmul.f32 %v4314, %v4330
      %v4351 = vmul.f32 %v4315, %v4330
      %v4352 = vmul.f32 %v4316, %v4330
      %v4353 = vmul.f32 %v4317, %v4330
      %v4354 = vmul.f32 %v4318, %v4330
      %v4355 = vmul.f32 %v4319, %v4330
      %v4356 = vmul.f32 %v4320, %v4330
      %v4357 = vmul.f32 %v4321, %v4330
      %v4358 = vmul.f32 %v4322, %v4330
      %v4359 = vmul.f32 %v4323, %v4330
      %v4360 = vmul.f32 %v4324, %v4330
      %v4361 = vmul.f32 %v4325, %v4330
      %v4362 = vmul.f32 %v4326, %v4330
      %v4363 = vadd.f32 %v4263, %v4331
      %v4364 = vadd.f32 %v4264, %v4332
      %v4365 = vadd.f32 %v4265, %v4333
      %v4366 = vadd.f32 %v4266, %v4334
      %v4367 = vadd.f32 %v4267, %v4335
      %v4368 = vadd.f32 %v4268, %v4336
      %v4369 = vadd.f32 %v4269, %v4337
      %v4370 = vadd.f32 %v4270, %v4338
      %v4371 = vadd.f32 %v4271, %v4339
      %v4372 = vadd.f32 %v4272, %v4340
      %v4373 = vadd.f32 %v4273, %v4341
      %v4374 = vadd.f32 %v4274, %v4342
      %v4375 = vadd.f32 %v4275, %v4343
      %v4376 = vadd.f32 %v4276, %v4344
      %v4377 = vadd.f32 %v4277, %v4345
      %v4378 = vadd.f32 %v4278, %v4346
      %v4379 = vadd.f32 %v4279, %v4347
      %v4380 = vadd.f32 %v4280, %v4348
      %v4381 = vadd.f32 %v4281, %v4349
      %v4382 = vadd.f32 %v4282, %v4350
      %v4383 = vadd.f32 %v4283, %v4351
      %v4384 = vadd.f32 %v4284, %v4352
      %v4385 = vadd.f32 %v4285, %v4353
      %v4386 = vadd.f32 %v4286, %v4354
      %v4387 = vadd.f32 %v4287, %v4355
      %v4388 = vadd.f32 %v4288, %v4356
      %v4389 = vadd.f32 %v4289, %v4357
      %v4390 = vadd.f32 %v4290, %v4358
      %v4391 = vadd.f32 %v4291, %v4359
      %v4392 = vadd.f32 %v4292, %v4360
      %v4393 = vadd.f32 %v4293, %v4361
      %v4394 = vadd.f32 %v4294, %v4362
      %v4395 = vld [vmem:[#allocation2 + $0x9] sm:$0xff]
      %v4396 = vld [vmem:[#allocation2 + $0x11] sm:$0xff]
      %v4397 = vld [vmem:[#allocation2 + $0x29] sm:$0xff]
      %v4398 = vld [vmem:[#allocation2 + $0x31] sm:$0xff]
      %v4399 = vld [vmem:[#allocation2 + $0x49] sm:$0xff]
      %v4400 = vld [vmem:[#allocation2 + $0x51] sm:$0xff]
      %v4401 = vld [vmem:[#allocation2 + $0x69] sm:$0xff]
      %v4402 = vld [vmem:[#allocation2 + $0x71] sm:$0xff]
      %v4403 = vld [vmem:[#allocation2 + $0x89] sm:$0xff]
      %v4404 = vld [vmem:[#allocation2 + $0x91] sm:$0xff]
      %v4405 = vld [vmem:[#allocation2 + $0xa9] sm:$0xff]
      %v4406 = vld [vmem:[#allocation2 + $0xb1] sm:$0xff]
      %v4407 = vld [vmem:[#allocation2 + $0xc9] sm:$0xff]
      %v4408 = vld [vmem:[#allocation2 + $0xd1] sm:$0xff]
      %v4409 = vld [vmem:[#allocation2 + $0xe9] sm:$0xff]
      %v4410 = vld [vmem:[#allocation2 + $0xf1] sm:$0xff]
      %v4411 = vld [vmem:[#allocation2 + $0x109] sm:$0xff]
      %v4412 = vld [vmem:[#allocation2 + $0x111] sm:$0xff]
      %v4413 = vld [vmem:[#allocation2 + $0x129] sm:$0xff]
      %v4414 = vld [vmem:[#allocation2 + $0x131] sm:$0xff]
      %v4415 = vld [vmem:[#allocation2 + $0x149] sm:$0xff]
      %v4416 = vld [vmem:[#allocation2 + $0x151] sm:$0xff]
      %v4417 = vld [vmem:[#allocation2 + $0x169] sm:$0xff]
      %v4418 = vld [vmem:[#allocation2 + $0x171] sm:$0xff]
      %v4419 = vld [vmem:[#allocation2 + $0x189] sm:$0xff]
      %v4420 = vld [vmem:[#allocation2 + $0x191] sm:$0xff]
      %v4421 = vld [vmem:[#allocation2 + $0x1a9] sm:$0xff]
      %v4422 = vld [vmem:[#allocation2 + $0x1b1] sm:$0xff]
      %v4423 = vld [vmem:[#allocation2 + $0x1c9] sm:$0xff]
      %v4424 = vld [vmem:[#allocation2 + $0x1d1] sm:$0xff]
      %v4425 = vld [vmem:[#allocation2 + $0x1e9] sm:$0xff]
      %v4426 = vld [vmem:[#allocation2 + $0x1f1] sm:$0xff]
      %v4427 = vlaneseq
      %v4428 = vshrl.u32 %v4427, 7
      %v4429 = vsub.s32 6, %v4428
      %v4430 = vrot.slane %v3825, %v4429
      %v4431 = vmul.f32 %v4395, %v4430
      %v4432 = vmul.f32 %v4396, %v4430
      %v4433 = vmul.f32 %v4397, %v4430
      %v4434 = vmul.f32 %v4398, %v4430
      %v4435 = vmul.f32 %v4399, %v4430
      %v4436 = vmul.f32 %v4400, %v4430
      %v4437 = vmul.f32 %v4401, %v4430
      %v4438 = vmul.f32 %v4402, %v4430
      %v4439 = vmul.f32 %v4403, %v4430
      %v4440 = vmul.f32 %v4404, %v4430
      %v4441 = vmul.f32 %v4405, %v4430
      %v4442 = vmul.f32 %v4406, %v4430
      %v4443 = vmul.f32 %v4407, %v4430
      %v4444 = vmul.f32 %v4408, %v4430
      %v4445 = vmul.f32 %v4409, %v4430
      %v4446 = vmul.f32 %v4410, %v4430
      %v4447 = vmul.f32 %v4411, %v4430
      %v4448 = vmul.f32 %v4412, %v4430
      %v4449 = vmul.f32 %v4413, %v4430
      %v4450 = vmul.f32 %v4414, %v4430
      %v4451 = vmul.f32 %v4415, %v4430
      %v4452 = vmul.f32 %v4416, %v4430
      %v4453 = vmul.f32 %v4417, %v4430
      %v4454 = vmul.f32 %v4418, %v4430
      %v4455 = vmul.f32 %v4419, %v4430
      %v4456 = vmul.f32 %v4420, %v4430
      %v4457 = vmul.f32 %v4421, %v4430
      %v4458 = vmul.f32 %v4422, %v4430
      %v4459 = vmul.f32 %v4423, %v4430
      %v4460 = vmul.f32 %v4424, %v4430
      %v4461 = vmul.f32 %v4425, %v4430
      %v4462 = vmul.f32 %v4426, %v4430
      %v4463 = vadd.f32 %v4363, %v4431
      %v4464 = vadd.f32 %v4364, %v4432
      %v4465 = vadd.f32 %v4365, %v4433
      %v4466 = vadd.f32 %v4366, %v4434
      %v4467 = vadd.f32 %v4367, %v4435
      %v4468 = vadd.f32 %v4368, %v4436
      %v4469 = vadd.f32 %v4369, %v4437
      %v4470 = vadd.f32 %v4370, %v4438
      %v4471 = vadd.f32 %v4371, %v4439
      %v4472 = vadd.f32 %v4372, %v4440
      %v4473 = vadd.f32 %v4373, %v4441
      %v4474 = vadd.f32 %v4374, %v4442
      %v4475 = vadd.f32 %v4375, %v4443
      %v4476 = vadd.f32 %v4376, %v4444
      %v4477 = vadd.f32 %v4377, %v4445
      %v4478 = vadd.f32 %v4378, %v4446
      %v4479 = vadd.f32 %v4379, %v4447
      %v4480 = vadd.f32 %v4380, %v4448
      %v4481 = vadd.f32 %v4381, %v4449
      %v4482 = vadd.f32 %v4382, %v4450
      %v4483 = vadd.f32 %v4383, %v4451
      %v4484 = vadd.f32 %v4384, %v4452
      %v4485 = vadd.f32 %v4385, %v4453
      %v4486 = vadd.f32 %v4386, %v4454
      %v4487 = vadd.f32 %v4387, %v4455
      %v4488 = vadd.f32 %v4388, %v4456
      %v4489 = vadd.f32 %v4389, %v4457
      %v4490 = vadd.f32 %v4390, %v4458
      %v4491 = vadd.f32 %v4391, %v4459
      %v4492 = vadd.f32 %v4392, %v4460
      %v4493 = vadd.f32 %v4393, %v4461
      %v4494 = vadd.f32 %v4394, %v4462
      %v4495 = vld [vmem:[#allocation2 + $0xa] sm:$0xff]
      %v4496 = vld [vmem:[#allocation2 + $0x12] sm:$0xff]
      %v4497 = vld [vmem:[#allocation2 + $0x2a] sm:$0xff]
      %v4498 = vld [vmem:[#allocation2 + $0x32] sm:$0xff]
      %v4499 = vld [vmem:[#allocation2 + $0x4a] sm:$0xff]
      %v4500 = vld [vmem:[#allocation2 + $0x52] sm:$0xff]
      %v4501 = vld [vmem:[#allocation2 + $0x6a] sm:$0xff]
      %v4502 = vld [vmem:[#allocation2 + $0x72] sm:$0xff]
      %v4503 = vld [vmem:[#allocation2 + $0x8a] sm:$0xff]
      %v4504 = vld [vmem:[#allocation2 + $0x92] sm:$0xff]
      %v4505 = vld [vmem:[#allocation2 + $0xaa] sm:$0xff]
      %v4506 = vld [vmem:[#allocation2 + $0xb2] sm:$0xff]
      %v4507 = vld [vmem:[#allocation2 + $0xca] sm:$0xff]
      %v4508 = vld [vmem:[#allocation2 + $0xd2] sm:$0xff]
      %v4509 = vld [vmem:[#allocation2 + $0xea] sm:$0xff]
      %v4510 = vld [vmem:[#allocation2 + $0xf2] sm:$0xff]
      %v4511 = vld [vmem:[#allocation2 + $0x10a] sm:$0xff]
      %v4512 = vld [vmem:[#allocation2 + $0x112] sm:$0xff]
      %v4513 = vld [vmem:[#allocation2 + $0x12a] sm:$0xff]
      %v4514 = vld [vmem:[#allocation2 + $0x132] sm:$0xff]
      %v4515 = vld [vmem:[#allocation2 + $0x14a] sm:$0xff]
      %v4516 = vld [vmem:[#allocation2 + $0x152] sm:$0xff]
      %v4517 = vld [vmem:[#allocation2 + $0x16a] sm:$0xff]
      %v4518 = vld [vmem:[#allocation2 + $0x172] sm:$0xff]
      %v4519 = vld [vmem:[#allocation2 + $0x18a] sm:$0xff]
      %v4520 = vld [vmem:[#allocation2 + $0x192] sm:$0xff]
      %v4521 = vld [vmem:[#allocation2 + $0x1aa] sm:$0xff]
      %v4522 = vld [vmem:[#allocation2 + $0x1b2] sm:$0xff]
      %v4523 = vld [vmem:[#allocation2 + $0x1ca] sm:$0xff]
      %v4524 = vld [vmem:[#allocation2 + $0x1d2] sm:$0xff]
      %v4525 = vld [vmem:[#allocation2 + $0x1ea] sm:$0xff]
      %v4526 = vld [vmem:[#allocation2 + $0x1f2] sm:$0xff]
      %v4527 = vlaneseq
      %v4528 = vshrl.u32 %v4527, 7
      %v4529 = vsub.s32 7, %v4528
      %v4530 = vrot.slane %v3825, %v4529
      %v4531 = vmul.f32 %v4495, %v4530
      %v4532 = vmul.f32 %v4496, %v4530
      %v4533 = vmul.f32 %v4497, %v4530
      %v4534 = vmul.f32 %v4498, %v4530
      %v4535 = vmul.f32 %v4499, %v4530
      %v4536 = vmul.f32 %v4500, %v4530
      %v4537 = vmul.f32 %v4501, %v4530
      %v4538 = vmul.f32 %v4502, %v4530
      %v4539 = vmul.f32 %v4503, %v4530
      %v4540 = vmul.f32 %v4504, %v4530
      %v4541 = vmul.f32 %v4505, %v4530
      %v4542 = vmul.f32 %v4506, %v4530
      %v4543 = vmul.f32 %v4507, %v4530
      %v4544 = vmul.f32 %v4508, %v4530
      %v4545 = vmul.f32 %v4509, %v4530
      %v4546 = vmul.f32 %v4510, %v4530
      %v4547 = vmul.f32 %v4511, %v4530
      %v4548 = vmul.f32 %v4512, %v4530
      %v4549 = vmul.f32 %v4513, %v4530
      %v4550 = vmul.f32 %v4514, %v4530
      %v4551 = vmul.f32 %v4515, %v4530
      %v4552 = vmul.f32 %v4516, %v4530
      %v4553 = vmul.f32 %v4517, %v4530
      %v4554 = vmul.f32 %v4518, %v4530
      %v4555 = vmul.f32 %v4519, %v4530
      %v4556 = vmul.f32 %v4520, %v4530
      %v4557 = vmul.f32 %v4521, %v4530
      %v4558 = vmul.f32 %v4522, %v4530
      %v4559 = vmul.f32 %v4523, %v4530
      %v4560 = vmul.f32 %v4524, %v4530
      %v4561 = vmul.f32 %v4525, %v4530
      %v4562 = vmul.f32 %v4526, %v4530
      %v4563 = vadd.f32 %v4463, %v4531
      %v4564 = vadd.f32 %v4464, %v4532
      %v4565 = vadd.f32 %v4465, %v4533
      %v4566 = vadd.f32 %v4466, %v4534
      %v4567 = vadd.f32 %v4467, %v4535
      %v4568 = vadd.f32 %v4468, %v4536
      %v4569 = vadd.f32 %v4469, %v4537
      %v4570 = vadd.f32 %v4470, %v4538
      %v4571 = vadd.f32 %v4471, %v4539
      %v4572 = vadd.f32 %v4472, %v4540
      %v4573 = vadd.f32 %v4473, %v4541
      %v4574 = vadd.f32 %v4474, %v4542
      %v4575 = vadd.f32 %v4475, %v4543
      %v4576 = vadd.f32 %v4476, %v4544
      %v4577 = vadd.f32 %v4477, %v4545
      %v4578 = vadd.f32 %v4478, %v4546
      %v4579 = vadd.f32 %v4479, %v4547
      %v4580 = vadd.f32 %v4480, %v4548
      %v4581 = vadd.f32 %v4481, %v4549
      %v4582 = vadd.f32 %v4482, %v4550
      %v4583 = vadd.f32 %v4483, %v4551
      %v4584 = vadd.f32 %v4484, %v4552
      %v4585 = vadd.f32 %v4485, %v4553
      %v4586 = vadd.f32 %v4486, %v4554
      %v4587 = vadd.f32 %v4487, %v4555
      %v4588 = vadd.f32 %v4488, %v4556
      %v4589 = vadd.f32 %v4489, %v4557
      %v4590 = vadd.f32 %v4490, %v4558
      %v4591 = vadd.f32 %v4491, %v4559
      %v4592 = vadd.f32 %v4492, %v4560
      %v4593 = vadd.f32 %v4493, %v4561
      %v4594 = vadd.f32 %v4494, %v4562
      %v4595 = vld [vmem:[#allocation2 + $0x13] sm:$0xff]
      %v4596 = vld [vmem:[#allocation2 + $0x33] sm:$0xff]
      %v4597 = vld [vmem:[#allocation2 + $0x53] sm:$0xff]
      %v4598 = vld [vmem:[#allocation2 + $0x73] sm:$0xff]
      %v4599 = vld [vmem:[#allocation2 + $0x93] sm:$0xff]
      %v4600 = vld [vmem:[#allocation2 + $0xb3] sm:$0xff]
      %v4601 = vld [vmem:[#allocation2 + $0xd3] sm:$0xff]
      %v4602 = vld [vmem:[#allocation2 + $0xf3] sm:$0xff]
      %v4603 = vld [vmem:[#allocation2 + $0x113] sm:$0xff]
      %v4604 = vld [vmem:[#allocation2 + $0x133] sm:$0xff]
      %v4605 = vld [vmem:[#allocation2 + $0x153] sm:$0xff]
      %v4606 = vld [vmem:[#allocation2 + $0x173] sm:$0xff]
      %v4607 = vld [vmem:[#allocation2 + $0x193] sm:$0xff]
      %v4608 = vld [vmem:[#allocation2 + $0x1b3] sm:$0xff]
      %v4609 = vld [vmem:[#allocation2 + $0x1d3] sm:$0xff]
      %v4610 = vld [vmem:[#allocation2 + $0x1f3] sm:$0xff]
      %v4611 = vlaneseq
      %v4612 = vshrl.u32 %v4611, 7
      %v4613 = vsub.s32 0, %v4612
      %v4614 = vrot.slane %v3826, %v4613
      %v4615 = vmul.f32 %v3828, %v4614
      %v4616 = vmul.f32 %v4595, %v4614
      %v4617 = vmul.f32 %v3830, %v4614
      %v4618 = vmul.f32 %v4596, %v4614
      %v4619 = vmul.f32 %v3832, %v4614
      %v4620 = vmul.f32 %v4597, %v4614
      %v4621 = vmul.f32 %v3834, %v4614
      %v4622 = vmul.f32 %v4598, %v4614
      %v4623 = vmul.f32 %v3836, %v4614
      %v4624 = vmul.f32 %v4599, %v4614
      %v4625 = vmul.f32 %v3838, %v4614
      %v4626 = vmul.f32 %v4600, %v4614
      %v4627 = vmul.f32 %v3840, %v4614
      %v4628 = vmul.f32 %v4601, %v4614
      %v4629 = vmul.f32 %v3842, %v4614
      %v4630 = vmul.f32 %v4602, %v4614
      %v4631 = vmul.f32 %v3844, %v4614
      %v4632 = vmul.f32 %v4603, %v4614
      %v4633 = vmul.f32 %v3846, %v4614
      %v4634 = vmul.f32 %v4604, %v4614
      %v4635 = vmul.f32 %v3848, %v4614
      %v4636 = vmul.f32 %v4605, %v4614
      %v4637 = vmul.f32 %v3850, %v4614
      %v4638 = vmul.f32 %v4606, %v4614
      %v4639 = vmul.f32 %v3852, %v4614
      %v4640 = vmul.f32 %v4607, %v4614
      %v4641 = vmul.f32 %v3854, %v4614
      %v4642 = vmul.f32 %v4608, %v4614
      %v4643 = vmul.f32 %v3856, %v4614
      %v4644 = vmul.f32 %v4609, %v4614
      %v4645 = vmul.f32 %v3858, %v4614
      %v4646 = vmul.f32 %v4610, %v4614
      %v4647 = vadd.f32 %v4563, %v4615
      %v4648 = vadd.f32 %v4564, %v4616
      %v4649 = vadd.f32 %v4565, %v4617
      %v4650 = vadd.f32 %v4566, %v4618
      %v4651 = vadd.f32 %v4567, %v4619
      %v4652 = vadd.f32 %v4568, %v4620
      %v4653 = vadd.f32 %v4569, %v4621
      %v4654 = vadd.f32 %v4570, %v4622
      %v4655 = vadd.f32 %v4571, %v4623
      %v4656 = vadd.f32 %v4572, %v4624
      %v4657 = vadd.f32 %v4573, %v4625
      %v4658 = vadd.f32 %v4574, %v4626
      %v4659 = vadd.f32 %v4575, %v4627
      %v4660 = vadd.f32 %v4576, %v4628
      %v4661 = vadd.f32 %v4577, %v4629
      %v4662 = vadd.f32 %v4578, %v4630
      %v4663 = vadd.f32 %v4579, %v4631
      %v4664 = vadd.f32 %v4580, %v4632
      %v4665 = vadd.f32 %v4581, %v4633
      %v4666 = vadd.f32 %v4582, %v4634
      %v4667 = vadd.f32 %v4583, %v4635
      %v4668 = vadd.f32 %v4584, %v4636
      %v4669 = vadd.f32 %v4585, %v4637
      %v4670 = vadd.f32 %v4586, %v4638
      %v4671 = vadd.f32 %v4587, %v4639
      %v4672 = vadd.f32 %v4588, %v4640
      %v4673 = vadd.f32 %v4589, %v4641
      %v4674 = vadd.f32 %v4590, %v4642
      %v4675 = vadd.f32 %v4591, %v4643
      %v4676 = vadd.f32 %v4592, %v4644
      %v4677 = vadd.f32 %v4593, %v4645
      %v4678 = vadd.f32 %v4594, %v4646
      %v4679 = vld [vmem:[#allocation2 + $0x14] sm:$0xff]
      %v4680 = vld [vmem:[#allocation2 + $0x34] sm:$0xff]
      %v4681 = vld [vmem:[#allocation2 + $0x54] sm:$0xff]
      %v4682 = vld [vmem:[#allocation2 + $0x74] sm:$0xff]
      %v4683 = vld [vmem:[#allocation2 + $0x94] sm:$0xff]
      %v4684 = vld [vmem:[#allocation2 + $0xb4] sm:$0xff]
      %v4685 = vld [vmem:[#allocation2 + $0xd4] sm:$0xff]
      %v4686 = vld [vmem:[#allocation2 + $0xf4] sm:$0xff]
      %v4687 = vld [vmem:[#allocation2 + $0x114] sm:$0xff]
      %v4688 = vld [vmem:[#allocation2 + $0x134] sm:$0xff]
      %v4689 = vld [vmem:[#allocation2 + $0x154] sm:$0xff]
      %v4690 = vld [vmem:[#allocation2 + $0x174] sm:$0xff]
      %v4691 = vld [vmem:[#allocation2 + $0x194] sm:$0xff]
      %v4692 = vld [vmem:[#allocation2 + $0x1b4] sm:$0xff]
      %v4693 = vld [vmem:[#allocation2 + $0x1d4] sm:$0xff]
      %v4694 = vld [vmem:[#allocation2 + $0x1f4] sm:$0xff]
      %v4695 = vlaneseq
      %v4696 = vshrl.u32 %v4695, 7
      %v4697 = vsub.s32 1, %v4696
      %v4698 = vrot.slane %v3826, %v4697
      %v4699 = vmul.f32 %v3896, %v4698
      %v4700 = vmul.f32 %v4679, %v4698
      %v4701 = vmul.f32 %v3898, %v4698
      %v4702 = vmul.f32 %v4680, %v4698
      %v4703 = vmul.f32 %v3900, %v4698
      %v4704 = vmul.f32 %v4681, %v4698
      %v4705 = vmul.f32 %v3902, %v4698
      %v4706 = vmul.f32 %v4682, %v4698
      %v4707 = vmul.f32 %v3904, %v4698
      %v4708 = vmul.f32 %v4683, %v4698
      %v4709 = vmul.f32 %v3906, %v4698
      %v4710 = vmul.f32 %v4684, %v4698
      %v4711 = vmul.f32 %v3908, %v4698
      %v4712 = vmul.f32 %v4685, %v4698
      %v4713 = vmul.f32 %v3910, %v4698
      %v4714 = vmul.f32 %v4686, %v4698
      %v4715 = vmul.f32 %v3912, %v4698
      %v4716 = vmul.f32 %v4687, %v4698
      %v4717 = vmul.f32 %v3914, %v4698
      %v4718 = vmul.f32 %v4688, %v4698
      %v4719 = vmul.f32 %v3916, %v4698
      %v4720 = vmul.f32 %v4689, %v4698
      %v4721 = vmul.f32 %v3918, %v4698
      %v4722 = vmul.f32 %v4690, %v4698
      %v4723 = vmul.f32 %v3920, %v4698
      %v4724 = vmul.f32 %v4691, %v4698
      %v4725 = vmul.f32 %v3922, %v4698
      %v4726 = vmul.f32 %v4692, %v4698
      %v4727 = vmul.f32 %v3924, %v4698
      %v4728 = vmul.f32 %v4693, %v4698
      %v4729 = vmul.f32 %v3926, %v4698
      %v4730 = vmul.f32 %v4694, %v4698
      %v4731 = vadd.f32 %v4647, %v4699
      %v4732 = vadd.f32 %v4648, %v4700
      %v4733 = vadd.f32 %v4649, %v4701
      %v4734 = vadd.f32 %v4650, %v4702
      %v4735 = vadd.f32 %v4651, %v4703
      %v4736 = vadd.f32 %v4652, %v4704
      %v4737 = vadd.f32 %v4653, %v4705
      %v4738 = vadd.f32 %v4654, %v4706
      %v4739 = vadd.f32 %v4655, %v4707
      %v4740 = vadd.f32 %v4656, %v4708
      %v4741 = vadd.f32 %v4657, %v4709
      %v4742 = vadd.f32 %v4658, %v4710
      %v4743 = vadd.f32 %v4659, %v4711
      %v4744 = vadd.f32 %v4660, %v4712
      %v4745 = vadd.f32 %v4661, %v4713
      %v4746 = vadd.f32 %v4662, %v4714
      %v4747 = vadd.f32 %v4663, %v4715
      %v4748 = vadd.f32 %v4664, %v4716
      %v4749 = vadd.f32 %v4665, %v4717
      %v4750 = vadd.f32 %v4666, %v4718
      %v4751 = vadd.f32 %v4667, %v4719
      %v4752 = vadd.f32 %v4668, %v4720
      %v4753 = vadd.f32 %v4669, %v4721
      %v4754 = vadd.f32 %v4670, %v4722
      %v4755 = vadd.f32 %v4671, %v4723
      %v4756 = vadd.f32 %v4672, %v4724
      %v4757 = vadd.f32 %v4673, %v4725
      %v4758 = vadd.f32 %v4674, %v4726
      %v4759 = vadd.f32 %v4675, %v4727
      %v4760 = vadd.f32 %v4676, %v4728
      %v4761 = vadd.f32 %v4677, %v4729
      %v4762 = vadd.f32 %v4678, %v4730
      %v4763 = vld [vmem:[#allocation2 + $0x15] sm:$0xff]
      %v4764 = vld [vmem:[#allocation2 + $0x35] sm:$0xff]
      %v4765 = vld [vmem:[#allocation2 + $0x55] sm:$0xff]
      %v4766 = vld [vmem:[#allocation2 + $0x75] sm:$0xff]
      %v4767 = vld [vmem:[#allocation2 + $0x95] sm:$0xff]
      %v4768 = vld [vmem:[#allocation2 + $0xb5] sm:$0xff]
      %v4769 = vld [vmem:[#allocation2 + $0xd5] sm:$0xff]
      %v4770 = vld [vmem:[#allocation2 + $0xf5] sm:$0xff]
      %v4771 = vld [vmem:[#allocation2 + $0x115] sm:$0xff]
      %v4772 = vld [vmem:[#allocation2 + $0x135] sm:$0xff]
      %v4773 = vld [vmem:[#allocation2 + $0x155] sm:$0xff]
      %v4774 = vld [vmem:[#allocation2 + $0x175] sm:$0xff]
      %v4775 = vld [vmem:[#allocation2 + $0x195] sm:$0xff]
      %v4776 = vld [vmem:[#allocation2 + $0x1b5] sm:$0xff]
      %v4777 = vld [vmem:[#allocation2 + $0x1d5] sm:$0xff]
      %v4778 = vld [vmem:[#allocation2 + $0x1f5] sm:$0xff]
      %v4779 = vlaneseq
      %v4780 = vshrl.u32 %v4779, 7
      %v4781 = vsub.s32 2, %v4780
      %v4782 = vrot.slane %v3826, %v4781
      %v4783 = vmul.f32 %v3996, %v4782
      %v4784 = vmul.f32 %v4763, %v4782
      %v4785 = vmul.f32 %v3998, %v4782
      %v4786 = vmul.f32 %v4764, %v4782
      %v4787 = vmul.f32 %v4000, %v4782
      %v4788 = vmul.f32 %v4765, %v4782
      %v4789 = vmul.f32 %v4002, %v4782
      %v4790 = vmul.f32 %v4766, %v4782
      %v4791 = vmul.f32 %v4004, %v4782
      %v4792 = vmul.f32 %v4767, %v4782
      %v4793 = vmul.f32 %v4006, %v4782
      %v4794 = vmul.f32 %v4768, %v4782
      %v4795 = vmul.f32 %v4008, %v4782
      %v4796 = vmul.f32 %v4769, %v4782
      %v4797 = vmul.f32 %v4010, %v4782
      %v4798 = vmul.f32 %v4770, %v4782
      %v4799 = vmul.f32 %v4012, %v4782
      %v4800 = vmul.f32 %v4771, %v4782
      %v4801 = vmul.f32 %v4014, %v4782
      %v4802 = vmul.f32 %v4772, %v4782
      %v4803 = vmul.f32 %v4016, %v4782
      %v4804 = vmul.f32 %v4773, %v4782
      %v4805 = vmul.f32 %v4018, %v4782
      %v4806 = vmul.f32 %v4774, %v4782
      %v4807 = vmul.f32 %v4020, %v4782
      %v4808 = vmul.f32 %v4775, %v4782
      %v4809 = vmul.f32 %v4022, %v4782
      %v4810 = vmul.f32 %v4776, %v4782
      %v4811 = vmul.f32 %v4024, %v4782
      %v4812 = vmul.f32 %v4777, %v4782
      %v4813 = vmul.f32 %v4026, %v4782
      %v4814 = vmul.f32 %v4778, %v4782
      %v4815 = vadd.f32 %v4731, %v4783
      %v4816 = vadd.f32 %v4732, %v4784
      %v4817 = vadd.f32 %v4733, %v4785
      %v4818 = vadd.f32 %v4734, %v4786
      %v4819 = vadd.f32 %v4735, %v4787
      %v4820 = vadd.f32 %v4736, %v4788
      %v4821 = vadd.f32 %v4737, %v4789
      %v4822 = vadd.f32 %v4738, %v4790
      %v4823 = vadd.f32 %v4739, %v4791
      %v4824 = vadd.f32 %v4740, %v4792
      %v4825 = vadd.f32 %v4741, %v4793
      %v4826 = vadd.f32 %v4742, %v4794
      %v4827 = vadd.f32 %v4743, %v4795
      %v4828 = vadd.f32 %v4744, %v4796
      %v4829 = vadd.f32 %v4745, %v4797
      %v4830 = vadd.f32 %v4746, %v4798
      %v4831 = vadd.f32 %v4747, %v4799
      %v4832 = vadd.f32 %v4748, %v4800
      %v4833 = vadd.f32 %v4749, %v4801
      %v4834 = vadd.f32 %v4750, %v4802
      %v4835 = vadd.f32 %v4751, %v4803
      %v4836 = vadd.f32 %v4752, %v4804
      %v4837 = vadd.f32 %v4753, %v4805
      %v4838 = vadd.f32 %v4754, %v4806
      %v4839 = vadd.f32 %v4755, %v4807
      %v4840 = vadd.f32 %v4756, %v4808
      %v4841 = vadd.f32 %v4757, %v4809
      %v4842 = vadd.f32 %v4758, %v4810
      %v4843 = vadd.f32 %v4759, %v4811
      %v4844 = vadd.f32 %v4760, %v4812
      %v4845 = vadd.f32 %v4761, %v4813
      %v4846 = vadd.f32 %v4762, %v4814
      %v4847 = vld [vmem:[%s9] sm:$0x1]
      %v4849 = vlaneseq
      %v4850 = vshrl.u32 %v4849, 7
      %v4851 = vsub.s32 0, %v4850
      %v4852 = vrot.slane %v4847, %v4851
      %v4854 = vadd.f32 %v4815, %v4852
      %v4855 = vadd.f32 %v4816, %v4852
      %v4856 = vadd.f32 %v4817, %v4852
      %v4857 = vadd.f32 %v4818, %v4852
      %v4858 = vadd.f32 %v4819, %v4852
      %v4859 = vadd.f32 %v4820, %v4852
      %v4860 = vadd.f32 %v4821, %v4852
      %v4861 = vadd.f32 %v4822, %v4852
      %v4862 = vadd.f32 %v4823, %v4852
      %v4863 = vadd.f32 %v4824, %v4852
      %v4864 = vadd.f32 %v4825, %v4852
      %v4865 = vadd.f32 %v4826, %v4852
      %v4866 = vadd.f32 %v4827, %v4852
      %v4867 = vadd.f32 %v4828, %v4852
      %v4868 = vadd.f32 %v4829, %v4852
      %v4869 = vadd.f32 %v4830, %v4852
      %v4870 = vadd.f32 %v4831, %v4852
      %v4871 = vadd.f32 %v4832, %v4852
      %v4872 = vadd.f32 %v4833, %v4852
      %v4873 = vadd.f32 %v4834, %v4852
      %v4874 = vadd.f32 %v4835, %v4852
      %v4875 = vadd.f32 %v4836, %v4852
      %v4876 = vadd.f32 %v4837, %v4852
      %v4877 = vadd.f32 %v4838, %v4852
      %v4878 = vadd.f32 %v4839, %v4852
      %v4879 = vadd.f32 %v4840, %v4852
      %v4880 = vadd.f32 %v4841, %v4852
      %v4881 = vadd.f32 %v4842, %v4852
      %v4882 = vadd.f32 %v4843, %v4852
      %v4883 = vadd.f32 %v4844, %v4852
      %v4884 = vadd.f32 %v4845, %v4852
      %v4885 = vadd.f32 %v4846, %v4852
      %4886 = vst.msk [vmem:[%s1425] sm:$0xff] %vm555, %v4854
      %4887 = vst.msk [vmem:[%s1425 + $0x8] sm:$0xff] %vm555, %v4855
      %4888 = vst.msk [vmem:[%s1425 + $0x10] sm:$0xff] %vm555, %v4856
      %4889 = vst.msk [vmem:[%s1425 + $0x18] sm:$0xff] %vm555, %v4857
      %4890 = vst.msk [vmem:[%s1425 + $0x20] sm:$0xff] %vm555, %v4858
      %4891 = vst.msk [vmem:[%s1425 + $0x28] sm:$0xff] %vm555, %v4859
      %4892 = vst.msk [vmem:[%s1425 + $0x30] sm:$0xff] %vm555, %v4860
      %4893 = vst.msk [vmem:[%s1425 + $0x38] sm:$0xff] %vm555, %v4861
      %4894 = vst.msk [vmem:[%s1425 + $0x40] sm:$0xff] %vm555, %v4862
      %4895 = vst.msk [vmem:[%s1425 + $0x48] sm:$0xff] %vm555, %v4863
      %4896 = vst.msk [vmem:[%s1425 + $0x50] sm:$0xff] %vm555, %v4864
      %4897 = vst.msk [vmem:[%s1425 + $0x58] sm:$0xff] %vm555, %v4865
      %4898 = vst.msk [vmem:[%s1425 + $0x60] sm:$0xff] %vm555, %v4866
      %4899 = vst.msk [vmem:[%s1425 + $0x68] sm:$0xff] %vm555, %v4867
      %4900 = vst.msk [vmem:[%s1425 + $0x70] sm:$0xff] %vm555, %v4868
      %4901 = vst.msk [vmem:[%s1425 + $0x78] sm:$0xff] %vm555, %v4869
      %4902 = vst.msk [vmem:[%s1425 + $0x80] sm:$0xff] %vm555, %v4870
      %4903 = vst.msk [vmem:[%s1425 + $0x88] sm:$0xff] %vm555, %v4871
      %4904 = vst.msk [vmem:[%s1425 + $0x90] sm:$0xff] %vm555, %v4872
      %4905 = vst.msk [vmem:[%s1425 + $0x98] sm:$0xff] %vm555, %v4873
      %4906 = vst.msk [vmem:[%s1425 + $0xa0] sm:$0xff] %vm555, %v4874
      %4907 = vst.msk [vmem:[%s1425 + $0xa8] sm:$0xff] %vm555, %v4875
      %4908 = vst.msk [vmem:[%s1425 + $0xb0] sm:$0xff] %vm555, %v4876
      %4909 = vst.msk [vmem:[%s1425 + $0xb8] sm:$0xff] %vm555, %v4877
      %4910 = vst.msk [vmem:[%s1425 + $0xc0] sm:$0xff] %vm555, %v4878
      %4911 = vst.msk [vmem:[%s1425 + $0xc8] sm:$0xff] %vm555, %v4879
      %4912 = vst.msk [vmem:[%s1425 + $0xd0] sm:$0xff] %vm555, %v4880
      %4913 = vst.msk [vmem:[%s1425 + $0xd8] sm:$0xff] %vm555, %v4881
      %4914 = vst.msk [vmem:[%s1425 + $0xe0] sm:$0xff] %vm555, %v4882
      %4915 = vst.msk [vmem:[%s1425 + $0xe8] sm:$0xff] %vm555, %v4883
      %4916 = vst.msk [vmem:[%s1425 + $0xf0] sm:$0xff] %vm555, %v4884
      %4917 = vst.msk [vmem:[%s1425 + $0xf8] sm:$0xff] %vm555, %v4885
      %v4918 = vld [vmem:[%s10] sm:$0xff]
      %v4919 = vld [vmem:[%s10 + $0x8] sm:$0x7]
      %v4920 = vld [vmem:[#allocation3] sm:$0xff]
      %v4921 = vld [vmem:[#allocation3 + $0x8] sm:$0xff]
      %v4922 = vld [vmem:[#allocation3 + $0x10] sm:$0xff]
      %v4923 = vld [vmem:[#allocation3 + $0x18] sm:$0xff]
      %v4924 = vld [vmem:[#allocation3 + $0x20] sm:$0xff]
      %v4925 = vld [vmem:[#allocation3 + $0x28] sm:$0xff]
      %v4926 = vld [vmem:[#allocation3 + $0x30] sm:$0xff]
      %v4927 = vld [vmem:[#allocation3 + $0x38] sm:$0xff]
      %v4928 = vld [vmem:[#allocation3 + $0x40] sm:$0xff]
      %v4929 = vld [vmem:[#allocation3 + $0x48] sm:$0xff]
      %v4930 = vld [vmem:[#allocation3 + $0x50] sm:$0xff]
      %v4931 = vld [vmem:[#allocation3 + $0x58] sm:$0xff]
      %v4932 = vld [vmem:[#allocation3 + $0x60] sm:$0xff]
      %v4933 = vld [vmem:[#allocation3 + $0x68] sm:$0xff]
      %v4934 = vld [vmem:[#allocation3 + $0x70] sm:$0xff]
      %v4935 = vld [vmem:[#allocation3 + $0x78] sm:$0xff]
      %v4936 = vld [vmem:[#allocation3 + $0x80] sm:$0xff]
      %v4937 = vld [vmem:[#allocation3 + $0x88] sm:$0xff]
      %v4938 = vld [vmem:[#allocation3 + $0x90] sm:$0xff]
      %v4939 = vld [vmem:[#allocation3 + $0x98] sm:$0xff]
      %v4940 = vld [vmem:[#allocation3 + $0xa0] sm:$0xff]
      %v4941 = vld [vmem:[#allocation3 + $0xa8] sm:$0xff]
      %v4942 = vld [vmem:[#allocation3 + $0xb0] sm:$0xff]
      %v4943 = vld [vmem:[#allocation3 + $0xb8] sm:$0xff]
      %v4944 = vld [vmem:[#allocation3 + $0xc0] sm:$0xff]
      %v4945 = vld [vmem:[#allocation3 + $0xc8] sm:$0xff]
      %v4946 = vld [vmem:[#allocation3 + $0xd0] sm:$0xff]
      %v4947 = vld [vmem:[#allocation3 + $0xd8] sm:$0xff]
      %v4948 = vld [vmem:[#allocation3 + $0xe0] sm:$0xff]
      %v4949 = vld [vmem:[#allocation3 + $0xe8] sm:$0xff]
      %v4950 = vld [vmem:[#allocation3 + $0xf0] sm:$0xff]
      %v4951 = vld [vmem:[#allocation3 + $0xf8] sm:$0xff]
      %v4952 = vlaneseq
      %v4953 = vshrl.u32 %v4952, 7
      %v4954 = vsub.s32 0, %v4953
      %v4955 = vrot.slane %v4918, %v4954
      %v4956 = vmul.f32 %v4920, %v4955
      %v4957 = vmul.f32 %v4921, %v4955
      %v4958 = vmul.f32 %v4922, %v4955
      %v4959 = vmul.f32 %v4923, %v4955
      %v4960 = vmul.f32 %v4924, %v4955
      %v4961 = vmul.f32 %v4925, %v4955
      %v4962 = vmul.f32 %v4926, %v4955
      %v4963 = vmul.f32 %v4927, %v4955
      %v4964 = vmul.f32 %v4928, %v4955
      %v4965 = vmul.f32 %v4929, %v4955
      %v4966 = vmul.f32 %v4930, %v4955
      %v4967 = vmul.f32 %v4931, %v4955
      %v4968 = vmul.f32 %v4932, %v4955
      %v4969 = vmul.f32 %v4933, %v4955
      %v4970 = vmul.f32 %v4934, %v4955
      %v4971 = vmul.f32 %v4935, %v4955
      %v4972 = vmul.f32 %v4936, %v4955
      %v4973 = vmul.f32 %v4937, %v4955
      %v4974 = vmul.f32 %v4938, %v4955
      %v4975 = vmul.f32 %v4939, %v4955
      %v4976 = vmul.f32 %v4940, %v4955
      %v4977 = vmul.f32 %v4941, %v4955
      %v4978 = vmul.f32 %v4942, %v4955
      %v4979 = vmul.f32 %v4943, %v4955
      %v4980 = vmul.f32 %v4944, %v4955
      %v4981 = vmul.f32 %v4945, %v4955
      %v4982 = vmul.f32 %v4946, %v4955
      %v4983 = vmul.f32 %v4947, %v4955
      %v4984 = vmul.f32 %v4948, %v4955
      %v4985 = vmul.f32 %v4949, %v4955
      %v4986 = vmul.f32 %v4950, %v4955
      %v4987 = vmul.f32 %v4951, %v4955
      %s4988 = scalar_lea.vmem [#allocation3], 16
      %v4989 = vld [vmem:[%s4988] sm:$0xff]
      %v4990 = vld [vmem:[%s4988 + $0x8] sm:$0xff]
      %v4991 = vld [vmem:[%s4988 + $0x10] sm:$0xff]
      %v4992 = vld [vmem:[%s4988 + $0x18] sm:$0xff]
      %v4993 = vld [vmem:[%s4988 + $0x20] sm:$0xff]
      %v4994 = vld [vmem:[%s4988 + $0x28] sm:$0xff]
      %v4995 = vld [vmem:[%s4988 + $0x30] sm:$0xff]
      %v4996 = vld [vmem:[%s4988 + $0x38] sm:$0xff]
      %v4997 = vld [vmem:[%s4988 + $0x40] sm:$0xff]
      %v4998 = vld [vmem:[%s4988 + $0x48] sm:$0xff]
      %v4999 = vld [vmem:[%s4988 + $0x50] sm:$0xff]
      %v5000 = vld [vmem:[%s4988 + $0x58] sm:$0xff]
      %v5001 = vld [vmem:[%s4988 + $0x60] sm:$0xff]
      %v5002 = vld [vmem:[%s4988 + $0x68] sm:$0xff]
      %v5003 = vld [vmem:[%s4988 + $0x70] sm:$0xff]
      %v5004 = vld [vmem:[%s4988 + $0x78] sm:$0xff]
      %v5005 = vld [vmem:[%s4988 + $0x80] sm:$0xff]
      %v5006 = vld [vmem:[%s4988 + $0x88] sm:$0xff]
      %v5007 = vld [vmem:[%s4988 + $0x90] sm:$0xff]
      %v5008 = vld [vmem:[%s4988 + $0x98] sm:$0xff]
      %v5009 = vld [vmem:[%s4988 + $0xa0] sm:$0xff]
      %v5010 = vld [vmem:[%s4988 + $0xa8] sm:$0xff]
      %v5011 = vld [vmem:[%s4988 + $0xb0] sm:$0xff]
      %v5012 = vld [vmem:[%s4988 + $0xb8] sm:$0xff]
      %v5013 = vld [vmem:[%s4988 + $0xc0] sm:$0xff]
      %v5014 = vld [vmem:[%s4988 + $0xc8] sm:$0xff]
      %v5015 = vld [vmem:[%s4988 + $0xd0] sm:$0xff]
      %v5016 = vld [vmem:[%s4988 + $0xd8] sm:$0xff]
      %v5017 = vld [vmem:[%s4988 + $0xe0] sm:$0xff]
      %v5018 = vld [vmem:[%s4988 + $0xe8] sm:$0xff]
      %v5019 = vld [vmem:[%s4988 + $0xf0] sm:$0xff]
      %v5020 = vld [vmem:[%s4988 + $0xf8] sm:$0xff]
      %v5021 = vlaneseq
      %v5022 = vshrl.u32 %v5021, 7
      %v5023 = vsub.s32 1, %v5022
      %v5024 = vrot.slane %v4918, %v5023
      %v5025 = vmul.f32 %v4989, %v5024
      %v5026 = vmul.f32 %v4990, %v5024
      %v5027 = vmul.f32 %v4991, %v5024
      %v5028 = vmul.f32 %v4992, %v5024
      %v5029 = vmul.f32 %v4993, %v5024
      %v5030 = vmul.f32 %v4994, %v5024
      %v5031 = vmul.f32 %v4995, %v5024
      %v5032 = vmul.f32 %v4996, %v5024
      %v5033 = vmul.f32 %v4997, %v5024
      %v5034 = vmul.f32 %v4998, %v5024
      %v5035 = vmul.f32 %v4999, %v5024
      %v5036 = vmul.f32 %v5000, %v5024
      %v5037 = vmul.f32 %v5001, %v5024
      %v5038 = vmul.f32 %v5002, %v5024
      %v5039 = vmul.f32 %v5003, %v5024
      %v5040 = vmul.f32 %v5004, %v5024
      %v5041 = vmul.f32 %v5005, %v5024
      %v5042 = vmul.f32 %v5006, %v5024
      %v5043 = vmul.f32 %v5007, %v5024
      %v5044 = vmul.f32 %v5008, %v5024
      %v5045 = vmul.f32 %v5009, %v5024
      %v5046 = vmul.f32 %v5010, %v5024
      %v5047 = vmul.f32 %v5011, %v5024
      %v5048 = vmul.f32 %v5012, %v5024
      %v5049 = vmul.f32 %v5013, %v5024
      %v5050 = vmul.f32 %v5014, %v5024
      %v5051 = vmul.f32 %v5015, %v5024
      %v5052 = vmul.f32 %v5016, %v5024
      %v5053 = vmul.f32 %v5017, %v5024
      %v5054 = vmul.f32 %v5018, %v5024
      %v5055 = vmul.f32 %v5019, %v5024
      %v5056 = vmul.f32 %v5020, %v5024
      %v5057 = vadd.f32 %v4956, %v5025
      %v5058 = vadd.f32 %v4957, %v5026
      %v5059 = vadd.f32 %v4958, %v5027
      %v5060 = vadd.f32 %v4959, %v5028
      %v5061 = vadd.f32 %v4960, %v5029
      %v5062 = vadd.f32 %v4961, %v5030
      %v5063 = vadd.f32 %v4962, %v5031
      %v5064 = vadd.f32 %v4963, %v5032
      %v5065 = vadd.f32 %v4964, %v5033
      %v5066 = vadd.f32 %v4965, %v5034
      %v5067 = vadd.f32 %v4966, %v5035
      %v5068 = vadd.f32 %v4967, %v5036
      %v5069 = vadd.f32 %v4968, %v5037
      %v5070 = vadd.f32 %v4969, %v5038
      %v5071 = vadd.f32 %v4970, %v5039
      %v5072 = vadd.f32 %v4971, %v5040
      %v5073 = vadd.f32 %v4972, %v5041
      %v5074 = vadd.f32 %v4973, %v5042
      %v5075 = vadd.f32 %v4974, %v5043
      %v5076 = vadd.f32 %v4975, %v5044
      %v5077 = vadd.f32 %v4976, %v5045
      %v5078 = vadd.f32 %v4977, %v5046
      %v5079 = vadd.f32 %v4978, %v5047
      %v5080 = vadd.f32 %v4979, %v5048
      %v5081 = vadd.f32 %v4980, %v5049
      %v5082 = vadd.f32 %v4981, %v5050
      %v5083 = vadd.f32 %v4982, %v5051
      %v5084 = vadd.f32 %v4983, %v5052
      %v5085 = vadd.f32 %v4984, %v5053
      %v5086 = vadd.f32 %v4985, %v5054
      %v5087 = vadd.f32 %v4986, %v5055
      %v5088 = vadd.f32 %v4987, %v5056
      %v5089 = vld [vmem:[%s1458] sm:$0xff]
      %v5090 = vld [vmem:[%s1458 + $0x8] sm:$0xff]
      %v5091 = vld [vmem:[%s1458 + $0x10] sm:$0xff]
      %v5092 = vld [vmem:[%s1458 + $0x18] sm:$0xff]
      %v5093 = vld [vmem:[%s1458 + $0x20] sm:$0xff]
      %v5094 = vld [vmem:[%s1458 + $0x28] sm:$0xff]
      %v5095 = vld [vmem:[%s1458 + $0x30] sm:$0xff]
      %v5096 = vld [vmem:[%s1458 + $0x38] sm:$0xff]
      %v5097 = vld [vmem:[%s1458 + $0x40] sm:$0xff]
      %v5098 = vld [vmem:[%s1458 + $0x48] sm:$0xff]
      %v5099 = vld [vmem:[%s1458 + $0x50] sm:$0xff]
      %v5100 = vld [vmem:[%s1458 + $0x58] sm:$0xff]
      %v5101 = vld [vmem:[%s1458 + $0x60] sm:$0xff]
      %v5102 = vld [vmem:[%s1458 + $0x68] sm:$0xff]
      %v5103 = vld [vmem:[%s1458 + $0x70] sm:$0xff]
      %v5104 = vld [vmem:[%s1458 + $0x78] sm:$0xff]
      %v5105 = vld [vmem:[%s1458 + $0x80] sm:$0xff]
      %v5106 = vld [vmem:[%s1458 + $0x88] sm:$0xff]
      %v5107 = vld [vmem:[%s1458 + $0x90] sm:$0xff]
      %v5108 = vld [vmem:[%s1458 + $0x98] sm:$0xff]
      %v5109 = vld [vmem:[%s1458 + $0xa0] sm:$0xff]
      %v5110 = vld [vmem:[%s1458 + $0xa8] sm:$0xff]
      %v5111 = vld [vmem:[%s1458 + $0xb0] sm:$0xff]
      %v5112 = vld [vmem:[%s1458 + $0xb8] sm:$0xff]
      %v5113 = vld [vmem:[%s1458 + $0xc0] sm:$0xff]
      %v5114 = vld [vmem:[%s1458 + $0xc8] sm:$0xff]
      %v5115 = vld [vmem:[%s1458 + $0xd0] sm:$0xff]
      %v5116 = vld [vmem:[%s1458 + $0xd8] sm:$0xff]
      %v5117 = vld [vmem:[%s1458 + $0xe0] sm:$0xff]
      %v5118 = vld [vmem:[%s1458 + $0xe8] sm:$0xff]
      %v5119 = vld [vmem:[%s1458 + $0xf0] sm:$0xff]
      %v5120 = vld [vmem:[%s1458 + $0xf8] sm:$0xff]
      %v5121 = vlaneseq
      %v5122 = vshrl.u32 %v5121, 7
      %v5123 = vsub.s32 2, %v5122
      %v5124 = vrot.slane %v4918, %v5123
      %v5125 = vmul.f32 %v5089, %v5124
      %v5126 = vmul.f32 %v5090, %v5124
      %v5127 = vmul.f32 %v5091, %v5124
      %v5128 = vmul.f32 %v5092, %v5124
      %v5129 = vmul.f32 %v5093, %v5124
      %v5130 = vmul.f32 %v5094, %v5124
      %v5131 = vmul.f32 %v5095, %v5124
      %v5132 = vmul.f32 %v5096, %v5124
      %v5133 = vmul.f32 %v5097, %v5124
      %v5134 = vmul.f32 %v5098, %v5124
      %v5135 = vmul.f32 %v5099, %v5124
      %v5136 = vmul.f32 %v5100, %v5124
      %v5137 = vmul.f32 %v5101, %v5124
      %v5138 = vmul.f32 %v5102, %v5124
      %v5139 = vmul.f32 %v5103, %v5124
      %v5140 = vmul.f32 %v5104, %v5124
      %v5141 = vmul.f32 %v5105, %v5124
      %v5142 = vmul.f32 %v5106, %v5124
      %v5143 = vmul.f32 %v5107, %v5124
      %v5144 = vmul.f32 %v5108, %v5124
      %v5145 = vmul.f32 %v5109, %v5124
      %v5146 = vmul.f32 %v5110, %v5124
      %v5147 = vmul.f32 %v5111, %v5124
      %v5148 = vmul.f32 %v5112, %v5124
      %v5149 = vmul.f32 %v5113, %v5124
      %v5150 = vmul.f32 %v5114, %v5124
      %v5151 = vmul.f32 %v5115, %v5124
      %v5152 = vmul.f32 %v5116, %v5124
      %v5153 = vmul.f32 %v5117, %v5124
      %v5154 = vmul.f32 %v5118, %v5124
      %v5155 = vmul.f32 %v5119, %v5124
      %v5156 = vmul.f32 %v5120, %v5124
      %v5157 = vadd.f32 %v5057, %v5125
      %v5158 = vadd.f32 %v5058, %v5126
      %v5159 = vadd.f32 %v5059, %v5127
      %v5160 = vadd.f32 %v5060, %v5128
      %v5161 = vadd.f32 %v5061, %v5129
      %v5162 = vadd.f32 %v5062, %v5130
      %v5163 = vadd.f32 %v5063, %v5131
      %v5164 = vadd.f32 %v5064, %v5132
      %v5165 = vadd.f32 %v5065, %v5133
      %v5166 = vadd.f32 %v5066, %v5134
      %v5167 = vadd.f32 %v5067, %v5135
      %v5168 = vadd.f32 %v5068, %v5136
      %v5169 = vadd.f32 %v5069, %v5137
      %v5170 = vadd.f32 %v5070, %v5138
      %v5171 = vadd.f32 %v5071, %v5139
      %v5172 = vadd.f32 %v5072, %v5140
      %v5173 = vadd.f32 %v5073, %v5141
      %v5174 = vadd.f32 %v5074, %v5142
      %v5175 = vadd.f32 %v5075, %v5143
      %v5176 = vadd.f32 %v5076, %v5144
      %v5177 = vadd.f32 %v5077, %v5145
      %v5178 = vadd.f32 %v5078, %v5146
      %v5179 = vadd.f32 %v5079, %v5147
      %v5180 = vadd.f32 %v5080, %v5148
      %v5181 = vadd.f32 %v5081, %v5149
      %v5182 = vadd.f32 %v5082, %v5150
      %v5183 = vadd.f32 %v5083, %v5151
      %v5184 = vadd.f32 %v5084, %v5152
      %v5185 = vadd.f32 %v5085, %v5153
      %v5186 = vadd.f32 %v5086, %v5154
      %v5187 = vadd.f32 %v5087, %v5155
      %v5188 = vadd.f32 %v5088, %v5156
      %v5189 = vld [vmem:[%s1504] sm:$0xff]
      %v5190 = vld [vmem:[%s1504 + $0x8] sm:$0xff]
      %v5191 = vld [vmem:[%s1504 + $0x10] sm:$0xff]
      %v5192 = vld [vmem:[%s1504 + $0x18] sm:$0xff]
      %v5193 = vld [vmem:[%s1504 + $0x20] sm:$0xff]
      %v5194 = vld [vmem:[%s1504 + $0x28] sm:$0xff]
      %v5195 = vld [vmem:[%s1504 + $0x30] sm:$0xff]
      %v5196 = vld [vmem:[%s1504 + $0x38] sm:$0xff]
      %v5197 = vld [vmem:[%s1504 + $0x40] sm:$0xff]
      %v5198 = vld [vmem:[%s1504 + $0x48] sm:$0xff]
      %v5199 = vld [vmem:[%s1504 + $0x50] sm:$0xff]
      %v5200 = vld [vmem:[%s1504 + $0x58] sm:$0xff]
      %v5201 = vld [vmem:[%s1504 + $0x60] sm:$0xff]
      %v5202 = vld [vmem:[%s1504 + $0x68] sm:$0xff]
      %v5203 = vld [vmem:[%s1504 + $0x70] sm:$0xff]
      %v5204 = vld [vmem:[%s1504 + $0x78] sm:$0xff]
      %v5205 = vld [vmem:[%s1504 + $0x80] sm:$0xff]
      %v5206 = vld [vmem:[%s1504 + $0x88] sm:$0xff]
      %v5207 = vld [vmem:[%s1504 + $0x90] sm:$0xff]
      %v5208 = vld [vmem:[%s1504 + $0x98] sm:$0xff]
      %v5209 = vld [vmem:[%s1504 + $0xa0] sm:$0xff]
      %v5210 = vld [vmem:[%s1504 + $0xa8] sm:$0xff]
      %v5211 = vld [vmem:[%s1504 + $0xb0] sm:$0xff]
      %v5212 = vld [vmem:[%s1504 + $0xb8] sm:$0xff]
      %v5213 = vld [vmem:[%s1504 + $0xc0] sm:$0xff]
      %v5214 = vld [vmem:[%s1504 + $0xc8] sm:$0xff]
      %v5215 = vld [vmem:[%s1504 + $0xd0] sm:$0xff]
      %v5216 = vld [vmem:[%s1504 + $0xd8] sm:$0xff]
      %v5217 = vld [vmem:[%s1504 + $0xe0] sm:$0xff]
      %v5218 = vld [vmem:[%s1504 + $0xe8] sm:$0xff]
      %v5219 = vld [vmem:[%s1504 + $0xf0] sm:$0xff]
      %v5220 = vld [vmem:[%s1504 + $0xf8] sm:$0xff]
      %v5221 = vlaneseq
      %v5222 = vshrl.u32 %v5221, 7
      %v5223 = vsub.s32 3, %v5222
      %v5224 = vrot.slane %v4918, %v5223
      %v5225 = vmul.f32 %v5189, %v5224
      %v5226 = vmul.f32 %v5190, %v5224
      %v5227 = vmul.f32 %v5191, %v5224
      %v5228 = vmul.f32 %v5192, %v5224
      %v5229 = vmul.f32 %v5193, %v5224
      %v5230 = vmul.f32 %v5194, %v5224
      %v5231 = vmul.f32 %v5195, %v5224
      %v5232 = vmul.f32 %v5196, %v5224
      %v5233 = vmul.f32 %v5197, %v5224
      %v5234 = vmul.f32 %v5198, %v5224
      %v5235 = vmul.f32 %v5199, %v5224
      %v5236 = vmul.f32 %v5200, %v5224
      %v5237 = vmul.f32 %v5201, %v5224
      %v5238 = vmul.f32 %v5202, %v5224
      %v5239 = vmul.f32 %v5203, %v5224
      %v5240 = vmul.f32 %v5204, %v5224
      %v5241 = vmul.f32 %v5205, %v5224
      %v5242 = vmul.f32 %v5206, %v5224
      %v5243 = vmul.f32 %v5207, %v5224
      %v5244 = vmul.f32 %v5208, %v5224
      %v5245 = vmul.f32 %v5209, %v5224
      %v5246 = vmul.f32 %v5210, %v5224
      %v5247 = vmul.f32 %v5211, %v5224
      %v5248 = vmul.f32 %v5212, %v5224
      %v5249 = vmul.f32 %v5213, %v5224
      %v5250 = vmul.f32 %v5214, %v5224
      %v5251 = vmul.f32 %v5215, %v5224
      %v5252 = vmul.f32 %v5216, %v5224
      %v5253 = vmul.f32 %v5217, %v5224
      %v5254 = vmul.f32 %v5218, %v5224
      %v5255 = vmul.f32 %v5219, %v5224
      %v5256 = vmul.f32 %v5220, %v5224
      %v5257 = vadd.f32 %v5157, %v5225
      %v5258 = vadd.f32 %v5158, %v5226
      %v5259 = vadd.f32 %v5159, %v5227
      %v5260 = vadd.f32 %v5160, %v5228
      %v5261 = vadd.f32 %v5161, %v5229
      %v5262 = vadd.f32 %v5162, %v5230
      %v5263 = vadd.f32 %v5163, %v5231
      %v5264 = vadd.f32 %v5164, %v5232
      %v5265 = vadd.f32 %v5165, %v5233
      %v5266 = vadd.f32 %v5166, %v5234
      %v5267 = vadd.f32 %v5167, %v5235
      %v5268 = vadd.f32 %v5168, %v5236
      %v5269 = vadd.f32 %v5169, %v5237
      %v5270 = vadd.f32 %v5170, %v5238
      %v5271 = vadd.f32 %v5171, %v5239
      %v5272 = vadd.f32 %v5172, %v5240
      %v5273 = vadd.f32 %v5173, %v5241
      %v5274 = vadd.f32 %v5174, %v5242
      %v5275 = vadd.f32 %v5175, %v5243
      %v5276 = vadd.f32 %v5176, %v5244
      %v5277 = vadd.f32 %v5177, %v5245
      %v5278 = vadd.f32 %v5178, %v5246
      %v5279 = vadd.f32 %v5179, %v5247
      %v5280 = vadd.f32 %v5180, %v5248
      %v5281 = vadd.f32 %v5181, %v5249
      %v5282 = vadd.f32 %v5182, %v5250
      %v5283 = vadd.f32 %v5183, %v5251
      %v5284 = vadd.f32 %v5184, %v5252
      %v5285 = vadd.f32 %v5185, %v5253
      %v5286 = vadd.f32 %v5186, %v5254
      %v5287 = vadd.f32 %v5187, %v5255
      %v5288 = vadd.f32 %v5188, %v5256
      %v5289 = vld [vmem:[%s1569] sm:$0xff]
      %v5290 = vld [vmem:[%s1569 + $0x8] sm:$0xff]
      %v5291 = vld [vmem:[%s1569 + $0x10] sm:$0xff]
      %v5292 = vld [vmem:[%s1569 + $0x18] sm:$0xff]
      %v5293 = vld [vmem:[%s1569 + $0x20] sm:$0xff]
      %v5294 = vld [vmem:[%s1569 + $0x28] sm:$0xff]
      %v5295 = vld [vmem:[%s1569 + $0x30] sm:$0xff]
      %v5296 = vld [vmem:[%s1569 + $0x38] sm:$0xff]
      %v5297 = vld [vmem:[%s1569 + $0x40] sm:$0xff]
      %v5298 = vld [vmem:[%s1569 + $0x48] sm:$0xff]
      %v5299 = vld [vmem:[%s1569 + $0x50] sm:$0xff]
      %v5300 = vld [vmem:[%s1569 + $0x58] sm:$0xff]
      %v5301 = vld [vmem:[%s1569 + $0x60] sm:$0xff]
      %v5302 = vld [vmem:[%s1569 + $0x68] sm:$0xff]
      %v5303 = vld [vmem:[%s1569 + $0x70] sm:$0xff]
      %v5304 = vld [vmem:[%s1569 + $0x78] sm:$0xff]
      %v5305 = vld [vmem:[%s1569 + $0x80] sm:$0xff]
      %v5306 = vld [vmem:[%s1569 + $0x88] sm:$0xff]
      %v5307 = vld [vmem:[%s1569 + $0x90] sm:$0xff]
      %v5308 = vld [vmem:[%s1569 + $0x98] sm:$0xff]
      %v5309 = vld [vmem:[%s1569 + $0xa0] sm:$0xff]
      %v5310 = vld [vmem:[%s1569 + $0xa8] sm:$0xff]
      %v5311 = vld [vmem:[%s1569 + $0xb0] sm:$0xff]
      %v5312 = vld [vmem:[%s1569 + $0xb8] sm:$0xff]
      %v5313 = vld [vmem:[%s1569 + $0xc0] sm:$0xff]
      %v5314 = vld [vmem:[%s1569 + $0xc8] sm:$0xff]
      %v5315 = vld [vmem:[%s1569 + $0xd0] sm:$0xff]
      %v5316 = vld [vmem:[%s1569 + $0xd8] sm:$0xff]
      %v5317 = vld [vmem:[%s1569 + $0xe0] sm:$0xff]
      %v5318 = vld [vmem:[%s1569 + $0xe8] sm:$0xff]
      %v5319 = vld [vmem:[%s1569 + $0xf0] sm:$0xff]
      %v5320 = vld [vmem:[%s1569 + $0xf8] sm:$0xff]
      %v5321 = vlaneseq
      %v5322 = vshrl.u32 %v5321, 7
      %v5323 = vsub.s32 4, %v5322
      %v5324 = vrot.slane %v4918, %v5323
      %v5325 = vmul.f32 %v5289, %v5324
      %v5326 = vmul.f32 %v5290, %v5324
      %v5327 = vmul.f32 %v5291, %v5324
      %v5328 = vmul.f32 %v5292, %v5324
      %v5329 = vmul.f32 %v5293, %v5324
      %v5330 = vmul.f32 %v5294, %v5324
      %v5331 = vmul.f32 %v5295, %v5324
      %v5332 = vmul.f32 %v5296, %v5324
      %v5333 = vmul.f32 %v5297, %v5324
      %v5334 = vmul.f32 %v5298, %v5324
      %v5335 = vmul.f32 %v5299, %v5324
      %v5336 = vmul.f32 %v5300, %v5324
      %v5337 = vmul.f32 %v5301, %v5324
      %v5338 = vmul.f32 %v5302, %v5324
      %v5339 = vmul.f32 %v5303, %v5324
      %v5340 = vmul.f32 %v5304, %v5324
      %v5341 = vmul.f32 %v5305, %v5324
      %v5342 = vmul.f32 %v5306, %v5324
      %v5343 = vmul.f32 %v5307, %v5324
      %v5344 = vmul.f32 %v5308, %v5324
      %v5345 = vmul.f32 %v5309, %v5324
      %v5346 = vmul.f32 %v5310, %v5324
      %v5347 = vmul.f32 %v5311, %v5324
      %v5348 = vmul.f32 %v5312, %v5324
      %v5349 = vmul.f32 %v5313, %v5324
      %v5350 = vmul.f32 %v5314, %v5324
      %v5351 = vmul.f32 %v5315, %v5324
      %v5352 = vmul.f32 %v5316, %v5324
      %v5353 = vmul.f32 %v5317, %v5324
      %v5354 = vmul.f32 %v5318, %v5324
      %v5355 = vmul.f32 %v5319, %v5324
      %v5356 = vmul.f32 %v5320, %v5324
      %v5357 = vadd.f32 %v5257, %v5325
      %v5358 = vadd.f32 %v5258, %v5326
      %v5359 = vadd.f32 %v5259, %v5327
      %v5360 = vadd.f32 %v5260, %v5328
      %v5361 = vadd.f32 %v5261, %v5329
      %v5362 = vadd.f32 %v5262, %v5330
      %v5363 = vadd.f32 %v5263, %v5331
      %v5364 = vadd.f32 %v5264, %v5332
      %v5365 = vadd.f32 %v5265, %v5333
      %v5366 = vadd.f32 %v5266, %v5334
      %v5367 = vadd.f32 %v5267, %v5335
      %v5368 = vadd.f32 %v5268, %v5336
      %v5369 = vadd.f32 %v5269, %v5337
      %v5370 = vadd.f32 %v5270, %v5338
      %v5371 = vadd.f32 %v5271, %v5339
      %v5372 = vadd.f32 %v5272, %v5340
      %v5373 = vadd.f32 %v5273, %v5341
      %v5374 = vadd.f32 %v5274, %v5342
      %v5375 = vadd.f32 %v5275, %v5343
      %v5376 = vadd.f32 %v5276, %v5344
      %v5377 = vadd.f32 %v5277, %v5345
      %v5378 = vadd.f32 %v5278, %v5346
      %v5379 = vadd.f32 %v5279, %v5347
      %v5380 = vadd.f32 %v5280, %v5348
      %v5381 = vadd.f32 %v5281, %v5349
      %v5382 = vadd.f32 %v5282, %v5350
      %v5383 = vadd.f32 %v5283, %v5351
      %v5384 = vadd.f32 %v5284, %v5352
      %v5385 = vadd.f32 %v5285, %v5353
      %v5386 = vadd.f32 %v5286, %v5354
      %v5387 = vadd.f32 %v5287, %v5355
      %v5388 = vadd.f32 %v5288, %v5356
      %v5389 = vld [vmem:[%s1425] sm:$0xff]
      %v5390 = vld [vmem:[%s1425 + $0x8] sm:$0xff]
      %v5391 = vld [vmem:[%s1425 + $0x10] sm:$0xff]
      %v5392 = vld [vmem:[%s1425 + $0x18] sm:$0xff]
      %v5393 = vld [vmem:[%s1425 + $0x20] sm:$0xff]
      %v5394 = vld [vmem:[%s1425 + $0x28] sm:$0xff]
      %v5395 = vld [vmem:[%s1425 + $0x30] sm:$0xff]
      %v5396 = vld [vmem:[%s1425 + $0x38] sm:$0xff]
      %v5397 = vld [vmem:[%s1425 + $0x40] sm:$0xff]
      %v5398 = vld [vmem:[%s1425 + $0x48] sm:$0xff]
      %v5399 = vld [vmem:[%s1425 + $0x50] sm:$0xff]
      %v5400 = vld [vmem:[%s1425 + $0x58] sm:$0xff]
      %v5401 = vld [vmem:[%s1425 + $0x60] sm:$0xff]
      %v5402 = vld [vmem:[%s1425 + $0x68] sm:$0xff]
      %v5403 = vld [vmem:[%s1425 + $0x70] sm:$0xff]
      %v5404 = vld [vmem:[%s1425 + $0x78] sm:$0xff]
      %v5405 = vld [vmem:[%s1425 + $0x80] sm:$0xff]
      %v5406 = vld [vmem:[%s1425 + $0x88] sm:$0xff]
      %v5407 = vld [vmem:[%s1425 + $0x90] sm:$0xff]
      %v5408 = vld [vmem:[%s1425 + $0x98] sm:$0xff]
      %v5409 = vld [vmem:[%s1425 + $0xa0] sm:$0xff]
      %v5410 = vld [vmem:[%s1425 + $0xa8] sm:$0xff]
      %v5411 = vld [vmem:[%s1425 + $0xb0] sm:$0xff]
      %v5412 = vld [vmem:[%s1425 + $0xb8] sm:$0xff]
      %v5413 = vld [vmem:[%s1425 + $0xc0] sm:$0xff]
      %v5414 = vld [vmem:[%s1425 + $0xc8] sm:$0xff]
      %v5415 = vld [vmem:[%s1425 + $0xd0] sm:$0xff]
      %v5416 = vld [vmem:[%s1425 + $0xd8] sm:$0xff]
      %v5417 = vld [vmem:[%s1425 + $0xe0] sm:$0xff]
      %v5418 = vld [vmem:[%s1425 + $0xe8] sm:$0xff]
      %v5419 = vld [vmem:[%s1425 + $0xf0] sm:$0xff]
      %v5420 = vld [vmem:[%s1425 + $0xf8] sm:$0xff]
      %v5421 = vlaneseq
      %v5422 = vshrl.u32 %v5421, 7
      %v5423 = vsub.s32 5, %v5422
      %v5424 = vrot.slane %v4918, %v5423
      %v5425 = vmul.f32 %v5389, %v5424
      %v5426 = vmul.f32 %v5390, %v5424
      %v5427 = vmul.f32 %v5391, %v5424
      %v5428 = vmul.f32 %v5392, %v5424
      %v5429 = vmul.f32 %v5393, %v5424
      %v5430 = vmul.f32 %v5394, %v5424
      %v5431 = vmul.f32 %v5395, %v5424
      %v5432 = vmul.f32 %v5396, %v5424
      %v5433 = vmul.f32 %v5397, %v5424
      %v5434 = vmul.f32 %v5398, %v5424
      %v5435 = vmul.f32 %v5399, %v5424
      %v5436 = vmul.f32 %v5400, %v5424
      %v5437 = vmul.f32 %v5401, %v5424
      %v5438 = vmul.f32 %v5402, %v5424
      %v5439 = vmul.f32 %v5403, %v5424
      %v5440 = vmul.f32 %v5404, %v5424
      %v5441 = vmul.f32 %v5405, %v5424
      %v5442 = vmul.f32 %v5406, %v5424
      %v5443 = vmul.f32 %v5407, %v5424
      %v5444 = vmul.f32 %v5408, %v5424
      %v5445 = vmul.f32 %v5409, %v5424
      %v5446 = vmul.f32 %v5410, %v5424
      %v5447 = vmul.f32 %v5411, %v5424
      %v5448 = vmul.f32 %v5412, %v5424
      %v5449 = vmul.f32 %v5413, %v5424
      %v5450 = vmul.f32 %v5414, %v5424
      %v5451 = vmul.f32 %v5415, %v5424
      %v5452 = vmul.f32 %v5416, %v5424
      %v5453 = vmul.f32 %v5417, %v5424
      %v5454 = vmul.f32 %v5418, %v5424
      %v5455 = vmul.f32 %v5419, %v5424
      %v5456 = vmul.f32 %v5420, %v5424
      %v5457 = vadd.f32 %v5357, %v5425
      %v5458 = vadd.f32 %v5358, %v5426
      %v5459 = vadd.f32 %v5359, %v5427
      %v5460 = vadd.f32 %v5360, %v5428
      %v5461 = vadd.f32 %v5361, %v5429
      %v5462 = vadd.f32 %v5362, %v5430
      %v5463 = vadd.f32 %v5363, %v5431
      %v5464 = vadd.f32 %v5364, %v5432
      %v5465 = vadd.f32 %v5365, %v5433
      %v5466 = vadd.f32 %v5366, %v5434
      %v5467 = vadd.f32 %v5367, %v5435
      %v5468 = vadd.f32 %v5368, %v5436
      %v5469 = vadd.f32 %v5369, %v5437
      %v5470 = vadd.f32 %v5370, %v5438
      %v5471 = vadd.f32 %v5371, %v5439
      %v5472 = vadd.f32 %v5372, %v5440
      %v5473 = vadd.f32 %v5373, %v5441
      %v5474 = vadd.f32 %v5374, %v5442
      %v5475 = vadd.f32 %v5375, %v5443
      %v5476 = vadd.f32 %v5376, %v5444
      %v5477 = vadd.f32 %v5377, %v5445
      %v5478 = vadd.f32 %v5378, %v5446
      %v5479 = vadd.f32 %v5379, %v5447
      %v5480 = vadd.f32 %v5380, %v5448
      %v5481 = vadd.f32 %v5381, %v5449
      %v5482 = vadd.f32 %v5382, %v5450
      %v5483 = vadd.f32 %v5383, %v5451
      %v5484 = vadd.f32 %v5384, %v5452
      %v5485 = vadd.f32 %v5385, %v5453
      %v5486 = vadd.f32 %v5386, %v5454
      %v5487 = vadd.f32 %v5387, %v5455
      %v5488 = vadd.f32 %v5388, %v5456
      %v5489 = vld [vmem:[%s1698] sm:$0xff]
      %v5490 = vld [vmem:[%s1698 + $0x8] sm:$0xff]
      %v5491 = vld [vmem:[%s1698 + $0x10] sm:$0xff]
      %v5492 = vld [vmem:[%s1698 + $0x18] sm:$0xff]
      %v5493 = vld [vmem:[%s1698 + $0x20] sm:$0xff]
      %v5494 = vld [vmem:[%s1698 + $0x28] sm:$0xff]
      %v5495 = vld [vmem:[%s1698 + $0x30] sm:$0xff]
      %v5496 = vld [vmem:[%s1698 + $0x38] sm:$0xff]
      %v5497 = vld [vmem:[%s1698 + $0x40] sm:$0xff]
      %v5498 = vld [vmem:[%s1698 + $0x48] sm:$0xff]
      %v5499 = vld [vmem:[%s1698 + $0x50] sm:$0xff]
      %v5500 = vld [vmem:[%s1698 + $0x58] sm:$0xff]
      %v5501 = vld [vmem:[%s1698 + $0x60] sm:$0xff]
      %v5502 = vld [vmem:[%s1698 + $0x68] sm:$0xff]
      %v5503 = vld [vmem:[%s1698 + $0x70] sm:$0xff]
      %v5504 = vld [vmem:[%s1698 + $0x78] sm:$0xff]
      %v5505 = vld [vmem:[%s1698 + $0x80] sm:$0xff]
      %v5506 = vld [vmem:[%s1698 + $0x88] sm:$0xff]
      %v5507 = vld [vmem:[%s1698 + $0x90] sm:$0xff]
      %v5508 = vld [vmem:[%s1698 + $0x98] sm:$0xff]
      %v5509 = vld [vmem:[%s1698 + $0xa0] sm:$0xff]
      %v5510 = vld [vmem:[%s1698 + $0xa8] sm:$0xff]
      %v5511 = vld [vmem:[%s1698 + $0xb0] sm:$0xff]
      %v5512 = vld [vmem:[%s1698 + $0xb8] sm:$0xff]
      %v5513 = vld [vmem:[%s1698 + $0xc0] sm:$0xff]
      %v5514 = vld [vmem:[%s1698 + $0xc8] sm:$0xff]
      %v5515 = vld [vmem:[%s1698 + $0xd0] sm:$0xff]
      %v5516 = vld [vmem:[%s1698 + $0xd8] sm:$0xff]
      %v5517 = vld [vmem:[%s1698 + $0xe0] sm:$0xff]
      %v5518 = vld [vmem:[%s1698 + $0xe8] sm:$0xff]
      %v5519 = vld [vmem:[%s1698 + $0xf0] sm:$0xff]
      %v5520 = vld [vmem:[%s1698 + $0xf8] sm:$0xff]
      %v5521 = vlaneseq
      %v5522 = vshrl.u32 %v5521, 7
      %v5523 = vsub.s32 6, %v5522
      %v5524 = vrot.slane %v4918, %v5523
      %v5525 = vmul.f32 %v5489, %v5524
      %v5526 = vmul.f32 %v5490, %v5524
      %v5527 = vmul.f32 %v5491, %v5524
      %v5528 = vmul.f32 %v5492, %v5524
      %v5529 = vmul.f32 %v5493, %v5524
      %v5530 = vmul.f32 %v5494, %v5524
      %v5531 = vmul.f32 %v5495, %v5524
      %v5532 = vmul.f32 %v5496, %v5524
      %v5533 = vmul.f32 %v5497, %v5524
      %v5534 = vmul.f32 %v5498, %v5524
      %v5535 = vmul.f32 %v5499, %v5524
      %v5536 = vmul.f32 %v5500, %v5524
      %v5537 = vmul.f32 %v5501, %v5524
      %v5538 = vmul.f32 %v5502, %v5524
      %v5539 = vmul.f32 %v5503, %v5524
      %v5540 = vmul.f32 %v5504, %v5524
      %v5541 = vmul.f32 %v5505, %v5524
      %v5542 = vmul.f32 %v5506, %v5524
      %v5543 = vmul.f32 %v5507, %v5524
      %v5544 = vmul.f32 %v5508, %v5524
      %v5545 = vmul.f32 %v5509, %v5524
      %v5546 = vmul.f32 %v5510, %v5524
      %v5547 = vmul.f32 %v5511, %v5524
      %v5548 = vmul.f32 %v5512, %v5524
      %v5549 = vmul.f32 %v5513, %v5524
      %v5550 = vmul.f32 %v5514, %v5524
      %v5551 = vmul.f32 %v5515, %v5524
      %v5552 = vmul.f32 %v5516, %v5524
      %v5553 = vmul.f32 %v5517, %v5524
      %v5554 = vmul.f32 %v5518, %v5524
      %v5555 = vmul.f32 %v5519, %v5524
      %v5556 = vmul.f32 %v5520, %v5524
      %v5557 = vadd.f32 %v5457, %v5525
      %v5558 = vadd.f32 %v5458, %v5526
      %v5559 = vadd.f32 %v5459, %v5527
      %v5560 = vadd.f32 %v5460, %v5528
      %v5561 = vadd.f32 %v5461, %v5529
      %v5562 = vadd.f32 %v5462, %v5530
      %v5563 = vadd.f32 %v5463, %v5531
      %v5564 = vadd.f32 %v5464, %v5532
      %v5565 = vadd.f32 %v5465, %v5533
      %v5566 = vadd.f32 %v5466, %v5534
      %v5567 = vadd.f32 %v5467, %v5535
      %v5568 = vadd.f32 %v5468, %v5536
      %v5569 = vadd.f32 %v5469, %v5537
      %v5570 = vadd.f32 %v5470, %v5538
      %v5571 = vadd.f32 %v5471, %v5539
      %v5572 = vadd.f32 %v5472, %v5540
      %v5573 = vadd.f32 %v5473, %v5541
      %v5574 = vadd.f32 %v5474, %v5542
      %v5575 = vadd.f32 %v5475, %v5543
      %v5576 = vadd.f32 %v5476, %v5544
      %v5577 = vadd.f32 %v5477, %v5545
      %v5578 = vadd.f32 %v5478, %v5546
      %v5579 = vadd.f32 %v5479, %v5547
      %v5580 = vadd.f32 %v5480, %v5548
      %v5581 = vadd.f32 %v5481, %v5549
      %v5582 = vadd.f32 %v5482, %v5550
      %v5583 = vadd.f32 %v5483, %v5551
      %v5584 = vadd.f32 %v5484, %v5552
      %v5585 = vadd.f32 %v5485, %v5553
      %v5586 = vadd.f32 %v5486, %v5554
      %v5587 = vadd.f32 %v5487, %v5555
      %v5588 = vadd.f32 %v5488, %v5556
      %v5589 = vld [vmem:[%s1763] sm:$0xff]
      %v5590 = vld [vmem:[%s1763 + $0x8] sm:$0xff]
      %v5591 = vld [vmem:[%s1763 + $0x10] sm:$0xff]
      %v5592 = vld [vmem:[%s1763 + $0x18] sm:$0xff]
      %v5593 = vld [vmem:[%s1763 + $0x20] sm:$0xff]
      %v5594 = vld [vmem:[%s1763 + $0x28] sm:$0xff]
      %v5595 = vld [vmem:[%s1763 + $0x30] sm:$0xff]
      %v5596 = vld [vmem:[%s1763 + $0x38] sm:$0xff]
      %v5597 = vld [vmem:[%s1763 + $0x40] sm:$0xff]
      %v5598 = vld [vmem:[%s1763 + $0x48] sm:$0xff]
      %v5599 = vld [vmem:[%s1763 + $0x50] sm:$0xff]
      %v5600 = vld [vmem:[%s1763 + $0x58] sm:$0xff]
      %v5601 = vld [vmem:[%s1763 + $0x60] sm:$0xff]
      %v5602 = vld [vmem:[%s1763 + $0x68] sm:$0xff]
      %v5603 = vld [vmem:[%s1763 + $0x70] sm:$0xff]
      %v5604 = vld [vmem:[%s1763 + $0x78] sm:$0xff]
      %v5605 = vld [vmem:[%s1763 + $0x80] sm:$0xff]
      %v5606 = vld [vmem:[%s1763 + $0x88] sm:$0xff]
      %v5607 = vld [vmem:[%s1763 + $0x90] sm:$0xff]
      %v5608 = vld [vmem:[%s1763 + $0x98] sm:$0xff]
      %v5609 = vld [vmem:[%s1763 + $0xa0] sm:$0xff]
      %v5610 = vld [vmem:[%s1763 + $0xa8] sm:$0xff]
      %v5611 = vld [vmem:[%s1763 + $0xb0] sm:$0xff]
      %v5612 = vld [vmem:[%s1763 + $0xb8] sm:$0xff]
      %v5613 = vld [vmem:[%s1763 + $0xc0] sm:$0xff]
      %v5614 = vld [vmem:[%s1763 + $0xc8] sm:$0xff]
      %v5615 = vld [vmem:[%s1763 + $0xd0] sm:$0xff]
      %v5616 = vld [vmem:[%s1763 + $0xd8] sm:$0xff]
      %v5617 = vld [vmem:[%s1763 + $0xe0] sm:$0xff]
      %v5618 = vld [vmem:[%s1763 + $0xe8] sm:$0xff]
      %v5619 = vld [vmem:[%s1763 + $0xf0] sm:$0xff]
      %v5620 = vld [vmem:[%s1763 + $0xf8] sm:$0xff]
      %v5621 = vlaneseq
      %v5622 = vshrl.u32 %v5621, 7
      %v5623 = vsub.s32 7, %v5622
      %v5624 = vrot.slane %v4918, %v5623
      %v5625 = vmul.f32 %v5589, %v5624
      %v5626 = vmul.f32 %v5590, %v5624
      %v5627 = vmul.f32 %v5591, %v5624
      %v5628 = vmul.f32 %v5592, %v5624
      %v5629 = vmul.f32 %v5593, %v5624
      %v5630 = vmul.f32 %v5594, %v5624
      %v5631 = vmul.f32 %v5595, %v5624
      %v5632 = vmul.f32 %v5596, %v5624
      %v5633 = vmul.f32 %v5597, %v5624
      %v5634 = vmul.f32 %v5598, %v5624
      %v5635 = vmul.f32 %v5599, %v5624
      %v5636 = vmul.f32 %v5600, %v5624
      %v5637 = vmul.f32 %v5601, %v5624
      %v5638 = vmul.f32 %v5602, %v5624
      %v5639 = vmul.f32 %v5603, %v5624
      %v5640 = vmul.f32 %v5604, %v5624
      %v5641 = vmul.f32 %v5605, %v5624
      %v5642 = vmul.f32 %v5606, %v5624
      %v5643 = vmul.f32 %v5607, %v5624
      %v5644 = vmul.f32 %v5608, %v5624
      %v5645 = vmul.f32 %v5609, %v5624
      %v5646 = vmul.f32 %v5610, %v5624
      %v5647 = vmul.f32 %v5611, %v5624
      %v5648 = vmul.f32 %v5612, %v5624
      %v5649 = vmul.f32 %v5613, %v5624
      %v5650 = vmul.f32 %v5614, %v5624
      %v5651 = vmul.f32 %v5615, %v5624
      %v5652 = vmul.f32 %v5616, %v5624
      %v5653 = vmul.f32 %v5617, %v5624
      %v5654 = vmul.f32 %v5618, %v5624
      %v5655 = vmul.f32 %v5619, %v5624
      %v5656 = vmul.f32 %v5620, %v5624
      %v5657 = vadd.f32 %v5557, %v5625
      %v5658 = vadd.f32 %v5558, %v5626
      %v5659 = vadd.f32 %v5559, %v5627
      %v5660 = vadd.f32 %v5560, %v5628
      %v5661 = vadd.f32 %v5561, %v5629
      %v5662 = vadd.f32 %v5562, %v5630
      %v5663 = vadd.f32 %v5563, %v5631
      %v5664 = vadd.f32 %v5564, %v5632
      %v5665 = vadd.f32 %v5565, %v5633
      %v5666 = vadd.f32 %v5566, %v5634
      %v5667 = vadd.f32 %v5567, %v5635
      %v5668 = vadd.f32 %v5568, %v5636
      %v5669 = vadd.f32 %v5569, %v5637
      %v5670 = vadd.f32 %v5570, %v5638
      %v5671 = vadd.f32 %v5571, %v5639
      %v5672 = vadd.f32 %v5572, %v5640
      %v5673 = vadd.f32 %v5573, %v5641
      %v5674 = vadd.f32 %v5574, %v5642
      %v5675 = vadd.f32 %v5575, %v5643
      %v5676 = vadd.f32 %v5576, %v5644
      %v5677 = vadd.f32 %v5577, %v5645
      %v5678 = vadd.f32 %v5578, %v5646
      %v5679 = vadd.f32 %v5579, %v5647
      %v5680 = vadd.f32 %v5580, %v5648
      %v5681 = vadd.f32 %v5581, %v5649
      %v5682 = vadd.f32 %v5582, %v5650
      %v5683 = vadd.f32 %v5583, %v5651
      %v5684 = vadd.f32 %v5584, %v5652
      %v5685 = vadd.f32 %v5585, %v5653
      %v5686 = vadd.f32 %v5586, %v5654
      %v5687 = vadd.f32 %v5587, %v5655
      %v5688 = vadd.f32 %v5588, %v5656
      %v5689 = vld [vmem:[%s1828] sm:$0xff]
      %v5690 = vld [vmem:[%s1828 + $0x8] sm:$0xff]
      %v5691 = vld [vmem:[%s1828 + $0x10] sm:$0xff]
      %v5692 = vld [vmem:[%s1828 + $0x18] sm:$0xff]
      %v5693 = vld [vmem:[%s1828 + $0x20] sm:$0xff]
      %v5694 = vld [vmem:[%s1828 + $0x28] sm:$0xff]
      %v5695 = vld [vmem:[%s1828 + $0x30] sm:$0xff]
      %v5696 = vld [vmem:[%s1828 + $0x38] sm:$0xff]
      %v5697 = vld [vmem:[%s1828 + $0x40] sm:$0xff]
      %v5698 = vld [vmem:[%s1828 + $0x48] sm:$0xff]
      %v5699 = vld [vmem:[%s1828 + $0x50] sm:$0xff]
      %v5700 = vld [vmem:[%s1828 + $0x58] sm:$0xff]
      %v5701 = vld [vmem:[%s1828 + $0x60] sm:$0xff]
      %v5702 = vld [vmem:[%s1828 + $0x68] sm:$0xff]
      %v5703 = vld [vmem:[%s1828 + $0x70] sm:$0xff]
      %v5704 = vld [vmem:[%s1828 + $0x78] sm:$0xff]
      %v5705 = vld [vmem:[%s1828 + $0x80] sm:$0xff]
      %v5706 = vld [vmem:[%s1828 + $0x88] sm:$0xff]
      %v5707 = vld [vmem:[%s1828 + $0x90] sm:$0xff]
      %v5708 = vld [vmem:[%s1828 + $0x98] sm:$0xff]
      %v5709 = vld [vmem:[%s1828 + $0xa0] sm:$0xff]
      %v5710 = vld [vmem:[%s1828 + $0xa8] sm:$0xff]
      %v5711 = vld [vmem:[%s1828 + $0xb0] sm:$0xff]
      %v5712 = vld [vmem:[%s1828 + $0xb8] sm:$0xff]
      %v5713 = vld [vmem:[%s1828 + $0xc0] sm:$0xff]
      %v5714 = vld [vmem:[%s1828 + $0xc8] sm:$0xff]
      %v5715 = vld [vmem:[%s1828 + $0xd0] sm:$0xff]
      %v5716 = vld [vmem:[%s1828 + $0xd8] sm:$0xff]
      %v5717 = vld [vmem:[%s1828 + $0xe0] sm:$0xff]
      %v5718 = vld [vmem:[%s1828 + $0xe8] sm:$0xff]
      %v5719 = vld [vmem:[%s1828 + $0xf0] sm:$0xff]
      %v5720 = vld [vmem:[%s1828 + $0xf8] sm:$0xff]
      %v5721 = vlaneseq
      %v5722 = vshrl.u32 %v5721, 7
      %v5723 = vsub.s32 0, %v5722
      %v5724 = vrot.slane %v4919, %v5723
      %v5725 = vmul.f32 %v5689, %v5724
      %v5726 = vmul.f32 %v5690, %v5724
      %v5727 = vmul.f32 %v5691, %v5724
      %v5728 = vmul.f32 %v5692, %v5724
      %v5729 = vmul.f32 %v5693, %v5724
      %v5730 = vmul.f32 %v5694, %v5724
      %v5731 = vmul.f32 %v5695, %v5724
      %v5732 = vmul.f32 %v5696, %v5724
      %v5733 = vmul.f32 %v5697, %v5724
      %v5734 = vmul.f32 %v5698, %v5724
      %v5735 = vmul.f32 %v5699, %v5724
      %v5736 = vmul.f32 %v5700, %v5724
      %v5737 = vmul.f32 %v5701, %v5724
      %v5738 = vmul.f32 %v5702, %v5724
      %v5739 = vmul.f32 %v5703, %v5724
      %v5740 = vmul.f32 %v5704, %v5724
      %v5741 = vmul.f32 %v5705, %v5724
      %v5742 = vmul.f32 %v5706, %v5724
      %v5743 = vmul.f32 %v5707, %v5724
      %v5744 = vmul.f32 %v5708, %v5724
      %v5745 = vmul.f32 %v5709, %v5724
      %v5746 = vmul.f32 %v5710, %v5724
      %v5747 = vmul.f32 %v5711, %v5724
      %v5748 = vmul.f32 %v5712, %v5724
      %v5749 = vmul.f32 %v5713, %v5724
      %v5750 = vmul.f32 %v5714, %v5724
      %v5751 = vmul.f32 %v5715, %v5724
      %v5752 = vmul.f32 %v5716, %v5724
      %v5753 = vmul.f32 %v5717, %v5724
      %v5754 = vmul.f32 %v5718, %v5724
      %v5755 = vmul.f32 %v5719, %v5724
      %v5756 = vmul.f32 %v5720, %v5724
      %v5757 = vadd.f32 %v5657, %v5725
      %v5758 = vadd.f32 %v5658, %v5726
      %v5759 = vadd.f32 %v5659, %v5727
      %v5760 = vadd.f32 %v5660, %v5728
      %v5761 = vadd.f32 %v5661, %v5729
      %v5762 = vadd.f32 %v5662, %v5730
      %v5763 = vadd.f32 %v5663, %v5731
      %v5764 = vadd.f32 %v5664, %v5732
      %v5765 = vadd.f32 %v5665, %v5733
      %v5766 = vadd.f32 %v5666, %v5734
      %v5767 = vadd.f32 %v5667, %v5735
      %v5768 = vadd.f32 %v5668, %v5736
      %v5769 = vadd.f32 %v5669, %v5737
      %v5770 = vadd.f32 %v5670, %v5738
      %v5771 = vadd.f32 %v5671, %v5739
      %v5772 = vadd.f32 %v5672, %v5740
      %v5773 = vadd.f32 %v5673, %v5741
      %v5774 = vadd.f32 %v5674, %v5742
      %v5775 = vadd.f32 %v5675, %v5743
      %v5776 = vadd.f32 %v5676, %v5744
      %v5777 = vadd.f32 %v5677, %v5745
      %v5778 = vadd.f32 %v5678, %v5746
      %v5779 = vadd.f32 %v5679, %v5747
      %v5780 = vadd.f32 %v5680, %v5748
      %v5781 = vadd.f32 %v5681, %v5749
      %v5782 = vadd.f32 %v5682, %v5750
      %v5783 = vadd.f32 %v5683, %v5751
      %v5784 = vadd.f32 %v5684, %v5752
      %v5785 = vadd.f32 %v5685, %v5753
      %v5786 = vadd.f32 %v5686, %v5754
      %v5787 = vadd.f32 %v5687, %v5755
      %v5788 = vadd.f32 %v5688, %v5756
      %s5789 = scalar_lea.vmem [#allocation3], 144
      %v5790 = vld [vmem:[%s5789] sm:$0xff]
      %v5791 = vld [vmem:[%s5789 + $0x8] sm:$0xff]
      %v5792 = vld [vmem:[%s5789 + $0x10] sm:$0xff]
      %v5793 = vld [vmem:[%s5789 + $0x18] sm:$0xff]
      %v5794 = vld [vmem:[%s5789 + $0x20] sm:$0xff]
      %v5795 = vld [vmem:[%s5789 + $0x28] sm:$0xff]
      %v5796 = vld [vmem:[%s5789 + $0x30] sm:$0xff]
      %v5797 = vld [vmem:[%s5789 + $0x38] sm:$0xff]
      %v5798 = vld [vmem:[%s5789 + $0x40] sm:$0xff]
      %v5799 = vld [vmem:[%s5789 + $0x48] sm:$0xff]
      %v5800 = vld [vmem:[%s5789 + $0x50] sm:$0xff]
      %v5801 = vld [vmem:[%s5789 + $0x58] sm:$0xff]
      %v5802 = vld [vmem:[%s5789 + $0x60] sm:$0xff]
      %v5803 = vld [vmem:[%s5789 + $0x68] sm:$0xff]
      %v5804 = vld [vmem:[%s5789 + $0x70] sm:$0xff]
      %v5805 = vld [vmem:[%s5789 + $0x78] sm:$0xff]
      %v5806 = vld [vmem:[%s5789 + $0x80] sm:$0xff]
      %v5807 = vld [vmem:[%s5789 + $0x88] sm:$0xff]
      %v5808 = vld [vmem:[%s5789 + $0x90] sm:$0xff]
      %v5809 = vld [vmem:[%s5789 + $0x98] sm:$0xff]
      %v5810 = vld [vmem:[%s5789 + $0xa0] sm:$0xff]
      %v5811 = vld [vmem:[%s5789 + $0xa8] sm:$0xff]
      %v5812 = vld [vmem:[%s5789 + $0xb0] sm:$0xff]
      %v5813 = vld [vmem:[%s5789 + $0xb8] sm:$0xff]
      %v5814 = vld [vmem:[%s5789 + $0xc0] sm:$0xff]
      %v5815 = vld [vmem:[%s5789 + $0xc8] sm:$0xff]
      %v5816 = vld [vmem:[%s5789 + $0xd0] sm:$0xff]
      %v5817 = vld [vmem:[%s5789 + $0xd8] sm:$0xff]
      %v5818 = vld [vmem:[%s5789 + $0xe0] sm:$0xff]
      %v5819 = vld [vmem:[%s5789 + $0xe8] sm:$0xff]
      %v5820 = vld [vmem:[%s5789 + $0xf0] sm:$0xff]
      %v5821 = vld [vmem:[%s5789 + $0xf8] sm:$0xff]
      %v5822 = vlaneseq
      %v5823 = vshrl.u32 %v5822, 7
      %v5824 = vsub.s32 1, %v5823
      %v5825 = vrot.slane %v4919, %v5824
      %v5826 = vmul.f32 %v5790, %v5825
      %v5827 = vmul.f32 %v5791, %v5825
      %v5828 = vmul.f32 %v5792, %v5825
      %v5829 = vmul.f32 %v5793, %v5825
      %v5830 = vmul.f32 %v5794, %v5825
      %v5831 = vmul.f32 %v5795, %v5825
      %v5832 = vmul.f32 %v5796, %v5825
      %v5833 = vmul.f32 %v5797, %v5825
      %v5834 = vmul.f32 %v5798, %v5825
      %v5835 = vmul.f32 %v5799, %v5825
      %v5836 = vmul.f32 %v5800, %v5825
      %v5837 = vmul.f32 %v5801, %v5825
      %v5838 = vmul.f32 %v5802, %v5825
      %v5839 = vmul.f32 %v5803, %v5825
      %v5840 = vmul.f32 %v5804, %v5825
      %v5841 = vmul.f32 %v5805, %v5825
      %v5842 = vmul.f32 %v5806, %v5825
      %v5843 = vmul.f32 %v5807, %v5825
      %v5844 = vmul.f32 %v5808, %v5825
      %v5845 = vmul.f32 %v5809, %v5825
      %v5846 = vmul.f32 %v5810, %v5825
      %v5847 = vmul.f32 %v5811, %v5825
      %v5848 = vmul.f32 %v5812, %v5825
      %v5849 = vmul.f32 %v5813, %v5825
      %v5850 = vmul.f32 %v5814, %v5825
      %v5851 = vmul.f32 %v5815, %v5825
      %v5852 = vmul.f32 %v5816, %v5825
      %v5853 = vmul.f32 %v5817, %v5825
      %v5854 = vmul.f32 %v5818, %v5825
      %v5855 = vmul.f32 %v5819, %v5825
      %v5856 = vmul.f32 %v5820, %v5825
      %v5857 = vmul.f32 %v5821, %v5825
      %v5858 = vadd.f32 %v5757, %v5826
      %v5859 = vadd.f32 %v5758, %v5827
      %v5860 = vadd.f32 %v5759, %v5828
      %v5861 = vadd.f32 %v5760, %v5829
      %v5862 = vadd.f32 %v5761, %v5830
      %v5863 = vadd.f32 %v5762, %v5831
      %v5864 = vadd.f32 %v5763, %v5832
      %v5865 = vadd.f32 %v5764, %v5833
      %v5866 = vadd.f32 %v5765, %v5834
      %v5867 = vadd.f32 %v5766, %v5835
      %v5868 = vadd.f32 %v5767, %v5836
      %v5869 = vadd.f32 %v5768, %v5837
      %v5870 = vadd.f32 %v5769, %v5838
      %v5871 = vadd.f32 %v5770, %v5839
      %v5872 = vadd.f32 %v5771, %v5840
      %v5873 = vadd.f32 %v5772, %v5841
      %v5874 = vadd.f32 %v5773, %v5842
      %v5875 = vadd.f32 %v5774, %v5843
      %v5876 = vadd.f32 %v5775, %v5844
      %v5877 = vadd.f32 %v5776, %v5845
      %v5878 = vadd.f32 %v5777, %v5846
      %v5879 = vadd.f32 %v5778, %v5847
      %v5880 = vadd.f32 %v5779, %v5848
      %v5881 = vadd.f32 %v5780, %v5849
      %v5882 = vadd.f32 %v5781, %v5850
      %v5883 = vadd.f32 %v5782, %v5851
      %v5884 = vadd.f32 %v5783, %v5852
      %v5885 = vadd.f32 %v5784, %v5853
      %v5886 = vadd.f32 %v5785, %v5854
      %v5887 = vadd.f32 %v5786, %v5855
      %v5888 = vadd.f32 %v5787, %v5856
      %v5889 = vadd.f32 %v5788, %v5857
      %s5890 = scalar_lea.vmem [#allocation3], 160
      %v5891 = vld [vmem:[%s5890] sm:$0xff]
      %v5892 = vld [vmem:[%s5890 + $0x8] sm:$0xff]
      %v5893 = vld [vmem:[%s5890 + $0x10] sm:$0xff]
      %v5894 = vld [vmem:[%s5890 + $0x18] sm:$0xff]
      %v5895 = vld [vmem:[%s5890 + $0x20] sm:$0xff]
      %v5896 = vld [vmem:[%s5890 + $0x28] sm:$0xff]
      %v5897 = vld [vmem:[%s5890 + $0x30] sm:$0xff]
      %v5898 = vld [vmem:[%s5890 + $0x38] sm:$0xff]
      %v5899 = vld [vmem:[%s5890 + $0x40] sm:$0xff]
      %v5900 = vld [vmem:[%s5890 + $0x48] sm:$0xff]
      %v5901 = vld [vmem:[%s5890 + $0x50] sm:$0xff]
      %v5902 = vld [vmem:[%s5890 + $0x58] sm:$0xff]
      %v5903 = vld [vmem:[%s5890 + $0x60] sm:$0xff]
      %v5904 = vld [vmem:[%s5890 + $0x68] sm:$0xff]
      %v5905 = vld [vmem:[%s5890 + $0x70] sm:$0xff]
      %v5906 = vld [vmem:[%s5890 + $0x78] sm:$0xff]
      %v5907 = vld [vmem:[%s5890 + $0x80] sm:$0xff]
      %v5908 = vld [vmem:[%s5890 + $0x88] sm:$0xff]
      %v5909 = vld [vmem:[%s5890 + $0x90] sm:$0xff]
      %v5910 = vld [vmem:[%s5890 + $0x98] sm:$0xff]
      %v5911 = vld [vmem:[%s5890 + $0xa0] sm:$0xff]
      %v5912 = vld [vmem:[%s5890 + $0xa8] sm:$0xff]
      %v5913 = vld [vmem:[%s5890 + $0xb0] sm:$0xff]
      %v5914 = vld [vmem:[%s5890 + $0xb8] sm:$0xff]
      %v5915 = vld [vmem:[%s5890 + $0xc0] sm:$0xff]
      %v5916 = vld [vmem:[%s5890 + $0xc8] sm:$0xff]
      %v5917 = vld [vmem:[%s5890 + $0xd0] sm:$0xff]
      %v5918 = vld [vmem:[%s5890 + $0xd8] sm:$0xff]
      %v5919 = vld [vmem:[%s5890 + $0xe0] sm:$0xff]
      %v5920 = vld [vmem:[%s5890 + $0xe8] sm:$0xff]
      %v5921 = vld [vmem:[%s5890 + $0xf0] sm:$0xff]
      %v5922 = vld [vmem:[%s5890 + $0xf8] sm:$0xff]
      %v5923 = vlaneseq
      %v5924 = vshrl.u32 %v5923, 7
      %v5925 = vsub.s32 2, %v5924
      %v5926 = vrot.slane %v4919, %v5925
      %v5927 = vmul.f32 %v5891, %v5926
      %v5928 = vmul.f32 %v5892, %v5926
      %v5929 = vmul.f32 %v5893, %v5926
      %v5930 = vmul.f32 %v5894, %v5926
      %v5931 = vmul.f32 %v5895, %v5926
      %v5932 = vmul.f32 %v5896, %v5926
      %v5933 = vmul.f32 %v5897, %v5926
      %v5934 = vmul.f32 %v5898, %v5926
      %v5935 = vmul.f32 %v5899, %v5926
      %v5936 = vmul.f32 %v5900, %v5926
      %v5937 = vmul.f32 %v5901, %v5926
      %v5938 = vmul.f32 %v5902, %v5926
      %v5939 = vmul.f32 %v5903, %v5926
      %v5940 = vmul.f32 %v5904, %v5926
      %v5941 = vmul.f32 %v5905, %v5926
      %v5942 = vmul.f32 %v5906, %v5926
      %v5943 = vmul.f32 %v5907, %v5926
      %v5944 = vmul.f32 %v5908, %v5926
      %v5945 = vmul.f32 %v5909, %v5926
      %v5946 = vmul.f32 %v5910, %v5926
      %v5947 = vmul.f32 %v5911, %v5926
      %v5948 = vmul.f32 %v5912, %v5926
      %v5949 = vmul.f32 %v5913, %v5926
      %v5950 = vmul.f32 %v5914, %v5926
      %v5951 = vmul.f32 %v5915, %v5926
      %v5952 = vmul.f32 %v5916, %v5926
      %v5953 = vmul.f32 %v5917, %v5926
      %v5954 = vmul.f32 %v5918, %v5926
      %v5955 = vmul.f32 %v5919, %v5926
      %v5956 = vmul.f32 %v5920, %v5926
      %v5957 = vmul.f32 %v5921, %v5926
      %v5958 = vmul.f32 %v5922, %v5926
      %v5959 = vadd.f32 %v5858, %v5927
      %v5960 = vadd.f32 %v5859, %v5928
      %v5961 = vadd.f32 %v5860, %v5929
      %v5962 = vadd.f32 %v5861, %v5930
      %v5963 = vadd.f32 %v5862, %v5931
      %v5964 = vadd.f32 %v5863, %v5932
      %v5965 = vadd.f32 %v5864, %v5933
      %v5966 = vadd.f32 %v5865, %v5934
      %v5967 = vadd.f32 %v5866, %v5935
      %v5968 = vadd.f32 %v5867, %v5936
      %v5969 = vadd.f32 %v5868, %v5937
      %v5970 = vadd.f32 %v5869, %v5938
      %v5971 = vadd.f32 %v5870, %v5939
      %v5972 = vadd.f32 %v5871, %v5940
      %v5973 = vadd.f32 %v5872, %v5941
      %v5974 = vadd.f32 %v5873, %v5942
      %v5975 = vadd.f32 %v5874, %v5943
      %v5976 = vadd.f32 %v5875, %v5944
      %v5977 = vadd.f32 %v5876, %v5945
      %v5978 = vadd.f32 %v5877, %v5946
      %v5979 = vadd.f32 %v5878, %v5947
      %v5980 = vadd.f32 %v5879, %v5948
      %v5981 = vadd.f32 %v5880, %v5949
      %v5982 = vadd.f32 %v5881, %v5950
      %v5983 = vadd.f32 %v5882, %v5951
      %v5984 = vadd.f32 %v5883, %v5952
      %v5985 = vadd.f32 %v5884, %v5953
      %v5986 = vadd.f32 %v5885, %v5954
      %v5987 = vadd.f32 %v5886, %v5955
      %v5988 = vadd.f32 %v5887, %v5956
      %v5989 = vadd.f32 %v5888, %v5957
      %v5990 = vadd.f32 %v5889, %v5958
      %v5991 = vld [vmem:[%s11] sm:$0x1]
      %v5993 = vlaneseq
      %v5994 = vshrl.u32 %v5993, 7
      %v5995 = vsub.s32 0, %v5994
      %v5996 = vrot.slane %v5991, %v5995
      %v5998 = vadd.f32 %v5959, %v5996
      %v5999 = vadd.f32 %v5960, %v5996
      %v6000 = vadd.f32 %v5961, %v5996
      %v6001 = vadd.f32 %v5962, %v5996
      %v6002 = vadd.f32 %v5963, %v5996
      %v6003 = vadd.f32 %v5964, %v5996
      %v6004 = vadd.f32 %v5965, %v5996
      %v6005 = vadd.f32 %v5966, %v5996
      %v6006 = vadd.f32 %v5967, %v5996
      %v6007 = vadd.f32 %v5968, %v5996
      %v6008 = vadd.f32 %v5969, %v5996
      %v6009 = vadd.f32 %v5970, %v5996
      %v6010 = vadd.f32 %v5971, %v5996
      %v6011 = vadd.f32 %v5972, %v5996
      %v6012 = vadd.f32 %v5973, %v5996
      %v6013 = vadd.f32 %v5974, %v5996
      %v6014 = vadd.f32 %v5975, %v5996
      %v6015 = vadd.f32 %v5976, %v5996
      %v6016 = vadd.f32 %v5977, %v5996
      %v6017 = vadd.f32 %v5978, %v5996
      %v6018 = vadd.f32 %v5979, %v5996
      %v6019 = vadd.f32 %v5980, %v5996
      %v6020 = vadd.f32 %v5981, %v5996
      %v6021 = vadd.f32 %v5982, %v5996
      %v6022 = vadd.f32 %v5983, %v5996
      %v6023 = vadd.f32 %v5984, %v5996
      %v6024 = vadd.f32 %v5985, %v5996
      %v6025 = vadd.f32 %v5986, %v5996
      %v6026 = vadd.f32 %v5987, %v5996
      %v6027 = vadd.f32 %v5988, %v5996
      %v6028 = vadd.f32 %v5989, %v5996
      %v6029 = vadd.f32 %v5990, %v5996
      %v6030 = vld [vmem:[%s12] sm:$0xf]
      %v6032 = vsel %vm555, %v5998, 0
      %v6035 = vsel %vm555, %v5999, 0
      %v6038 = vsel %vm555, %v6000, 0
      %v6041 = vsel %vm555, %v6001, 0
      %v6044 = vsel %vm555, %v6002, 0
      %v6047 = vsel %vm555, %v6003, 0
      %v6050 = vsel %vm555, %v6004, 0
      %v6053 = vsel %vm555, %v6005, 0
      %v6056 = vsel %vm555, %v6006, 0
      %v6059 = vsel %vm555, %v6007, 0
      %v6062 = vsel %vm555, %v6008, 0
      %v6065 = vsel %vm555, %v6009, 0
      %v6068 = vsel %vm555, %v6010, 0
      %v6071 = vsel %vm555, %v6011, 0
      %v6074 = vsel %vm555, %v6012, 0
      %v6077 = vsel %vm555, %v6013, 0
      %v6080 = vsel %vm555, %v6014, 0
      %v6083 = vsel %vm555, %v6015, 0
      %v6086 = vsel %vm555, %v6016, 0
      %v6089 = vsel %vm555, %v6017, 0
      %v6092 = vsel %vm555, %v6018, 0
      %v6095 = vsel %vm555, %v6019, 0
      %v6098 = vsel %vm555, %v6020, 0
      %v6101 = vsel %vm555, %v6021, 0
      %v6104 = vsel %vm555, %v6022, 0
      %v6107 = vsel %vm555, %v6023, 0
      %v6110 = vsel %vm555, %v6024, 0
      %v6113 = vsel %vm555, %v6025, 0
      %v6116 = vsel %vm555, %v6026, 0
      %v6119 = vsel %vm555, %v6027, 0
      %v6122 = vsel %vm555, %v6028, 0
      %v6125 = vsel %vm555, %v6029, 0
      %v6128 = vsel %vm652, %v6030, 0
      %6130 = vmatprep.subr.mxu0 0.0
      %6131 = vmatpush1.msra.mxu0 0.0
      %6132 = vmatprep.subr.mxu0 0.0
      %6133 = vmatpush1.msra.mxu0 0.0
      %6134 = vmatprep.subr.mxu0 0.0
      %6135 = vmatpush1.msra.mxu0 0.0
      %6136 = vmatprep.subr.mxu0 0.0
      %6137 = vmatpush1.msra.mxu0 0.0
      %6138 = vmatprep.subr.mxu0 0.0
      %6139 = vmatpush1.msra.mxu0 0.0
      %6140 = vmatprep.subr.mxu0 0.0
      %6141 = vmatpush1.msra.mxu0 0.0
      %6142 = vmatprep.subr.mxu0 0.0
      %6143 = vmatpush1.msra.mxu0 0.0
      %6144 = vmatprep.subr.mxu0 0.0
      %6145 = vmatpush1.msra.mxu0 0.0
      %6146 = vmatprep.subr.mxu0 0.0
      %6147 = vmatpush1.msra.mxu0 0.0
      %6148 = vmatprep.subr.mxu0 0.0
      %6149 = vmatpush1.msra.mxu0 0.0
      %6150 = vmatprep.subr.mxu0 0.0
      %6151 = vmatpush1.msra.mxu0 0.0
      %6152 = vmatprep.subr.mxu0 0.0
      %6153 = vmatpush1.msra.mxu0 0.0
      %6154 = vmatprep.subr.mxu0 0.0
      %6155 = vmatpush1.msra.mxu0 0.0
      %6156 = vmatprep.subr.mxu0 0.0
      %6157 = vmatpush1.msra.mxu0 0.0
      %6158 = vmatprep.subr.mxu0 0.0
      %6159 = vmatpush1.msra.mxu0 0.0
      %6160 = vmatprep.subr.mxu0 0.0
      %6161 = vmatpush1.msra.mxu0 %v6128
      %6162 = vmatprep.subr.mxu0 0.0
      %6163 = vmatpush2.msra.mxu0 0.0
      %6164 = vmatprep.subr.mxu0 0.0
      %6165 = vmatpush2.msra.mxu0 0.0
      %6166 = vmatprep.subr.mxu0 0.0
      %6167 = vmatpush2.msra.mxu0 0.0
      %6168 = vmatprep.subr.mxu0 0.0
      %6169 = vmatpush2.msra.mxu0 0.0
      %6170 = vmatprep.subr.mxu0 0.0
      %6171 = vmatpush2.msra.mxu0 0.0
      %6172 = vmatprep.subr.mxu0 0.0
      %6173 = vmatpush2.msra.mxu0 0.0
      %6174 = vmatprep.subr.mxu0 0.0
      %6175 = vmatpush2.msra.mxu0 0.0
      %6176 = vmatprep.subr.mxu0 0.0
      %6177 = vmatpush2.msra.mxu0 0.0
      %6178 = vmatprep.subr.mxu0 0.0
      %6179 = vmatpush2.msra.mxu0 0.0
      %6180 = vmatprep.subr.mxu0 0.0
      %6181 = vmatpush2.msra.mxu0 0.0
      %6182 = vmatprep.subr.mxu0 0.0
      %6183 = vmatpush2.msra.mxu0 0.0
      %6184 = vmatprep.subr.mxu0 0.0
      %6185 = vmatpush2.msra.mxu0 0.0
      %6186 = vmatprep.subr.mxu0 0.0
      %6187 = vmatpush2.msra.mxu0 0.0
      %6188 = vmatprep.subr.mxu0 0.0
      %6189 = vmatpush2.msra.mxu0 0.0
      %6190 = vmatprep.subr.mxu0 0.0
      %6191 = vmatpush2.msra.mxu0 0.0
      %6192 = vmatprep.subr.mxu0 0.0
      %6193 = vmatpush2.msra.mxu0 0.0
      %6194 = vmatprep.mubr.f32.mxu0 0.0
      %6195 = vmatmul.mubr.f32.gmra.mxu0 %v6032
      %v6196 = vpop.f32.mrf.mxu0
      %v6197 = vadd.f32 0.0, %v6196
      %v6198 = vpop.f32.mrf.mxu0
      %6199 = vmatprep.mubr.f32.mxu0 0.0
      %6200 = vmatmul.mubr.f32.gmra.mxu0 %v6035
      %v6201 = vpop.f32.mrf.mxu0
      %v6202 = vadd.f32 0.0, %v6201
      %v6203 = vpop.f32.mrf.mxu0
      %6204 = vmatprep.mubr.f32.mxu0 0.0
      %6205 = vmatmul.mubr.f32.gmra.mxu0 %v6038
      %v6206 = vpop.f32.mrf.mxu0
      %v6207 = vadd.f32 0.0, %v6206
      %v6208 = vpop.f32.mrf.mxu0
      %6209 = vmatprep.mubr.f32.mxu0 0.0
      %6210 = vmatmul.mubr.f32.gmra.mxu0 %v6041
      %v6211 = vpop.f32.mrf.mxu0
      %v6212 = vadd.f32 0.0, %v6211
      %v6213 = vpop.f32.mrf.mxu0
      %6214 = vmatprep.mubr.f32.mxu0 0.0
      %6215 = vmatmul.mubr.f32.gmra.mxu0 %v6044
      %v6216 = vpop.f32.mrf.mxu0
      %v6217 = vadd.f32 0.0, %v6216
      %v6218 = vpop.f32.mrf.mxu0
      %6219 = vmatprep.mubr.f32.mxu0 0.0
      %6220 = vmatmul.mubr.f32.gmra.mxu0 %v6047
      %v6221 = vpop.f32.mrf.mxu0
      %v6222 = vadd.f32 0.0, %v6221
      %v6223 = vpop.f32.mrf.mxu0
      %6224 = vmatprep.mubr.f32.mxu0 0.0
      %6225 = vmatmul.mubr.f32.gmra.mxu0 %v6050
      %v6226 = vpop.f32.mrf.mxu0
      %v6227 = vadd.f32 0.0, %v6226
      %v6228 = vpop.f32.mrf.mxu0
      %6229 = vmatprep.mubr.f32.mxu0 0.0
      %6230 = vmatmul.mubr.f32.gmra.mxu0 %v6053
      %v6231 = vpop.f32.mrf.mxu0
      %v6232 = vadd.f32 0.0, %v6231
      %v6233 = vpop.f32.mrf.mxu0
      %6234 = vmatprep.mubr.f32.mxu0 0.0
      %6235 = vmatmul.mubr.f32.gmra.mxu0 %v6056
      %v6236 = vpop.f32.mrf.mxu0
      %v6237 = vadd.f32 0.0, %v6236
      %v6238 = vpop.f32.mrf.mxu0
      %6239 = vmatprep.mubr.f32.mxu0 0.0
      %6240 = vmatmul.mubr.f32.gmra.mxu0 %v6059
      %v6241 = vpop.f32.mrf.mxu0
      %v6242 = vadd.f32 0.0, %v6241
      %v6243 = vpop.f32.mrf.mxu0
      %6244 = vmatprep.mubr.f32.mxu0 0.0
      %6245 = vmatmul.mubr.f32.gmra.mxu0 %v6062
      %v6246 = vpop.f32.mrf.mxu0
      %v6247 = vadd.f32 0.0, %v6246
      %v6248 = vpop.f32.mrf.mxu0
      %6249 = vmatprep.mubr.f32.mxu0 0.0
      %6250 = vmatmul.mubr.f32.gmra.mxu0 %v6065
      %v6251 = vpop.f32.mrf.mxu0
      %v6252 = vadd.f32 0.0, %v6251
      %v6253 = vpop.f32.mrf.mxu0
      %6254 = vmatprep.mubr.f32.mxu0 0.0
      %6255 = vmatmul.mubr.f32.gmra.mxu0 %v6068
      %v6256 = vpop.f32.mrf.mxu0
      %v6257 = vadd.f32 0.0, %v6256
      %v6258 = vpop.f32.mrf.mxu0
      %6259 = vmatprep.mubr.f32.mxu0 0.0
      %6260 = vmatmul.mubr.f32.gmra.mxu0 %v6071
      %v6261 = vpop.f32.mrf.mxu0
      %v6262 = vadd.f32 0.0, %v6261
      %v6263 = vpop.f32.mrf.mxu0
      %6264 = vmatprep.mubr.f32.mxu0 0.0
      %6265 = vmatmul.mubr.f32.gmra.mxu0 %v6074
      %v6266 = vpop.f32.mrf.mxu0
      %v6267 = vadd.f32 0.0, %v6266
      %v6268 = vpop.f32.mrf.mxu0
      %6269 = vmatprep.mubr.f32.mxu0 0.0
      %6270 = vmatmul.mubr.f32.gmra.mxu0 %v6077
      %v6271 = vpop.f32.mrf.mxu0
      %v6272 = vadd.f32 0.0, %v6271
      %v6273 = vpop.f32.mrf.mxu0
      %6274 = vmatprep.mubr.f32.mxu0 0.0
      %6275 = vmatmul.mubr.f32.gmra.mxu0 %v6080
      %v6276 = vpop.f32.mrf.mxu0
      %v6277 = vadd.f32 0.0, %v6276
      %v6278 = vpop.f32.mrf.mxu0
      %6279 = vmatprep.mubr.f32.mxu0 0.0
      %6280 = vmatmul.mubr.f32.gmra.mxu0 %v6083
      %v6281 = vpop.f32.mrf.mxu0
      %v6282 = vadd.f32 0.0, %v6281
      %v6283 = vpop.f32.mrf.mxu0
      %6284 = vmatprep.mubr.f32.mxu0 0.0
      %6285 = vmatmul.mubr.f32.gmra.mxu0 %v6086
      %v6286 = vpop.f32.mrf.mxu0
      %v6287 = vadd.f32 0.0, %v6286
      %v6288 = vpop.f32.mrf.mxu0
      %6289 = vmatprep.mubr.f32.mxu0 0.0
      %6290 = vmatmul.mubr.f32.gmra.mxu0 %v6089
      %v6291 = vpop.f32.mrf.mxu0
      %v6292 = vadd.f32 0.0, %v6291
      %v6293 = vpop.f32.mrf.mxu0
      %6294 = vmatprep.mubr.f32.mxu0 0.0
      %6295 = vmatmul.mubr.f32.gmra.mxu0 %v6092
      %v6296 = vpop.f32.mrf.mxu0
      %v6297 = vadd.f32 0.0, %v6296
      %v6298 = vpop.f32.mrf.mxu0
      %6299 = vmatprep.mubr.f32.mxu0 0.0
      %6300 = vmatmul.mubr.f32.gmra.mxu0 %v6095
      %v6301 = vpop.f32.mrf.mxu0
      %v6302 = vadd.f32 0.0, %v6301
      %v6303 = vpop.f32.mrf.mxu0
      %6304 = vmatprep.mubr.f32.mxu0 0.0
      %6305 = vmatmul.mubr.f32.gmra.mxu0 %v6098
      %v6306 = vpop.f32.mrf.mxu0
      %v6307 = vadd.f32 0.0, %v6306
      %v6308 = vpop.f32.mrf.mxu0
      %6309 = vmatprep.mubr.f32.mxu0 0.0
      %6310 = vmatmul.mubr.f32.gmra.mxu0 %v6101
      %v6311 = vpop.f32.mrf.mxu0
      %v6312 = vadd.f32 0.0, %v6311
      %v6313 = vpop.f32.mrf.mxu0
      %6314 = vmatprep.mubr.f32.mxu0 0.0
      %6315 = vmatmul.mubr.f32.gmra.mxu0 %v6104
      %v6316 = vpop.f32.mrf.mxu0
      %v6317 = vadd.f32 0.0, %v6316
      %v6318 = vpop.f32.mrf.mxu0
      %6319 = vmatprep.mubr.f32.mxu0 0.0
      %6320 = vmatmul.mubr.f32.gmra.mxu0 %v6107
      %v6321 = vpop.f32.mrf.mxu0
      %v6322 = vadd.f32 0.0, %v6321
      %v6323 = vpop.f32.mrf.mxu0
      %6324 = vmatprep.mubr.f32.mxu0 0.0
      %6325 = vmatmul.mubr.f32.gmra.mxu0 %v6110
      %v6326 = vpop.f32.mrf.mxu0
      %v6327 = vadd.f32 0.0, %v6326
      %v6328 = vpop.f32.mrf.mxu0
      %6329 = vmatprep.mubr.f32.mxu0 0.0
      %6330 = vmatmul.mubr.f32.gmra.mxu0 %v6113
      %v6331 = vpop.f32.mrf.mxu0
      %v6332 = vadd.f32 0.0, %v6331
      %v6333 = vpop.f32.mrf.mxu0
      %6334 = vmatprep.mubr.f32.mxu0 0.0
      %6335 = vmatmul.mubr.f32.gmra.mxu0 %v6116
      %v6336 = vpop.f32.mrf.mxu0
      %v6337 = vadd.f32 0.0, %v6336
      %v6338 = vpop.f32.mrf.mxu0
      %6339 = vmatprep.mubr.f32.mxu0 0.0
      %6340 = vmatmul.mubr.f32.gmra.mxu0 %v6119
      %v6341 = vpop.f32.mrf.mxu0
      %v6342 = vadd.f32 0.0, %v6341
      %v6343 = vpop.f32.mrf.mxu0
      %6344 = vmatprep.mubr.f32.mxu0 0.0
      %6345 = vmatmul.mubr.f32.gmra.mxu0 %v6122
      %v6346 = vpop.f32.mrf.mxu0
      %v6347 = vadd.f32 0.0, %v6346
      %v6348 = vpop.f32.mrf.mxu0
      %6349 = vmatprep.mubr.f32.mxu0 0.0
      %6350 = vmatmul.mubr.f32.gmra.mxu0 %v6125
      %v6351 = vpop.f32.mrf.mxu0
      %v6352 = vadd.f32 0.0, %v6351
      %v6353 = vpop.f32.mrf.mxu0
      %6354 = vdwg.mxu0
      %v6355 = vld [vmem:[%s13] sm:$0x1]
      %v6357 = vlaneseq
      %v6358 = vshrl.u32 %v6357, 7
      %v6359 = vsub.s32 0, %v6358
      %v6360 = vrot.slane %v6355, %v6359
      %v6362 = vmul.f32 %v6197, %v6360
      %v6363 = vmul.f32 %v6202, %v6360
      %v6364 = vmul.f32 %v6207, %v6360
      %v6365 = vmul.f32 %v6212, %v6360
      %v6366 = vmul.f32 %v6217, %v6360
      %v6367 = vmul.f32 %v6222, %v6360
      %v6368 = vmul.f32 %v6227, %v6360
      %v6369 = vmul.f32 %v6232, %v6360
      %v6370 = vmul.f32 %v6237, %v6360
      %v6371 = vmul.f32 %v6242, %v6360
      %v6372 = vmul.f32 %v6247, %v6360
      %v6373 = vmul.f32 %v6252, %v6360
      %v6374 = vmul.f32 %v6257, %v6360
      %v6375 = vmul.f32 %v6262, %v6360
      %v6376 = vmul.f32 %v6267, %v6360
      %v6377 = vmul.f32 %v6272, %v6360
      %v6378 = vmul.f32 %v6277, %v6360
      %v6379 = vmul.f32 %v6282, %v6360
      %v6380 = vmul.f32 %v6287, %v6360
      %v6381 = vmul.f32 %v6292, %v6360
      %v6382 = vmul.f32 %v6297, %v6360
      %v6383 = vmul.f32 %v6302, %v6360
      %v6384 = vmul.f32 %v6307, %v6360
      %v6385 = vmul.f32 %v6312, %v6360
      %v6386 = vmul.f32 %v6317, %v6360
      %v6387 = vmul.f32 %v6322, %v6360
      %v6388 = vmul.f32 %v6327, %v6360
      %v6389 = vmul.f32 %v6332, %v6360
      %v6390 = vmul.f32 %v6337, %v6360
      %v6391 = vmul.f32 %v6342, %v6360
      %v6392 = vmul.f32 %v6347, %v6360
      %v6393 = vmul.f32 %v6352, %v6360
      %v6394 = vld [vmem:[%s14] sm:$0x1]
      %v6396 = vlaneseq
      %v6397 = vshrl.u32 %v6396, 7
      %v6398 = vsub.s32 0, %v6397
      %v6399 = vrot.slane %v6394, %v6398
      %v6401 = vadd.f32 %v6362, %v6399
      %v6402 = vadd.f32 %v6363, %v6399
      %v6403 = vadd.f32 %v6364, %v6399
      %v6404 = vadd.f32 %v6365, %v6399
      %v6405 = vadd.f32 %v6366, %v6399
      %v6406 = vadd.f32 %v6367, %v6399
      %v6407 = vadd.f32 %v6368, %v6399
      %v6408 = vadd.f32 %v6369, %v6399
      %v6409 = vadd.f32 %v6370, %v6399
      %v6410 = vadd.f32 %v6371, %v6399
      %v6411 = vadd.f32 %v6372, %v6399
      %v6412 = vadd.f32 %v6373, %v6399
      %v6413 = vadd.f32 %v6374, %v6399
      %v6414 = vadd.f32 %v6375, %v6399
      %v6415 = vadd.f32 %v6376, %v6399
      %v6416 = vadd.f32 %v6377, %v6399
      %v6417 = vadd.f32 %v6378, %v6399
      %v6418 = vadd.f32 %v6379, %v6399
      %v6419 = vadd.f32 %v6380, %v6399
      %v6420 = vadd.f32 %v6381, %v6399
      %v6421 = vadd.f32 %v6382, %v6399
      %v6422 = vadd.f32 %v6383, %v6399
      %v6423 = vadd.f32 %v6384, %v6399
      %v6424 = vadd.f32 %v6385, %v6399
      %v6425 = vadd.f32 %v6386, %v6399
      %v6426 = vadd.f32 %v6387, %v6399
      %v6427 = vadd.f32 %v6388, %v6399
      %v6428 = vadd.f32 %v6389, %v6399
      %v6429 = vadd.f32 %v6390, %v6399
      %v6430 = vadd.f32 %v6391, %v6399
      %v6431 = vadd.f32 %v6392, %v6399
      %v6432 = vadd.f32 %v6393, %v6399
      %v6433 = vxor.u32 %v6401, 2147483648
      %v6434 = vxor.u32 %v6402, 2147483648
      %v6435 = vxor.u32 %v6403, 2147483648
      %v6436 = vxor.u32 %v6404, 2147483648
      %v6437 = vxor.u32 %v6405, 2147483648
      %v6438 = vxor.u32 %v6406, 2147483648
      %v6439 = vxor.u32 %v6407, 2147483648
      %v6440 = vxor.u32 %v6408, 2147483648
      %v6441 = vxor.u32 %v6409, 2147483648
      %v6442 = vxor.u32 %v6410, 2147483648
      %v6443 = vxor.u32 %v6411, 2147483648
      %v6444 = vxor.u32 %v6412, 2147483648
      %v6445 = vxor.u32 %v6413, 2147483648
      %v6446 = vxor.u32 %v6414, 2147483648
      %v6447 = vxor.u32 %v6415, 2147483648
      %v6448 = vxor.u32 %v6416, 2147483648
      %v6449 = vxor.u32 %v6417, 2147483648
      %v6450 = vxor.u32 %v6418, 2147483648
      %v6451 = vxor.u32 %v6419, 2147483648
      %v6452 = vxor.u32 %v6420, 2147483648
      %v6453 = vxor.u32 %v6421, 2147483648
      %v6454 = vxor.u32 %v6422, 2147483648
      %v6455 = vxor.u32 %v6423, 2147483648
      %v6456 = vxor.u32 %v6424, 2147483648
      %v6457 = vxor.u32 %v6425, 2147483648
      %v6458 = vxor.u32 %v6426, 2147483648
      %v6459 = vxor.u32 %v6427, 2147483648
      %v6460 = vxor.u32 %v6428, 2147483648
      %v6461 = vxor.u32 %v6429, 2147483648
      %v6462 = vxor.u32 %v6430, 2147483648
      %v6463 = vxor.u32 %v6431, 2147483648
      %v6464 = vxor.u32 %v6432, 2147483648
      %v6465 = vmul.f32 %v6433, 1.442695
      %v6466 = vpow.pop %v6465
      %v6467 = vmul.f32 %v6434, 1.442695
      %v6468 = vpow.pop %v6467
      %v6469 = vmul.f32 %v6435, 1.442695
      %v6470 = vpow.pop %v6469
      %v6471 = vmul.f32 %v6436, 1.442695
      %v6472 = vpow.pop %v6471
      %v6473 = vmul.f32 %v6437, 1.442695
      %v6474 = vpow.pop %v6473
      %v6475 = vmul.f32 %v6438, 1.442695
      %v6476 = vpow.pop %v6475
      %v6477 = vmul.f32 %v6439, 1.442695
      %v6478 = vpow.pop %v6477
      %v6479 = vmul.f32 %v6440, 1.442695
      %v6480 = vpow.pop %v6479
      %v6481 = vmul.f32 %v6441, 1.442695
      %v6482 = vpow.pop %v6481
      %v6483 = vmul.f32 %v6442, 1.442695
      %v6484 = vpow.pop %v6483
      %v6485 = vmul.f32 %v6443, 1.442695
      %v6486 = vpow.pop %v6485
      %v6487 = vmul.f32 %v6444, 1.442695
      %v6488 = vpow.pop %v6487
      %v6489 = vmul.f32 %v6445, 1.442695
      %v6490 = vpow.pop %v6489
      %v6491 = vmul.f32 %v6446, 1.442695
      %v6492 = vpow.pop %v6491
      %v6493 = vmul.f32 %v6447, 1.442695
      %v6494 = vpow.pop %v6493
      %v6495 = vmul.f32 %v6448, 1.442695
      %v6496 = vpow.pop %v6495
      %v6497 = vmul.f32 %v6449, 1.442695
      %v6498 = vpow.pop %v6497
      %v6499 = vmul.f32 %v6450, 1.442695
      %v6500 = vpow.pop %v6499
      %v6501 = vmul.f32 %v6451, 1.442695
      %v6502 = vpow.pop %v6501
      %v6503 = vmul.f32 %v6452, 1.442695
      %v6504 = vpow.pop %v6503
      %v6505 = vmul.f32 %v6453, 1.442695
      %v6506 = vpow.pop %v6505
      %v6507 = vmul.f32 %v6454, 1.442695
      %v6508 = vpow.pop %v6507
      %v6509 = vmul.f32 %v6455, 1.442695
      %v6510 = vpow.pop %v6509
      %v6511 = vmul.f32 %v6456, 1.442695
      %v6512 = vpow.pop %v6511
      %v6513 = vmul.f32 %v6457, 1.442695
      %v6514 = vpow.pop %v6513
      %v6515 = vmul.f32 %v6458, 1.442695
      %v6516 = vpow.pop %v6515
      %v6517 = vmul.f32 %v6459, 1.442695
      %v6518 = vpow.pop %v6517
      %v6519 = vmul.f32 %v6460, 1.442695
      %v6520 = vpow.pop %v6519
      %v6521 = vmul.f32 %v6461, 1.442695
      %v6522 = vpow.pop %v6521
      %v6523 = vmul.f32 %v6462, 1.442695
      %v6524 = vpow.pop %v6523
      %v6525 = vmul.f32 %v6463, 1.442695
      %v6526 = vpow.pop %v6525
      %v6527 = vmul.f32 %v6464, 1.442695
      %v6528 = vpow.pop %v6527
      %v6529 = vadd.f32 %v6466, 1.0
      %v6530 = vadd.f32 %v6468, 1.0
      %v6531 = vadd.f32 %v6470, 1.0
      %v6532 = vadd.f32 %v6472, 1.0
      %v6533 = vadd.f32 %v6474, 1.0
      %v6534 = vadd.f32 %v6476, 1.0
      %v6535 = vadd.f32 %v6478, 1.0
      %v6536 = vadd.f32 %v6480, 1.0
      %v6537 = vadd.f32 %v6482, 1.0
      %v6538 = vadd.f32 %v6484, 1.0
      %v6539 = vadd.f32 %v6486, 1.0
      %v6540 = vadd.f32 %v6488, 1.0
      %v6541 = vadd.f32 %v6490, 1.0
      %v6542 = vadd.f32 %v6492, 1.0
      %v6543 = vadd.f32 %v6494, 1.0
      %v6544 = vadd.f32 %v6496, 1.0
      %v6545 = vadd.f32 %v6498, 1.0
      %v6546 = vadd.f32 %v6500, 1.0
      %v6547 = vadd.f32 %v6502, 1.0
      %v6548 = vadd.f32 %v6504, 1.0
      %v6549 = vadd.f32 %v6506, 1.0
      %v6550 = vadd.f32 %v6508, 1.0
      %v6551 = vadd.f32 %v6510, 1.0
      %v6552 = vadd.f32 %v6512, 1.0
      %v6553 = vadd.f32 %v6514, 1.0
      %v6554 = vadd.f32 %v6516, 1.0
      %v6555 = vadd.f32 %v6518, 1.0
      %v6556 = vadd.f32 %v6520, 1.0
      %v6557 = vadd.f32 %v6522, 1.0
      %v6558 = vadd.f32 %v6524, 1.0
      %v6559 = vadd.f32 %v6526, 1.0
      %v6560 = vadd.f32 %v6528, 1.0
      %v6561 = vrcp.pop %v6529
      %v6562 = vmul.f32 1.0, %v6561
      %v6563 = vrcp.pop %v6530
      %v6564 = vmul.f32 1.0, %v6563
      %v6565 = vrcp.pop %v6531
      %v6566 = vmul.f32 1.0, %v6565
      %v6567 = vrcp.pop %v6532
      %v6568 = vmul.f32 1.0, %v6567
      %v6569 = vrcp.pop %v6533
      %v6570 = vmul.f32 1.0, %v6569
      %v6571 = vrcp.pop %v6534
      %v6572 = vmul.f32 1.0, %v6571
      %v6573 = vrcp.pop %v6535
      %v6574 = vmul.f32 1.0, %v6573
      %v6575 = vrcp.pop %v6536
      %v6576 = vmul.f32 1.0, %v6575
      %v6577 = vrcp.pop %v6537
      %v6578 = vmul.f32 1.0, %v6577
      %v6579 = vrcp.pop %v6538
      %v6580 = vmul.f32 1.0, %v6579
      %v6581 = vrcp.pop %v6539
      %v6582 = vmul.f32 1.0, %v6581
      %v6583 = vrcp.pop %v6540
      %v6584 = vmul.f32 1.0, %v6583
      %v6585 = vrcp.pop %v6541
      %v6586 = vmul.f32 1.0, %v6585
      %v6587 = vrcp.pop %v6542
      %v6588 = vmul.f32 1.0, %v6587
      %v6589 = vrcp.pop %v6543
      %v6590 = vmul.f32 1.0, %v6589
      %v6591 = vrcp.pop %v6544
      %v6592 = vmul.f32 1.0, %v6591
      %v6593 = vrcp.pop %v6545
      %v6594 = vmul.f32 1.0, %v6593
      %v6595 = vrcp.pop %v6546
      %v6596 = vmul.f32 1.0, %v6595
      %v6597 = vrcp.pop %v6547
      %v6598 = vmul.f32 1.0, %v6597
      %v6599 = vrcp.pop %v6548
      %v6600 = vmul.f32 1.0, %v6599
      %v6601 = vrcp.pop %v6549
      %v6602 = vmul.f32 1.0, %v6601
      %v6603 = vrcp.pop %v6550
      %v6604 = vmul.f32 1.0, %v6603
      %v6605 = vrcp.pop %v6551
      %v6606 = vmul.f32 1.0, %v6605
      %v6607 = vrcp.pop %v6552
      %v6608 = vmul.f32 1.0, %v6607
      %v6609 = vrcp.pop %v6553
      %v6610 = vmul.f32 1.0, %v6609
      %v6611 = vrcp.pop %v6554
      %v6612 = vmul.f32 1.0, %v6611
      %v6613 = vrcp.pop %v6555
      %v6614 = vmul.f32 1.0, %v6613
      %v6615 = vrcp.pop %v6556
      %v6616 = vmul.f32 1.0, %v6615
      %v6617 = vrcp.pop %v6557
      %v6618 = vmul.f32 1.0, %v6617
      %v6619 = vrcp.pop %v6558
      %v6620 = vmul.f32 1.0, %v6619
      %v6621 = vrcp.pop %v6559
      %v6622 = vmul.f32 1.0, %v6621
      %v6623 = vrcp.pop %v6560
      %v6624 = vmul.f32 1.0, %v6623
      %v6625 = vmul.f32 %v6401, %v6562
      %v6626 = vmul.f32 %v6402, %v6564
      %v6627 = vmul.f32 %v6403, %v6566
      %v6628 = vmul.f32 %v6404, %v6568
      %v6629 = vmul.f32 %v6405, %v6570
      %v6630 = vmul.f32 %v6406, %v6572
      %v6631 = vmul.f32 %v6407, %v6574
      %v6632 = vmul.f32 %v6408, %v6576
      %v6633 = vmul.f32 %v6409, %v6578
      %v6634 = vmul.f32 %v6410, %v6580
      %v6635 = vmul.f32 %v6411, %v6582
      %v6636 = vmul.f32 %v6412, %v6584
      %v6637 = vmul.f32 %v6413, %v6586
      %v6638 = vmul.f32 %v6414, %v6588
      %v6639 = vmul.f32 %v6415, %v6590
      %v6640 = vmul.f32 %v6416, %v6592
      %v6641 = vmul.f32 %v6417, %v6594
      %v6642 = vmul.f32 %v6418, %v6596
      %v6643 = vmul.f32 %v6419, %v6598
      %v6644 = vmul.f32 %v6420, %v6600
      %v6645 = vmul.f32 %v6421, %v6602
      %v6646 = vmul.f32 %v6422, %v6604
      %v6647 = vmul.f32 %v6423, %v6606
      %v6648 = vmul.f32 %v6424, %v6608
      %v6649 = vmul.f32 %v6425, %v6610
      %v6650 = vmul.f32 %v6426, %v6612
      %v6651 = vmul.f32 %v6427, %v6614
      %v6652 = vmul.f32 %v6428, %v6616
      %v6653 = vmul.f32 %v6429, %v6618
      %v6654 = vmul.f32 %v6430, %v6620
      %v6655 = vmul.f32 %v6431, %v6622
      %v6656 = vmul.f32 %v6432, %v6624
      %v6657 = vxor.u32 %v6625, 2147483648
      %v6658 = vxor.u32 %v6626, 2147483648
      %v6659 = vxor.u32 %v6627, 2147483648
      %v6660 = vxor.u32 %v6628, 2147483648
      %v6661 = vxor.u32 %v6629, 2147483648
      %v6662 = vxor.u32 %v6630, 2147483648
      %v6663 = vxor.u32 %v6631, 2147483648
      %v6664 = vxor.u32 %v6632, 2147483648
      %v6665 = vxor.u32 %v6633, 2147483648
      %v6666 = vxor.u32 %v6634, 2147483648
      %v6667 = vxor.u32 %v6635, 2147483648
      %v6668 = vxor.u32 %v6636, 2147483648
      %v6669 = vxor.u32 %v6637, 2147483648
      %v6670 = vxor.u32 %v6638, 2147483648
      %v6671 = vxor.u32 %v6639, 2147483648
      %v6672 = vxor.u32 %v6640, 2147483648
      %v6673 = vxor.u32 %v6641, 2147483648
      %v6674 = vxor.u32 %v6642, 2147483648
      %v6675 = vxor.u32 %v6643, 2147483648
      %v6676 = vxor.u32 %v6644, 2147483648
      %v6677 = vxor.u32 %v6645, 2147483648
      %v6678 = vxor.u32 %v6646, 2147483648
      %v6679 = vxor.u32 %v6647, 2147483648
      %v6680 = vxor.u32 %v6648, 2147483648
      %v6681 = vxor.u32 %v6649, 2147483648
      %v6682 = vxor.u32 %v6650, 2147483648
      %v6683 = vxor.u32 %v6651, 2147483648
      %v6684 = vxor.u32 %v6652, 2147483648
      %v6685 = vxor.u32 %v6653, 2147483648
      %v6686 = vxor.u32 %v6654, 2147483648
      %v6687 = vxor.u32 %v6655, 2147483648
      %v6688 = vxor.u32 %v6656, 2147483648
      %v6689 = vmul.f32 %v6657, 1.442695
      %v6690 = vpow.pop %v6689
      %v6691 = vmul.f32 %v6658, 1.442695
      %v6692 = vpow.pop %v6691
      %v6693 = vmul.f32 %v6659, 1.442695
      %v6694 = vpow.pop %v6693
      %v6695 = vmul.f32 %v6660, 1.442695
      %v6696 = vpow.pop %v6695
      %v6697 = vmul.f32 %v6661, 1.442695
      %v6698 = vpow.pop %v6697
      %v6699 = vmul.f32 %v6662, 1.442695
      %v6700 = vpow.pop %v6699
      %v6701 = vmul.f32 %v6663, 1.442695
      %v6702 = vpow.pop %v6701
      %v6703 = vmul.f32 %v6664, 1.442695
      %v6704 = vpow.pop %v6703
      %v6705 = vmul.f32 %v6665, 1.442695
      %v6706 = vpow.pop %v6705
      %v6707 = vmul.f32 %v6666, 1.442695
      %v6708 = vpow.pop %v6707
      %v6709 = vmul.f32 %v6667, 1.442695
      %v6710 = vpow.pop %v6709
      %v6711 = vmul.f32 %v6668, 1.442695
      %v6712 = vpow.pop %v6711
      %v6713 = vmul.f32 %v6669, 1.442695
      %v6714 = vpow.pop %v6713
      %v6715 = vmul.f32 %v6670, 1.442695
      %v6716 = vpow.pop %v6715
      %v6717 = vmul.f32 %v6671, 1.442695
      %v6718 = vpow.pop %v6717
      %v6719 = vmul.f32 %v6672, 1.442695
      %v6720 = vpow.pop %v6719
      %v6721 = vmul.f32 %v6673, 1.442695
      %v6722 = vpow.pop %v6721
      %v6723 = vmul.f32 %v6674, 1.442695
      %v6724 = vpow.pop %v6723
      %v6725 = vmul.f32 %v6675, 1.442695
      %v6726 = vpow.pop %v6725
      %v6727 = vmul.f32 %v6676, 1.442695
      %v6728 = vpow.pop %v6727
      %v6729 = vmul.f32 %v6677, 1.442695
      %v6730 = vpow.pop %v6729
      %v6731 = vmul.f32 %v6678, 1.442695
      %v6732 = vpow.pop %v6731
      %v6733 = vmul.f32 %v6679, 1.442695
      %v6734 = vpow.pop %v6733
      %v6735 = vmul.f32 %v6680, 1.442695
      %v6736 = vpow.pop %v6735
      %v6737 = vmul.f32 %v6681, 1.442695
      %v6738 = vpow.pop %v6737
      %v6739 = vmul.f32 %v6682, 1.442695
      %v6740 = vpow.pop %v6739
      %v6741 = vmul.f32 %v6683, 1.442695
      %v6742 = vpow.pop %v6741
      %v6743 = vmul.f32 %v6684, 1.442695
      %v6744 = vpow.pop %v6743
      %v6745 = vmul.f32 %v6685, 1.442695
      %v6746 = vpow.pop %v6745
      %v6747 = vmul.f32 %v6686, 1.442695
      %v6748 = vpow.pop %v6747
      %v6749 = vmul.f32 %v6687, 1.442695
      %v6750 = vpow.pop %v6749
      %v6751 = vmul.f32 %v6688, 1.442695
      %v6752 = vpow.pop %v6751
      %v6753 = vadd.f32 %v6690, 1.0
      %v6754 = vadd.f32 %v6692, 1.0
      %v6755 = vadd.f32 %v6694, 1.0
      %v6756 = vadd.f32 %v6696, 1.0
      %v6757 = vadd.f32 %v6698, 1.0
      %v6758 = vadd.f32 %v6700, 1.0
      %v6759 = vadd.f32 %v6702, 1.0
      %v6760 = vadd.f32 %v6704, 1.0
      %v6761 = vadd.f32 %v6706, 1.0
      %v6762 = vadd.f32 %v6708, 1.0
      %v6763 = vadd.f32 %v6710, 1.0
      %v6764 = vadd.f32 %v6712, 1.0
      %v6765 = vadd.f32 %v6714, 1.0
      %v6766 = vadd.f32 %v6716, 1.0
      %v6767 = vadd.f32 %v6718, 1.0
      %v6768 = vadd.f32 %v6720, 1.0
      %v6769 = vadd.f32 %v6722, 1.0
      %v6770 = vadd.f32 %v6724, 1.0
      %v6771 = vadd.f32 %v6726, 1.0
      %v6772 = vadd.f32 %v6728, 1.0
      %v6773 = vadd.f32 %v6730, 1.0
      %v6774 = vadd.f32 %v6732, 1.0
      %v6775 = vadd.f32 %v6734, 1.0
      %v6776 = vadd.f32 %v6736, 1.0
      %v6777 = vadd.f32 %v6738, 1.0
      %v6778 = vadd.f32 %v6740, 1.0
      %v6779 = vadd.f32 %v6742, 1.0
      %v6780 = vadd.f32 %v6744, 1.0
      %v6781 = vadd.f32 %v6746, 1.0
      %v6782 = vadd.f32 %v6748, 1.0
      %v6783 = vadd.f32 %v6750, 1.0
      %v6784 = vadd.f32 %v6752, 1.0
      %v6785 = vrcp.pop %v6753
      %v6786 = vmul.f32 1.0, %v6785
      %v6787 = vrcp.pop %v6754
      %v6788 = vmul.f32 1.0, %v6787
      %v6789 = vrcp.pop %v6755
      %v6790 = vmul.f32 1.0, %v6789
      %v6791 = vrcp.pop %v6756
      %v6792 = vmul.f32 1.0, %v6791
      %v6793 = vrcp.pop %v6757
      %v6794 = vmul.f32 1.0, %v6793
      %v6795 = vrcp.pop %v6758
      %v6796 = vmul.f32 1.0, %v6795
      %v6797 = vrcp.pop %v6759
      %v6798 = vmul.f32 1.0, %v6797
      %v6799 = vrcp.pop %v6760
      %v6800 = vmul.f32 1.0, %v6799
      %v6801 = vrcp.pop %v6761
      %v6802 = vmul.f32 1.0, %v6801
      %v6803 = vrcp.pop %v6762
      %v6804 = vmul.f32 1.0, %v6803
      %v6805 = vrcp.pop %v6763
      %v6806 = vmul.f32 1.0, %v6805
      %v6807 = vrcp.pop %v6764
      %v6808 = vmul.f32 1.0, %v6807
      %v6809 = vrcp.pop %v6765
      %v6810 = vmul.f32 1.0, %v6809
      %v6811 = vrcp.pop %v6766
      %v6812 = vmul.f32 1.0, %v6811
      %v6813 = vrcp.pop %v6767
      %v6814 = vmul.f32 1.0, %v6813
      %v6815 = vrcp.pop %v6768
      %v6816 = vmul.f32 1.0, %v6815
      %v6817 = vrcp.pop %v6769
      %v6818 = vmul.f32 1.0, %v6817
      %v6819 = vrcp.pop %v6770
      %v6820 = vmul.f32 1.0, %v6819
      %v6821 = vrcp.pop %v6771
      %v6822 = vmul.f32 1.0, %v6821
      %v6823 = vrcp.pop %v6772
      %v6824 = vmul.f32 1.0, %v6823
      %v6825 = vrcp.pop %v6773
      %v6826 = vmul.f32 1.0, %v6825
      %v6827 = vrcp.pop %v6774
      %v6828 = vmul.f32 1.0, %v6827
      %v6829 = vrcp.pop %v6775
      %v6830 = vmul.f32 1.0, %v6829
      %v6831 = vrcp.pop %v6776
      %v6832 = vmul.f32 1.0, %v6831
      %v6833 = vrcp.pop %v6777
      %v6834 = vmul.f32 1.0, %v6833
      %v6835 = vrcp.pop %v6778
      %v6836 = vmul.f32 1.0, %v6835
      %v6837 = vrcp.pop %v6779
      %v6838 = vmul.f32 1.0, %v6837
      %v6839 = vrcp.pop %v6780
      %v6840 = vmul.f32 1.0, %v6839
      %v6841 = vrcp.pop %v6781
      %v6842 = vmul.f32 1.0, %v6841
      %v6843 = vrcp.pop %v6782
      %v6844 = vmul.f32 1.0, %v6843
      %v6845 = vrcp.pop %v6783
      %v6846 = vmul.f32 1.0, %v6845
      %v6847 = vrcp.pop %v6784
      %v6848 = vmul.f32 1.0, %v6847
      %v6849 = vld [vmem:[%s509] sm:$0xff]
      %v6850 = vld [vmem:[%s509 + $0x8] sm:$0xff]
      %v6851 = vld [vmem:[%s509 + $0x10] sm:$0xff]
      %v6852 = vld [vmem:[%s509 + $0x18] sm:$0xff]
      %v6853 = vld [vmem:[%s509 + $0x20] sm:$0xff]
      %v6854 = vld [vmem:[%s509 + $0x28] sm:$0xff]
      %v6855 = vld [vmem:[%s509 + $0x30] sm:$0xff]
      %v6856 = vld [vmem:[%s509 + $0x38] sm:$0xff]
      %v6857 = vld [vmem:[%s509 + $0x40] sm:$0xff]
      %v6858 = vld [vmem:[%s509 + $0x48] sm:$0xff]
      %v6859 = vld [vmem:[%s509 + $0x50] sm:$0xff]
      %v6860 = vld [vmem:[%s509 + $0x58] sm:$0xff]
      %v6861 = vld [vmem:[%s509 + $0x60] sm:$0xff]
      %v6862 = vld [vmem:[%s509 + $0x68] sm:$0xff]
      %v6863 = vld [vmem:[%s509 + $0x70] sm:$0xff]
      %v6864 = vld [vmem:[%s509 + $0x78] sm:$0xff]
      %v6865 = vld [vmem:[%s509 + $0x80] sm:$0xff]
      %v6866 = vld [vmem:[%s509 + $0x88] sm:$0xff]
      %v6867 = vld [vmem:[%s509 + $0x90] sm:$0xff]
      %v6868 = vld [vmem:[%s509 + $0x98] sm:$0xff]
      %v6869 = vld [vmem:[%s509 + $0xa0] sm:$0xff]
      %v6870 = vld [vmem:[%s509 + $0xa8] sm:$0xff]
      %v6871 = vld [vmem:[%s509 + $0xb0] sm:$0xff]
      %v6872 = vld [vmem:[%s509 + $0xb8] sm:$0xff]
      %v6873 = vld [vmem:[%s509 + $0xc0] sm:$0xff]
      %v6874 = vld [vmem:[%s509 + $0xc8] sm:$0xff]
      %v6875 = vld [vmem:[%s509 + $0xd0] sm:$0xff]
      %v6876 = vld [vmem:[%s509 + $0xd8] sm:$0xff]
      %v6877 = vld [vmem:[%s509 + $0xe0] sm:$0xff]
      %v6878 = vld [vmem:[%s509 + $0xe8] sm:$0xff]
      %v6879 = vld [vmem:[%s509 + $0xf0] sm:$0xff]
      %v6880 = vld [vmem:[%s509 + $0xf8] sm:$0xff]
      %v6881 = vmul.f32 %v6849, %v6786
      %v6882 = vmul.f32 %v6850, %v6788
      %v6883 = vmul.f32 %v6851, %v6790
      %v6884 = vmul.f32 %v6852, %v6792
      %v6885 = vmul.f32 %v6853, %v6794
      %v6886 = vmul.f32 %v6854, %v6796
      %v6887 = vmul.f32 %v6855, %v6798
      %v6888 = vmul.f32 %v6856, %v6800
      %v6889 = vmul.f32 %v6857, %v6802
      %v6890 = vmul.f32 %v6858, %v6804
      %v6891 = vmul.f32 %v6859, %v6806
      %v6892 = vmul.f32 %v6860, %v6808
      %v6893 = vmul.f32 %v6861, %v6810
      %v6894 = vmul.f32 %v6862, %v6812
      %v6895 = vmul.f32 %v6863, %v6814
      %v6896 = vmul.f32 %v6864, %v6816
      %v6897 = vmul.f32 %v6865, %v6818
      %v6898 = vmul.f32 %v6866, %v6820
      %v6899 = vmul.f32 %v6867, %v6822
      %v6900 = vmul.f32 %v6868, %v6824
      %v6901 = vmul.f32 %v6869, %v6826
      %v6902 = vmul.f32 %v6870, %v6828
      %v6903 = vmul.f32 %v6871, %v6830
      %v6904 = vmul.f32 %v6872, %v6832
      %v6905 = vmul.f32 %v6873, %v6834
      %v6906 = vmul.f32 %v6874, %v6836
      %v6907 = vmul.f32 %v6875, %v6838
      %v6908 = vmul.f32 %v6876, %v6840
      %v6909 = vmul.f32 %v6877, %v6842
      %v6910 = vmul.f32 %v6878, %v6844
      %v6911 = vmul.f32 %v6879, %v6846
      %v6912 = vmul.f32 %v6880, %v6848
      %v6913 = vadd.f32 %v6881, %v6849
      %v6914 = vadd.f32 %v6882, %v6850
      %v6915 = vadd.f32 %v6883, %v6851
      %v6916 = vadd.f32 %v6884, %v6852
      %v6917 = vadd.f32 %v6885, %v6853
      %v6918 = vadd.f32 %v6886, %v6854
      %v6919 = vadd.f32 %v6887, %v6855
      %v6920 = vadd.f32 %v6888, %v6856
      %v6921 = vadd.f32 %v6889, %v6857
      %v6922 = vadd.f32 %v6890, %v6858
      %v6923 = vadd.f32 %v6891, %v6859
      %v6924 = vadd.f32 %v6892, %v6860
      %v6925 = vadd.f32 %v6893, %v6861
      %v6926 = vadd.f32 %v6894, %v6862
      %v6927 = vadd.f32 %v6895, %v6863
      %v6928 = vadd.f32 %v6896, %v6864
      %v6929 = vadd.f32 %v6897, %v6865
      %v6930 = vadd.f32 %v6898, %v6866
      %v6931 = vadd.f32 %v6899, %v6867
      %v6932 = vadd.f32 %v6900, %v6868
      %v6933 = vadd.f32 %v6901, %v6869
      %v6934 = vadd.f32 %v6902, %v6870
      %v6935 = vadd.f32 %v6903, %v6871
      %v6936 = vadd.f32 %v6904, %v6872
      %v6937 = vadd.f32 %v6905, %v6873
      %v6938 = vadd.f32 %v6906, %v6874
      %v6939 = vadd.f32 %v6907, %v6875
      %v6940 = vadd.f32 %v6908, %v6876
      %v6941 = vadd.f32 %v6909, %v6877
      %v6942 = vadd.f32 %v6910, %v6878
      %v6943 = vadd.f32 %v6911, %v6879
      %v6944 = vadd.f32 %v6912, %v6880
      %6945 = vst.msk [vmem:[%s514] sm:$0xff] %vm555, %v6913
      %6946 = vst.msk [vmem:[%s514 + $0x8] sm:$0xff] %vm555, %v6914
      %6947 = vst.msk [vmem:[%s514 + $0x10] sm:$0xff] %vm555, %v6915
      %6948 = vst.msk [vmem:[%s514 + $0x18] sm:$0xff] %vm555, %v6916
      %6949 = vst.msk [vmem:[%s514 + $0x20] sm:$0xff] %vm555, %v6917
      %6950 = vst.msk [vmem:[%s514 + $0x28] sm:$0xff] %vm555, %v6918
      %6951 = vst.msk [vmem:[%s514 + $0x30] sm:$0xff] %vm555, %v6919
      %6952 = vst.msk [vmem:[%s514 + $0x38] sm:$0xff] %vm555, %v6920
      %6953 = vst.msk [vmem:[%s514 + $0x40] sm:$0xff] %vm555, %v6921
      %6954 = vst.msk [vmem:[%s514 + $0x48] sm:$0xff] %vm555, %v6922
      %6955 = vst.msk [vmem:[%s514 + $0x50] sm:$0xff] %vm555, %v6923
      %6956 = vst.msk [vmem:[%s514 + $0x58] sm:$0xff] %vm555, %v6924
      %6957 = vst.msk [vmem:[%s514 + $0x60] sm:$0xff] %vm555, %v6925
      %6958 = vst.msk [vmem:[%s514 + $0x68] sm:$0xff] %vm555, %v6926
      %6959 = vst.msk [vmem:[%s514 + $0x70] sm:$0xff] %vm555, %v6927
      %6960 = vst.msk [vmem:[%s514 + $0x78] sm:$0xff] %vm555, %v6928
      %6961 = vst.msk [vmem:[%s514 + $0x80] sm:$0xff] %vm555, %v6929
      %6962 = vst.msk [vmem:[%s514 + $0x88] sm:$0xff] %vm555, %v6930
      %6963 = vst.msk [vmem:[%s514 + $0x90] sm:$0xff] %vm555, %v6931
      %6964 = vst.msk [vmem:[%s514 + $0x98] sm:$0xff] %vm555, %v6932
      %6965 = vst.msk [vmem:[%s514 + $0xa0] sm:$0xff] %vm555, %v6933
      %6966 = vst.msk [vmem:[%s514 + $0xa8] sm:$0xff] %vm555, %v6934
      %6967 = vst.msk [vmem:[%s514 + $0xb0] sm:$0xff] %vm555, %v6935
      %6968 = vst.msk [vmem:[%s514 + $0xb8] sm:$0xff] %vm555, %v6936
      %6969 = vst.msk [vmem:[%s514 + $0xc0] sm:$0xff] %vm555, %v6937
      %6970 = vst.msk [vmem:[%s514 + $0xc8] sm:$0xff] %vm555, %v6938
      %6971 = vst.msk [vmem:[%s514 + $0xd0] sm:$0xff] %vm555, %v6939
      %6972 = vst.msk [vmem:[%s514 + $0xd8] sm:$0xff] %vm555, %v6940
      %6973 = vst.msk [vmem:[%s514 + $0xe0] sm:$0xff] %vm555, %v6941
      %6974 = vst.msk [vmem:[%s514 + $0xe8] sm:$0xff] %vm555, %v6942
      %6975 = vst.msk [vmem:[%s514 + $0xf0] sm:$0xff] %vm555, %v6943
      %6976 = vst.msk [vmem:[%s514 + $0xf8] sm:$0xff] %vm555, %v6944
      %p6977 = scmp.lt.s32.totalorder %s26, 1
      %s6978 = scalar_select %p6977, %s26, 1
      %s6979 = smul.addr %s6978, 32
      %s6980 = smul.addr %s6979, 8
      %s6981 = scalar_lea.vmem %s15, %s6980
      // Predicated region
      $region81: #{tpu_custom_call.1} parent=79 // pred_check
        %p6982 = pneg %p369
      $region82: #{tpu_custom_call.1} parent=79 // pred_check_branch
        %6984 = sbr.rel (%p6982) target = $region84
      $region83: #{tpu_custom_call.1} parent=79 // pred_region
        _
      $region84: #{tpu_custom_call.1} parent=79 // pred_fallthru
        _
    $region80: #{tpu_custom_call.1} parent=5 // pred_fallthru
      _
    %p6985 = scmp.le.s32.totalorder 2, %s21
    // Predicated region
    $region85: #{tpu_custom_call.1} parent=5 // pred_check
      %p6986 = pneg %p6985
    $region86: #{tpu_custom_call.1} parent=5 // pred_check_branch
      %6988 = sbr.rel (%p6986) target = $region88
    $region87: #{tpu_custom_call.1} parent=5 // pred_region
      %s6989 = ssub.s32 %s21, 2
      // Predicated region
      $region89: #{tpu_custom_call.1} parent=87 // pred_check
        %p6990 = pneg %p375
      $region90: #{tpu_custom_call.1} parent=87 // pred_check_branch
        %6992 = sbr.rel (%p6990) target = $region92
      $region91: #{tpu_custom_call.1} parent=87 // pred_region
        %p6993 = scmp.lt.s32.totalorder %s27, 1
        %s6994 = scalar_select %p6993, %s27, 1
        %s6995 = smul.addr %s6994, 32
        %s6996 = smul.addr %s6995, 8
        %s6997 = scalar_lea.vmem %s15, %s6996
      $region92: #{tpu_custom_call.1} parent=87 // pred_fallthru
        _
    $region88: #{tpu_custom_call.1} parent=5 // pred_fallthru
      _
  $region6: #{tpu_custom_call.1} parent=0 // loop_footer
    %s25 = sadd.s32 1, %s21
  $region7: #{tpu_custom_call.1} parent=0 // loop_footer_branch
    %20 = sbr.rel target = $region3
  $region8: #{tpu_custom_call.1} parent=0 // loop_exit
    _

</llo_original>
